<compile_context>
chip_gen: v7x
topology: tpu7x:2x2x1
jax: 0.10.0
libtpu: 0.0.40
codegen_flags: <defaults>
</compile_context>

<pallas_src>
import functools

import jax
import jax.numpy as jnp
from jax import lax
from jax.experimental import pallas as pl
from jax.experimental.pallas import tpu as pltpu

OUT_LANES = 128  # lane-dense width for the 1-wide classifier head


# ----------------------------- Pallas kernel --------------------------------

def csat_kernel(n_rounds,
                x0_ref, adj_ref,
                # init MLP
                iw1, ib1, iw2, ib2,
                # forward_msg MLP
                fmw1, fmb1, fmw2, fmb2,
                # backward_msg MLP
                bmw1, bmb1, bmw2, bmb2,
                # forward_update GRU (fused gates: [dim, 3*dim], biases [1, 3*dim])
                f_wi, f_wh, f_bi, f_bh,
                # backward_update GRU
                b_wi, b_wh, b_bi, b_bh,
                # classif MLP (w2/b2 padded to OUT_LANES)
                cw1, cb1, cw2, cb2,
                out_ref):
    # ---- hoist every load / broadcast out of the round loop --------------
    x0 = x0_ref[...]                     # f32 [N, 2*emb]
    adj = adj_ref[...]                   # bf16 [N, N]

    iw1_v, ib1_v, iw2_v, ib2_v = iw1[...], ib1[...], iw2[...], ib2[...]
    fmw1_v, fmb1_v, fmw2_v, fmb2_v = fmw1[...], fmb1[...], fmw2[...], fmb2[...]
    bmw1_v, bmb1_v, bmw2_v, bmb2_v = bmw1[...], bmb1[...], bmw2[...], bmb2[...]
    f_wi_v, f_wh_v, f_bi_v, f_bh_v = f_wi[...], f_wh[...], f_bi[...], f_bh[...]
    b_wi_v, b_wh_v, b_bi_v, b_bh_v = b_wi[...], b_wh[...], b_bi[...], b_bh[...]
    cw1_v, cb1_v, cw2_v, cb2_v = cw1[...], cb1[...], cw2[...], cb2[...]

    def mlp(x, w1, b1, w2, b2):
        # bf16 operands on the MXU, f32 accumulate; elementwise stays f32.
        h = jnp.dot(x.astype(jnp.bfloat16), w1,
                    preferred_element_type=jnp.float32) + b1
        h = jnp.maximum(h, 0.0)
        return jnp.dot(h.astype(jnp.bfloat16), w2,
                       preferred_element_type=jnp.float32) + b2

    dim = f_wh_v.shape[0]  # static

    def gru(x, h, wi, wh, bi, bh):
        # PyTorch nn.GRU single-step semantics (gate order r, z, n), with the
        # three gate matmuls fused into one wide [dim, 3*dim] matmul each for
        # the input and hidden paths. bhn stays inside the r*(...) term.
        gi = jnp.dot(x.astype(jnp.bfloat16), wi,
                     preferred_element_type=jnp.float32) + bi
        gh = jnp.dot(h.astype(jnp.bfloat16), wh,
                     preferred_element_type=jnp.float32) + bh
        r = jax.nn.sigmoid(gi[:, 0:dim] + gh[:, 0:dim])
        z = jax.nn.sigmoid(gi[:, dim:2 * dim] + gh[:, dim:2 * dim])
        n = jnp.tanh(gi[:, 2 * dim:3 * dim] + r * gh[:, 2 * dim:3 * dim])
        return (1.0 - z) * n + z * h

    # h_state = init(cat(emb_var, emb_dec))
    h0 = mlp(x0, iw1_v, ib1_v, iw2_v, ib2_v)

    def round_body(_, h):
        # forward message + (dense) adjacency matmul + GRU update
        f_pre = mlp(h, fmw1_v, fmb1_v, fmw2_v, fmb2_v)
        f_msg = jnp.dot(adj, f_pre.astype(jnp.bfloat16),
                        preferred_element_type=jnp.float32)
        h = gru(f_msg, h, f_wi_v, f_wh_v, f_bi_v, f_bh_v)

        # backward message over adj^T without materializing adj^T:
        #   adj^T @ b_pre == (b_pre^T @ adj)^T  — only the small [N,dim]
        # operand and [dim,N] result go through the XLU (off the MXU slot).
        b_pre = mlp(h, bmw1_v, bmb1_v, bmw2_v, bmb2_v)
        b_msg = jnp.dot(b_pre.T.astype(jnp.bfloat16), adj,
                        preferred_element_type=jnp.float32).T
        h = gru(b_msg, h, b_wi_v, b_wh_v, b_bi_v, b_bh_v)
        return h

    if n_rounds <= 8:
        # static unroll: cross-round visibility for the LLO scheduler
        h = h0
        for _ in range(n_rounds):
            h = round_body(0, h)
    else:
        h = lax.fori_loop(0, n_rounds, round_body, h0)

    # classif head; w2/b2 pre-padded to OUT_LANES -> lane-dense (unmasked) store.
    out_ref[...] = mlp(h, cw1_v, cb1_v, cw2_v, cb2_v)


# ------------------------------ parameter init ------------------------------

def _linear(key, fan_in, fan_out):
    k1, k2 = jax.random.split(key)
    bound = 1.0 / float(fan_in) ** 0.5
    w = jax.random.uniform(k1, (fan_in, fan_out), jnp.float32, -bound, bound)
    b = jax.random.uniform(k2, (1, fan_out), jnp.float32, -bound, bound)
    return w, b


def _mlp_params(key, d_in, d_hid, d_out):
    k1, k2 = jax.random.split(key)
    w1, b1 = _linear(k1, d_in, d_hid)
    w2, b2 = _linear(k2, d_hid, d_out)
    return [w1, b1, w2, b2]


def _gru_params(key, dim):
    # Fused-gate layout: Wi = [Wir|Wiz|Win], Wh = [Whr|Whz|Whn] -> [dim, 3*dim];
    # biases bi = [bir|biz|bin], bh = [bhr|bhz|bhn] -> [1, 3*dim].
    ks = jax.random.split(key, 4)
    bound = 1.0 / float(dim) ** 0.5
    wi = jax.random.uniform(ks[0], (dim, 3 * dim), jnp.float32, -bound, bound)
    wh = jax.random.uniform(ks[1], (dim, 3 * dim), jnp.float32, -bound, bound)
    bi = jax.random.uniform(ks[2], (1, 3 * dim), jnp.float32, -bound, bound)
    bh = jax.random.uniform(ks[3], (1, 3 * dim), jnp.float32, -bound, bound)
    return [wi, wh, bi, bh]


def init_csat_params(key, emb_dim, dim, dim_agg, dim_class):
    keys = jax.random.split(key, 9)
    params = {}
    params["emb_var"] = jax.random.normal(keys[0], (4, emb_dim), jnp.float32) * 0.1
    params["emb_dec"] = jax.random.normal(keys[1], (3, emb_dim), jnp.float32) * 0.1
    params["init"] = _mlp_params(keys[2], 2 * emb_dim, dim, dim)
    params["fmsg"] = _mlp_params(keys[3], dim, dim_agg, dim)
    params["bmsg"] = _mlp_params(keys[4], dim, dim_agg, dim)
    params["fgru"] = _gru_params(keys[5], dim)
    params["bgru"] = _gru_params(keys[6], dim)
    params["classif"] = _mlp_params(keys[7], dim, dim_class, 1)
    return params


# --------------------------------- wrapper ----------------------------------

def _vmem_limit_bytes():
    # ~56 MiB on v7x (64 MiB VMEM), capped at 100 MiB on v5e/v6e (128 MiB).
    try:
        cap = int(pltpu.get_tpu_info().vmem_capacity_bytes)
        return min(cap - 8 * 1024 * 1024, 100 * 1024 * 1024)
    except Exception:
        return 48 * 1024 * 1024


def csat_forward(features, adj, params, n_rounds):
    # Glue in XLA: embedding gathers + concat (data-dependent indexing).
    emb_var = params["emb_var"][features[:, 0]]
    emb_dec = params["emb_dec"][features[:, 1]]
    x0 = jnp.concatenate([emb_var, emb_dec], axis=1).astype(jnp.float32)

    n = x0.shape[0]
    n_pad = ((n + 127) // 128) * 128      # tile-aligned node count
    if n_pad != n:
        x0 = jnp.pad(x0, ((0, n_pad - n), (0, 0)))
        adj = jnp.pad(adj.astype(jnp.float32),
                      ((0, n_pad - n), (0, n_pad - n)))
    # bf16 adjacency: halves VMEM/HBM footprint; f32 accumulation in-kernel.
    adj_bf16 = adj.astype(jnp.bfloat16)

    def mlp_inputs(p):
        w1, b1, w2, b2 = p
        return [w1.astype(jnp.bfloat16), b1, w2.astype(jnp.bfloat16), b2]

    def gru_inputs(p):
        wi, wh, bi, bh = p
        return [wi.astype(jnp.bfloat16), wh.astype(jnp.bfloat16), bi, bh]

    cw1, cb1, cw2, cb2 = params["classif"]
    cw2p = jnp.pad(cw2, ((0, 0), (0, OUT_LANES - cw2.shape[1])))
    cb2p = jnp.pad(cb2, ((0, 0), (0, OUT_LANES - cb2.shape[1])))
    classif_inputs = [cw1.astype(jnp.bfloat16), cb1,
                      cw2p.astype(jnp.bfloat16), cb2p]

    inputs = ([x0, adj_bf16]
              + mlp_inputs(params["init"])
              + mlp_inputs(params["fmsg"])
              + mlp_inputs(params["bmsg"])
              + gru_inputs(params["fgru"])
              + gru_inputs(params["bgru"])
              + classif_inputs)

    vmem = pl.BlockSpec(memory_space=pltpu.MemorySpace.VMEM)
    out = pl.pallas_call(
        functools.partial(csat_kernel, int(n_rounds)),
        out_shape=jax.ShapeDtypeStruct((n_pad, OUT_LANES), jnp.float32),
        in_specs=[vmem] * len(inputs),
        out_specs=vmem,
        compiler_params=pltpu.CompilerParams(
            vmem_limit_bytes=_vmem_limit_bytes()),
    )(*inputs)
    # TODO(synk): for N too large for whole-array VMEM residency, switch to a
    # grid over adjacency row-blocks (streaming fallback) instead of this path.
    return out[:n, :1]


# ----------------------------------- main ------------------------------------

if __name__ == "__main__":
    # Small shapes consistent with the module (dim padded 100->128 per lane width).
    N = 48           # number of graph nodes / variables
    EMB = 64         # embedding width (100 in the original; 2*EMB = 128 lanes)
    DIM = 128        # hidden dim (100 -> 128, lane-aligned)
    DIM_AGG = 128    # message MLP hidden dim (50 -> 128)
    DIM_CLASS = 128  # classifier MLP hidden dim (30 -> 128)
    N_ROUNDS = 4     # message-passing rounds (20 in the original)

    key = jax.random.PRNGKey(0)
    k_par, k_feat_v, k_feat_d, k_adj_v, k_adj_m = jax.random.split(key, 5)

    params = init_csat_params(k_par, EMB, DIM, DIM_AGG, DIM_CLASS)

    # features[:, 0] in [0, 4) (var type), features[:, 1] in [0, 3) (decision)
    feat_var = jax.random.randint(k_feat_v, (N, 1), 0, 4, jnp.int32)
    feat_dec = jax.random.randint(k_feat_d, (N, 1), 0, 3, jnp.int32)
    features = jnp.concatenate([feat_var, feat_dec], axis=1)

    # Sparse adjacency represented densely (torch_sparse.matmul -> dense matmul).
    adj_vals = jax.random.uniform(k_adj_v, (N, N), jnp.float32)
    adj_mask = (jax.random.uniform(k_adj_m, (N, N)) < 0.25).astype(jnp.float32)
    adj = adj_vals * adj_mask

    out = csat_forward(features, adj, params, N_ROUNDS)
    out = jax.block_until_ready(out)
    assert out.shape == (N, 1) and out.dtype == jnp.float32
    assert bool(jnp.all(jnp.isfinite(out)))
    print("KERNEL_OK")
</pallas_src>

<mosaic_0001>
module attributes {stable_mosaic.version = 11 : i64} {
  func.func @csat_kernel(%arg0: memref<128x128xf32, #tpu.memory_space<vmem>>, %arg1: memref<128x128xbf16, #tpu.memory_space<vmem>>, %arg2: memref<128x128xbf16, #tpu.memory_space<vmem>>, %arg3: memref<1x128xf32, #tpu.memory_space<vmem>>, %arg4: memref<128x128xbf16, #tpu.memory_space<vmem>>, %arg5: memref<1x128xf32, #tpu.memory_space<vmem>>, %arg6: memref<128x128xbf16, #tpu.memory_space<vmem>>, %arg7: memref<1x128xf32, #tpu.memory_space<vmem>>, %arg8: memref<128x128xbf16, #tpu.memory_space<vmem>>, %arg9: memref<1x128xf32, #tpu.memory_space<vmem>>, %arg10: memref<128x128xbf16, #tpu.memory_space<vmem>>, %arg11: memref<1x128xf32, #tpu.memory_space<vmem>>, %arg12: memref<128x128xbf16, #tpu.memory_space<vmem>>, %arg13: memref<1x128xf32, #tpu.memory_space<vmem>>, %arg14: memref<128x384xbf16, #tpu.memory_space<vmem>>, %arg15: memref<128x384xbf16, #tpu.memory_space<vmem>>, %arg16: memref<1x384xf32, #tpu.memory_space<vmem>>, %arg17: memref<1x384xf32, #tpu.memory_space<vmem>>, %arg18: memref<128x384xbf16, #tpu.memory_space<vmem>>, %arg19: memref<128x384xbf16, #tpu.memory_space<vmem>>, %arg20: memref<1x384xf32, #tpu.memory_space<vmem>>, %arg21: memref<1x384xf32, #tpu.memory_space<vmem>>, %arg22: memref<128x128xbf16, #tpu.memory_space<vmem>>, %arg23: memref<1x128xf32, #tpu.memory_space<vmem>>, %arg24: memref<128x128xbf16, #tpu.memory_space<vmem>>, %arg25: memref<1x128xf32, #tpu.memory_space<vmem>>, %arg26: memref<128x128xf32, #tpu.memory_space<vmem>>) attributes {dimension_semantics = [], scalar_prefetch = 0 : i64, scratch_operands = 0 : i64, tpu.core_type = #tpu.core_type<tc>} {
    %c0 = arith.constant 0 : index
    %c0_0 = arith.constant 0 : index
    %0 = vector.load %arg0[%c0, %c0_0] : memref<128x128xf32, #tpu.memory_space<vmem>>, vector<128x128xf32>
    %c0_1 = arith.constant 0 : index
    %c0_2 = arith.constant 0 : index
    %1 = vector.load %arg1[%c0_1, %c0_2] : memref<128x128xbf16, #tpu.memory_space<vmem>>, vector<128x128xbf16>
    %c0_3 = arith.constant 0 : index
    %c0_4 = arith.constant 0 : index
    %2 = vector.load %arg2[%c0_3, %c0_4] : memref<128x128xbf16, #tpu.memory_space<vmem>>, vector<128x128xbf16>
    %c0_5 = arith.constant 0 : index
    %c0_6 = arith.constant 0 : index
    %3 = vector.load %arg3[%c0_5, %c0_6] : memref<1x128xf32, #tpu.memory_space<vmem>>, vector<1x128xf32>
    %c0_7 = arith.constant 0 : index
    %c0_8 = arith.constant 0 : index
    %4 = vector.load %arg4[%c0_7, %c0_8] : memref<128x128xbf16, #tpu.memory_space<vmem>>, vector<128x128xbf16>
    %c0_9 = arith.constant 0 : index
    %c0_10 = arith.constant 0 : index
    %5 = vector.load %arg5[%c0_9, %c0_10] : memref<1x128xf32, #tpu.memory_space<vmem>>, vector<1x128xf32>
    %c0_11 = arith.constant 0 : index
    %c0_12 = arith.constant 0 : index
    %6 = vector.load %arg6[%c0_11, %c0_12] : memref<128x128xbf16, #tpu.memory_space<vmem>>, vector<128x128xbf16>
    %c0_13 = arith.constant 0 : index
    %c0_14 = arith.constant 0 : index
    %7 = vector.load %arg7[%c0_13, %c0_14] : memref<1x128xf32, #tpu.memory_space<vmem>>, vector<1x128xf32>
    %c0_15 = arith.constant 0 : index
    %c0_16 = arith.constant 0 : index
    %8 = vector.load %arg8[%c0_15, %c0_16] : memref<128x128xbf16, #tpu.memory_space<vmem>>, vector<128x128xbf16>
    %c0_17 = arith.constant 0 : index
    %c0_18 = arith.constant 0 : index
    %9 = vector.load %arg9[%c0_17, %c0_18] : memref<1x128xf32, #tpu.memory_space<vmem>>, vector<1x128xf32>
    %c0_19 = arith.constant 0 : index
    %c0_20 = arith.constant 0 : index
    %10 = vector.load %arg10[%c0_19, %c0_20] : memref<128x128xbf16, #tpu.memory_space<vmem>>, vector<128x128xbf16>
    %c0_21 = arith.constant 0 : index
    %c0_22 = arith.constant 0 : index
    %11 = vector.load %arg11[%c0_21, %c0_22] : memref<1x128xf32, #tpu.memory_space<vmem>>, vector<1x128xf32>
    %c0_23 = arith.constant 0 : index
    %c0_24 = arith.constant 0 : index
    %12 = vector.load %arg12[%c0_23, %c0_24] : memref<128x128xbf16, #tpu.memory_space<vmem>>, vector<128x128xbf16>
    %c0_25 = arith.constant 0 : index
    %c0_26 = arith.constant 0 : index
    %13 = vector.load %arg13[%c0_25, %c0_26] : memref<1x128xf32, #tpu.memory_space<vmem>>, vector<1x128xf32>
    %c0_27 = arith.constant 0 : index
    %c0_28 = arith.constant 0 : index
    %14 = vector.load %arg14[%c0_27, %c0_28] : memref<128x384xbf16, #tpu.memory_space<vmem>>, vector<128x384xbf16>
    %c0_29 = arith.constant 0 : index
    %c0_30 = arith.constant 0 : index
    %15 = vector.load %arg15[%c0_29, %c0_30] : memref<128x384xbf16, #tpu.memory_space<vmem>>, vector<128x384xbf16>
    %c0_31 = arith.constant 0 : index
    %c0_32 = arith.constant 0 : index
    %16 = vector.load %arg16[%c0_31, %c0_32] : memref<1x384xf32, #tpu.memory_space<vmem>>, vector<1x384xf32>
    %c0_33 = arith.constant 0 : index
    %c0_34 = arith.constant 0 : index
    %17 = vector.load %arg17[%c0_33, %c0_34] : memref<1x384xf32, #tpu.memory_space<vmem>>, vector<1x384xf32>
    %c0_35 = arith.constant 0 : index
    %c0_36 = arith.constant 0 : index
    %18 = vector.load %arg18[%c0_35, %c0_36] : memref<128x384xbf16, #tpu.memory_space<vmem>>, vector<128x384xbf16>
    %c0_37 = arith.constant 0 : index
    %c0_38 = arith.constant 0 : index
    %19 = vector.load %arg19[%c0_37, %c0_38] : memref<128x384xbf16, #tpu.memory_space<vmem>>, vector<128x384xbf16>
    %c0_39 = arith.constant 0 : index
    %c0_40 = arith.constant 0 : index
    %20 = vector.load %arg20[%c0_39, %c0_40] : memref<1x384xf32, #tpu.memory_space<vmem>>, vector<1x384xf32>
    %c0_41 = arith.constant 0 : index
    %c0_42 = arith.constant 0 : index
    %21 = vector.load %arg21[%c0_41, %c0_42] : memref<1x384xf32, #tpu.memory_space<vmem>>, vector<1x384xf32>
    %c0_43 = arith.constant 0 : index
    %c0_44 = arith.constant 0 : index
    %22 = vector.load %arg22[%c0_43, %c0_44] : memref<128x128xbf16, #tpu.memory_space<vmem>>, vector<128x128xbf16>
    %c0_45 = arith.constant 0 : index
    %c0_46 = arith.constant 0 : index
    %23 = vector.load %arg23[%c0_45, %c0_46] : memref<1x128xf32, #tpu.memory_space<vmem>>, vector<1x128xf32>
    %c0_47 = arith.constant 0 : index
    %c0_48 = arith.constant 0 : index
    %24 = vector.load %arg24[%c0_47, %c0_48] : memref<128x128xbf16, #tpu.memory_space<vmem>>, vector<128x128xbf16>
    %c0_49 = arith.constant 0 : index
    %c0_50 = arith.constant 0 : index
    %25 = vector.load %arg25[%c0_49, %c0_50] : memref<1x128xf32, #tpu.memory_space<vmem>>, vector<1x128xf32>
    %26 = arith.truncf %0 : vector<128x128xf32> to vector<128x128xbf16>
    %cst = arith.constant dense<0.000000e+00> : vector<128x128xf32>
    %27 = tpu.matmul %26, %2, %cst {dimension_numbers = #tpu.dot_dimension_numbers<[1], [0], [0], [1], [0, 0, 1, 1], [], []>} : vector<128x128xbf16>, vector<128x128xbf16>, vector<128x128xf32> -> vector<128x128xf32>
    %28 = vector.broadcast %3 : vector<1x128xf32> to vector<128x128xf32>
    %29 = arith.addf %27, %28 : vector<128x128xf32>
    %cst_51 = arith.constant 0.000000e+00 : f32
    %30 = vector.broadcast %cst_51 : f32 to vector<128x128xf32>
    %31 = arith.maximumf %29, %30 : vector<128x128xf32>
    %32 = arith.truncf %31 : vector<128x128xf32> to vector<128x128xbf16>
    %cst_52 = arith.constant dense<0.000000e+00> : vector<128x128xf32>
    %33 = tpu.matmul %32, %4, %cst_52 {dimension_numbers = #tpu.dot_dimension_numbers<[1], [0], [0], [1], [0, 0, 1, 1], [], []>} : vector<128x128xbf16>, vector<128x128xbf16>, vector<128x128xf32> -> vector<128x128xf32>
    %34 = vector.broadcast %5 : vector<1x128xf32> to vector<128x128xf32>
    %35 = arith.addf %33, %34 : vector<128x128xf32>
    %36 = arith.truncf %35 : vector<128x128xf32> to vector<128x128xbf16>
    %cst_53 = arith.constant dense<0.000000e+00> : vector<128x128xf32>
    %37 = tpu.matmul %36, %6, %cst_53 {dimension_numbers = #tpu.dot_dimension_numbers<[1], [0], [0], [1], [0, 0, 1, 1], [], []>} : vector<128x128xbf16>, vector<128x128xbf16>, vector<128x128xf32> -> vector<128x128xf32>
    %38 = vector.broadcast %7 : vector<1x128xf32> to vector<128x128xf32>
    %39 = arith.addf %37, %38 : vector<128x128xf32>
    %cst_54 = arith.constant 0.000000e+00 : f32
    %40 = vector.broadcast %cst_54 : f32 to vector<128x128xf32>
    %41 = arith.maximumf %39, %40 : vector<128x128xf32>
    %42 = arith.truncf %41 : vector<128x128xf32> to vector<128x128xbf16>
    %cst_55 = arith.constant dense<0.000000e+00> : vector<128x128xf32>
    %43 = tpu.matmul %42, %8, %cst_55 {dimension_numbers = #tpu.dot_dimension_numbers<[1], [0], [0], [1], [0, 0, 1, 1], [], []>} : vector<128x128xbf16>, vector<128x128xbf16>, vector<128x128xf32> -> vector<128x128xf32>
    %44 = vector.broadcast %9 : vector<1x128xf32> to vector<128x128xf32>
    %45 = arith.addf %43, %44 : vector<128x128xf32>
    %46 = arith.truncf %45 : vector<128x128xf32> to vector<128x128xbf16>
    %cst_56 = arith.constant dense<0.000000e+00> : vector<128x128xf32>
    %47 = tpu.matmul %1, %46, %cst_56 {dimension_numbers = #tpu.dot_dimension_numbers<[1], [0], [0], [1], [0, 0, 1, 1], [], []>} : vector<128x128xbf16>, vector<128x128xbf16>, vector<128x128xf32> -> vector<128x128xf32>
    %48 = arith.truncf %47 : vector<128x128xf32> to vector<128x128xbf16>
    %cst_57 = arith.constant dense<0.000000e+00> : vector<128x384xf32>
    %49 = tpu.matmul %48, %14, %cst_57 {dimension_numbers = #tpu.dot_dimension_numbers<[1], [0], [0], [1], [0, 0, 1, 1], [], []>} : vector<128x128xbf16>, vector<128x384xbf16>, vector<128x384xf32> -> vector<128x384xf32>
    %50 = vector.broadcast %16 : vector<1x384xf32> to vector<128x384xf32>
    %51 = arith.addf %49, %50 : vector<128x384xf32>
    %52 = arith.truncf %35 : vector<128x128xf32> to vector<128x128xbf16>
    %cst_58 = arith.constant dense<0.000000e+00> : vector<128x384xf32>
    %53 = tpu.matmul %52, %15, %cst_58 {dimension_numbers = #tpu.dot_dimension_numbers<[1], [0], [0], [1], [0, 0, 1, 1], [], []>} : vector<128x128xbf16>, vector<128x384xbf16>, vector<128x384xf32> -> vector<128x384xf32>
    %54 = vector.broadcast %17 : vector<1x384xf32> to vector<128x384xf32>
    %55 = arith.addf %53, %54 : vector<128x384xf32>
    %56 = vector.extract_strided_slice %51 {offsets = [0, 0], sizes = [128, 128], strides = [1, 1]} : vector<128x384xf32> to vector<128x128xf32>
    %57 = vector.extract_strided_slice %55 {offsets = [0, 0], sizes = [128, 128], strides = [1, 1]} : vector<128x384xf32> to vector<128x128xf32>
    %58 = arith.addf %56, %57 : vector<128x128xf32>
    %59 = arith.negf %58 : vector<128x128xf32>
    %60 = math.exp %59 : vector<128x128xf32>
    %cst_59 = arith.constant 1.000000e+00 : f32
    %61 = vector.broadcast %cst_59 : f32 to vector<128x128xf32>
    %62 = arith.addf %61, %60 : vector<128x128xf32>
    %63 = arith.divf %61, %62 : vector<128x128xf32>
    %64 = vector.extract_strided_slice %51 {offsets = [0, 128], sizes = [128, 128], strides = [1, 1]} : vector<128x384xf32> to vector<128x128xf32>
    %65 = vector.extract_strided_slice %55 {offsets = [0, 128], sizes = [128, 128], strides = [1, 1]} : vector<128x384xf32> to vector<128x128xf32>
    %66 = arith.addf %64, %65 : vector<128x128xf32>
    %67 = arith.negf %66 : vector<128x128xf32>
    %68 = math.exp %67 : vector<128x128xf32>
    %cst_60 = arith.constant 1.000000e+00 : f32
    %69 = vector.broadcast %cst_60 : f32 to vector<128x128xf32>
    %70 = arith.addf %69, %68 : vector<128x128xf32>
    %71 = arith.divf %69, %70 : vector<128x128xf32>
    %72 = vector.extract_strided_slice %51 {offsets = [0, 256], sizes = [128, 128], strides = [1, 1]} : vector<128x384xf32> to vector<128x128xf32>
    %73 = vector.extract_strided_slice %55 {offsets = [0, 256], sizes = [128, 128], strides = [1, 1]} : vector<128x384xf32> to vector<128x128xf32>
    %74 = arith.mulf %63, %73 : vector<128x128xf32>
    %75 = arith.addf %72, %74 : vector<128x128xf32>
    %76 = math.tanh %75 : vector<128x128xf32>
    %cst_61 = arith.constant 1.000000e+00 : f32
    %77 = vector.broadcast %cst_61 : f32 to vector<128x128xf32>
    %78 = arith.subf %77, %71 : vector<128x128xf32>
    %79 = arith.mulf %78, %76 : vector<128x128xf32>
    %80 = arith.mulf %71, %35 : vector<128x128xf32>
    %81 = arith.addf %79, %80 : vector<128x128xf32>
    %82 = arith.truncf %81 : vector<128x128xf32> to vector<128x128xbf16>
    %cst_62 = arith.constant dense<0.000000e+00> : vector<128x128xf32>
    %83 = tpu.matmul %82, %10, %cst_62 {dimension_numbers = #tpu.dot_dimension_numbers<[1], [0], [0], [1], [0, 0, 1, 1], [], []>} : vector<128x128xbf16>, vector<128x128xbf16>, vector<128x128xf32> -> vector<128x128xf32>
    %84 = vector.broadcast %11 : vector<1x128xf32> to vector<128x128xf32>
    %85 = arith.addf %83, %84 : vector<128x128xf32>
    %cst_63 = arith.constant 0.000000e+00 : f32
    %86 = vector.broadcast %cst_63 : f32 to vector<128x128xf32>
    %87 = arith.maximumf %85, %86 : vector<128x128xf32>
    %88 = arith.truncf %87 : vector<128x128xf32> to vector<128x128xbf16>
    %cst_64 = arith.constant dense<0.000000e+00> : vector<128x128xf32>
    %89 = tpu.matmul %88, %12, %cst_64 {dimension_numbers = #tpu.dot_dimension_numbers<[1], [0], [0], [1], [0, 0, 1, 1], [], []>} : vector<128x128xbf16>, vector<128x128xbf16>, vector<128x128xf32> -> vector<128x128xf32>
    %90 = vector.broadcast %13 : vector<1x128xf32> to vector<128x128xf32>
    %91 = arith.addf %89, %90 : vector<128x128xf32>
    %92 = tpu.transpose %91, [1, 0] : vector<128x128xf32> -> vector<128x128xf32>
    %93 = arith.truncf %92 : vector<128x128xf32> to vector<128x128xbf16>
    %cst_65 = arith.constant dense<0.000000e+00> : vector<128x128xf32>
    %94 = tpu.matmul %93, %1, %cst_65 {dimension_numbers = #tpu.dot_dimension_numbers<[1], [0], [0], [1], [0, 0, 1, 1], [], []>} : vector<128x128xbf16>, vector<128x128xbf16>, vector<128x128xf32> -> vector<128x128xf32>
    %95 = tpu.transpose %94, [1, 0] : vector<128x128xf32> -> vector<128x128xf32>
    %96 = arith.truncf %95 : vector<128x128xf32> to vector<128x128xbf16>
    %cst_66 = arith.constant dense<0.000000e+00> : vector<128x384xf32>
    %97 = tpu.matmul %96, %18, %cst_66 {dimension_numbers = #tpu.dot_dimension_numbers<[1], [0], [0], [1], [0, 0, 1, 1], [], []>} : vector<128x128xbf16>, vector<128x384xbf16>, vector<128x384xf32> -> vector<128x384xf32>
    %98 = vector.broadcast %20 : vector<1x384xf32> to vector<128x384xf32>
    %99 = arith.addf %97, %98 : vector<128x384xf32>
    %100 = arith.truncf %81 : vector<128x128xf32> to vector<128x128xbf16>
    %cst_67 = arith.constant dense<0.000000e+00> : vector<128x384xf32>
    %101 = tpu.matmul %100, %19, %cst_67 {dimension_numbers = #tpu.dot_dimension_numbers<[1], [0], [0], [1], [0, 0, 1, 1], [], []>} : vector<128x128xbf16>, vector<128x384xbf16>, vector<128x384xf32> -> vector<128x384xf32>
    %102 = vector.broadcast %21 : vector<1x384xf32> to vector<128x384xf32>
    %103 = arith.addf %101, %102 : vector<128x384xf32>
    %104 = vector.extract_strided_slice %99 {offsets = [0, 0], sizes = [128, 128], strides = [1, 1]} : vector<128x384xf32> to vector<128x128xf32>
    %105 = vector.extract_strided_slice %103 {offsets = [0, 0], sizes = [128, 128], strides = [1, 1]} : vector<128x384xf32> to vector<128x128xf32>
    %106 = arith.addf %104, %105 : vector<128x128xf32>
    %107 = arith.negf %106 : vector<128x128xf32>
    %108 = math.exp %107 : vector<128x128xf32>
    %cst_68 = arith.constant 1.000000e+00 : f32
    %109 = vector.broadcast %cst_68 : f32 to vector<128x128xf32>
    %110 = arith.addf %109, %108 : vector<128x128xf32>
    %111 = arith.divf %109, %110 : vector<128x128xf32>
    %112 = vector.extract_strided_slice %99 {offsets = [0, 128], sizes = [128, 128], strides = [1, 1]} : vector<128x384xf32> to vector<128x128xf32>
    %113 = vector.extract_strided_slice %103 {offsets = [0, 128], sizes = [128, 128], strides = [1, 1]} : vector<128x384xf32> to vector<128x128xf32>
    %114 = arith.addf %112, %113 : vector<128x128xf32>
    %115 = arith.negf %114 : vector<128x128xf32>
    %116 = math.exp %115 : vector<128x128xf32>
    %cst_69 = arith.constant 1.000000e+00 : f32
    %117 = vector.broadcast %cst_69 : f32 to vector<128x128xf32>
    %118 = arith.addf %117, %116 : vector<128x128xf32>
    %119 = arith.divf %117, %118 : vector<128x128xf32>
    %120 = vector.extract_strided_slice %99 {offsets = [0, 256], sizes = [128, 128], strides = [1, 1]} : vector<128x384xf32> to vector<128x128xf32>
    %121 = vector.extract_strided_slice %103 {offsets = [0, 256], sizes = [128, 128], strides = [1, 1]} : vector<128x384xf32> to vector<128x128xf32>
    %122 = arith.mulf %111, %121 : vector<128x128xf32>
    %123 = arith.addf %120, %122 : vector<128x128xf32>
    %124 = math.tanh %123 : vector<128x128xf32>
    %cst_70 = arith.constant 1.000000e+00 : f32
    %125 = vector.broadcast %cst_70 : f32 to vector<128x128xf32>
    %126 = arith.subf %125, %119 : vector<128x128xf32>
    %127 = arith.mulf %126, %124 : vector<128x128xf32>
    %128 = arith.mulf %119, %81 : vector<128x128xf32>
    %129 = arith.addf %127, %128 : vector<128x128xf32>
    %130 = arith.truncf %129 : vector<128x128xf32> to vector<128x128xbf16>
    %cst_71 = arith.constant dense<0.000000e+00> : vector<128x128xf32>
    %131 = tpu.matmul %130, %6, %cst_71 {dimension_numbers = #tpu.dot_dimension_numbers<[1], [0], [0], [1], [0, 0, 1, 1], [], []>} : vector<128x128xbf16>, vector<128x128xbf16>, vector<128x128xf32> -> vector<128x128xf32>
    %132 = vector.broadcast %7 : vector<1x128xf32> to vector<128x128xf32>
    %133 = arith.addf %131, %132 : vector<128x128xf32>
    %cst_72 = arith.constant 0.000000e+00 : f32
    %134 = vector.broadcast %cst_72 : f32 to vector<128x128xf32>
    %135 = arith.maximumf %133, %134 : vector<128x128xf32>
    %136 = arith.truncf %135 : vector<128x128xf32> to vector<128x128xbf16>
    %cst_73 = arith.constant dense<0.000000e+00> : vector<128x128xf32>
    %137 = tpu.matmul %136, %8, %cst_73 {dimension_numbers = #tpu.dot_dimension_numbers<[1], [0], [0], [1], [0, 0, 1, 1], [], []>} : vector<128x128xbf16>, vector<128x128xbf16>, vector<128x128xf32> -> vector<128x128xf32>
    %138 = vector.broadcast %9 : vector<1x128xf32> to vector<128x128xf32>
    %139 = arith.addf %137, %138 : vector<128x128xf32>
    %140 = arith.truncf %139 : vector<128x128xf32> to vector<128x128xbf16>
    %cst_74 = arith.constant dense<0.000000e+00> : vector<128x128xf32>
    %141 = tpu.matmul %1, %140, %cst_74 {dimension_numbers = #tpu.dot_dimension_numbers<[1], [0], [0], [1], [0, 0, 1, 1], [], []>} : vector<128x128xbf16>, vector<128x128xbf16>, vector<128x128xf32> -> vector<128x128xf32>
    %142 = arith.truncf %141 : vector<128x128xf32> to vector<128x128xbf16>
    %cst_75 = arith.constant dense<0.000000e+00> : vector<128x384xf32>
    %143 = tpu.matmul %142, %14, %cst_75 {dimension_numbers = #tpu.dot_dimension_numbers<[1], [0], [0], [1], [0, 0, 1, 1], [], []>} : vector<128x128xbf16>, vector<128x384xbf16>, vector<128x384xf32> -> vector<128x384xf32>
    %144 = vector.broadcast %16 : vector<1x384xf32> to vector<128x384xf32>
    %145 = arith.addf %143, %144 : vector<128x384xf32>
    %146 = arith.truncf %129 : vector<128x128xf32> to vector<128x128xbf16>
    %cst_76 = arith.constant dense<0.000000e+00> : vector<128x384xf32>
    %147 = tpu.matmul %146, %15, %cst_76 {dimension_numbers = #tpu.dot_dimension_numbers<[1], [0], [0], [1], [0, 0, 1, 1], [], []>} : vector<128x128xbf16>, vector<128x384xbf16>, vector<128x384xf32> -> vector<128x384xf32>
    %148 = vector.broadcast %17 : vector<1x384xf32> to vector<128x384xf32>
    %149 = arith.addf %147, %148 : vector<128x384xf32>
    %150 = vector.extract_strided_slice %145 {offsets = [0, 0], sizes = [128, 128], strides = [1, 1]} : vector<128x384xf32> to vector<128x128xf32>
    %151 = vector.extract_strided_slice %149 {offsets = [0, 0], sizes = [128, 128], strides = [1, 1]} : vector<128x384xf32> to vector<128x128xf32>
    %152 = arith.addf %150, %151 : vector<128x128xf32>
    %153 = arith.negf %152 : vector<128x128xf32>
    %154 = math.exp %153 : vector<128x128xf32>
    %cst_77 = arith.constant 1.000000e+00 : f32
    %155 = vector.broadcast %cst_77 : f32 to vector<128x128xf32>
    %156 = arith.addf %155, %154 : vector<128x128xf32>
    %157 = arith.divf %155, %156 : vector<128x128xf32>
    %158 = vector.extract_strided_slice %145 {offsets = [0, 128], sizes = [128, 128], strides = [1, 1]} : vector<128x384xf32> to vector<128x128xf32>
    %159 = vector.extract_strided_slice %149 {offsets = [0, 128], sizes = [128, 128], strides = [1, 1]} : vector<128x384xf32> to vector<128x128xf32>
    %160 = arith.addf %158, %159 : vector<128x128xf32>
    %161 = arith.negf %160 : vector<128x128xf32>
    %162 = math.exp %161 : vector<128x128xf32>
    %cst_78 = arith.constant 1.000000e+00 : f32
    %163 = vector.broadcast %cst_78 : f32 to vector<128x128xf32>
    %164 = arith.addf %163, %162 : vector<128x128xf32>
    %165 = arith.divf %163, %164 : vector<128x128xf32>
    %166 = vector.extract_strided_slice %145 {offsets = [0, 256], sizes = [128, 128], strides = [1, 1]} : vector<128x384xf32> to vector<128x128xf32>
    %167 = vector.extract_strided_slice %149 {offsets = [0, 256], sizes = [128, 128], strides = [1, 1]} : vector<128x384xf32> to vector<128x128xf32>
    %168 = arith.mulf %157, %167 : vector<128x128xf32>
    %169 = arith.addf %166, %168 : vector<128x128xf32>
    %170 = math.tanh %169 : vector<128x128xf32>
    %cst_79 = arith.constant 1.000000e+00 : f32
    %171 = vector.broadcast %cst_79 : f32 to vector<128x128xf32>
    %172 = arith.subf %171, %165 : vector<128x128xf32>
    %173 = arith.mulf %172, %170 : vector<128x128xf32>
    %174 = arith.mulf %165, %129 : vector<128x128xf32>
    %175 = arith.addf %173, %174 : vector<128x128xf32>
    %176 = arith.truncf %175 : vector<128x128xf32> to vector<128x128xbf16>
    %cst_80 = arith.constant dense<0.000000e+00> : vector<128x128xf32>
    %177 = tpu.matmul %176, %10, %cst_80 {dimension_numbers = #tpu.dot_dimension_numbers<[1], [0], [0], [1], [0, 0, 1, 1], [], []>} : vector<128x128xbf16>, vector<128x128xbf16>, vector<128x128xf32> -> vector<128x128xf32>
    %178 = vector.broadcast %11 : vector<1x128xf32> to vector<128x128xf32>
    %179 = arith.addf %177, %178 : vector<128x128xf32>
    %cst_81 = arith.constant 0.000000e+00 : f32
    %180 = vector.broadcast %cst_81 : f32 to vector<128x128xf32>
    %181 = arith.maximumf %179, %180 : vector<128x128xf32>
    %182 = arith.truncf %181 : vector<128x128xf32> to vector<128x128xbf16>
    %cst_82 = arith.constant dense<0.000000e+00> : vector<128x128xf32>
    %183 = tpu.matmul %182, %12, %cst_82 {dimension_numbers = #tpu.dot_dimension_numbers<[1], [0], [0], [1], [0, 0, 1, 1], [], []>} : vector<128x128xbf16>, vector<128x128xbf16>, vector<128x128xf32> -> vector<128x128xf32>
    %184 = vector.broadcast %13 : vector<1x128xf32> to vector<128x128xf32>
    %185 = arith.addf %183, %184 : vector<128x128xf32>
    %186 = tpu.transpose %185, [1, 0] : vector<128x128xf32> -> vector<128x128xf32>
    %187 = arith.truncf %186 : vector<128x128xf32> to vector<128x128xbf16>
    %cst_83 = arith.constant dense<0.000000e+00> : vector<128x128xf32>
    %188 = tpu.matmul %187, %1, %cst_83 {dimension_numbers = #tpu.dot_dimension_numbers<[1], [0], [0], [1], [0, 0, 1, 1], [], []>} : vector<128x128xbf16>, vector<128x128xbf16>, vector<128x128xf32> -> vector<128x128xf32>
    %189 = tpu.transpose %188, [1, 0] : vector<128x128xf32> -> vector<128x128xf32>
    %190 = arith.truncf %189 : vector<128x128xf32> to vector<128x128xbf16>
    %cst_84 = arith.constant dense<0.000000e+00> : vector<128x384xf32>
    %191 = tpu.matmul %190, %18, %cst_84 {dimension_numbers = #tpu.dot_dimension_numbers<[1], [0], [0], [1], [0, 0, 1, 1], [], []>} : vector<128x128xbf16>, vector<128x384xbf16>, vector<128x384xf32> -> vector<128x384xf32>
    %192 = vector.broadcast %20 : vector<1x384xf32> to vector<128x384xf32>
    %193 = arith.addf %191, %192 : vector<128x384xf32>
    %194 = arith.truncf %175 : vector<128x128xf32> to vector<128x128xbf16>
    %cst_85 = arith.constant dense<0.000000e+00> : vector<128x384xf32>
    %195 = tpu.matmul %194, %19, %cst_85 {dimension_numbers = #tpu.dot_dimension_numbers<[1], [0], [0], [1], [0, 0, 1, 1], [], []>} : vector<128x128xbf16>, vector<128x384xbf16>, vector<128x384xf32> -> vector<128x384xf32>
    %196 = vector.broadcast %21 : vector<1x384xf32> to vector<128x384xf32>
    %197 = arith.addf %195, %196 : vector<128x384xf32>
    %198 = vector.extract_strided_slice %193 {offsets = [0, 0], sizes = [128, 128], strides = [1, 1]} : vector<128x384xf32> to vector<128x128xf32>
    %199 = vector.extract_strided_slice %197 {offsets = [0, 0], sizes = [128, 128], strides = [1, 1]} : vector<128x384xf32> to vector<128x128xf32>
    %200 = arith.addf %198, %199 : vector<128x128xf32>
    %201 = arith.negf %200 : vector<128x128xf32>
    %202 = math.exp %201 : vector<128x128xf32>
    %cst_86 = arith.constant 1.000000e+00 : f32
    %203 = vector.broadcast %cst_86 : f32 to vector<128x128xf32>
    %204 = arith.addf %203, %202 : vector<128x128xf32>
    %205 = arith.divf %203, %204 : vector<128x128xf32>
    %206 = vector.extract_strided_slice %193 {offsets = [0, 128], sizes = [128, 128], strides = [1, 1]} : vector<128x384xf32> to vector<128x128xf32>
    %207 = vector.extract_strided_slice %197 {offsets = [0, 128], sizes = [128, 128], strides = [1, 1]} : vector<128x384xf32> to vector<128x128xf32>
    %208 = arith.addf %206, %207 : vector<128x128xf32>
    %209 = arith.negf %208 : vector<128x128xf32>
    %210 = math.exp %209 : vector<128x128xf32>
    %cst_87 = arith.constant 1.000000e+00 : f32
    %211 = vector.broadcast %cst_87 : f32 to vector<128x128xf32>
    %212 = arith.addf %211, %210 : vector<128x128xf32>
    %213 = arith.divf %211, %212 : vector<128x128xf32>
    %214 = vector.extract_strided_slice %193 {offsets = [0, 256], sizes = [128, 128], strides = [1, 1]} : vector<128x384xf32> to vector<128x128xf32>
    %215 = vector.extract_strided_slice %197 {offsets = [0, 256], sizes = [128, 128], strides = [1, 1]} : vector<128x384xf32> to vector<128x128xf32>
    %216 = arith.mulf %205, %215 : vector<128x128xf32>
    %217 = arith.addf %214, %216 : vector<128x128xf32>
    %218 = math.tanh %217 : vector<128x128xf32>
    %cst_88 = arith.constant 1.000000e+00 : f32
    %219 = vector.broadcast %cst_88 : f32 to vector<128x128xf32>
    %220 = arith.subf %219, %213 : vector<128x128xf32>
    %221 = arith.mulf %220, %218 : vector<128x128xf32>
    %222 = arith.mulf %213, %175 : vector<128x128xf32>
    %223 = arith.addf %221, %222 : vector<128x128xf32>
    %224 = arith.truncf %223 : vector<128x128xf32> to vector<128x128xbf16>
    %cst_89 = arith.constant dense<0.000000e+00> : vector<128x128xf32>
    %225 = tpu.matmul %224, %6, %cst_89 {dimension_numbers = #tpu.dot_dimension_numbers<[1], [0], [0], [1], [0, 0, 1, 1], [], []>} : vector<128x128xbf16>, vector<128x128xbf16>, vector<128x128xf32> -> vector<128x128xf32>
    %226 = vector.broadcast %7 : vector<1x128xf32> to vector<128x128xf32>
    %227 = arith.addf %225, %226 : vector<128x128xf32>
    %cst_90 = arith.constant 0.000000e+00 : f32
    %228 = vector.broadcast %cst_90 : f32 to vector<128x128xf32>
    %229 = arith.maximumf %227, %228 : vector<128x128xf32>
    %230 = arith.truncf %229 : vector<128x128xf32> to vector<128x128xbf16>
    %cst_91 = arith.constant dense<0.000000e+00> : vector<128x128xf32>
    %231 = tpu.matmul %230, %8, %cst_91 {dimension_numbers = #tpu.dot_dimension_numbers<[1], [0], [0], [1], [0, 0, 1, 1], [], []>} : vector<128x128xbf16>, vector<128x128xbf16>, vector<128x128xf32> -> vector<128x128xf32>
    %232 = vector.broadcast %9 : vector<1x128xf32> to vector<128x128xf32>
    %233 = arith.addf %231, %232 : vector<128x128xf32>
    %234 = arith.truncf %233 : vector<128x128xf32> to vector<128x128xbf16>
    %cst_92 = arith.constant dense<0.000000e+00> : vector<128x128xf32>
    %235 = tpu.matmul %1, %234, %cst_92 {dimension_numbers = #tpu.dot_dimension_numbers<[1], [0], [0], [1], [0, 0, 1, 1], [], []>} : vector<128x128xbf16>, vector<128x128xbf16>, vector<128x128xf32> -> vector<128x128xf32>
    %236 = arith.truncf %235 : vector<128x128xf32> to vector<128x128xbf16>
    %cst_93 = arith.constant dense<0.000000e+00> : vector<128x384xf32>
    %237 = tpu.matmul %236, %14, %cst_93 {dimension_numbers = #tpu.dot_dimension_numbers<[1], [0], [0], [1], [0, 0, 1, 1], [], []>} : vector<128x128xbf16>, vector<128x384xbf16>, vector<128x384xf32> -> vector<128x384xf32>
    %238 = vector.broadcast %16 : vector<1x384xf32> to vector<128x384xf32>
    %239 = arith.addf %237, %238 : vector<128x384xf32>
    %240 = arith.truncf %223 : vector<128x128xf32> to vector<128x128xbf16>
    %cst_94 = arith.constant dense<0.000000e+00> : vector<128x384xf32>
    %241 = tpu.matmul %240, %15, %cst_94 {dimension_numbers = #tpu.dot_dimension_numbers<[1], [0], [0], [1], [0, 0, 1, 1], [], []>} : vector<128x128xbf16>, vector<128x384xbf16>, vector<128x384xf32> -> vector<128x384xf32>
    %242 = vector.broadcast %17 : vector<1x384xf32> to vector<128x384xf32>
    %243 = arith.addf %241, %242 : vector<128x384xf32>
    %244 = vector.extract_strided_slice %239 {offsets = [0, 0], sizes = [128, 128], strides = [1, 1]} : vector<128x384xf32> to vector<128x128xf32>
    %245 = vector.extract_strided_slice %243 {offsets = [0, 0], sizes = [128, 128], strides = [1, 1]} : vector<128x384xf32> to vector<128x128xf32>
    %246 = arith.addf %244, %245 : vector<128x128xf32>
    %247 = arith.negf %246 : vector<128x128xf32>
    %248 = math.exp %247 : vector<128x128xf32>
    %cst_95 = arith.constant 1.000000e+00 : f32
    %249 = vector.broadcast %cst_95 : f32 to vector<128x128xf32>
    %250 = arith.addf %249, %248 : vector<128x128xf32>
    %251 = arith.divf %249, %250 : vector<128x128xf32>
    %252 = vector.extract_strided_slice %239 {offsets = [0, 128], sizes = [128, 128], strides = [1, 1]} : vector<128x384xf32> to vector<128x128xf32>
    %253 = vector.extract_strided_slice %243 {offsets = [0, 128], sizes = [128, 128], strides = [1, 1]} : vector<128x384xf32> to vector<128x128xf32>
    %254 = arith.addf %252, %253 : vector<128x128xf32>
    %255 = arith.negf %254 : vector<128x128xf32>
    %256 = math.exp %255 : vector<128x128xf32>
    %cst_96 = arith.constant 1.000000e+00 : f32
    %257 = vector.broadcast %cst_96 : f32 to vector<128x128xf32>
    %258 = arith.addf %257, %256 : vector<128x128xf32>
    %259 = arith.divf %257, %258 : vector<128x128xf32>
    %260 = vector.extract_strided_slice %239 {offsets = [0, 256], sizes = [128, 128], strides = [1, 1]} : vector<128x384xf32> to vector<128x128xf32>
    %261 = vector.extract_strided_slice %243 {offsets = [0, 256], sizes = [128, 128], strides = [1, 1]} : vector<128x384xf32> to vector<128x128xf32>
    %262 = arith.mulf %251, %261 : vector<128x128xf32>
    %263 = arith.addf %260, %262 : vector<128x128xf32>
    %264 = math.tanh %263 : vector<128x128xf32>
    %cst_97 = arith.constant 1.000000e+00 : f32
    %265 = vector.broadcast %cst_97 : f32 to vector<128x128xf32>
    %266 = arith.subf %265, %259 : vector<128x128xf32>
    %267 = arith.mulf %266, %264 : vector<128x128xf32>
    %268 = arith.mulf %259, %223 : vector<128x128xf32>
    %269 = arith.addf %267, %268 : vector<128x128xf32>
    %270 = arith.truncf %269 : vector<128x128xf32> to vector<128x128xbf16>
    %cst_98 = arith.constant dense<0.000000e+00> : vector<128x128xf32>
    %271 = tpu.matmul %270, %10, %cst_98 {dimension_numbers = #tpu.dot_dimension_numbers<[1], [0], [0], [1], [0, 0, 1, 1], [], []>} : vector<128x128xbf16>, vector<128x128xbf16>, vector<128x128xf32> -> vector<128x128xf32>
    %272 = vector.broadcast %11 : vector<1x128xf32> to vector<128x128xf32>
    %273 = arith.addf %271, %272 : vector<128x128xf32>
    %cst_99 = arith.constant 0.000000e+00 : f32
    %274 = vector.broadcast %cst_99 : f32 to vector<128x128xf32>
    %275 = arith.maximumf %273, %274 : vector<128x128xf32>
    %276 = arith.truncf %275 : vector<128x128xf32> to vector<128x128xbf16>
    %cst_100 = arith.constant dense<0.000000e+00> : vector<128x128xf32>
    %277 = tpu.matmul %276, %12, %cst_100 {dimension_numbers = #tpu.dot_dimension_numbers<[1], [0], [0], [1], [0, 0, 1, 1], [], []>} : vector<128x128xbf16>, vector<128x128xbf16>, vector<128x128xf32> -> vector<128x128xf32>
    %278 = vector.broadcast %13 : vector<1x128xf32> to vector<128x128xf32>
    %279 = arith.addf %277, %278 : vector<128x128xf32>
    %280 = tpu.transpose %279, [1, 0] : vector<128x128xf32> -> vector<128x128xf32>
    %281 = arith.truncf %280 : vector<128x128xf32> to vector<128x128xbf16>
    %cst_101 = arith.constant dense<0.000000e+00> : vector<128x128xf32>
    %282 = tpu.matmul %281, %1, %cst_101 {dimension_numbers = #tpu.dot_dimension_numbers<[1], [0], [0], [1], [0, 0, 1, 1], [], []>} : vector<128x128xbf16>, vector<128x128xbf16>, vector<128x128xf32> -> vector<128x128xf32>
    %283 = tpu.transpose %282, [1, 0] : vector<128x128xf32> -> vector<128x128xf32>
    %284 = arith.truncf %283 : vector<128x128xf32> to vector<128x128xbf16>
    %cst_102 = arith.constant dense<0.000000e+00> : vector<128x384xf32>
    %285 = tpu.matmul %284, %18, %cst_102 {dimension_numbers = #tpu.dot_dimension_numbers<[1], [0], [0], [1], [0, 0, 1, 1], [], []>} : vector<128x128xbf16>, vector<128x384xbf16>, vector<128x384xf32> -> vector<128x384xf32>
    %286 = vector.broadcast %20 : vector<1x384xf32> to vector<128x384xf32>
    %287 = arith.addf %285, %286 : vector<128x384xf32>
    %288 = arith.truncf %269 : vector<128x128xf32> to vector<128x128xbf16>
    %cst_103 = arith.constant dense<0.000000e+00> : vector<128x384xf32>
    %289 = tpu.matmul %288, %19, %cst_103 {dimension_numbers = #tpu.dot_dimension_numbers<[1], [0], [0], [1], [0, 0, 1, 1], [], []>} : vector<128x128xbf16>, vector<128x384xbf16>, vector<128x384xf32> -> vector<128x384xf32>
    %290 = vector.broadcast %21 : vector<1x384xf32> to vector<128x384xf32>
    %291 = arith.addf %289, %290 : vector<128x384xf32>
    %292 = vector.extract_strided_slice %287 {offsets = [0, 0], sizes = [128, 128], strides = [1, 1]} : vector<128x384xf32> to vector<128x128xf32>
    %293 = vector.extract_strided_slice %291 {offsets = [0, 0], sizes = [128, 128], strides = [1, 1]} : vector<128x384xf32> to vector<128x128xf32>
    %294 = arith.addf %292, %293 : vector<128x128xf32>
    %295 = arith.negf %294 : vector<128x128xf32>
    %296 = math.exp %295 : vector<128x128xf32>
    %cst_104 = arith.constant 1.000000e+00 : f32
    %297 = vector.broadcast %cst_104 : f32 to vector<128x128xf32>
    %298 = arith.addf %297, %296 : vector<128x128xf32>
    %299 = arith.divf %297, %298 : vector<128x128xf32>
    %300 = vector.extract_strided_slice %287 {offsets = [0, 128], sizes = [128, 128], strides = [1, 1]} : vector<128x384xf32> to vector<128x128xf32>
    %301 = vector.extract_strided_slice %291 {offsets = [0, 128], sizes = [128, 128], strides = [1, 1]} : vector<128x384xf32> to vector<128x128xf32>
    %302 = arith.addf %300, %301 : vector<128x128xf32>
    %303 = arith.negf %302 : vector<128x128xf32>
    %304 = math.exp %303 : vector<128x128xf32>
    %cst_105 = arith.constant 1.000000e+00 : f32
    %305 = vector.broadcast %cst_105 : f32 to vector<128x128xf32>
    %306 = arith.addf %305, %304 : vector<128x128xf32>
    %307 = arith.divf %305, %306 : vector<128x128xf32>
    %308 = vector.extract_strided_slice %287 {offsets = [0, 256], sizes = [128, 128], strides = [1, 1]} : vector<128x384xf32> to vector<128x128xf32>
    %309 = vector.extract_strided_slice %291 {offsets = [0, 256], sizes = [128, 128], strides = [1, 1]} : vector<128x384xf32> to vector<128x128xf32>
    %310 = arith.mulf %299, %309 : vector<128x128xf32>
    %311 = arith.addf %308, %310 : vector<128x128xf32>
    %312 = math.tanh %311 : vector<128x128xf32>
    %cst_106 = arith.constant 1.000000e+00 : f32
    %313 = vector.broadcast %cst_106 : f32 to vector<128x128xf32>
    %314 = arith.subf %313, %307 : vector<128x128xf32>
    %315 = arith.mulf %314, %312 : vector<128x128xf32>
    %316 = arith.mulf %307, %269 : vector<128x128xf32>
    %317 = arith.addf %315, %316 : vector<128x128xf32>
    %318 = arith.truncf %317 : vector<128x128xf32> to vector<128x128xbf16>
    %cst_107 = arith.constant dense<0.000000e+00> : vector<128x128xf32>
    %319 = tpu.matmul %318, %6, %cst_107 {dimension_numbers = #tpu.dot_dimension_numbers<[1], [0], [0], [1], [0, 0, 1, 1], [], []>} : vector<128x128xbf16>, vector<128x128xbf16>, vector<128x128xf32> -> vector<128x128xf32>
    %320 = vector.broadcast %7 : vector<1x128xf32> to vector<128x128xf32>
    %321 = arith.addf %319, %320 : vector<128x128xf32>
    %cst_108 = arith.constant 0.000000e+00 : f32
    %322 = vector.broadcast %cst_108 : f32 to vector<128x128xf32>
    %323 = arith.maximumf %321, %322 : vector<128x128xf32>
    %324 = arith.truncf %323 : vector<128x128xf32> to vector<128x128xbf16>
    %cst_109 = arith.constant dense<0.000000e+00> : vector<128x128xf32>
    %325 = tpu.matmul %324, %8, %cst_109 {dimension_numbers = #tpu.dot_dimension_numbers<[1], [0], [0], [1], [0, 0, 1, 1], [], []>} : vector<128x128xbf16>, vector<128x128xbf16>, vector<128x128xf32> -> vector<128x128xf32>
    %326 = vector.broadcast %9 : vector<1x128xf32> to vector<128x128xf32>
    %327 = arith.addf %325, %326 : vector<128x128xf32>
    %328 = arith.truncf %327 : vector<128x128xf32> to vector<128x128xbf16>
    %cst_110 = arith.constant dense<0.000000e+00> : vector<128x128xf32>
    %329 = tpu.matmul %1, %328, %cst_110 {dimension_numbers = #tpu.dot_dimension_numbers<[1], [0], [0], [1], [0, 0, 1, 1], [], []>} : vector<128x128xbf16>, vector<128x128xbf16>, vector<128x128xf32> -> vector<128x128xf32>
    %330 = arith.truncf %329 : vector<128x128xf32> to vector<128x128xbf16>
    %cst_111 = arith.constant dense<0.000000e+00> : vector<128x384xf32>
    %331 = tpu.matmul %330, %14, %cst_111 {dimension_numbers = #tpu.dot_dimension_numbers<[1], [0], [0], [1], [0, 0, 1, 1], [], []>} : vector<128x128xbf16>, vector<128x384xbf16>, vector<128x384xf32> -> vector<128x384xf32>
    %332 = vector.broadcast %16 : vector<1x384xf32> to vector<128x384xf32>
    %333 = arith.addf %331, %332 : vector<128x384xf32>
    %334 = arith.truncf %317 : vector<128x128xf32> to vector<128x128xbf16>
    %cst_112 = arith.constant dense<0.000000e+00> : vector<128x384xf32>
    %335 = tpu.matmul %334, %15, %cst_112 {dimension_numbers = #tpu.dot_dimension_numbers<[1], [0], [0], [1], [0, 0, 1, 1], [], []>} : vector<128x128xbf16>, vector<128x384xbf16>, vector<128x384xf32> -> vector<128x384xf32>
    %336 = vector.broadcast %17 : vector<1x384xf32> to vector<128x384xf32>
    %337 = arith.addf %335, %336 : vector<128x384xf32>
    %338 = vector.extract_strided_slice %333 {offsets = [0, 0], sizes = [128, 128], strides = [1, 1]} : vector<128x384xf32> to vector<128x128xf32>
    %339 = vector.extract_strided_slice %337 {offsets = [0, 0], sizes = [128, 128], strides = [1, 1]} : vector<128x384xf32> to vector<128x128xf32>
    %340 = arith.addf %338, %339 : vector<128x128xf32>
    %341 = arith.negf %340 : vector<128x128xf32>
    %342 = math.exp %341 : vector<128x128xf32>
    %cst_113 = arith.constant 1.000000e+00 : f32
    %343 = vector.broadcast %cst_113 : f32 to vector<128x128xf32>
    %344 = arith.addf %343, %342 : vector<128x128xf32>
    %345 = arith.divf %343, %344 : vector<128x128xf32>
    %346 = vector.extract_strided_slice %333 {offsets = [0, 128], sizes = [128, 128], strides = [1, 1]} : vector<128x384xf32> to vector<128x128xf32>
    %347 = vector.extract_strided_slice %337 {offsets = [0, 128], sizes = [128, 128], strides = [1, 1]} : vector<128x384xf32> to vector<128x128xf32>
    %348 = arith.addf %346, %347 : vector<128x128xf32>
    %349 = arith.negf %348 : vector<128x128xf32>
    %350 = math.exp %349 : vector<128x128xf32>
    %cst_114 = arith.constant 1.000000e+00 : f32
    %351 = vector.broadcast %cst_114 : f32 to vector<128x128xf32>
    %352 = arith.addf %351, %350 : vector<128x128xf32>
    %353 = arith.divf %351, %352 : vector<128x128xf32>
    %354 = vector.extract_strided_slice %333 {offsets = [0, 256], sizes = [128, 128], strides = [1, 1]} : vector<128x384xf32> to vector<128x128xf32>
    %355 = vector.extract_strided_slice %337 {offsets = [0, 256], sizes = [128, 128], strides = [1, 1]} : vector<128x384xf32> to vector<128x128xf32>
    %356 = arith.mulf %345, %355 : vector<128x128xf32>
    %357 = arith.addf %354, %356 : vector<128x128xf32>
    %358 = math.tanh %357 : vector<128x128xf32>
    %cst_115 = arith.constant 1.000000e+00 : f32
    %359 = vector.broadcast %cst_115 : f32 to vector<128x128xf32>
    %360 = arith.subf %359, %353 : vector<128x128xf32>
    %361 = arith.mulf %360, %358 : vector<128x128xf32>
    %362 = arith.mulf %353, %317 : vector<128x128xf32>
    %363 = arith.addf %361, %362 : vector<128x128xf32>
    %364 = arith.truncf %363 : vector<128x128xf32> to vector<128x128xbf16>
    %cst_116 = arith.constant dense<0.000000e+00> : vector<128x128xf32>
    %365 = tpu.matmul %364, %10, %cst_116 {dimension_numbers = #tpu.dot_dimension_numbers<[1], [0], [0], [1], [0, 0, 1, 1], [], []>} : vector<128x128xbf16>, vector<128x128xbf16>, vector<128x128xf32> -> vector<128x128xf32>
    %366 = vector.broadcast %11 : vector<1x128xf32> to vector<128x128xf32>
    %367 = arith.addf %365, %366 : vector<128x128xf32>
    %cst_117 = arith.constant 0.000000e+00 : f32
    %368 = vector.broadcast %cst_117 : f32 to vector<128x128xf32>
    %369 = arith.maximumf %367, %368 : vector<128x128xf32>
    %370 = arith.truncf %369 : vector<128x128xf32> to vector<128x128xbf16>
    %cst_118 = arith.constant dense<0.000000e+00> : vector<128x128xf32>
    %371 = tpu.matmul %370, %12, %cst_118 {dimension_numbers = #tpu.dot_dimension_numbers<[1], [0], [0], [1], [0, 0, 1, 1], [], []>} : vector<128x128xbf16>, vector<128x128xbf16>, vector<128x128xf32> -> vector<128x128xf32>
    %372 = vector.broadcast %13 : vector<1x128xf32> to vector<128x128xf32>
    %373 = arith.addf %371, %372 : vector<128x128xf32>
    %374 = tpu.transpose %373, [1, 0] : vector<128x128xf32> -> vector<128x128xf32>
    %375 = arith.truncf %374 : vector<128x128xf32> to vector<128x128xbf16>
    %cst_119 = arith.constant dense<0.000000e+00> : vector<128x128xf32>
    %376 = tpu.matmul %375, %1, %cst_119 {dimension_numbers = #tpu.dot_dimension_numbers<[1], [0], [0], [1], [0, 0, 1, 1], [], []>} : vector<128x128xbf16>, vector<128x128xbf16>, vector<128x128xf32> -> vector<128x128xf32>
    %377 = tpu.transpose %376, [1, 0] : vector<128x128xf32> -> vector<128x128xf32>
    %378 = arith.truncf %377 : vector<128x128xf32> to vector<128x128xbf16>
    %cst_120 = arith.constant dense<0.000000e+00> : vector<128x384xf32>
    %379 = tpu.matmul %378, %18, %cst_120 {dimension_numbers = #tpu.dot_dimension_numbers<[1], [0], [0], [1], [0, 0, 1, 1], [], []>} : vector<128x128xbf16>, vector<128x384xbf16>, vector<128x384xf32> -> vector<128x384xf32>
    %380 = vector.broadcast %20 : vector<1x384xf32> to vector<128x384xf32>
    %381 = arith.addf %379, %380 : vector<128x384xf32>
    %382 = arith.truncf %363 : vector<128x128xf32> to vector<128x128xbf16>
    %cst_121 = arith.constant dense<0.000000e+00> : vector<128x384xf32>
    %383 = tpu.matmul %382, %19, %cst_121 {dimension_numbers = #tpu.dot_dimension_numbers<[1], [0], [0], [1], [0, 0, 1, 1], [], []>} : vector<128x128xbf16>, vector<128x384xbf16>, vector<128x384xf32> -> vector<128x384xf32>
    %384 = vector.broadcast %21 : vector<1x384xf32> to vector<128x384xf32>
    %385 = arith.addf %383, %384 : vector<128x384xf32>
    %386 = vector.extract_strided_slice %381 {offsets = [0, 0], sizes = [128, 128], strides = [1, 1]} : vector<128x384xf32> to vector<128x128xf32>
    %387 = vector.extract_strided_slice %385 {offsets = [0, 0], sizes = [128, 128], strides = [1, 1]} : vector<128x384xf32> to vector<128x128xf32>
    %388 = arith.addf %386, %387 : vector<128x128xf32>
    %389 = arith.negf %388 : vector<128x128xf32>
    %390 = math.exp %389 : vector<128x128xf32>
    %cst_122 = arith.constant 1.000000e+00 : f32
    %391 = vector.broadcast %cst_122 : f32 to vector<128x128xf32>
    %392 = arith.addf %391, %390 : vector<128x128xf32>
    %393 = arith.divf %391, %392 : vector<128x128xf32>
    %394 = vector.extract_strided_slice %381 {offsets = [0, 128], sizes = [128, 128], strides = [1, 1]} : vector<128x384xf32> to vector<128x128xf32>
    %395 = vector.extract_strided_slice %385 {offsets = [0, 128], sizes = [128, 128], strides = [1, 1]} : vector<128x384xf32> to vector<128x128xf32>
    %396 = arith.addf %394, %395 : vector<128x128xf32>
    %397 = arith.negf %396 : vector<128x128xf32>
    %398 = math.exp %397 : vector<128x128xf32>
    %cst_123 = arith.constant 1.000000e+00 : f32
    %399 = vector.broadcast %cst_123 : f32 to vector<128x128xf32>
    %400 = arith.addf %399, %398 : vector<128x128xf32>
    %401 = arith.divf %399, %400 : vector<128x128xf32>
    %402 = vector.extract_strided_slice %381 {offsets = [0, 256], sizes = [128, 128], strides = [1, 1]} : vector<128x384xf32> to vector<128x128xf32>
    %403 = vector.extract_strided_slice %385 {offsets = [0, 256], sizes = [128, 128], strides = [1, 1]} : vector<128x384xf32> to vector<128x128xf32>
    %404 = arith.mulf %393, %403 : vector<128x128xf32>
    %405 = arith.addf %402, %404 : vector<128x128xf32>
    %406 = math.tanh %405 : vector<128x128xf32>
    %cst_124 = arith.constant 1.000000e+00 : f32
    %407 = vector.broadcast %cst_124 : f32 to vector<128x128xf32>
    %408 = arith.subf %407, %401 : vector<128x128xf32>
    %409 = arith.mulf %408, %406 : vector<128x128xf32>
    %410 = arith.mulf %401, %363 : vector<128x128xf32>
    %411 = arith.addf %409, %410 : vector<128x128xf32>
    %412 = arith.truncf %411 : vector<128x128xf32> to vector<128x128xbf16>
    %cst_125 = arith.constant dense<0.000000e+00> : vector<128x128xf32>
    %413 = tpu.matmul %412, %22, %cst_125 {dimension_numbers = #tpu.dot_dimension_numbers<[1], [0], [0], [1], [0, 0, 1, 1], [], []>} : vector<128x128xbf16>, vector<128x128xbf16>, vector<128x128xf32> -> vector<128x128xf32>
    %414 = vector.broadcast %23 : vector<1x128xf32> to vector<128x128xf32>
    %415 = arith.addf %413, %414 : vector<128x128xf32>
    %cst_126 = arith.constant 0.000000e+00 : f32
    %416 = vector.broadcast %cst_126 : f32 to vector<128x128xf32>
    %417 = arith.maximumf %415, %416 : vector<128x128xf32>
    %418 = arith.truncf %417 : vector<128x128xf32> to vector<128x128xbf16>
    %cst_127 = arith.constant dense<0.000000e+00> : vector<128x128xf32>
    %419 = tpu.matmul %418, %24, %cst_127 {dimension_numbers = #tpu.dot_dimension_numbers<[1], [0], [0], [1], [0, 0, 1, 1], [], []>} : vector<128x128xbf16>, vector<128x128xbf16>, vector<128x128xf32> -> vector<128x128xf32>
    %420 = vector.broadcast %25 : vector<1x128xf32> to vector<128x128xf32>
    %421 = arith.addf %419, %420 : vector<128x128xf32>
    %c0_128 = arith.constant 0 : index
    %c0_129 = arith.constant 0 : index
    %422 = vector.load %arg26[%c0_128, %c0_129] : memref<128x128xf32, #tpu.memory_space<vmem>>, vector<128x128xf32>
    tpu.vector_store %arg26[%c0_128, %c0_129], %421 {strides = array<i32>} : memref<128x128xf32, #tpu.memory_space<vmem>>, vector<128x128xf32>,
    return
  }
}

</mosaic_0001>

<llo_original>
// kernel: tpu_custom_call.1
$region0: #{tpu_custom_call.1}
  #allocation0 [shape = 'u32[]', space=smem, size = 0x4, offset = 0x4, fixed_abs, tag = 'smem constant byte address 0x4 - core index']
  #allocation1 [shape = 'u32[144,128]{1,0:T(1,128)}', space=vmem, size = 0x12000, scoped, tag = 'internal scratch']
  %s0 = inlined_call_operand.hbm [shape: f32[128,128], index: 0, kind: input, shape index: {}]
  %s1 = inlined_call_operand.hbm [shape: bf16[128,128], index: 1, kind: input, shape index: {}]
  %s2 = inlined_call_operand.hbm [shape: bf16[128,128], index: 2, kind: input, shape index: {}]
  %s3 = inlined_call_operand.vmem [shape: f32[1,128], index: 3, kind: input, shape index: {}]
  %s4 = inlined_call_operand.hbm [shape: bf16[128,128], index: 4, kind: input, shape index: {}]
  %s5 = inlined_call_operand.vmem [shape: f32[1,128], index: 5, kind: input, shape index: {}]
  %s6 = inlined_call_operand.hbm [shape: bf16[128,128], index: 6, kind: input, shape index: {}]
  %s7 = inlined_call_operand.vmem [shape: f32[1,128], index: 7, kind: input, shape index: {}]
  %s8 = inlined_call_operand.hbm [shape: bf16[128,128], index: 8, kind: input, shape index: {}]
  %s9 = inlined_call_operand.vmem [shape: f32[1,128], index: 9, kind: input, shape index: {}]
  %s10 = inlined_call_operand.hbm [shape: bf16[128,128], index: 10, kind: input, shape index: {}]
  %s11 = inlined_call_operand.vmem [shape: f32[1,128], index: 11, kind: input, shape index: {}]
  %s12 = inlined_call_operand.hbm [shape: bf16[128,128], index: 12, kind: input, shape index: {}]
  %s13 = inlined_call_operand.vmem [shape: f32[1,128], index: 13, kind: input, shape index: {}]
  %s14 = inlined_call_operand.hbm [shape: bf16[128,384], index: 14, kind: input, shape index: {}]
  %s15 = inlined_call_operand.hbm [shape: bf16[128,384], index: 15, kind: input, shape index: {}]
  %s16 = inlined_call_operand.vmem [shape: f32[1,384], index: 16, kind: input, shape index: {}]
  %s17 = inlined_call_operand.vmem [shape: f32[1,384], index: 17, kind: input, shape index: {}]
  %s18 = inlined_call_operand.hbm [shape: bf16[128,384], index: 18, kind: input, shape index: {}]
  %s19 = inlined_call_operand.hbm [shape: bf16[128,384], index: 19, kind: input, shape index: {}]
  %s20 = inlined_call_operand.vmem [shape: f32[1,384], index: 20, kind: input, shape index: {}]
  %s21 = inlined_call_operand.vmem [shape: f32[1,384], index: 21, kind: input, shape index: {}]
  %s22 = inlined_call_operand.vmem [shape: bf16[128,128], index: 22, kind: input, shape index: {}]
  %s23 = inlined_call_operand.vmem [shape: f32[1,128], index: 23, kind: input, shape index: {}]
  %s24 = inlined_call_operand.hbm [shape: bf16[128,128], index: 24, kind: input, shape index: {}]
  %s25 = inlined_call_operand.vmem [shape: f32[1,128], index: 25, kind: input, shape index: {}]
  %s26 = inlined_call_operand.hbm [shape: f32[128,128], index: 26, kind: output, shape index: {}]
  %s27 = sld [smem:[#allocation0]]
  $region166: #{tpu_custom_call.1} parent=0
    _
  %s29 = ssub.s32 1, %s27
  %s30 = scalar_select 0, %s29, %s27
  $region1: #{tpu_custom_call.1} parent=0
    #allocation2 [shape = 'u8[65536]{0}', space=vmem, size = 0x10000, scoped, tag = 'input window, operand 0, single buffered']
    #allocation3 [shape = 's32[1]{0}', space=sflag, size = 0x4, scoped, tag = 'scoped memory for tpu_custom_call.1']
    #allocation4 [shape = 's32[1]{0}', space=sflag, size = 0x4, scoped, tag = 'scoped memory for tpu_custom_call.1']
    #allocation5 [shape = 'u8[32768]{0}', space=vmem, size = 0x8000, scoped, tag = 'input window, operand 1, single buffered']
    #allocation6 [shape = 's32[1]{0}', space=sflag, size = 0x4, scoped, tag = 'scoped memory for tpu_custom_call.1']
    #allocation7 [shape = 'u8[32768]{0}', space=vmem, size = 0x8000, scoped, tag = 'input window, operand 2, single buffered']
    #allocation8 [shape = 'u8[32768]{0}', space=vmem, size = 0x8000, scoped, tag = 'input window, operand 4, single buffered']
    #allocation9 [shape = 's32[1]{0}', space=sflag, size = 0x4, scoped, tag = 'scoped memory for tpu_custom_call.1']
    #allocation10 [shape = 'u8[32768]{0}', space=vmem, size = 0x8000, scoped, tag = 'input window, operand 6, single buffered']
    #allocation11 [shape = 'u8[32768]{0}', space=vmem, size = 0x8000, scoped, tag = 'input window, operand 8, single buffered']
    #allocation12 [shape = 's32[1]{0}', space=sflag, size = 0x4, scoped, tag = 'scoped memory for tpu_custom_call.1']
    #allocation13 [shape = 'u8[32768]{0}', space=vmem, size = 0x8000, scoped, tag = 'input window, operand 10, single buffered']
    #allocation14 [shape = 'u8[32768]{0}', space=vmem, size = 0x8000, scoped, tag = 'input window, operand 12, single buffered']
    #allocation15 [shape = 's32[1]{0}', space=sflag, size = 0x4, scoped, tag = 'scoped memory for tpu_custom_call.1']
    #allocation16 [shape = 'u8[98304]{0}', space=vmem, size = 0x18000, scoped, tag = 'input window, operand 14, single buffered']
    #allocation17 [shape = 'u8[98304]{0}', space=vmem, size = 0x18000, scoped, tag = 'input window, operand 15, single buffered']
    #allocation18 [shape = 's32[1]{0}', space=sflag, size = 0x4, scoped, tag = 'scoped memory for tpu_custom_call.1']
    #allocation19 [shape = 'u8[98304]{0}', space=vmem, size = 0x18000, scoped, tag = 'input window, operand 18, single buffered']
    #allocation20 [shape = 'u8[98304]{0}', space=vmem, size = 0x18000, scoped, tag = 'input window, operand 19, single buffered']
    #allocation21 [shape = 's32[1]{0}', space=sflag, size = 0x4, scoped, tag = 'scoped memory for tpu_custom_call.1']
    #allocation22 [shape = 'u8[32768]{0}', space=vmem, size = 0x8000, scoped, tag = 'input window, operand 24, single buffered']
    #allocation23 [shape = 'u8[65536]{0}', space=vmem, size = 0x10000, scoped, tag = 'output window, operand 0, single buffered']
    %31 = vsyncpa [#allocation3], 0
    %32 = vsyncpa [#allocation6], 0
    %33 = vsyncpa [#allocation9], 0
    %34 = vsyncpa [#allocation12], 0
    %35 = vsyncpa [#allocation15], 0
    %36 = vsyncpa [#allocation18], 0
    %37 = vsyncpa [#allocation21], 0
    %38 = vsyncpa [#allocation4], 0
    // Predicated region
    $region2: #{tpu_custom_call.1} parent=1 // pred_check
      _
    $region3: #{tpu_custom_call.1} parent=1 // pred_check_branch
      %40 = sbr.rel (0) target = $region5
    $region4: #{tpu_custom_call.1} parent=1 // pred_region
      %s42 = ssub.s32 2048, 2048
      %43 = vsyncadd [#allocation3], %s42
      %s44 = sshll.u32 [#allocation2], 4
      %s45 = int_to_ptr.vmem [resolvable:$true] %s44
      %50 = dma.hbm_to_vmem [thread:$0]  %s0, 2048, %s45, [#allocation3], 128, 128, 8
    $region5: #{tpu_custom_call.1} parent=1 // pred_fallthru
      _
    // Predicated region
    $region6: #{tpu_custom_call.1} parent=1 // pred_check
      _
    $region7: #{tpu_custom_call.1} parent=1 // pred_check_branch
      %52 = sbr.rel (0) target = $region9
    $region8: #{tpu_custom_call.1} parent=1 // pred_region
      %s54 = ssub.s32 1024, 1024
      %55 = vsyncadd [#allocation6], %s54
      %s56 = sshll.u32 [#allocation5], 4
      %s57 = int_to_ptr.vmem [resolvable:$true] %s56
      %62 = dma.hbm_to_vmem [thread:$0]  %s1, 1024, %s57, [#allocation6], 64, 64, 4
    $region9: #{tpu_custom_call.1} parent=1 // pred_fallthru
      _
    // Predicated region
    $region10: #{tpu_custom_call.1} parent=1 // pred_check
      _
    $region11: #{tpu_custom_call.1} parent=1 // pred_check_branch
      %64 = sbr.rel (0) target = $region13
    $region12: #{tpu_custom_call.1} parent=1 // pred_region
      %s66 = ssub.s32 1024, 1024
      %67 = vsyncadd [#allocation6], %s66
      %s68 = sshll.u32 [#allocation7], 4
      %s69 = int_to_ptr.vmem [resolvable:$true] %s68
      %74 = dma.hbm_to_vmem [thread:$0]  %s2, 1024, %s69, [#allocation6], 64, 64, 4
    $region13: #{tpu_custom_call.1} parent=1 // pred_fallthru
      _
    // Predicated region
    $region14: #{tpu_custom_call.1} parent=1 // pred_check
      _
    $region15: #{tpu_custom_call.1} parent=1 // pred_check_branch
      %76 = sbr.rel (0) target = $region17
    $region16: #{tpu_custom_call.1} parent=1 // pred_region
      _
    $region17: #{tpu_custom_call.1} parent=1 // pred_fallthru
      _
    // Predicated region
    $region18: #{tpu_custom_call.1} parent=1 // pred_check
      _
    $region19: #{tpu_custom_call.1} parent=1 // pred_check_branch
      %78 = sbr.rel (0) target = $region21
    $region20: #{tpu_custom_call.1} parent=1 // pred_region
      %s80 = ssub.s32 1024, 1024
      %81 = vsyncadd [#allocation9], %s80
      %s82 = sshll.u32 [#allocation8], 4
      %s83 = int_to_ptr.vmem [resolvable:$true] %s82
      %88 = dma.hbm_to_vmem [thread:$0]  %s4, 1024, %s83, [#allocation9], 64, 64, 4
    $region21: #{tpu_custom_call.1} parent=1 // pred_fallthru
      _
    // Predicated region
    $region22: #{tpu_custom_call.1} parent=1 // pred_check
      _
    $region23: #{tpu_custom_call.1} parent=1 // pred_check_branch
      %90 = sbr.rel (0) target = $region25
    $region24: #{tpu_custom_call.1} parent=1 // pred_region
      _
    $region25: #{tpu_custom_call.1} parent=1 // pred_fallthru
      _
    // Predicated region
    $region26: #{tpu_custom_call.1} parent=1 // pred_check
      _
    $region27: #{tpu_custom_call.1} parent=1 // pred_check_branch
      %92 = sbr.rel (0) target = $region29
    $region28: #{tpu_custom_call.1} parent=1 // pred_region
      %s94 = ssub.s32 1024, 1024
      %95 = vsyncadd [#allocation9], %s94
      %s96 = sshll.u32 [#allocation10], 4
      %s97 = int_to_ptr.vmem [resolvable:$true] %s96
      %102 = dma.hbm_to_vmem [thread:$0]  %s6, 1024, %s97, [#allocation9], 64, 64, 4
    $region29: #{tpu_custom_call.1} parent=1 // pred_fallthru
      _
    // Predicated region
    $region30: #{tpu_custom_call.1} parent=1 // pred_check
      _
    $region31: #{tpu_custom_call.1} parent=1 // pred_check_branch
      %104 = sbr.rel (0) target = $region33
    $region32: #{tpu_custom_call.1} parent=1 // pred_region
      _
    $region33: #{tpu_custom_call.1} parent=1 // pred_fallthru
      _
    // Predicated region
    $region34: #{tpu_custom_call.1} parent=1 // pred_check
      _
    $region35: #{tpu_custom_call.1} parent=1 // pred_check_branch
      %106 = sbr.rel (0) target = $region37
    $region36: #{tpu_custom_call.1} parent=1 // pred_region
      %s108 = ssub.s32 1024, 1024
      %109 = vsyncadd [#allocation12], %s108
      %s110 = sshll.u32 [#allocation11], 4
      %s111 = int_to_ptr.vmem [resolvable:$true] %s110
      %116 = dma.hbm_to_vmem [thread:$0]  %s8, 1024, %s111, [#allocation12], 64, 64, 4
    $region37: #{tpu_custom_call.1} parent=1 // pred_fallthru
      _
    // Predicated region
    $region38: #{tpu_custom_call.1} parent=1 // pred_check
      _
    $region39: #{tpu_custom_call.1} parent=1 // pred_check_branch
      %118 = sbr.rel (0) target = $region41
    $region40: #{tpu_custom_call.1} parent=1 // pred_region
      _
    $region41: #{tpu_custom_call.1} parent=1 // pred_fallthru
      _
    // Predicated region
    $region42: #{tpu_custom_call.1} parent=1 // pred_check
      _
    $region43: #{tpu_custom_call.1} parent=1 // pred_check_branch
      %120 = sbr.rel (0) target = $region45
    $region44: #{tpu_custom_call.1} parent=1 // pred_region
      %s122 = ssub.s32 1024, 1024
      %123 = vsyncadd [#allocation12], %s122
      %s124 = sshll.u32 [#allocation13], 4
      %s125 = int_to_ptr.vmem [resolvable:$true] %s124
      %130 = dma.hbm_to_vmem [thread:$0]  %s10, 1024, %s125, [#allocation12], 64, 64, 4
    $region45: #{tpu_custom_call.1} parent=1 // pred_fallthru
      _
    // Predicated region
    $region46: #{tpu_custom_call.1} parent=1 // pred_check
      _
    $region47: #{tpu_custom_call.1} parent=1 // pred_check_branch
      %132 = sbr.rel (0) target = $region49
    $region48: #{tpu_custom_call.1} parent=1 // pred_region
      _
    $region49: #{tpu_custom_call.1} parent=1 // pred_fallthru
      _
    // Predicated region
    $region50: #{tpu_custom_call.1} parent=1 // pred_check
      _
    $region51: #{tpu_custom_call.1} parent=1 // pred_check_branch
      %134 = sbr.rel (0) target = $region53
    $region52: #{tpu_custom_call.1} parent=1 // pred_region
      %s136 = ssub.s32 1024, 1024
      %137 = vsyncadd [#allocation15], %s136
      %s138 = sshll.u32 [#allocation14], 4
      %s139 = int_to_ptr.vmem [resolvable:$true] %s138
      %144 = dma.hbm_to_vmem [thread:$0]  %s12, 1024, %s139, [#allocation15], 64, 64, 4
    $region53: #{tpu_custom_call.1} parent=1 // pred_fallthru
      _
    // Predicated region
    $region54: #{tpu_custom_call.1} parent=1 // pred_check
      _
    $region55: #{tpu_custom_call.1} parent=1 // pred_check_branch
      %146 = sbr.rel (0) target = $region57
    $region56: #{tpu_custom_call.1} parent=1 // pred_region
      _
    $region57: #{tpu_custom_call.1} parent=1 // pred_fallthru
      _
    // Predicated region
    $region58: #{tpu_custom_call.1} parent=1 // pred_check
      _
    $region59: #{tpu_custom_call.1} parent=1 // pred_check_branch
      %148 = sbr.rel (0) target = $region61
    $region60: #{tpu_custom_call.1} parent=1 // pred_region
      %s150 = ssub.s32 3072, 3072
      %151 = vsyncadd [#allocation15], %s150
      %s152 = sshll.u32 [#allocation16], 4
      %s153 = int_to_ptr.vmem [resolvable:$true] %s152
      %158 = dma.hbm_to_vmem [thread:$0]  %s14, 3072, %s153, [#allocation15], 192, 192, 12
    $region61: #{tpu_custom_call.1} parent=1 // pred_fallthru
      _
    // Predicated region
    $region62: #{tpu_custom_call.1} parent=1 // pred_check
      _
    $region63: #{tpu_custom_call.1} parent=1 // pred_check_branch
      %160 = sbr.rel (0) target = $region65
    $region64: #{tpu_custom_call.1} parent=1 // pred_region
      %s162 = ssub.s32 3072, 3072
      %163 = vsyncadd [#allocation18], %s162
      %s164 = sshll.u32 [#allocation17], 4
      %s165 = int_to_ptr.vmem [resolvable:$true] %s164
      %170 = dma.hbm_to_vmem [thread:$0]  %s15, 3072, %s165, [#allocation18], 192, 192, 12
    $region65: #{tpu_custom_call.1} parent=1 // pred_fallthru
      _
    // Predicated region
    $region66: #{tpu_custom_call.1} parent=1 // pred_check
      _
    $region67: #{tpu_custom_call.1} parent=1 // pred_check_branch
      %172 = sbr.rel (0) target = $region69
    $region68: #{tpu_custom_call.1} parent=1 // pred_region
      _
    $region69: #{tpu_custom_call.1} parent=1 // pred_fallthru
      _
    // Predicated region
    $region70: #{tpu_custom_call.1} parent=1 // pred_check
      _
    $region71: #{tpu_custom_call.1} parent=1 // pred_check_branch
      %174 = sbr.rel (0) target = $region73
    $region72: #{tpu_custom_call.1} parent=1 // pred_region
      _
    $region73: #{tpu_custom_call.1} parent=1 // pred_fallthru
      _
    // Predicated region
    $region74: #{tpu_custom_call.1} parent=1 // pred_check
      _
    $region75: #{tpu_custom_call.1} parent=1 // pred_check_branch
      %176 = sbr.rel (0) target = $region77
    $region76: #{tpu_custom_call.1} parent=1 // pred_region
      %s178 = ssub.s32 3072, 3072
      %179 = vsyncadd [#allocation18], %s178
      %s180 = sshll.u32 [#allocation19], 4
      %s181 = int_to_ptr.vmem [resolvable:$true] %s180
      %186 = dma.hbm_to_vmem [thread:$0]  %s18, 3072, %s181, [#allocation18], 192, 192, 12
    $region77: #{tpu_custom_call.1} parent=1 // pred_fallthru
      _
    // Predicated region
    $region78: #{tpu_custom_call.1} parent=1 // pred_check
      _
    $region79: #{tpu_custom_call.1} parent=1 // pred_check_branch
      %188 = sbr.rel (0) target = $region81
    $region80: #{tpu_custom_call.1} parent=1 // pred_region
      %s190 = ssub.s32 3072, 3072
      %191 = vsyncadd [#allocation21], %s190
      %s192 = sshll.u32 [#allocation20], 4
      %s193 = int_to_ptr.vmem [resolvable:$true] %s192
      %198 = dma.hbm_to_vmem [thread:$0]  %s19, 3072, %s193, [#allocation21], 192, 192, 12
    $region81: #{tpu_custom_call.1} parent=1 // pred_fallthru
      _
    // Predicated region
    $region82: #{tpu_custom_call.1} parent=1 // pred_check
      _
    $region83: #{tpu_custom_call.1} parent=1 // pred_check_branch
      %200 = sbr.rel (0) target = $region85
    $region84: #{tpu_custom_call.1} parent=1 // pred_region
      _
    $region85: #{tpu_custom_call.1} parent=1 // pred_fallthru
      _
    // Predicated region
    $region86: #{tpu_custom_call.1} parent=1 // pred_check
      _
    $region87: #{tpu_custom_call.1} parent=1 // pred_check_branch
      %202 = sbr.rel (0) target = $region89
    $region88: #{tpu_custom_call.1} parent=1 // pred_region
      _
    $region89: #{tpu_custom_call.1} parent=1 // pred_fallthru
      _
    // Predicated region
    $region90: #{tpu_custom_call.1} parent=1 // pred_check
      _
    $region91: #{tpu_custom_call.1} parent=1 // pred_check_branch
      %204 = sbr.rel (0) target = $region93
    $region92: #{tpu_custom_call.1} parent=1 // pred_region
      _
    $region93: #{tpu_custom_call.1} parent=1 // pred_fallthru
      _
    // Predicated region
    $region94: #{tpu_custom_call.1} parent=1 // pred_check
      _
    $region95: #{tpu_custom_call.1} parent=1 // pred_check_branch
      %206 = sbr.rel (0) target = $region97
    $region96: #{tpu_custom_call.1} parent=1 // pred_region
      _
    $region97: #{tpu_custom_call.1} parent=1 // pred_fallthru
      _
    // Predicated region
    $region98: #{tpu_custom_call.1} parent=1 // pred_check
      _
    $region99: #{tpu_custom_call.1} parent=1 // pred_check_branch
      %208 = sbr.rel (0) target = $region101
    $region100: #{tpu_custom_call.1} parent=1 // pred_region
      %s210 = ssub.s32 1024, 1024
      %211 = vsyncadd [#allocation21], %s210
      %s212 = sshll.u32 [#allocation22], 4
      %s213 = int_to_ptr.vmem [resolvable:$true] %s212
      %218 = dma.hbm_to_vmem [thread:$0]  %s24, 1024, %s213, [#allocation21], 64, 64, 4
    $region101: #{tpu_custom_call.1} parent=1 // pred_fallthru
      _
    // Predicated region
    $region102: #{tpu_custom_call.1} parent=1 // pred_check
      _
    $region103: #{tpu_custom_call.1} parent=1 // pred_check_branch
      %220 = sbr.rel (0) target = $region105
    $region104: #{tpu_custom_call.1} parent=1 // pred_region
      _
    $region105: #{tpu_custom_call.1} parent=1 // pred_fallthru
      _
    // Predicated region
    $region106: #{tpu_custom_call.1} parent=1 // pred_check
      _
    $region107: #{tpu_custom_call.1} parent=1 // pred_check_branch
      %222 = sbr.rel (0) target = $region109
    $region108: #{tpu_custom_call.1} parent=1 // pred_region
      %223 = dma.done [#allocation3], 2048
    $region109: #{tpu_custom_call.1} parent=1 // pred_fallthru
      _
    // Predicated region
    $region110: #{tpu_custom_call.1} parent=1 // pred_check
      _
    $region111: #{tpu_custom_call.1} parent=1 // pred_check_branch
      %225 = sbr.rel (0) target = $region113
    $region112: #{tpu_custom_call.1} parent=1 // pred_region
      %226 = dma.done [#allocation6], 1024
    $region113: #{tpu_custom_call.1} parent=1 // pred_fallthru
      _
    // Predicated region
    $region114: #{tpu_custom_call.1} parent=1 // pred_check
      _
    $region115: #{tpu_custom_call.1} parent=1 // pred_check_branch
      %228 = sbr.rel (0) target = $region117
    $region116: #{tpu_custom_call.1} parent=1 // pred_region
      %229 = dma.done [#allocation6], 1024
    $region117: #{tpu_custom_call.1} parent=1 // pred_fallthru
      _
    // Predicated region
    $region118: #{tpu_custom_call.1} parent=1 // pred_check
      _
    $region119: #{tpu_custom_call.1} parent=1 // pred_check_branch
      %231 = sbr.rel (0) target = $region121
    $region120: #{tpu_custom_call.1} parent=1 // pred_region
      %232 = dma.done [#allocation9], 1024
    $region121: #{tpu_custom_call.1} parent=1 // pred_fallthru
      _
    // Predicated region
    $region122: #{tpu_custom_call.1} parent=1 // pred_check
      _
    $region123: #{tpu_custom_call.1} parent=1 // pred_check_branch
      %234 = sbr.rel (0) target = $region125
    $region124: #{tpu_custom_call.1} parent=1 // pred_region
      %235 = dma.done [#allocation9], 1024
    $region125: #{tpu_custom_call.1} parent=1 // pred_fallthru
      _
    // Predicated region
    $region126: #{tpu_custom_call.1} parent=1 // pred_check
      _
    $region127: #{tpu_custom_call.1} parent=1 // pred_check_branch
      %237 = sbr.rel (0) target = $region129
    $region128: #{tpu_custom_call.1} parent=1 // pred_region
      %238 = dma.done [#allocation12], 1024
    $region129: #{tpu_custom_call.1} parent=1 // pred_fallthru
      _
    // Predicated region
    $region130: #{tpu_custom_call.1} parent=1 // pred_check
      _
    $region131: #{tpu_custom_call.1} parent=1 // pred_check_branch
      %240 = sbr.rel (0) target = $region133
    $region132: #{tpu_custom_call.1} parent=1 // pred_region
      %241 = dma.done [#allocation12], 1024
    $region133: #{tpu_custom_call.1} parent=1 // pred_fallthru
      _
    // Predicated region
    $region134: #{tpu_custom_call.1} parent=1 // pred_check
      _
    $region135: #{tpu_custom_call.1} parent=1 // pred_check_branch
      %243 = sbr.rel (0) target = $region137
    $region136: #{tpu_custom_call.1} parent=1 // pred_region
      %244 = dma.done [#allocation15], 1024
    $region137: #{tpu_custom_call.1} parent=1 // pred_fallthru
      _
    // Predicated region
    $region138: #{tpu_custom_call.1} parent=1 // pred_check
      _
    $region139: #{tpu_custom_call.1} parent=1 // pred_check_branch
      %246 = sbr.rel (0) target = $region141
    $region140: #{tpu_custom_call.1} parent=1 // pred_region
      %247 = dma.done [#allocation15], 3072
    $region141: #{tpu_custom_call.1} parent=1 // pred_fallthru
      _
    // Predicated region
    $region142: #{tpu_custom_call.1} parent=1 // pred_check
      _
    $region143: #{tpu_custom_call.1} parent=1 // pred_check_branch
      %249 = sbr.rel (0) target = $region145
    $region144: #{tpu_custom_call.1} parent=1 // pred_region
      %250 = dma.done [#allocation18], 3072
    $region145: #{tpu_custom_call.1} parent=1 // pred_fallthru
      _
    // Predicated region
    $region146: #{tpu_custom_call.1} parent=1 // pred_check
      _
    $region147: #{tpu_custom_call.1} parent=1 // pred_check_branch
      %252 = sbr.rel (0) target = $region149
    $region148: #{tpu_custom_call.1} parent=1 // pred_region
      %253 = dma.done [#allocation18], 3072
    $region149: #{tpu_custom_call.1} parent=1 // pred_fallthru
      _
    // Predicated region
    $region150: #{tpu_custom_call.1} parent=1 // pred_check
      _
    $region151: #{tpu_custom_call.1} parent=1 // pred_check_branch
      %255 = sbr.rel (0) target = $region153
    $region152: #{tpu_custom_call.1} parent=1 // pred_region
      %256 = dma.done [#allocation21], 3072
    $region153: #{tpu_custom_call.1} parent=1 // pred_fallthru
      _
    // Predicated region
    $region154: #{tpu_custom_call.1} parent=1 // pred_check
      _
    $region155: #{tpu_custom_call.1} parent=1 // pred_check_branch
      %258 = sbr.rel (0) target = $region157
    $region156: #{tpu_custom_call.1} parent=1 // pred_region
      %259 = dma.done [#allocation21], 1024
    $region157: #{tpu_custom_call.1} parent=1 // pred_fallthru
      _
    %v261 = vld [vmem:[#allocation2] sm:$0xff]
    %v262 = vld [vmem:[#allocation2 + $0x8] sm:$0xff]
    %v263 = vld [vmem:[#allocation2 + $0x10] sm:$0xff]
    %v264 = vld [vmem:[#allocation2 + $0x18] sm:$0xff]
    %v265 = vld [vmem:[#allocation2 + $0x20] sm:$0xff]
    %v266 = vld [vmem:[#allocation2 + $0x28] sm:$0xff]
    %v267 = vld [vmem:[#allocation2 + $0x30] sm:$0xff]
    %v268 = vld [vmem:[#allocation2 + $0x38] sm:$0xff]
    %v269 = vld [vmem:[#allocation2 + $0x40] sm:$0xff]
    %v270 = vld [vmem:[#allocation2 + $0x48] sm:$0xff]
    %v271 = vld [vmem:[#allocation2 + $0x50] sm:$0xff]
    %v272 = vld [vmem:[#allocation2 + $0x58] sm:$0xff]
    %v273 = vld [vmem:[#allocation2 + $0x60] sm:$0xff]
    %v274 = vld [vmem:[#allocation2 + $0x68] sm:$0xff]
    %v275 = vld [vmem:[#allocation2 + $0x70] sm:$0xff]
    %v276 = vld [vmem:[#allocation2 + $0x78] sm:$0xff]
    %v277 = vld [vmem:[#allocation5] sm:$0xf]
    %v278 = vld [vmem:[#allocation5 + $0x4] sm:$0xf]
    %v279 = vld [vmem:[#allocation5 + $0x8] sm:$0xf]
    %v280 = vld [vmem:[#allocation5 + $0xc] sm:$0xf]
    %v281 = vld [vmem:[#allocation5 + $0x10] sm:$0xf]
    %v282 = vld [vmem:[#allocation5 + $0x14] sm:$0xf]
    %v283 = vld [vmem:[#allocation5 + $0x18] sm:$0xf]
    %v284 = vld [vmem:[#allocation5 + $0x1c] sm:$0xf]
    %v285 = vld [vmem:[#allocation5 + $0x20] sm:$0xf]
    %v286 = vld [vmem:[#allocation5 + $0x24] sm:$0xf]
    %v287 = vld [vmem:[#allocation5 + $0x28] sm:$0xf]
    %v288 = vld [vmem:[#allocation5 + $0x2c] sm:$0xf]
    %v289 = vld [vmem:[#allocation5 + $0x30] sm:$0xf]
    %v290 = vld [vmem:[#allocation5 + $0x34] sm:$0xf]
    %v291 = vld [vmem:[#allocation5 + $0x38] sm:$0xf]
    %v292 = vld [vmem:[#allocation5 + $0x3c] sm:$0xf]
    %v293 = vld [vmem:[#allocation7] sm:$0xf]
    %v294 = vld [vmem:[#allocation7 + $0x4] sm:$0xf]
    %v295 = vld [vmem:[#allocation7 + $0x8] sm:$0xf]
    %v296 = vld [vmem:[#allocation7 + $0xc] sm:$0xf]
    %v297 = vld [vmem:[#allocation7 + $0x10] sm:$0xf]
    %v298 = vld [vmem:[#allocation7 + $0x14] sm:$0xf]
    %v299 = vld [vmem:[#allocation7 + $0x18] sm:$0xf]
    %v300 = vld [vmem:[#allocation7 + $0x1c] sm:$0xf]
    %v301 = vld [vmem:[#allocation7 + $0x20] sm:$0xf]
    %v302 = vld [vmem:[#allocation7 + $0x24] sm:$0xf]
    %v303 = vld [vmem:[#allocation7 + $0x28] sm:$0xf]
    %v304 = vld [vmem:[#allocation7 + $0x2c] sm:$0xf]
    %v305 = vld [vmem:[#allocation7 + $0x30] sm:$0xf]
    %v306 = vld [vmem:[#allocation7 + $0x34] sm:$0xf]
    %v307 = vld [vmem:[#allocation7 + $0x38] sm:$0xf]
    %v308 = vld [vmem:[#allocation7 + $0x3c] sm:$0xf]
    %v309 = vld [vmem:[%s3] sm:$0x1]
    %v310 = vld [vmem:[#allocation8] sm:$0xf]
    %v311 = vld [vmem:[#allocation8 + $0x4] sm:$0xf]
    %v312 = vld [vmem:[#allocation8 + $0x8] sm:$0xf]
    %v313 = vld [vmem:[#allocation8 + $0xc] sm:$0xf]
    %v314 = vld [vmem:[#allocation8 + $0x10] sm:$0xf]
    %v315 = vld [vmem:[#allocation8 + $0x14] sm:$0xf]
    %v316 = vld [vmem:[#allocation8 + $0x18] sm:$0xf]
    %v317 = vld [vmem:[#allocation8 + $0x1c] sm:$0xf]
    %v318 = vld [vmem:[#allocation8 + $0x20] sm:$0xf]
    %v319 = vld [vmem:[#allocation8 + $0x24] sm:$0xf]
    %v320 = vld [vmem:[#allocation8 + $0x28] sm:$0xf]
    %v321 = vld [vmem:[#allocation8 + $0x2c] sm:$0xf]
    %v322 = vld [vmem:[#allocation8 + $0x30] sm:$0xf]
    %v323 = vld [vmem:[#allocation8 + $0x34] sm:$0xf]
    %v324 = vld [vmem:[#allocation8 + $0x38] sm:$0xf]
    %v325 = vld [vmem:[#allocation8 + $0x3c] sm:$0xf]
    %v326 = vld [vmem:[%s5] sm:$0x1]
    %v327 = vld [vmem:[#allocation10] sm:$0xf]
    %v328 = vld [vmem:[#allocation10 + $0x4] sm:$0xf]
    %v329 = vld [vmem:[#allocation10 + $0x8] sm:$0xf]
    %v330 = vld [vmem:[#allocation10 + $0xc] sm:$0xf]
    %v331 = vld [vmem:[#allocation10 + $0x10] sm:$0xf]
    %v332 = vld [vmem:[#allocation10 + $0x14] sm:$0xf]
    %v333 = vld [vmem:[#allocation10 + $0x18] sm:$0xf]
    %v334 = vld [vmem:[#allocation10 + $0x1c] sm:$0xf]
    %v335 = vld [vmem:[#allocation10 + $0x20] sm:$0xf]
    %v336 = vld [vmem:[#allocation10 + $0x24] sm:$0xf]
    %v337 = vld [vmem:[#allocation10 + $0x28] sm:$0xf]
    %v338 = vld [vmem:[#allocation10 + $0x2c] sm:$0xf]
    %v339 = vld [vmem:[#allocation10 + $0x30] sm:$0xf]
    %v340 = vld [vmem:[#allocation10 + $0x34] sm:$0xf]
    %v341 = vld [vmem:[#allocation10 + $0x38] sm:$0xf]
    %v342 = vld [vmem:[#allocation10 + $0x3c] sm:$0xf]
    %v343 = vld [vmem:[%s7] sm:$0x1]
    %v344 = vld [vmem:[#allocation11] sm:$0xf]
    %v345 = vld [vmem:[#allocation11 + $0x4] sm:$0xf]
    %v346 = vld [vmem:[#allocation11 + $0x8] sm:$0xf]
    %v347 = vld [vmem:[#allocation11 + $0xc] sm:$0xf]
    %v348 = vld [vmem:[#allocation11 + $0x10] sm:$0xf]
    %v349 = vld [vmem:[#allocation11 + $0x14] sm:$0xf]
    %v350 = vld [vmem:[#allocation11 + $0x18] sm:$0xf]
    %v351 = vld [vmem:[#allocation11 + $0x1c] sm:$0xf]
    %v352 = vld [vmem:[#allocation11 + $0x20] sm:$0xf]
    %v353 = vld [vmem:[#allocation11 + $0x24] sm:$0xf]
    %v354 = vld [vmem:[#allocation11 + $0x28] sm:$0xf]
    %v355 = vld [vmem:[#allocation11 + $0x2c] sm:$0xf]
    %v356 = vld [vmem:[#allocation11 + $0x30] sm:$0xf]
    %v357 = vld [vmem:[#allocation11 + $0x34] sm:$0xf]
    %v358 = vld [vmem:[#allocation11 + $0x38] sm:$0xf]
    %v359 = vld [vmem:[#allocation11 + $0x3c] sm:$0xf]
    %v360 = vld [vmem:[%s9] sm:$0x1]
    %v361 = vld [vmem:[#allocation13] sm:$0xf]
    %v362 = vld [vmem:[#allocation13 + $0x4] sm:$0xf]
    %v363 = vld [vmem:[#allocation13 + $0x8] sm:$0xf]
    %v364 = vld [vmem:[#allocation13 + $0xc] sm:$0xf]
    %v365 = vld [vmem:[#allocation13 + $0x10] sm:$0xf]
    %v366 = vld [vmem:[#allocation13 + $0x14] sm:$0xf]
    %v367 = vld [vmem:[#allocation13 + $0x18] sm:$0xf]
    %v368 = vld [vmem:[#allocation13 + $0x1c] sm:$0xf]
    %v369 = vld [vmem:[#allocation13 + $0x20] sm:$0xf]
    %v370 = vld [vmem:[#allocation13 + $0x24] sm:$0xf]
    %v371 = vld [vmem:[#allocation13 + $0x28] sm:$0xf]
    %v372 = vld [vmem:[#allocation13 + $0x2c] sm:$0xf]
    %v373 = vld [vmem:[#allocation13 + $0x30] sm:$0xf]
    %v374 = vld [vmem:[#allocation13 + $0x34] sm:$0xf]
    %v375 = vld [vmem:[#allocation13 + $0x38] sm:$0xf]
    %v376 = vld [vmem:[#allocation13 + $0x3c] sm:$0xf]
    %v377 = vld [vmem:[%s11] sm:$0x1]
    %v378 = vld [vmem:[#allocation14] sm:$0xf]
    %v379 = vld [vmem:[#allocation14 + $0x4] sm:$0xf]
    %v380 = vld [vmem:[#allocation14 + $0x8] sm:$0xf]
    %v381 = vld [vmem:[#allocation14 + $0xc] sm:$0xf]
    %v382 = vld [vmem:[#allocation14 + $0x10] sm:$0xf]
    %v383 = vld [vmem:[#allocation14 + $0x14] sm:$0xf]
    %v384 = vld [vmem:[#allocation14 + $0x18] sm:$0xf]
    %v385 = vld [vmem:[#allocation14 + $0x1c] sm:$0xf]
    %v386 = vld [vmem:[#allocation14 + $0x20] sm:$0xf]
    %v387 = vld [vmem:[#allocation14 + $0x24] sm:$0xf]
    %v388 = vld [vmem:[#allocation14 + $0x28] sm:$0xf]
    %v389 = vld [vmem:[#allocation14 + $0x2c] sm:$0xf]
    %v390 = vld [vmem:[#allocation14 + $0x30] sm:$0xf]
    %v391 = vld [vmem:[#allocation14 + $0x34] sm:$0xf]
    %v392 = vld [vmem:[#allocation14 + $0x38] sm:$0xf]
    %v393 = vld [vmem:[#allocation14 + $0x3c] sm:$0xf]
    %v394 = vld [vmem:[%s13] sm:$0x1]
    %v395 = vld [vmem:[#allocation16] sm:$0xff]
    %v396 = vld [vmem:[#allocation16 + $0x8] sm:$0xf]
    %v397 = vld [vmem:[#allocation16 + $0xc] sm:$0xff]
    %v398 = vld [vmem:[#allocation16 + $0x14] sm:$0xf]
    %v399 = vld [vmem:[#allocation16 + $0x18] sm:$0xff]
    %v400 = vld [vmem:[#allocation16 + $0x20] sm:$0xf]
    %v401 = vld [vmem:[#allocation16 + $0x24] sm:$0xff]
    %v402 = vld [vmem:[#allocation16 + $0x2c] sm:$0xf]
    %v403 = vld [vmem:[#allocation16 + $0x30] sm:$0xff]
    %v404 = vld [vmem:[#allocation16 + $0x38] sm:$0xf]
    %v405 = vld [vmem:[#allocation16 + $0x3c] sm:$0xff]
    %v406 = vld [vmem:[#allocation16 + $0x44] sm:$0xf]
    %v407 = vld [vmem:[#allocation16 + $0x48] sm:$0xff]
    %v408 = vld [vmem:[#allocation16 + $0x50] sm:$0xf]
    %v409 = vld [vmem:[#allocation16 + $0x54] sm:$0xff]
    %v410 = vld [vmem:[#allocation16 + $0x5c] sm:$0xf]
    %v411 = vld [vmem:[#allocation16 + $0x60] sm:$0xff]
    %v412 = vld [vmem:[#allocation16 + $0x68] sm:$0xf]
    %v413 = vld [vmem:[#allocation16 + $0x6c] sm:$0xff]
    %v414 = vld [vmem:[#allocation16 + $0x74] sm:$0xf]
    %v415 = vld [vmem:[#allocation16 + $0x78] sm:$0xff]
    %v416 = vld [vmem:[#allocation16 + $0x80] sm:$0xf]
    %v417 = vld [vmem:[#allocation16 + $0x84] sm:$0xff]
    %v418 = vld [vmem:[#allocation16 + $0x8c] sm:$0xf]
    %v419 = vld [vmem:[#allocation16 + $0x90] sm:$0xff]
    %v420 = vld [vmem:[#allocation16 + $0x98] sm:$0xf]
    %v421 = vld [vmem:[#allocation16 + $0x9c] sm:$0xff]
    %v422 = vld [vmem:[#allocation16 + $0xa4] sm:$0xf]
    %v423 = vld [vmem:[#allocation16 + $0xa8] sm:$0xff]
    %v424 = vld [vmem:[#allocation16 + $0xb0] sm:$0xf]
    %v425 = vld [vmem:[#allocation16 + $0xb4] sm:$0xff]
    %v426 = vld [vmem:[#allocation16 + $0xbc] sm:$0xf]
    %v427 = vld [vmem:[#allocation17] sm:$0xff]
    %v428 = vld [vmem:[#allocation17 + $0x8] sm:$0xf]
    %v429 = vld [vmem:[#allocation17 + $0xc] sm:$0xff]
    %v430 = vld [vmem:[#allocation17 + $0x14] sm:$0xf]
    %v431 = vld [vmem:[#allocation17 + $0x18] sm:$0xff]
    %v432 = vld [vmem:[#allocation17 + $0x20] sm:$0xf]
    %v433 = vld [vmem:[#allocation17 + $0x24] sm:$0xff]
    %v434 = vld [vmem:[#allocation17 + $0x2c] sm:$0xf]
    %v435 = vld [vmem:[#allocation17 + $0x30] sm:$0xff]
    %v436 = vld [vmem:[#allocation17 + $0x38] sm:$0xf]
    %v437 = vld [vmem:[#allocation17 + $0x3c] sm:$0xff]
    %v438 = vld [vmem:[#allocation17 + $0x44] sm:$0xf]
    %v439 = vld [vmem:[#allocation17 + $0x48] sm:$0xff]
    %v440 = vld [vmem:[#allocation17 + $0x50] sm:$0xf]
    %v441 = vld [vmem:[#allocation17 + $0x54] sm:$0xff]
    %v442 = vld [vmem:[#allocation17 + $0x5c] sm:$0xf]
    %v443 = vld [vmem:[#allocation17 + $0x60] sm:$0xff]
    %v444 = vld [vmem:[#allocation17 + $0x68] sm:$0xf]
    %v445 = vld [vmem:[#allocation17 + $0x6c] sm:$0xff]
    %v446 = vld [vmem:[#allocation17 + $0x74] sm:$0xf]
    %v447 = vld [vmem:[#allocation17 + $0x78] sm:$0xff]
    %v448 = vld [vmem:[#allocation17 + $0x80] sm:$0xf]
    %v449 = vld [vmem:[#allocation17 + $0x84] sm:$0xff]
    %v450 = vld [vmem:[#allocation17 + $0x8c] sm:$0xf]
    %v451 = vld [vmem:[#allocation17 + $0x90] sm:$0xff]
    %v452 = vld [vmem:[#allocation17 + $0x98] sm:$0xf]
    %v453 = vld [vmem:[#allocation17 + $0x9c] sm:$0xff]
    %v454 = vld [vmem:[#allocation17 + $0xa4] sm:$0xf]
    %v455 = vld [vmem:[#allocation17 + $0xa8] sm:$0xff]
    %v456 = vld [vmem:[#allocation17 + $0xb0] sm:$0xf]
    %v457 = vld [vmem:[#allocation17 + $0xb4] sm:$0xff]
    %v458 = vld [vmem:[#allocation17 + $0xbc] sm:$0xf]
    %v459 = vld [vmem:[%s16] sm:$0x7]
    %v460 = vld [vmem:[%s17] sm:$0x7]
    %v461 = vld [vmem:[#allocation19] sm:$0xff]
    %v462 = vld [vmem:[#allocation19 + $0x8] sm:$0xf]
    %v463 = vld [vmem:[#allocation19 + $0xc] sm:$0xff]
    %v464 = vld [vmem:[#allocation19 + $0x14] sm:$0xf]
    %v465 = vld [vmem:[#allocation19 + $0x18] sm:$0xff]
    %v466 = vld [vmem:[#allocation19 + $0x20] sm:$0xf]
    %v467 = vld [vmem:[#allocation19 + $0x24] sm:$0xff]
    %v468 = vld [vmem:[#allocation19 + $0x2c] sm:$0xf]
    %v469 = vld [vmem:[#allocation19 + $0x30] sm:$0xff]
    %v470 = vld [vmem:[#allocation19 + $0x38] sm:$0xf]
    %v471 = vld [vmem:[#allocation19 + $0x3c] sm:$0xff]
    %v472 = vld [vmem:[#allocation19 + $0x44] sm:$0xf]
    %v473 = vld [vmem:[#allocation19 + $0x48] sm:$0xff]
    %v474 = vld [vmem:[#allocation19 + $0x50] sm:$0xf]
    %v475 = vld [vmem:[#allocation19 + $0x54] sm:$0xff]
    %v476 = vld [vmem:[#allocation19 + $0x5c] sm:$0xf]
    %v477 = vld [vmem:[#allocation19 + $0x60] sm:$0xff]
    %v478 = vld [vmem:[#allocation19 + $0x68] sm:$0xf]
    %v479 = vld [vmem:[#allocation19 + $0x6c] sm:$0xff]
    %v480 = vld [vmem:[#allocation19 + $0x74] sm:$0xf]
    %v481 = vld [vmem:[#allocation19 + $0x78] sm:$0xff]
    %v482 = vld [vmem:[#allocation19 + $0x80] sm:$0xf]
    %v483 = vld [vmem:[#allocation19 + $0x84] sm:$0xff]
    %v484 = vld [vmem:[#allocation19 + $0x8c] sm:$0xf]
    %v485 = vld [vmem:[#allocation19 + $0x90] sm:$0xff]
    %v486 = vld [vmem:[#allocation19 + $0x98] sm:$0xf]
    %v487 = vld [vmem:[#allocation19 + $0x9c] sm:$0xff]
    %v488 = vld [vmem:[#allocation19 + $0xa4] sm:$0xf]
    %v489 = vld [vmem:[#allocation19 + $0xa8] sm:$0xff]
    %v490 = vld [vmem:[#allocation19 + $0xb0] sm:$0xf]
    %v491 = vld [vmem:[#allocation19 + $0xb4] sm:$0xff]
    %v492 = vld [vmem:[#allocation19 + $0xbc] sm:$0xf]
    %v493 = vld [vmem:[#allocation20] sm:$0xff]
    %v494 = vld [vmem:[#allocation20 + $0x8] sm:$0xf]
    %v495 = vld [vmem:[#allocation20 + $0xc] sm:$0xff]
    %v496 = vld [vmem:[#allocation20 + $0x14] sm:$0xf]
    %v497 = vld [vmem:[#allocation20 + $0x18] sm:$0xff]
    %v498 = vld [vmem:[#allocation20 + $0x20] sm:$0xf]
    %v499 = vld [vmem:[#allocation20 + $0x24] sm:$0xff]
    %v500 = vld [vmem:[#allocation20 + $0x2c] sm:$0xf]
    %v501 = vld [vmem:[#allocation20 + $0x30] sm:$0xff]
    %v502 = vld [vmem:[#allocation20 + $0x38] sm:$0xf]
    %v503 = vld [vmem:[#allocation20 + $0x3c] sm:$0xff]
    %v504 = vld [vmem:[#allocation20 + $0x44] sm:$0xf]
    %v505 = vld [vmem:[#allocation20 + $0x48] sm:$0xff]
    %v506 = vld [vmem:[#allocation20 + $0x50] sm:$0xf]
    %v507 = vld [vmem:[#allocation20 + $0x54] sm:$0xff]
    %v508 = vld [vmem:[#allocation20 + $0x5c] sm:$0xf]
    %v509 = vld [vmem:[#allocation20 + $0x60] sm:$0xff]
    %v510 = vld [vmem:[#allocation20 + $0x68] sm:$0xf]
    %v511 = vld [vmem:[#allocation20 + $0x6c] sm:$0xff]
    %v512 = vld [vmem:[#allocation20 + $0x74] sm:$0xf]
    %v513 = vld [vmem:[#allocation20 + $0x78] sm:$0xff]
    %v514 = vld [vmem:[#allocation20 + $0x80] sm:$0xf]
    %v515 = vld [vmem:[#allocation20 + $0x84] sm:$0xff]
    %v516 = vld [vmem:[#allocation20 + $0x8c] sm:$0xf]
    %v517 = vld [vmem:[#allocation20 + $0x90] sm:$0xff]
    %v518 = vld [vmem:[#allocation20 + $0x98] sm:$0xf]
    %v519 = vld [vmem:[#allocation20 + $0x9c] sm:$0xff]
    %v520 = vld [vmem:[#allocation20 + $0xa4] sm:$0xf]
    %v521 = vld [vmem:[#allocation20 + $0xa8] sm:$0xff]
    %v522 = vld [vmem:[#allocation20 + $0xb0] sm:$0xf]
    %v523 = vld [vmem:[#allocation20 + $0xb4] sm:$0xff]
    %v524 = vld [vmem:[#allocation20 + $0xbc] sm:$0xf]
    %v525 = vld [vmem:[%s20] sm:$0x7]
    %v526 = vld [vmem:[%s21] sm:$0x7]
    %v527 = vld [vmem:[%s22] sm:$0xf]
    %v528 = vld [vmem:[%s22 + $0x4] sm:$0xf]
    %v529 = vld [vmem:[%s22 + $0x8] sm:$0xf]
    %v530 = vld [vmem:[%s22 + $0xc] sm:$0xf]
    %v531 = vld [vmem:[%s22 + $0x10] sm:$0xf]
    %v532 = vld [vmem:[%s22 + $0x14] sm:$0xf]
    %v533 = vld [vmem:[%s22 + $0x18] sm:$0xf]
    %v534 = vld [vmem:[%s22 + $0x1c] sm:$0xf]
    %v535 = vld [vmem:[%s22 + $0x20] sm:$0xf]
    %v536 = vld [vmem:[%s22 + $0x24] sm:$0xf]
    %v537 = vld [vmem:[%s22 + $0x28] sm:$0xf]
    %v538 = vld [vmem:[%s22 + $0x2c] sm:$0xf]
    %v539 = vld [vmem:[%s22 + $0x30] sm:$0xf]
    %v540 = vld [vmem:[%s22 + $0x34] sm:$0xf]
    %v541 = vld [vmem:[%s22 + $0x38] sm:$0xf]
    %v542 = vld [vmem:[%s22 + $0x3c] sm:$0xf]
    %v543 = vld [vmem:[%s23] sm:$0x1]
    %v544 = vld [vmem:[#allocation22] sm:$0xf]
    %v545 = vld [vmem:[#allocation22 + $0x4] sm:$0xf]
    %v546 = vld [vmem:[#allocation22 + $0x8] sm:$0xf]
    %v547 = vld [vmem:[#allocation22 + $0xc] sm:$0xf]
    %v548 = vld [vmem:[#allocation22 + $0x10] sm:$0xf]
    %v549 = vld [vmem:[#allocation22 + $0x14] sm:$0xf]
    %v550 = vld [vmem:[#allocation22 + $0x18] sm:$0xf]
    %v551 = vld [vmem:[#allocation22 + $0x1c] sm:$0xf]
    %v552 = vld [vmem:[#allocation22 + $0x20] sm:$0xf]
    %v553 = vld [vmem:[#allocation22 + $0x24] sm:$0xf]
    %v554 = vld [vmem:[#allocation22 + $0x28] sm:$0xf]
    %v555 = vld [vmem:[#allocation22 + $0x2c] sm:$0xf]
    %v556 = vld [vmem:[#allocation22 + $0x30] sm:$0xf]
    %v557 = vld [vmem:[#allocation22 + $0x34] sm:$0xf]
    %v558 = vld [vmem:[#allocation22 + $0x38] sm:$0xf]
    %v559 = vld [vmem:[#allocation22 + $0x3c] sm:$0xf]
    %v560 = vld [vmem:[%s25] sm:$0x1]
    %v561 = vpack.c.bf16 %v262, %v261
    %v562 = vpack.c.bf16 %v264, %v263
    %v563 = vpack.c.bf16 %v266, %v265
    %v564 = vpack.c.bf16 %v268, %v267
    %v565 = vpack.c.bf16 %v270, %v269
    %v566 = vpack.c.bf16 %v272, %v271
    %v567 = vpack.c.bf16 %v274, %v273
    %v568 = vpack.c.bf16 %v276, %v275
    %v570 = vlaneseq
    %v571 = vshrl.u32 %v570, 7
    %v572 = vsub.s32 0, %v571
    %v573 = vrot.slane %v309, %v572
    %v591 = vunpack.c.l.b16 %v293
    %v592 = vunpack.c.l.b16 %v294
    %v593 = vunpack.c.l.b16 %v295
    %v594 = vunpack.c.l.b16 %v296
    %v595 = vunpack.c.l.b16 %v297
    %v596 = vunpack.c.l.b16 %v298
    %v597 = vunpack.c.l.b16 %v299
    %v598 = vunpack.c.l.b16 %v300
    %v599 = vunpack.c.l.b16 %v301
    %v600 = vunpack.c.l.b16 %v302
    %v601 = vunpack.c.l.b16 %v303
    %v602 = vunpack.c.l.b16 %v304
    %v603 = vunpack.c.l.b16 %v305
    %v604 = vunpack.c.l.b16 %v306
    %v605 = vunpack.c.l.b16 %v307
    %v606 = vunpack.c.l.b16 %v308
    %v607 = vpack.c.b16 %v592, %v591
    %v608 = vpack.c.b16 %v594, %v593
    %v609 = vpack.c.b16 %v596, %v595
    %v610 = vpack.c.b16 %v598, %v597
    %v611 = vpack.c.b16 %v600, %v599
    %v612 = vpack.c.b16 %v602, %v601
    %v613 = vpack.c.b16 %v604, %v603
    %v614 = vpack.c.b16 %v606, %v605
    %623 = vmatprep.subr.bf16.mxu0 0
    %624 = vmatpush1.bf16.msra.mxu0 %v607
    %625 = vmatprep.subr.bf16.mxu0 0
    %626 = vmatpush1.bf16.msra.mxu0 %v608
    %627 = vmatprep.subr.bf16.mxu0 0
    %628 = vmatpush1.bf16.msra.mxu0 %v609
    %629 = vmatprep.subr.bf16.mxu0 0
    %630 = vmatpush1.bf16.msra.mxu0 %v610
    %631 = vmatprep.subr.bf16.mxu0 0
    %632 = vmatpush1.bf16.msra.mxu0 %v611
    %633 = vmatprep.subr.bf16.mxu0 0
    %634 = vmatpush1.bf16.msra.mxu0 %v612
    %635 = vmatprep.subr.bf16.mxu0 0
    %636 = vmatpush1.bf16.msra.mxu0 %v613
    %637 = vmatprep.subr.bf16.mxu0 0
    %638 = vmatpush1.bf16.msra.mxu0 %v614
    %639 = vmatprep.subr.bf16.mxu0 0
    %640 = vmatpush1.bf16.msra.mxu0 0
    %641 = vmatprep.subr.bf16.mxu0 0
    %642 = vmatpush1.bf16.msra.mxu0 0
    %643 = vmatprep.subr.bf16.mxu0 0
    %644 = vmatpush1.bf16.msra.mxu0 0
    %645 = vmatprep.subr.bf16.mxu0 0
    %646 = vmatpush1.bf16.msra.mxu0 0
    %647 = vmatprep.subr.bf16.mxu0 0
    %648 = vmatpush1.bf16.msra.mxu0 0
    %649 = vmatprep.subr.bf16.mxu0 0
    %650 = vmatpush1.bf16.msra.mxu0 0
    %651 = vmatprep.subr.bf16.mxu0 0
    %652 = vmatpush1.bf16.msra.mxu0 0
    %653 = vmatprep.subr.bf16.mxu0 0
    %654 = vmatpush1.bf16.msra.mxu0 0
    %655 = vmatprep.mubr.bf16.mxu0 0
    %656 = vmatmul.mubr.bf16.gmra.mrb[0].mxu0 %v561
    %v657 = vpop.f32.mrb[0].mxu0
    %v658 = vadd.f32 %v573, %v657
    %v659 = vpop.f32.mrb[0].mxu0
    %v660 = vpop.f32.mrb[0].mxu0
    %v661 = vadd.f32 %v573, %v660
    %v662 = vpop.f32.mrb[0].mxu0
    %663 = vmatprep.mubr.bf16.mxu0 0
    %664 = vmatmul.mubr.bf16.gmra.mrb[0].mxu0 %v562
    %v665 = vpop.f32.mrb[0].mxu0
    %v666 = vadd.f32 %v573, %v665
    %v667 = vpop.f32.mrb[0].mxu0
    %v668 = vpop.f32.mrb[0].mxu0
    %v669 = vadd.f32 %v573, %v668
    %v670 = vpop.f32.mrb[0].mxu0
    %671 = vmatprep.mubr.bf16.mxu0 0
    %672 = vmatmul.mubr.bf16.gmra.mrb[0].mxu0 %v563
    %v673 = vpop.f32.mrb[0].mxu0
    %v674 = vadd.f32 %v573, %v673
    %v675 = vpop.f32.mrb[0].mxu0
    %v676 = vpop.f32.mrb[0].mxu0
    %v677 = vadd.f32 %v573, %v676
    %v678 = vpop.f32.mrb[0].mxu0
    %679 = vmatprep.mubr.bf16.mxu0 0
    %680 = vmatmul.mubr.bf16.gmra.mrb[0].mxu0 %v564
    %v681 = vpop.f32.mrb[0].mxu0
    %v682 = vadd.f32 %v573, %v681
    %v683 = vpop.f32.mrb[0].mxu0
    %v684 = vpop.f32.mrb[0].mxu0
    %v685 = vadd.f32 %v573, %v684
    %v686 = vpop.f32.mrb[0].mxu0
    %687 = vmatprep.mubr.bf16.mxu0 0
    %688 = vmatmul.mubr.bf16.gmra.mrb[0].mxu0 %v565
    %v689 = vpop.f32.mrb[0].mxu0
    %v690 = vadd.f32 %v573, %v689
    %v691 = vpop.f32.mrb[0].mxu0
    %v692 = vpop.f32.mrb[0].mxu0
    %v693 = vadd.f32 %v573, %v692
    %v694 = vpop.f32.mrb[0].mxu0
    %695 = vmatprep.mubr.bf16.mxu0 0
    %696 = vmatmul.mubr.bf16.gmra.mrb[0].mxu0 %v566
    %v697 = vpop.f32.mrb[0].mxu0
    %v698 = vadd.f32 %v573, %v697
    %v699 = vpop.f32.mrb[0].mxu0
    %v700 = vpop.f32.mrb[0].mxu0
    %v701 = vadd.f32 %v573, %v700
    %v702 = vpop.f32.mrb[0].mxu0
    %703 = vmatprep.mubr.bf16.mxu0 0
    %704 = vmatmul.mubr.bf16.gmra.mrb[0].mxu0 %v567
    %v705 = vpop.f32.mrb[0].mxu0
    %v706 = vadd.f32 %v573, %v705
    %v707 = vpop.f32.mrb[0].mxu0
    %v708 = vpop.f32.mrb[0].mxu0
    %v709 = vadd.f32 %v573, %v708
    %v710 = vpop.f32.mrb[0].mxu0
    %711 = vmatprep.mubr.bf16.mxu0 0
    %712 = vmatmul.mubr.bf16.gmra.mrb[0].mxu0 %v568
    %v713 = vpop.f32.mrb[0].mxu0
    %v714 = vadd.f32 %v573, %v713
    %v715 = vpop.f32.mrb[0].mxu0
    %v716 = vpop.f32.mrb[0].mxu0
    %v717 = vadd.f32 %v573, %v716
    %v718 = vpop.f32.mrb[0].mxu0
    %719 = vdwg.mxu0
    %v720 = vmax.f32 %v658, 0.0
    %v721 = vmax.f32 %v661, 0.0
    %v722 = vmax.f32 %v666, 0.0
    %v723 = vmax.f32 %v669, 0.0
    %v724 = vmax.f32 %v674, 0.0
    %v725 = vmax.f32 %v677, 0.0
    %v726 = vmax.f32 %v682, 0.0
    %v727 = vmax.f32 %v685, 0.0
    %v728 = vmax.f32 %v690, 0.0
    %v729 = vmax.f32 %v693, 0.0
    %v730 = vmax.f32 %v698, 0.0
    %v731 = vmax.f32 %v701, 0.0
    %v732 = vmax.f32 %v706, 0.0
    %v733 = vmax.f32 %v709, 0.0
    %v734 = vmax.f32 %v714, 0.0
    %v735 = vmax.f32 %v717, 0.0
    %v736 = vpack.c.bf16 %v721, %v720
    %v737 = vpack.c.bf16 %v723, %v722
    %v738 = vpack.c.bf16 %v725, %v724
    %v739 = vpack.c.bf16 %v727, %v726
    %v740 = vpack.c.bf16 %v729, %v728
    %v741 = vpack.c.bf16 %v731, %v730
    %v742 = vpack.c.bf16 %v733, %v732
    %v743 = vpack.c.bf16 %v735, %v734
    %v745 = vlaneseq
    %v746 = vshrl.u32 %v745, 7
    %v747 = vsub.s32 0, %v746
    %v748 = vrot.slane %v326, %v747
    %v766 = vunpack.c.l.b16 %v310
    %v767 = vunpack.c.l.b16 %v311
    %v768 = vunpack.c.l.b16 %v312
    %v769 = vunpack.c.l.b16 %v313
    %v770 = vunpack.c.l.b16 %v314
    %v771 = vunpack.c.l.b16 %v315
    %v772 = vunpack.c.l.b16 %v316
    %v773 = vunpack.c.l.b16 %v317
    %v774 = vunpack.c.l.b16 %v318
    %v775 = vunpack.c.l.b16 %v319
    %v776 = vunpack.c.l.b16 %v320
    %v777 = vunpack.c.l.b16 %v321
    %v778 = vunpack.c.l.b16 %v322
    %v779 = vunpack.c.l.b16 %v323
    %v780 = vunpack.c.l.b16 %v324
    %v781 = vunpack.c.l.b16 %v325
    %v782 = vpack.c.b16 %v767, %v766
    %v783 = vpack.c.b16 %v769, %v768
    %v784 = vpack.c.b16 %v771, %v770
    %v785 = vpack.c.b16 %v773, %v772
    %v786 = vpack.c.b16 %v775, %v774
    %v787 = vpack.c.b16 %v777, %v776
    %v788 = vpack.c.b16 %v779, %v778
    %v789 = vpack.c.b16 %v781, %v780
    %798 = vmatprep.subr.bf16.mxu0 0
    %799 = vmatpush1.bf16.msra.mxu0 %v782
    %800 = vmatprep.subr.bf16.mxu0 0
    %801 = vmatpush1.bf16.msra.mxu0 %v783
    %802 = vmatprep.subr.bf16.mxu0 0
    %803 = vmatpush1.bf16.msra.mxu0 %v784
    %804 = vmatprep.subr.bf16.mxu0 0
    %805 = vmatpush1.bf16.msra.mxu0 %v785
    %806 = vmatprep.subr.bf16.mxu0 0
    %807 = vmatpush1.bf16.msra.mxu0 %v786
    %808 = vmatprep.subr.bf16.mxu0 0
    %809 = vmatpush1.bf16.msra.mxu0 %v787
    %810 = vmatprep.subr.bf16.mxu0 0
    %811 = vmatpush1.bf16.msra.mxu0 %v788
    %812 = vmatprep.subr.bf16.mxu0 0
    %813 = vmatpush1.bf16.msra.mxu0 %v789
    %814 = vmatprep.subr.bf16.mxu0 0
    %815 = vmatpush1.bf16.msra.mxu0 0
    %816 = vmatprep.subr.bf16.mxu0 0
    %817 = vmatpush1.bf16.msra.mxu0 0
    %818 = vmatprep.subr.bf16.mxu0 0
    %819 = vmatpush1.bf16.msra.mxu0 0
    %820 = vmatprep.subr.bf16.mxu0 0
    %821 = vmatpush1.bf16.msra.mxu0 0
    %822 = vmatprep.subr.bf16.mxu0 0
    %823 = vmatpush1.bf16.msra.mxu0 0
    %824 = vmatprep.subr.bf16.mxu0 0
    %825 = vmatpush1.bf16.msra.mxu0 0
    %826 = vmatprep.subr.bf16.mxu0 0
    %827 = vmatpush1.bf16.msra.mxu0 0
    %828 = vmatprep.subr.bf16.mxu0 0
    %829 = vmatpush1.bf16.msra.mxu0 0
    %830 = vmatprep.mubr.bf16.mxu0 0
    %831 = vmatmul.mubr.bf16.gmra.mrb[0].mxu0 %v736
    %v832 = vpop.f32.mrb[0].mxu0
    %v833 = vadd.f32 %v748, %v832
    %v834 = vpop.f32.mrb[0].mxu0
    %v835 = vpop.f32.mrb[0].mxu0
    %v836 = vadd.f32 %v748, %v835
    %v837 = vpop.f32.mrb[0].mxu0
    %838 = vmatprep.mubr.bf16.mxu0 0
    %839 = vmatmul.mubr.bf16.gmra.mrb[0].mxu0 %v737
    %v840 = vpop.f32.mrb[0].mxu0
    %v841 = vadd.f32 %v748, %v840
    %v842 = vpop.f32.mrb[0].mxu0
    %v843 = vpop.f32.mrb[0].mxu0
    %v844 = vadd.f32 %v748, %v843
    %v845 = vpop.f32.mrb[0].mxu0
    %846 = vmatprep.mubr.bf16.mxu0 0
    %847 = vmatmul.mubr.bf16.gmra.mrb[0].mxu0 %v738
    %v848 = vpop.f32.mrb[0].mxu0
    %v849 = vadd.f32 %v748, %v848
    %v850 = vpop.f32.mrb[0].mxu0
    %v851 = vpop.f32.mrb[0].mxu0
    %v852 = vadd.f32 %v748, %v851
    %v853 = vpop.f32.mrb[0].mxu0
    %854 = vmatprep.mubr.bf16.mxu0 0
    %855 = vmatmul.mubr.bf16.gmra.mrb[0].mxu0 %v739
    %v856 = vpop.f32.mrb[0].mxu0
    %v857 = vadd.f32 %v748, %v856
    %v858 = vpop.f32.mrb[0].mxu0
    %v859 = vpop.f32.mrb[0].mxu0
    %v860 = vadd.f32 %v748, %v859
    %v861 = vpop.f32.mrb[0].mxu0
    %862 = vmatprep.mubr.bf16.mxu0 0
    %863 = vmatmul.mubr.bf16.gmra.mrb[0].mxu0 %v740
    %v864 = vpop.f32.mrb[0].mxu0
    %v865 = vadd.f32 %v748, %v864
    %v866 = vpop.f32.mrb[0].mxu0
    %v867 = vpop.f32.mrb[0].mxu0
    %v868 = vadd.f32 %v748, %v867
    %v869 = vpop.f32.mrb[0].mxu0
    %870 = vmatprep.mubr.bf16.mxu0 0
    %871 = vmatmul.mubr.bf16.gmra.mrb[0].mxu0 %v741
    %v872 = vpop.f32.mrb[0].mxu0
    %v873 = vadd.f32 %v748, %v872
    %v874 = vpop.f32.mrb[0].mxu0
    %v875 = vpop.f32.mrb[0].mxu0
    %v876 = vadd.f32 %v748, %v875
    %v877 = vpop.f32.mrb[0].mxu0
    %878 = vmatprep.mubr.bf16.mxu0 0
    %879 = vmatmul.mubr.bf16.gmra.mrb[0].mxu0 %v742
    %v880 = vpop.f32.mrb[0].mxu0
    %v881 = vadd.f32 %v748, %v880
    %v882 = vpop.f32.mrb[0].mxu0
    %v883 = vpop.f32.mrb[0].mxu0
    %v884 = vadd.f32 %v748, %v883
    %v885 = vpop.f32.mrb[0].mxu0
    %886 = vmatprep.mubr.bf16.mxu0 0
    %887 = vmatmul.mubr.bf16.gmra.mrb[0].mxu0 %v743
    %v888 = vpop.f32.mrb[0].mxu0
    %v889 = vadd.f32 %v748, %v888
    %v890 = vpop.f32.mrb[0].mxu0
    %v891 = vpop.f32.mrb[0].mxu0
    %v892 = vadd.f32 %v748, %v891
    %v893 = vpop.f32.mrb[0].mxu0
    %894 = vdwg.mxu0
    %v895 = vpack.c.bf16 %v836, %v833
    %v896 = vpack.c.bf16 %v844, %v841
    %v897 = vpack.c.bf16 %v852, %v849
    %v898 = vpack.c.bf16 %v860, %v857
    %v899 = vpack.c.bf16 %v868, %v865
    %v900 = vpack.c.bf16 %v876, %v873
    %v901 = vpack.c.bf16 %v884, %v881
    %v902 = vpack.c.bf16 %v892, %v889
    %v904 = vlaneseq
    %v905 = vshrl.u32 %v904, 7
    %v906 = vsub.s32 0, %v905
    %v907 = vrot.slane %v343, %v906
    %v925 = vunpack.c.l.b16 %v327
    %v926 = vunpack.c.l.b16 %v328
    %v927 = vunpack.c.l.b16 %v329
    %v928 = vunpack.c.l.b16 %v330
    %v929 = vunpack.c.l.b16 %v331
    %v930 = vunpack.c.l.b16 %v332
    %v931 = vunpack.c.l.b16 %v333
    %v932 = vunpack.c.l.b16 %v334
    %v933 = vunpack.c.l.b16 %v335
    %v934 = vunpack.c.l.b16 %v336
    %v935 = vunpack.c.l.b16 %v337
    %v936 = vunpack.c.l.b16 %v338
    %v937 = vunpack.c.l.b16 %v339
    %v938 = vunpack.c.l.b16 %v340
    %v939 = vunpack.c.l.b16 %v341
    %v940 = vunpack.c.l.b16 %v342
    %v941 = vpack.c.b16 %v926, %v925
    %v942 = vpack.c.b16 %v928, %v927
    %v943 = vpack.c.b16 %v930, %v929
    %v944 = vpack.c.b16 %v932, %v931
    %v945 = vpack.c.b16 %v934, %v933
    %v946 = vpack.c.b16 %v936, %v935
    %v947 = vpack.c.b16 %v938, %v937
    %v948 = vpack.c.b16 %v940, %v939
    %957 = vmatprep.subr.bf16.mxu0 0
    %958 = vmatpush1.bf16.msra.mxu0 %v941
    %959 = vmatprep.subr.bf16.mxu0 0
    %960 = vmatpush1.bf16.msra.mxu0 %v942
    %961 = vmatprep.subr.bf16.mxu0 0
    %962 = vmatpush1.bf16.msra.mxu0 %v943
    %963 = vmatprep.subr.bf16.mxu0 0
    %964 = vmatpush1.bf16.msra.mxu0 %v944
    %965 = vmatprep.subr.bf16.mxu0 0
    %966 = vmatpush1.bf16.msra.mxu0 %v945
    %967 = vmatprep.subr.bf16.mxu0 0
    %968 = vmatpush1.bf16.msra.mxu0 %v946
    %969 = vmatprep.subr.bf16.mxu0 0
    %970 = vmatpush1.bf16.msra.mxu0 %v947
    %971 = vmatprep.subr.bf16.mxu0 0
    %972 = vmatpush1.bf16.msra.mxu0 %v948
    %973 = vmatprep.subr.bf16.mxu0 0
    %974 = vmatpush1.bf16.msra.mxu0 0
    %975 = vmatprep.subr.bf16.mxu0 0
    %976 = vmatpush1.bf16.msra.mxu0 0
    %977 = vmatprep.subr.bf16.mxu0 0
    %978 = vmatpush1.bf16.msra.mxu0 0
    %979 = vmatprep.subr.bf16.mxu0 0
    %980 = vmatpush1.bf16.msra.mxu0 0
    %981 = vmatprep.subr.bf16.mxu0 0
    %982 = vmatpush1.bf16.msra.mxu0 0
    %983 = vmatprep.subr.bf16.mxu0 0
    %984 = vmatpush1.bf16.msra.mxu0 0
    %985 = vmatprep.subr.bf16.mxu0 0
    %986 = vmatpush1.bf16.msra.mxu0 0
    %987 = vmatprep.subr.bf16.mxu0 0
    %988 = vmatpush1.bf16.msra.mxu0 0
    %989 = vmatprep.mubr.bf16.mxu0 0
    %990 = vmatmul.mubr.bf16.gmra.mrb[0].mxu0 %v895
    %v991 = vpop.f32.mrb[0].mxu0
    %v992 = vadd.f32 %v907, %v991
    %v993 = vpop.f32.mrb[0].mxu0
    %v994 = vpop.f32.mrb[0].mxu0
    %v995 = vadd.f32 %v907, %v994
    %v996 = vpop.f32.mrb[0].mxu0
    %997 = vmatprep.mubr.bf16.mxu0 0
    %998 = vmatmul.mubr.bf16.gmra.mrb[0].mxu0 %v896
    %v999 = vpop.f32.mrb[0].mxu0
    %v1000 = vadd.f32 %v907, %v999
    %v1001 = vpop.f32.mrb[0].mxu0
    %v1002 = vpop.f32.mrb[0].mxu0
    %v1003 = vadd.f32 %v907, %v1002
    %v1004 = vpop.f32.mrb[0].mxu0
    %1005 = vmatprep.mubr.bf16.mxu0 0
    %1006 = vmatmul.mubr.bf16.gmra.mrb[0].mxu0 %v897
    %v1007 = vpop.f32.mrb[0].mxu0
    %v1008 = vadd.f32 %v907, %v1007
    %v1009 = vpop.f32.mrb[0].mxu0
    %v1010 = vpop.f32.mrb[0].mxu0
    %v1011 = vadd.f32 %v907, %v1010
    %v1012 = vpop.f32.mrb[0].mxu0
    %1013 = vmatprep.mubr.bf16.mxu0 0
    %1014 = vmatmul.mubr.bf16.gmra.mrb[0].mxu0 %v898
    %v1015 = vpop.f32.mrb[0].mxu0
    %v1016 = vadd.f32 %v907, %v1015
    %v1017 = vpop.f32.mrb[0].mxu0
    %v1018 = vpop.f32.mrb[0].mxu0
    %v1019 = vadd.f32 %v907, %v1018
    %v1020 = vpop.f32.mrb[0].mxu0
    %1021 = vmatprep.mubr.bf16.mxu0 0
    %1022 = vmatmul.mubr.bf16.gmra.mrb[0].mxu0 %v899
    %v1023 = vpop.f32.mrb[0].mxu0
    %v1024 = vadd.f32 %v907, %v1023
    %v1025 = vpop.f32.mrb[0].mxu0
    %v1026 = vpop.f32.mrb[0].mxu0
    %v1027 = vadd.f32 %v907, %v1026
    %v1028 = vpop.f32.mrb[0].mxu0
    %1029 = vmatprep.mubr.bf16.mxu0 0
    %1030 = vmatmul.mubr.bf16.gmra.mrb[0].mxu0 %v900
    %v1031 = vpop.f32.mrb[0].mxu0
    %v1032 = vadd.f32 %v907, %v1031
    %v1033 = vpop.f32.mrb[0].mxu0
    %v1034 = vpop.f32.mrb[0].mxu0
    %v1035 = vadd.f32 %v907, %v1034
    %v1036 = vpop.f32.mrb[0].mxu0
    %1037 = vmatprep.mubr.bf16.mxu0 0
    %1038 = vmatmul.mubr.bf16.gmra.mrb[0].mxu0 %v901
    %v1039 = vpop.f32.mrb[0].mxu0
    %v1040 = vadd.f32 %v907, %v1039
    %v1041 = vpop.f32.mrb[0].mxu0
    %v1042 = vpop.f32.mrb[0].mxu0
    %v1043 = vadd.f32 %v907, %v1042
    %v1044 = vpop.f32.mrb[0].mxu0
    %1045 = vmatprep.mubr.bf16.mxu0 0
    %1046 = vmatmul.mubr.bf16.gmra.mrb[0].mxu0 %v902
    %v1047 = vpop.f32.mrb[0].mxu0
    %v1048 = vadd.f32 %v907, %v1047
    %v1049 = vpop.f32.mrb[0].mxu0
    %v1050 = vpop.f32.mrb[0].mxu0
    %v1051 = vadd.f32 %v907, %v1050
    %v1052 = vpop.f32.mrb[0].mxu0
    %1053 = vdwg.mxu0
    %v1054 = vmax.f32 %v992, 0.0
    %v1055 = vmax.f32 %v995, 0.0
    %v1056 = vmax.f32 %v1000, 0.0
    %v1057 = vmax.f32 %v1003, 0.0
    %v1058 = vmax.f32 %v1008, 0.0
    %v1059 = vmax.f32 %v1011, 0.0
    %v1060 = vmax.f32 %v1016, 0.0
    %v1061 = vmax.f32 %v1019, 0.0
    %v1062 = vmax.f32 %v1024, 0.0
    %v1063 = vmax.f32 %v1027, 0.0
    %v1064 = vmax.f32 %v1032, 0.0
    %v1065 = vmax.f32 %v1035, 0.0
    %v1066 = vmax.f32 %v1040, 0.0
    %v1067 = vmax.f32 %v1043, 0.0
    %v1068 = vmax.f32 %v1048, 0.0
    %v1069 = vmax.f32 %v1051, 0.0
    %v1070 = vpack.c.bf16 %v1055, %v1054
    %v1071 = vpack.c.bf16 %v1057, %v1056
    %v1072 = vpack.c.bf16 %v1059, %v1058
    %v1073 = vpack.c.bf16 %v1061, %v1060
    %v1074 = vpack.c.bf16 %v1063, %v1062
    %v1075 = vpack.c.bf16 %v1065, %v1064
    %v1076 = vpack.c.bf16 %v1067, %v1066
    %v1077 = vpack.c.bf16 %v1069, %v1068
    %v1079 = vlaneseq
    %v1080 = vshrl.u32 %v1079, 7
    %v1081 = vsub.s32 0, %v1080
    %v1082 = vrot.slane %v360, %v1081
    %v1100 = vunpack.c.l.b16 %v344
    %v1101 = vunpack.c.l.b16 %v345
    %v1102 = vunpack.c.l.b16 %v346
    %v1103 = vunpack.c.l.b16 %v347
    %v1104 = vunpack.c.l.b16 %v348
    %v1105 = vunpack.c.l.b16 %v349
    %v1106 = vunpack.c.l.b16 %v350
    %v1107 = vunpack.c.l.b16 %v351
    %v1108 = vunpack.c.l.b16 %v352
    %v1109 = vunpack.c.l.b16 %v353
    %v1110 = vunpack.c.l.b16 %v354
    %v1111 = vunpack.c.l.b16 %v355
    %v1112 = vunpack.c.l.b16 %v356
    %v1113 = vunpack.c.l.b16 %v357
    %v1114 = vunpack.c.l.b16 %v358
    %v1115 = vunpack.c.l.b16 %v359
    %v1116 = vpack.c.b16 %v1101, %v1100
    %v1117 = vpack.c.b16 %v1103, %v1102
    %v1118 = vpack.c.b16 %v1105, %v1104
    %v1119 = vpack.c.b16 %v1107, %v1106
    %v1120 = vpack.c.b16 %v1109, %v1108
    %v1121 = vpack.c.b16 %v1111, %v1110
    %v1122 = vpack.c.b16 %v1113, %v1112
    %v1123 = vpack.c.b16 %v1115, %v1114
    %1132 = vmatprep.subr.bf16.mxu0 0
    %1133 = vmatpush1.bf16.msra.mxu0 %v1116
    %1134 = vmatprep.subr.bf16.mxu0 0
    %1135 = vmatpush1.bf16.msra.mxu0 %v1117
    %1136 = vmatprep.subr.bf16.mxu0 0
    %1137 = vmatpush1.bf16.msra.mxu0 %v1118
    %1138 = vmatprep.subr.bf16.mxu0 0
    %1139 = vmatpush1.bf16.msra.mxu0 %v1119
    %1140 = vmatprep.subr.bf16.mxu0 0
    %1141 = vmatpush1.bf16.msra.mxu0 %v1120
    %1142 = vmatprep.subr.bf16.mxu0 0
    %1143 = vmatpush1.bf16.msra.mxu0 %v1121
    %1144 = vmatprep.subr.bf16.mxu0 0
    %1145 = vmatpush1.bf16.msra.mxu0 %v1122
    %1146 = vmatprep.subr.bf16.mxu0 0
    %1147 = vmatpush1.bf16.msra.mxu0 %v1123
    %1148 = vmatprep.subr.bf16.mxu0 0
    %1149 = vmatpush1.bf16.msra.mxu0 0
    %1150 = vmatprep.subr.bf16.mxu0 0
    %1151 = vmatpush1.bf16.msra.mxu0 0
    %1152 = vmatprep.subr.bf16.mxu0 0
    %1153 = vmatpush1.bf16.msra.mxu0 0
    %1154 = vmatprep.subr.bf16.mxu0 0
    %1155 = vmatpush1.bf16.msra.mxu0 0
    %1156 = vmatprep.subr.bf16.mxu0 0
    %1157 = vmatpush1.bf16.msra.mxu0 0
    %1158 = vmatprep.subr.bf16.mxu0 0
    %1159 = vmatpush1.bf16.msra.mxu0 0
    %1160 = vmatprep.subr.bf16.mxu0 0
    %1161 = vmatpush1.bf16.msra.mxu0 0
    %1162 = vmatprep.subr.bf16.mxu0 0
    %1163 = vmatpush1.bf16.msra.mxu0 0
    %1164 = vmatprep.mubr.bf16.mxu0 0
    %1165 = vmatmul.mubr.bf16.gmra.mrb[0].mxu0 %v1070
    %v1166 = vpop.f32.mrb[0].mxu0
    %v1167 = vadd.f32 %v1082, %v1166
    %v1168 = vpop.f32.mrb[0].mxu0
    %v1169 = vpop.f32.mrb[0].mxu0
    %v1170 = vadd.f32 %v1082, %v1169
    %v1171 = vpop.f32.mrb[0].mxu0
    %1172 = vmatprep.mubr.bf16.mxu0 0
    %1173 = vmatmul.mubr.bf16.gmra.mrb[0].mxu0 %v1071
    %v1174 = vpop.f32.mrb[0].mxu0
    %v1175 = vadd.f32 %v1082, %v1174
    %v1176 = vpop.f32.mrb[0].mxu0
    %v1177 = vpop.f32.mrb[0].mxu0
    %v1178 = vadd.f32 %v1082, %v1177
    %v1179 = vpop.f32.mrb[0].mxu0
    %1180 = vmatprep.mubr.bf16.mxu0 0
    %1181 = vmatmul.mubr.bf16.gmra.mrb[0].mxu0 %v1072
    %v1182 = vpop.f32.mrb[0].mxu0
    %v1183 = vadd.f32 %v1082, %v1182
    %v1184 = vpop.f32.mrb[0].mxu0
    %v1185 = vpop.f32.mrb[0].mxu0
    %v1186 = vadd.f32 %v1082, %v1185
    %v1187 = vpop.f32.mrb[0].mxu0
    %1188 = vmatprep.mubr.bf16.mxu0 0
    %1189 = vmatmul.mubr.bf16.gmra.mrb[0].mxu0 %v1073
    %v1190 = vpop.f32.mrb[0].mxu0
    %v1191 = vadd.f32 %v1082, %v1190
    %v1192 = vpop.f32.mrb[0].mxu0
    %v1193 = vpop.f32.mrb[0].mxu0
    %v1194 = vadd.f32 %v1082, %v1193
    %v1195 = vpop.f32.mrb[0].mxu0
    %1196 = vmatprep.mubr.bf16.mxu0 0
    %1197 = vmatmul.mubr.bf16.gmra.mrb[0].mxu0 %v1074
    %v1198 = vpop.f32.mrb[0].mxu0
    %v1199 = vadd.f32 %v1082, %v1198
    %v1200 = vpop.f32.mrb[0].mxu0
    %v1201 = vpop.f32.mrb[0].mxu0
    %v1202 = vadd.f32 %v1082, %v1201
    %v1203 = vpop.f32.mrb[0].mxu0
    %1204 = vmatprep.mubr.bf16.mxu0 0
    %1205 = vmatmul.mubr.bf16.gmra.mrb[0].mxu0 %v1075
    %v1206 = vpop.f32.mrb[0].mxu0
    %v1207 = vadd.f32 %v1082, %v1206
    %v1208 = vpop.f32.mrb[0].mxu0
    %v1209 = vpop.f32.mrb[0].mxu0
    %v1210 = vadd.f32 %v1082, %v1209
    %v1211 = vpop.f32.mrb[0].mxu0
    %1212 = vmatprep.mubr.bf16.mxu0 0
    %1213 = vmatmul.mubr.bf16.gmra.mrb[0].mxu0 %v1076
    %v1214 = vpop.f32.mrb[0].mxu0
    %v1215 = vadd.f32 %v1082, %v1214
    %v1216 = vpop.f32.mrb[0].mxu0
    %v1217 = vpop.f32.mrb[0].mxu0
    %v1218 = vadd.f32 %v1082, %v1217
    %v1219 = vpop.f32.mrb[0].mxu0
    %1220 = vmatprep.mubr.bf16.mxu0 0
    %1221 = vmatmul.mubr.bf16.gmra.mrb[0].mxu0 %v1077
    %v1222 = vpop.f32.mrb[0].mxu0
    %v1223 = vadd.f32 %v1082, %v1222
    %v1224 = vpop.f32.mrb[0].mxu0
    %v1225 = vpop.f32.mrb[0].mxu0
    %v1226 = vadd.f32 %v1082, %v1225
    %v1227 = vpop.f32.mrb[0].mxu0
    %1228 = vdwg.mxu0
    %v1229 = vpack.c.bf16 %v1170, %v1167
    %v1230 = vpack.c.bf16 %v1178, %v1175
    %v1231 = vpack.c.bf16 %v1186, %v1183
    %v1232 = vpack.c.bf16 %v1194, %v1191
    %v1233 = vpack.c.bf16 %v1202, %v1199
    %v1234 = vpack.c.bf16 %v1210, %v1207
    %v1235 = vpack.c.bf16 %v1218, %v1215
    %v1236 = vpack.c.bf16 %v1226, %v1223
    %v1253 = vunpack.c.l.b16 %v277
    %v1254 = vunpack.c.l.b16 %v278
    %v1255 = vunpack.c.l.b16 %v279
    %v1256 = vunpack.c.l.b16 %v280
    %v1257 = vunpack.c.l.b16 %v281
    %v1258 = vunpack.c.l.b16 %v282
    %v1259 = vunpack.c.l.b16 %v283
    %v1260 = vunpack.c.l.b16 %v284
    %v1261 = vunpack.c.l.b16 %v285
    %v1262 = vunpack.c.l.b16 %v286
    %v1263 = vunpack.c.l.b16 %v287
    %v1264 = vunpack.c.l.b16 %v288
    %v1265 = vunpack.c.l.b16 %v289
    %v1266 = vunpack.c.l.b16 %v290
    %v1267 = vunpack.c.l.b16 %v291
    %v1268 = vunpack.c.l.b16 %v292
    %v1269 = vpack.c.b16 %v1254, %v1253
    %v1270 = vpack.c.b16 %v1256, %v1255
    %v1271 = vpack.c.b16 %v1258, %v1257
    %v1272 = vpack.c.b16 %v1260, %v1259
    %v1273 = vpack.c.b16 %v1262, %v1261
    %v1274 = vpack.c.b16 %v1264, %v1263
    %v1275 = vpack.c.b16 %v1266, %v1265
    %v1276 = vpack.c.b16 %v1268, %v1267
    %1285 = vmatprep.subr.bf16.mxu0 0
    %1286 = vmatpush1.bf16.msra.mxu0 %v1229
    %1287 = vmatprep.subr.bf16.mxu0 0
    %1288 = vmatpush1.bf16.msra.mxu0 %v1230
    %1289 = vmatprep.subr.bf16.mxu0 0
    %1290 = vmatpush1.bf16.msra.mxu0 %v1231
    %1291 = vmatprep.subr.bf16.mxu0 0
    %1292 = vmatpush1.bf16.msra.mxu0 %v1232
    %1293 = vmatprep.subr.bf16.mxu0 0
    %1294 = vmatpush1.bf16.msra.mxu0 %v1233
    %1295 = vmatprep.subr.bf16.mxu0 0
    %1296 = vmatpush1.bf16.msra.mxu0 %v1234
    %1297 = vmatprep.subr.bf16.mxu0 0
    %1298 = vmatpush1.bf16.msra.mxu0 %v1235
    %1299 = vmatprep.subr.bf16.mxu0 0
    %1300 = vmatpush1.bf16.msra.mxu0 %v1236
    %1301 = vmatprep.subr.bf16.mxu0 0
    %1302 = vmatpush1.bf16.msra.mxu0 0
    %1303 = vmatprep.subr.bf16.mxu0 0
    %1304 = vmatpush1.bf16.msra.mxu0 0
    %1305 = vmatprep.subr.bf16.mxu0 0
    %1306 = vmatpush1.bf16.msra.mxu0 0
    %1307 = vmatprep.subr.bf16.mxu0 0
    %1308 = vmatpush1.bf16.msra.mxu0 0
    %1309 = vmatprep.subr.bf16.mxu0 0
    %1310 = vmatpush1.bf16.msra.mxu0 0
    %1311 = vmatprep.subr.bf16.mxu0 0
    %1312 = vmatpush1.bf16.msra.mxu0 0
    %1313 = vmatprep.subr.bf16.mxu0 0
    %1314 = vmatpush1.bf16.msra.mxu0 0
    %1315 = vmatprep.subr.bf16.mxu0 0
    %1316 = vmatpush1.bf16.msra.mxu0 0
    %1317 = vmatprep.mubr.bf16.mxu0 0
    %1318 = vmatmul.mubr.bf16.gmra.mrb[0].mxu0 %v1269
    %v1319 = vpop.f32.mrb[0].mxu0
    %v1320 = vadd.f32 0.0, %v1319
    %v1321 = vpop.f32.mrb[0].mxu0
    %v1322 = vpop.f32.mrb[0].mxu0
    %v1323 = vadd.f32 0.0, %v1322
    %v1324 = vpop.f32.mrb[0].mxu0
    %1325 = vmatprep.mubr.bf16.mxu0 0
    %1326 = vmatmul.mubr.bf16.gmra.mrb[0].mxu0 %v1270
    %v1327 = vpop.f32.mrb[0].mxu0
    %v1328 = vadd.f32 0.0, %v1327
    %v1329 = vpop.f32.mrb[0].mxu0
    %v1330 = vpop.f32.mrb[0].mxu0
    %v1331 = vadd.f32 0.0, %v1330
    %v1332 = vpop.f32.mrb[0].mxu0
    %1333 = vmatprep.mubr.bf16.mxu0 0
    %1334 = vmatmul.mubr.bf16.gmra.mrb[0].mxu0 %v1271
    %v1335 = vpop.f32.mrb[0].mxu0
    %v1336 = vadd.f32 0.0, %v1335
    %v1337 = vpop.f32.mrb[0].mxu0
    %v1338 = vpop.f32.mrb[0].mxu0
    %v1339 = vadd.f32 0.0, %v1338
    %v1340 = vpop.f32.mrb[0].mxu0
    %1341 = vmatprep.mubr.bf16.mxu0 0
    %1342 = vmatmul.mubr.bf16.gmra.mrb[0].mxu0 %v1272
    %v1343 = vpop.f32.mrb[0].mxu0
    %v1344 = vadd.f32 0.0, %v1343
    %v1345 = vpop.f32.mrb[0].mxu0
    %v1346 = vpop.f32.mrb[0].mxu0
    %v1347 = vadd.f32 0.0, %v1346
    %v1348 = vpop.f32.mrb[0].mxu0
    %1349 = vmatprep.mubr.bf16.mxu0 0
    %1350 = vmatmul.mubr.bf16.gmra.mrb[0].mxu0 %v1273
    %v1351 = vpop.f32.mrb[0].mxu0
    %v1352 = vadd.f32 0.0, %v1351
    %v1353 = vpop.f32.mrb[0].mxu0
    %v1354 = vpop.f32.mrb[0].mxu0
    %v1355 = vadd.f32 0.0, %v1354
    %v1356 = vpop.f32.mrb[0].mxu0
    %1357 = vmatprep.mubr.bf16.mxu0 0
    %1358 = vmatmul.mubr.bf16.gmra.mrb[0].mxu0 %v1274
    %v1359 = vpop.f32.mrb[0].mxu0
    %v1360 = vadd.f32 0.0, %v1359
    %v1361 = vpop.f32.mrb[0].mxu0
    %v1362 = vpop.f32.mrb[0].mxu0
    %v1363 = vadd.f32 0.0, %v1362
    %v1364 = vpop.f32.mrb[0].mxu0
    %1365 = vmatprep.mubr.bf16.mxu0 0
    %1366 = vmatmul.mubr.bf16.gmra.mrb[0].mxu0 %v1275
    %v1367 = vpop.f32.mrb[0].mxu0
    %v1368 = vadd.f32 0.0, %v1367
    %v1369 = vpop.f32.mrb[0].mxu0
    %v1370 = vpop.f32.mrb[0].mxu0
    %v1371 = vadd.f32 0.0, %v1370
    %v1372 = vpop.f32.mrb[0].mxu0
    %1373 = vmatprep.mubr.bf16.mxu0 0
    %1374 = vmatmul.mubr.bf16.gmra.mrb[0].mxu0 %v1276
    %v1375 = vpop.f32.mrb[0].mxu0
    %v1376 = vadd.f32 0.0, %v1375
    %v1377 = vpop.f32.mrb[0].mxu0
    %v1378 = vpop.f32.mrb[0].mxu0
    %v1379 = vadd.f32 0.0, %v1378
    %v1380 = vpop.f32.mrb[0].mxu0
    %1381 = vdwg.mxu0
    %v1382 = vpack.c.bf16 %v1323, %v1320
    %v1383 = vpack.c.bf16 %v1331, %v1328
    %v1384 = vpack.c.bf16 %v1339, %v1336
    %v1385 = vpack.c.bf16 %v1347, %v1344
    %v1386 = vpack.c.bf16 %v1355, %v1352
    %v1387 = vpack.c.bf16 %v1363, %v1360
    %v1388 = vpack.c.bf16 %v1371, %v1368
    %v1389 = vpack.c.bf16 %v1379, %v1376
    %v1391 = vlaneseq
    %v1392 = vshrl.u32 %v1391, 7
    %v1393 = vsub.s32 0, %v1392
    %v1394 = vrot.slane %v459, %v1393
    %v1395 = vlaneseq
    %v1396 = vshrl.u32 %v1395, 7
    %v1397 = vsub.s32 1, %v1396
    %v1398 = vrot.slane %v459, %v1397
    %v1399 = vlaneseq
    %v1400 = vshrl.u32 %v1399, 7
    %v1401 = vsub.s32 2, %v1400
    %v1402 = vrot.slane %v459, %v1401
    %v1438 = vunpack.c.l.b16 %v395
    %v1439 = vunpack.c.h.b16 %v395
    %v1440 = vunpack.c.l.b16 %v396
    %v1441 = vunpack.c.l.b16 %v397
    %v1442 = vunpack.c.h.b16 %v397
    %v1443 = vunpack.c.l.b16 %v398
    %v1444 = vunpack.c.l.b16 %v399
    %v1445 = vunpack.c.h.b16 %v399
    %v1446 = vunpack.c.l.b16 %v400
    %v1447 = vunpack.c.l.b16 %v401
    %v1448 = vunpack.c.h.b16 %v401
    %v1449 = vunpack.c.l.b16 %v402
    %v1450 = vunpack.c.l.b16 %v403
    %v1451 = vunpack.c.h.b16 %v403
    %v1452 = vunpack.c.l.b16 %v404
    %v1453 = vunpack.c.l.b16 %v405
    %v1454 = vunpack.c.h.b16 %v405
    %v1455 = vunpack.c.l.b16 %v406
    %v1456 = vunpack.c.l.b16 %v407
    %v1457 = vunpack.c.h.b16 %v407
    %v1458 = vunpack.c.l.b16 %v408
    %v1459 = vunpack.c.l.b16 %v409
    %v1460 = vunpack.c.h.b16 %v409
    %v1461 = vunpack.c.l.b16 %v410
    %v1462 = vunpack.c.l.b16 %v411
    %v1463 = vunpack.c.h.b16 %v411
    %v1464 = vunpack.c.l.b16 %v412
    %v1465 = vunpack.c.l.b16 %v413
    %v1466 = vunpack.c.h.b16 %v413
    %v1467 = vunpack.c.l.b16 %v414
    %v1468 = vunpack.c.l.b16 %v415
    %v1469 = vunpack.c.h.b16 %v415
    %v1470 = vunpack.c.l.b16 %v416
    %v1471 = vunpack.c.l.b16 %v417
    %v1472 = vunpack.c.h.b16 %v417
    %v1473 = vunpack.c.l.b16 %v418
    %v1474 = vunpack.c.l.b16 %v419
    %v1475 = vunpack.c.h.b16 %v419
    %v1476 = vunpack.c.l.b16 %v420
    %v1477 = vunpack.c.l.b16 %v421
    %v1478 = vunpack.c.h.b16 %v421
    %v1479 = vunpack.c.l.b16 %v422
    %v1480 = vunpack.c.l.b16 %v423
    %v1481 = vunpack.c.h.b16 %v423
    %v1482 = vunpack.c.l.b16 %v424
    %v1483 = vunpack.c.l.b16 %v425
    %v1484 = vunpack.c.h.b16 %v425
    %v1485 = vunpack.c.l.b16 %v426
    %v1486 = vpack.c.b16 %v1441, %v1438
    %v1487 = vpack.c.b16 %v1442, %v1439
    %v1488 = vpack.c.b16 %v1443, %v1440
    %v1489 = vpack.c.b16 %v1447, %v1444
    %v1490 = vpack.c.b16 %v1448, %v1445
    %v1491 = vpack.c.b16 %v1449, %v1446
    %v1492 = vpack.c.b16 %v1453, %v1450
    %v1493 = vpack.c.b16 %v1454, %v1451
    %v1494 = vpack.c.b16 %v1455, %v1452
    %v1495 = vpack.c.b16 %v1459, %v1456
    %v1496 = vpack.c.b16 %v1460, %v1457
    %v1497 = vpack.c.b16 %v1461, %v1458
    %v1498 = vpack.c.b16 %v1465, %v1462
    %v1499 = vpack.c.b16 %v1466, %v1463
    %v1500 = vpack.c.b16 %v1467, %v1464
    %v1501 = vpack.c.b16 %v1471, %v1468
    %v1502 = vpack.c.b16 %v1472, %v1469
    %v1503 = vpack.c.b16 %v1473, %v1470
    %v1504 = vpack.c.b16 %v1477, %v1474
    %v1505 = vpack.c.b16 %v1478, %v1475
    %v1506 = vpack.c.b16 %v1479, %v1476
    %v1507 = vpack.c.b16 %v1483, %v1480
    %v1508 = vpack.c.b16 %v1484, %v1481
    %v1509 = vpack.c.b16 %v1485, %v1482
    %1534 = vmatprep.subr.bf16.mxu0 %v1487
    %1535 = vmatpush1.bf16.msra.mxu0 %v1486
    %1536 = vmatprep.subr.bf16.mxu0 %v1490
    %1537 = vmatpush1.bf16.msra.mxu0 %v1489
    %1538 = vmatprep.subr.bf16.mxu0 %v1493
    %1539 = vmatpush1.bf16.msra.mxu0 %v1492
    %1540 = vmatprep.subr.bf16.mxu0 %v1496
    %1541 = vmatpush1.bf16.msra.mxu0 %v1495
    %1542 = vmatprep.subr.bf16.mxu0 %v1499
    %1543 = vmatpush1.bf16.msra.mxu0 %v1498
    %1544 = vmatprep.subr.bf16.mxu0 %v1502
    %1545 = vmatpush1.bf16.msra.mxu0 %v1501
    %1546 = vmatprep.subr.bf16.mxu0 %v1505
    %1547 = vmatpush1.bf16.msra.mxu0 %v1504
    %1548 = vmatprep.subr.bf16.mxu0 %v1508
    %1549 = vmatpush1.bf16.msra.mxu0 %v1507
    %1550 = vmatprep.subr.bf16.mxu0 0
    %1551 = vmatpush1.bf16.msra.mxu0 0
    %1552 = vmatprep.subr.bf16.mxu0 0
    %1553 = vmatpush1.bf16.msra.mxu0 0
    %1554 = vmatprep.subr.bf16.mxu0 0
    %1555 = vmatpush1.bf16.msra.mxu0 0
    %1556 = vmatprep.subr.bf16.mxu0 0
    %1557 = vmatpush1.bf16.msra.mxu0 0
    %1558 = vmatprep.subr.bf16.mxu0 0
    %1559 = vmatpush1.bf16.msra.mxu0 0
    %1560 = vmatprep.subr.bf16.mxu0 0
    %1561 = vmatpush1.bf16.msra.mxu0 0
    %1562 = vmatprep.subr.bf16.mxu0 0
    %1563 = vmatpush1.bf16.msra.mxu0 0
    %1564 = vmatprep.subr.bf16.mxu0 0
    %1565 = vmatpush1.bf16.msra.mxu0 0
    %1566 = vmatprep.mubr.bf16.mxu0 0
    %1567 = vmatmul.mubr.bf16.gmra.mrb[0].mxu0 %v1382
    %v1568 = vpop.f32.mrb[0].mxu0
    %v1569 = vadd.f32 %v1394, %v1568
    %v1570 = vpop.f32.mrb[0].mxu0
    %v1571 = vadd.f32 %v1398, %v1570
    %v1572 = vpop.f32.mrb[0].mxu0
    %v1573 = vadd.f32 %v1394, %v1572
    %v1574 = vpop.f32.mrb[0].mxu0
    %v1575 = vadd.f32 %v1398, %v1574
    %1576 = vmatprep.mubr.bf16.mxu0 0
    %1577 = vmatmul.mubr.bf16.gmra.mrb[0].mxu0 %v1383
    %v1578 = vpop.f32.mrb[0].mxu0
    %v1579 = vadd.f32 %v1394, %v1578
    %v1580 = vpop.f32.mrb[0].mxu0
    %v1581 = vadd.f32 %v1398, %v1580
    %v1582 = vpop.f32.mrb[0].mxu0
    %v1583 = vadd.f32 %v1394, %v1582
    %v1584 = vpop.f32.mrb[0].mxu0
    %v1585 = vadd.f32 %v1398, %v1584
    %1586 = vmatprep.mubr.bf16.mxu0 0
    %1587 = vmatmul.mubr.bf16.gmra.mrb[0].mxu0 %v1384
    %v1588 = vpop.f32.mrb[0].mxu0
    %v1589 = vadd.f32 %v1394, %v1588
    %v1590 = vpop.f32.mrb[0].mxu0
    %v1591 = vadd.f32 %v1398, %v1590
    %v1592 = vpop.f32.mrb[0].mxu0
    %v1593 = vadd.f32 %v1394, %v1592
    %v1594 = vpop.f32.mrb[0].mxu0
    %v1595 = vadd.f32 %v1398, %v1594
    %1596 = vmatprep.mubr.bf16.mxu0 0
    %1597 = vmatmul.mubr.bf16.gmra.mrb[0].mxu0 %v1385
    %v1598 = vpop.f32.mrb[0].mxu0
    %v1599 = vadd.f32 %v1394, %v1598
    %v1600 = vpop.f32.mrb[0].mxu0
    %v1601 = vadd.f32 %v1398, %v1600
    %v1602 = vpop.f32.mrb[0].mxu0
    %v1603 = vadd.f32 %v1394, %v1602
    %v1604 = vpop.f32.mrb[0].mxu0
    %v1605 = vadd.f32 %v1398, %v1604
    %1606 = vmatprep.mubr.bf16.mxu0 0
    %1607 = vmatmul.mubr.bf16.gmra.mrb[0].mxu0 %v1386
    %v1608 = vpop.f32.mrb[0].mxu0
    %v1609 = vadd.f32 %v1394, %v1608
    %v1610 = vpop.f32.mrb[0].mxu0
    %v1611 = vadd.f32 %v1398, %v1610
    %v1612 = vpop.f32.mrb[0].mxu0
    %v1613 = vadd.f32 %v1394, %v1612
    %v1614 = vpop.f32.mrb[0].mxu0
    %v1615 = vadd.f32 %v1398, %v1614
    %1616 = vmatprep.mubr.bf16.mxu0 0
    %1617 = vmatmul.mubr.bf16.gmra.mrb[0].mxu0 %v1387
    %v1618 = vpop.f32.mrb[0].mxu0
    %v1619 = vadd.f32 %v1394, %v1618
    %v1620 = vpop.f32.mrb[0].mxu0
    %v1621 = vadd.f32 %v1398, %v1620
    %v1622 = vpop.f32.mrb[0].mxu0
    %v1623 = vadd.f32 %v1394, %v1622
    %v1624 = vpop.f32.mrb[0].mxu0
    %v1625 = vadd.f32 %v1398, %v1624
    %1626 = vmatprep.mubr.bf16.mxu0 0
    %1627 = vmatmul.mubr.bf16.gmra.mrb[0].mxu0 %v1388
    %v1628 = vpop.f32.mrb[0].mxu0
    %v1629 = vadd.f32 %v1394, %v1628
    %v1630 = vpop.f32.mrb[0].mxu0
    %v1631 = vadd.f32 %v1398, %v1630
    %v1632 = vpop.f32.mrb[0].mxu0
    %v1633 = vadd.f32 %v1394, %v1632
    %v1634 = vpop.f32.mrb[0].mxu0
    %v1635 = vadd.f32 %v1398, %v1634
    %1636 = vmatprep.mubr.bf16.mxu0 0
    %1637 = vmatmul.mubr.bf16.gmra.mrb[0].mxu0 %v1389
    %v1638 = vpop.f32.mrb[0].mxu0
    %v1639 = vadd.f32 %v1394, %v1638
    %v1640 = vpop.f32.mrb[0].mxu0
    %v1641 = vadd.f32 %v1398, %v1640
    %v1642 = vpop.f32.mrb[0].mxu0
    %v1643 = vadd.f32 %v1394, %v1642
    %v1644 = vpop.f32.mrb[0].mxu0
    %v1645 = vadd.f32 %v1398, %v1644
    %1646 = vdwg.mxu0
    %1647 = vmatprep.subr.bf16.mxu0 0
    %1648 = vmatpush1.bf16.msra.mxu0 %v1488
    %1649 = vmatprep.subr.bf16.mxu0 0
    %1650 = vmatpush1.bf16.msra.mxu0 %v1491
    %1651 = vmatprep.subr.bf16.mxu0 0
    %1652 = vmatpush1.bf16.msra.mxu0 %v1494
    %1653 = vmatprep.subr.bf16.mxu0 0
    %1654 = vmatpush1.bf16.msra.mxu0 %v1497
    %1655 = vmatprep.subr.bf16.mxu0 0
    %1656 = vmatpush1.bf16.msra.mxu0 %v1500
    %1657 = vmatprep.subr.bf16.mxu0 0
    %1658 = vmatpush1.bf16.msra.mxu0 %v1503
    %1659 = vmatprep.subr.bf16.mxu0 0
    %1660 = vmatpush1.bf16.msra.mxu0 %v1506
    %1661 = vmatprep.subr.bf16.mxu0 0
    %1662 = vmatpush1.bf16.msra.mxu0 %v1509
    %1663 = vmatprep.subr.bf16.mxu0 0
    %1664 = vmatpush1.bf16.msra.mxu0 0
    %1665 = vmatprep.subr.bf16.mxu0 0
    %1666 = vmatpush1.bf16.msra.mxu0 0
    %1667 = vmatprep.subr.bf16.mxu0 0
    %1668 = vmatpush1.bf16.msra.mxu0 0
    %1669 = vmatprep.subr.bf16.mxu0 0
    %1670 = vmatpush1.bf16.msra.mxu0 0
    %1671 = vmatprep.subr.bf16.mxu0 0
    %1672 = vmatpush1.bf16.msra.mxu0 0
    %1673 = vmatprep.subr.bf16.mxu0 0
    %1674 = vmatpush1.bf16.msra.mxu0 0
    %1675 = vmatprep.subr.bf16.mxu0 0
    %1676 = vmatpush1.bf16.msra.mxu0 0
    %1677 = vmatprep.subr.bf16.mxu0 0
    %1678 = vmatpush1.bf16.msra.mxu0 0
    %1679 = vmatprep.mubr.bf16.mxu0 0
    %1680 = vmatmul.mubr.bf16.gmra.mrb[0].mxu0 %v1382
    %v1681 = vpop.f32.mrb[0].mxu0
    %v1682 = vadd.f32 %v1402, %v1681
    %v1683 = vpop.f32.mrb[0].mxu0
    %v1684 = vpop.f32.mrb[0].mxu0
    %v1685 = vadd.f32 %v1402, %v1684
    %v1686 = vpop.f32.mrb[0].mxu0
    %1687 = vmatprep.mubr.bf16.mxu0 0
    %1688 = vmatmul.mubr.bf16.gmra.mrb[0].mxu0 %v1383
    %v1689 = vpop.f32.mrb[0].mxu0
    %v1690 = vadd.f32 %v1402, %v1689
    %v1691 = vpop.f32.mrb[0].mxu0
    %v1692 = vpop.f32.mrb[0].mxu0
    %v1693 = vadd.f32 %v1402, %v1692
    %v1694 = vpop.f32.mrb[0].mxu0
    %1695 = vmatprep.mubr.bf16.mxu0 0
    %1696 = vmatmul.mubr.bf16.gmra.mrb[0].mxu0 %v1384
    %v1697 = vpop.f32.mrb[0].mxu0
    %v1698 = vadd.f32 %v1402, %v1697
    %v1699 = vpop.f32.mrb[0].mxu0
    %v1700 = vpop.f32.mrb[0].mxu0
    %v1701 = vadd.f32 %v1402, %v1700
    %v1702 = vpop.f32.mrb[0].mxu0
    %1703 = vmatprep.mubr.bf16.mxu0 0
    %1704 = vmatmul.mubr.bf16.gmra.mrb[0].mxu0 %v1385
    %v1705 = vpop.f32.mrb[0].mxu0
    %v1706 = vadd.f32 %v1402, %v1705
    %v1707 = vpop.f32.mrb[0].mxu0
    %v1708 = vpop.f32.mrb[0].mxu0
    %v1709 = vadd.f32 %v1402, %v1708
    %v1710 = vpop.f32.mrb[0].mxu0
    %1711 = vmatprep.mubr.bf16.mxu0 0
    %1712 = vmatmul.mubr.bf16.gmra.mrb[0].mxu0 %v1386
    %v1713 = vpop.f32.mrb[0].mxu0
    %v1714 = vadd.f32 %v1402, %v1713
    %v1715 = vpop.f32.mrb[0].mxu0
    %v1716 = vpop.f32.mrb[0].mxu0
    %v1717 = vadd.f32 %v1402, %v1716
    %v1718 = vpop.f32.mrb[0].mxu0
    %1719 = vmatprep.mubr.bf16.mxu0 0
    %1720 = vmatmul.mubr.bf16.gmra.mrb[0].mxu0 %v1387
    %v1721 = vpop.f32.mrb[0].mxu0
    %v1722 = vadd.f32 %v1402, %v1721
    %v1723 = vpop.f32.mrb[0].mxu0
    %v1724 = vpop.f32.mrb[0].mxu0
    %v1725 = vadd.f32 %v1402, %v1724
    %v1726 = vpop.f32.mrb[0].mxu0
    %1727 = vmatprep.mubr.bf16.mxu0 0
    %1728 = vmatmul.mubr.bf16.gmra.mrb[0].mxu0 %v1388
    %v1729 = vpop.f32.mrb[0].mxu0
    %v1730 = vadd.f32 %v1402, %v1729
    %v1731 = vpop.f32.mrb[0].mxu0
    %v1732 = vpop.f32.mrb[0].mxu0
    %v1733 = vadd.f32 %v1402, %v1732
    %v1734 = vpop.f32.mrb[0].mxu0
    %1735 = vmatprep.mubr.bf16.mxu0 0
    %1736 = vmatmul.mubr.bf16.gmra.mrb[0].mxu0 %v1389
    %v1737 = vpop.f32.mrb[0].mxu0
    %v1738 = vadd.f32 %v1402, %v1737
    %v1739 = vpop.f32.mrb[0].mxu0
    %v1740 = vpop.f32.mrb[0].mxu0
    %v1741 = vadd.f32 %v1402, %v1740
    %v1742 = vpop.f32.mrb[0].mxu0
    %1743 = vdwg.mxu0
    %v1745 = vlaneseq
    %v1746 = vshrl.u32 %v1745, 7
    %v1747 = vsub.s32 0, %v1746
    %v1748 = vrot.slane %v460, %v1747
    %v1749 = vlaneseq
    %v1750 = vshrl.u32 %v1749, 7
    %v1751 = vsub.s32 1, %v1750
    %v1752 = vrot.slane %v460, %v1751
    %v1753 = vlaneseq
    %v1754 = vshrl.u32 %v1753, 7
    %v1755 = vsub.s32 2, %v1754
    %v1756 = vrot.slane %v460, %v1755
    %v1792 = vunpack.c.l.b16 %v427
    %v1793 = vunpack.c.h.b16 %v427
    %v1794 = vunpack.c.l.b16 %v428
    %v1795 = vunpack.c.l.b16 %v429
    %v1796 = vunpack.c.h.b16 %v429
    %v1797 = vunpack.c.l.b16 %v430
    %v1798 = vunpack.c.l.b16 %v431
    %v1799 = vunpack.c.h.b16 %v431
    %v1800 = vunpack.c.l.b16 %v432
    %v1801 = vunpack.c.l.b16 %v433
    %v1802 = vunpack.c.h.b16 %v433
    %v1803 = vunpack.c.l.b16 %v434
    %v1804 = vunpack.c.l.b16 %v435
    %v1805 = vunpack.c.h.b16 %v435
    %v1806 = vunpack.c.l.b16 %v436
    %v1807 = vunpack.c.l.b16 %v437
    %v1808 = vunpack.c.h.b16 %v437
    %v1809 = vunpack.c.l.b16 %v438
    %v1810 = vunpack.c.l.b16 %v439
    %v1811 = vunpack.c.h.b16 %v439
    %v1812 = vunpack.c.l.b16 %v440
    %v1813 = vunpack.c.l.b16 %v441
    %v1814 = vunpack.c.h.b16 %v441
    %v1815 = vunpack.c.l.b16 %v442
    %v1816 = vunpack.c.l.b16 %v443
    %v1817 = vunpack.c.h.b16 %v443
    %v1818 = vunpack.c.l.b16 %v444
    %v1819 = vunpack.c.l.b16 %v445
    %v1820 = vunpack.c.h.b16 %v445
    %v1821 = vunpack.c.l.b16 %v446
    %v1822 = vunpack.c.l.b16 %v447
    %v1823 = vunpack.c.h.b16 %v447
    %v1824 = vunpack.c.l.b16 %v448
    %v1825 = vunpack.c.l.b16 %v449
    %v1826 = vunpack.c.h.b16 %v449
    %v1827 = vunpack.c.l.b16 %v450
    %v1828 = vunpack.c.l.b16 %v451
    %v1829 = vunpack.c.h.b16 %v451
    %v1830 = vunpack.c.l.b16 %v452
    %v1831 = vunpack.c.l.b16 %v453
    %v1832 = vunpack.c.h.b16 %v453
    %v1833 = vunpack.c.l.b16 %v454
    %v1834 = vunpack.c.l.b16 %v455
    %v1835 = vunpack.c.h.b16 %v455
    %v1836 = vunpack.c.l.b16 %v456
    %v1837 = vunpack.c.l.b16 %v457
    %v1838 = vunpack.c.h.b16 %v457
    %v1839 = vunpack.c.l.b16 %v458
    %v1840 = vpack.c.b16 %v1795, %v1792
    %v1841 = vpack.c.b16 %v1796, %v1793
    %v1842 = vpack.c.b16 %v1797, %v1794
    %v1843 = vpack.c.b16 %v1801, %v1798
    %v1844 = vpack.c.b16 %v1802, %v1799
    %v1845 = vpack.c.b16 %v1803, %v1800
    %v1846 = vpack.c.b16 %v1807, %v1804
    %v1847 = vpack.c.b16 %v1808, %v1805
    %v1848 = vpack.c.b16 %v1809, %v1806
    %v1849 = vpack.c.b16 %v1813, %v1810
    %v1850 = vpack.c.b16 %v1814, %v1811
    %v1851 = vpack.c.b16 %v1815, %v1812
    %v1852 = vpack.c.b16 %v1819, %v1816
    %v1853 = vpack.c.b16 %v1820, %v1817
    %v1854 = vpack.c.b16 %v1821, %v1818
    %v1855 = vpack.c.b16 %v1825, %v1822
    %v1856 = vpack.c.b16 %v1826, %v1823
    %v1857 = vpack.c.b16 %v1827, %v1824
    %v1858 = vpack.c.b16 %v1831, %v1828
    %v1859 = vpack.c.b16 %v1832, %v1829
    %v1860 = vpack.c.b16 %v1833, %v1830
    %v1861 = vpack.c.b16 %v1837, %v1834
    %v1862 = vpack.c.b16 %v1838, %v1835
    %v1863 = vpack.c.b16 %v1839, %v1836
    %1888 = vmatprep.subr.bf16.mxu0 %v1841
    %1889 = vmatpush1.bf16.msra.mxu0 %v1840
    %1890 = vmatprep.subr.bf16.mxu0 %v1844
    %1891 = vmatpush1.bf16.msra.mxu0 %v1843
    %1892 = vmatprep.subr.bf16.mxu0 %v1847
    %1893 = vmatpush1.bf16.msra.mxu0 %v1846
    %1894 = vmatprep.subr.bf16.mxu0 %v1850
    %1895 = vmatpush1.bf16.msra.mxu0 %v1849
    %1896 = vmatprep.subr.bf16.mxu0 %v1853
    %1897 = vmatpush1.bf16.msra.mxu0 %v1852
    %1898 = vmatprep.subr.bf16.mxu0 %v1856
    %1899 = vmatpush1.bf16.msra.mxu0 %v1855
    %1900 = vmatprep.subr.bf16.mxu0 %v1859
    %1901 = vmatpush1.bf16.msra.mxu0 %v1858
    %1902 = vmatprep.subr.bf16.mxu0 %v1862
    %1903 = vmatpush1.bf16.msra.mxu0 %v1861
    %1904 = vmatprep.subr.bf16.mxu0 0
    %1905 = vmatpush1.bf16.msra.mxu0 0
    %1906 = vmatprep.subr.bf16.mxu0 0
    %1907 = vmatpush1.bf16.msra.mxu0 0
    %1908 = vmatprep.subr.bf16.mxu0 0
    %1909 = vmatpush1.bf16.msra.mxu0 0
    %1910 = vmatprep.subr.bf16.mxu0 0
    %1911 = vmatpush1.bf16.msra.mxu0 0
    %1912 = vmatprep.subr.bf16.mxu0 0
    %1913 = vmatpush1.bf16.msra.mxu0 0
    %1914 = vmatprep.subr.bf16.mxu0 0
    %1915 = vmatpush1.bf16.msra.mxu0 0
    %1916 = vmatprep.subr.bf16.mxu0 0
    %1917 = vmatpush1.bf16.msra.mxu0 0
    %1918 = vmatprep.subr.bf16.mxu0 0
    %1919 = vmatpush1.bf16.msra.mxu0 0
    %1920 = vmatprep.mubr.bf16.mxu0 0
    %1921 = vmatmul.mubr.bf16.gmra.mrb[0].mxu0 %v895
    %v1922 = vpop.f32.mrb[0].mxu0
    %v1923 = vadd.f32 %v1748, %v1922
    %v1924 = vpop.f32.mrb[0].mxu0
    %v1925 = vadd.f32 %v1752, %v1924
    %v1926 = vpop.f32.mrb[0].mxu0
    %v1927 = vadd.f32 %v1748, %v1926
    %v1928 = vpop.f32.mrb[0].mxu0
    %v1929 = vadd.f32 %v1752, %v1928
    %1930 = vmatprep.mubr.bf16.mxu0 0
    %1931 = vmatmul.mubr.bf16.gmra.mrb[0].mxu0 %v896
    %v1932 = vpop.f32.mrb[0].mxu0
    %v1933 = vadd.f32 %v1748, %v1932
    %v1934 = vpop.f32.mrb[0].mxu0
    %v1935 = vadd.f32 %v1752, %v1934
    %v1936 = vpop.f32.mrb[0].mxu0
    %v1937 = vadd.f32 %v1748, %v1936
    %v1938 = vpop.f32.mrb[0].mxu0
    %v1939 = vadd.f32 %v1752, %v1938
    %1940 = vmatprep.mubr.bf16.mxu0 0
    %1941 = vmatmul.mubr.bf16.gmra.mrb[0].mxu0 %v897
    %v1942 = vpop.f32.mrb[0].mxu0
    %v1943 = vadd.f32 %v1748, %v1942
    %v1944 = vpop.f32.mrb[0].mxu0
    %v1945 = vadd.f32 %v1752, %v1944
    %v1946 = vpop.f32.mrb[0].mxu0
    %v1947 = vadd.f32 %v1748, %v1946
    %v1948 = vpop.f32.mrb[0].mxu0
    %v1949 = vadd.f32 %v1752, %v1948
    %1950 = vmatprep.mubr.bf16.mxu0 0
    %1951 = vmatmul.mubr.bf16.gmra.mrb[0].mxu0 %v898
    %v1952 = vpop.f32.mrb[0].mxu0
    %v1953 = vadd.f32 %v1748, %v1952
    %v1954 = vpop.f32.mrb[0].mxu0
    %v1955 = vadd.f32 %v1752, %v1954
    %v1956 = vpop.f32.mrb[0].mxu0
    %v1957 = vadd.f32 %v1748, %v1956
    %v1958 = vpop.f32.mrb[0].mxu0
    %v1959 = vadd.f32 %v1752, %v1958
    %1960 = vmatprep.mubr.bf16.mxu0 0
    %1961 = vmatmul.mubr.bf16.gmra.mrb[0].mxu0 %v899
    %v1962 = vpop.f32.mrb[0].mxu0
    %v1963 = vadd.f32 %v1748, %v1962
    %v1964 = vpop.f32.mrb[0].mxu0
    %v1965 = vadd.f32 %v1752, %v1964
    %v1966 = vpop.f32.mrb[0].mxu0
    %v1967 = vadd.f32 %v1748, %v1966
    %v1968 = vpop.f32.mrb[0].mxu0
    %v1969 = vadd.f32 %v1752, %v1968
    %1970 = vmatprep.mubr.bf16.mxu0 0
    %1971 = vmatmul.mubr.bf16.gmra.mrb[0].mxu0 %v900
    %v1972 = vpop.f32.mrb[0].mxu0
    %v1973 = vadd.f32 %v1748, %v1972
    %v1974 = vpop.f32.mrb[0].mxu0
    %v1975 = vadd.f32 %v1752, %v1974
    %v1976 = vpop.f32.mrb[0].mxu0
    %v1977 = vadd.f32 %v1748, %v1976
    %v1978 = vpop.f32.mrb[0].mxu0
    %v1979 = vadd.f32 %v1752, %v1978
    %1980 = vmatprep.mubr.bf16.mxu0 0
    %1981 = vmatmul.mubr.bf16.gmra.mrb[0].mxu0 %v901
    %v1982 = vpop.f32.mrb[0].mxu0
    %v1983 = vadd.f32 %v1748, %v1982
    %v1984 = vpop.f32.mrb[0].mxu0
    %v1985 = vadd.f32 %v1752, %v1984
    %v1986 = vpop.f32.mrb[0].mxu0
    %v1987 = vadd.f32 %v1748, %v1986
    %v1988 = vpop.f32.mrb[0].mxu0
    %v1989 = vadd.f32 %v1752, %v1988
    %1990 = vmatprep.mubr.bf16.mxu0 0
    %1991 = vmatmul.mubr.bf16.gmra.mrb[0].mxu0 %v902
    %v1992 = vpop.f32.mrb[0].mxu0
    %v1993 = vadd.f32 %v1748, %v1992
    %v1994 = vpop.f32.mrb[0].mxu0
    %v1995 = vadd.f32 %v1752, %v1994
    %v1996 = vpop.f32.mrb[0].mxu0
    %v1997 = vadd.f32 %v1748, %v1996
    %v1998 = vpop.f32.mrb[0].mxu0
    %v1999 = vadd.f32 %v1752, %v1998
    %2000 = vdwg.mxu0
    %2001 = vmatprep.subr.bf16.mxu0 0
    %2002 = vmatpush1.bf16.msra.mxu0 %v1842
    %2003 = vmatprep.subr.bf16.mxu0 0
    %2004 = vmatpush1.bf16.msra.mxu0 %v1845
    %2005 = vmatprep.subr.bf16.mxu0 0
    %2006 = vmatpush1.bf16.msra.mxu0 %v1848
    %2007 = vmatprep.subr.bf16.mxu0 0
    %2008 = vmatpush1.bf16.msra.mxu0 %v1851
    %2009 = vmatprep.subr.bf16.mxu0 0
    %2010 = vmatpush1.bf16.msra.mxu0 %v1854
    %2011 = vmatprep.subr.bf16.mxu0 0
    %2012 = vmatpush1.bf16.msra.mxu0 %v1857
    %2013 = vmatprep.subr.bf16.mxu0 0
    %2014 = vmatpush1.bf16.msra.mxu0 %v1860
    %2015 = vmatprep.subr.bf16.mxu0 0
    %2016 = vmatpush1.bf16.msra.mxu0 %v1863
    %2017 = vmatprep.subr.bf16.mxu0 0
    %2018 = vmatpush1.bf16.msra.mxu0 0
    %2019 = vmatprep.subr.bf16.mxu0 0
    %2020 = vmatpush1.bf16.msra.mxu0 0
    %2021 = vmatprep.subr.bf16.mxu0 0
    %2022 = vmatpush1.bf16.msra.mxu0 0
    %2023 = vmatprep.subr.bf16.mxu0 0
    %2024 = vmatpush1.bf16.msra.mxu0 0
    %2025 = vmatprep.subr.bf16.mxu0 0
    %2026 = vmatpush1.bf16.msra.mxu0 0
    %2027 = vmatprep.subr.bf16.mxu0 0
    %2028 = vmatpush1.bf16.msra.mxu0 0
    %2029 = vmatprep.subr.bf16.mxu0 0
    %2030 = vmatpush1.bf16.msra.mxu0 0
    %2031 = vmatprep.subr.bf16.mxu0 0
    %2032 = vmatpush1.bf16.msra.mxu0 0
    %2033 = vmatprep.mubr.bf16.mxu0 0
    %2034 = vmatmul.mubr.bf16.gmra.mrb[0].mxu0 %v895
    %v2035 = vpop.f32.mrb[0].mxu0
    %v2036 = vadd.f32 %v1756, %v2035
    %v2037 = vpop.f32.mrb[0].mxu0
    %v2038 = vpop.f32.mrb[0].mxu0
    %v2039 = vadd.f32 %v1756, %v2038
    %v2040 = vpop.f32.mrb[0].mxu0
    %2041 = vmatprep.mubr.bf16.mxu0 0
    %2042 = vmatmul.mubr.bf16.gmra.mrb[0].mxu0 %v896
    %v2043 = vpop.f32.mrb[0].mxu0
    %v2044 = vadd.f32 %v1756, %v2043
    %v2045 = vpop.f32.mrb[0].mxu0
    %v2046 = vpop.f32.mrb[0].mxu0
    %v2047 = vadd.f32 %v1756, %v2046
    %v2048 = vpop.f32.mrb[0].mxu0
    %2049 = vmatprep.mubr.bf16.mxu0 0
    %2050 = vmatmul.mubr.bf16.gmra.mrb[0].mxu0 %v897
    %v2051 = vpop.f32.mrb[0].mxu0
    %v2052 = vadd.f32 %v1756, %v2051
    %v2053 = vpop.f32.mrb[0].mxu0
    %v2054 = vpop.f32.mrb[0].mxu0
    %v2055 = vadd.f32 %v1756, %v2054
    %v2056 = vpop.f32.mrb[0].mxu0
    %2057 = vmatprep.mubr.bf16.mxu0 0
    %2058 = vmatmul.mubr.bf16.gmra.mrb[0].mxu0 %v898
    %v2059 = vpop.f32.mrb[0].mxu0
    %v2060 = vadd.f32 %v1756, %v2059
    %v2061 = vpop.f32.mrb[0].mxu0
    %v2062 = vpop.f32.mrb[0].mxu0
    %v2063 = vadd.f32 %v1756, %v2062
    %v2064 = vpop.f32.mrb[0].mxu0
    %2065 = vmatprep.mubr.bf16.mxu0 0
    %2066 = vmatmul.mubr.bf16.gmra.mrb[0].mxu0 %v899
    %v2067 = vpop.f32.mrb[0].mxu0
    %v2068 = vadd.f32 %v1756, %v2067
    %v2069 = vpop.f32.mrb[0].mxu0
    %v2070 = vpop.f32.mrb[0].mxu0
    %v2071 = vadd.f32 %v1756, %v2070
    %v2072 = vpop.f32.mrb[0].mxu0
    %2073 = vmatprep.mubr.bf16.mxu0 0
    %2074 = vmatmul.mubr.bf16.gmra.mrb[0].mxu0 %v900
    %v2075 = vpop.f32.mrb[0].mxu0
    %v2076 = vadd.f32 %v1756, %v2075
    %v2077 = vpop.f32.mrb[0].mxu0
    %v2078 = vpop.f32.mrb[0].mxu0
    %v2079 = vadd.f32 %v1756, %v2078
    %v2080 = vpop.f32.mrb[0].mxu0
    %2081 = vmatprep.mubr.bf16.mxu0 0
    %2082 = vmatmul.mubr.bf16.gmra.mrb[0].mxu0 %v901
    %v2083 = vpop.f32.mrb[0].mxu0
    %v2084 = vadd.f32 %v1756, %v2083
    %v2085 = vpop.f32.mrb[0].mxu0
    %v2086 = vpop.f32.mrb[0].mxu0
    %v2087 = vadd.f32 %v1756, %v2086
    %v2088 = vpop.f32.mrb[0].mxu0
    %2089 = vmatprep.mubr.bf16.mxu0 0
    %2090 = vmatmul.mubr.bf16.gmra.mrb[0].mxu0 %v902
    %v2091 = vpop.f32.mrb[0].mxu0
    %v2092 = vadd.f32 %v1756, %v2091
    %v2093 = vpop.f32.mrb[0].mxu0
    %v2094 = vpop.f32.mrb[0].mxu0
    %v2095 = vadd.f32 %v1756, %v2094
    %v2096 = vpop.f32.mrb[0].mxu0
    %2097 = vdwg.mxu0
    %v2098 = vadd.f32 %v1569, %v1923
    %v2099 = vadd.f32 %v1573, %v1927
    %v2100 = vadd.f32 %v1579, %v1933
    %v2101 = vadd.f32 %v1583, %v1937
    %v2102 = vadd.f32 %v1589, %v1943
    %v2103 = vadd.f32 %v1593, %v1947
    %v2104 = vadd.f32 %v1599, %v1953
    %v2105 = vadd.f32 %v1603, %v1957
    %v2106 = vadd.f32 %v1609, %v1963
    %v2107 = vadd.f32 %v1613, %v1967
    %v2108 = vadd.f32 %v1619, %v1973
    %v2109 = vadd.f32 %v1623, %v1977
    %v2110 = vadd.f32 %v1629, %v1983
    %v2111 = vadd.f32 %v1633, %v1987
    %v2112 = vadd.f32 %v1639, %v1993
    %v2113 = vadd.f32 %v1643, %v1997
    %v2114 = vxor.u32 %v2098, 2147483648
    %v2115 = vxor.u32 %v2099, 2147483648
    %v2116 = vxor.u32 %v2100, 2147483648
    %v2117 = vxor.u32 %v2101, 2147483648
    %v2118 = vxor.u32 %v2102, 2147483648
    %v2119 = vxor.u32 %v2103, 2147483648
    %v2120 = vxor.u32 %v2104, 2147483648
    %v2121 = vxor.u32 %v2105, 2147483648
    %v2122 = vxor.u32 %v2106, 2147483648
    %v2123 = vxor.u32 %v2107, 2147483648
    %v2124 = vxor.u32 %v2108, 2147483648
    %v2125 = vxor.u32 %v2109, 2147483648
    %v2126 = vxor.u32 %v2110, 2147483648
    %v2127 = vxor.u32 %v2111, 2147483648
    %v2128 = vxor.u32 %v2112, 2147483648
    %v2129 = vxor.u32 %v2113, 2147483648
    %v2130 = vmul.f32 %v2114, 1.442695
    %v2131 = vpow.pop %v2130
    %v2132 = vmul.f32 %v2115, 1.442695
    %v2133 = vpow.pop %v2132
    %v2134 = vmul.f32 %v2116, 1.442695
    %v2135 = vpow.pop %v2134
    %v2136 = vmul.f32 %v2117, 1.442695
    %v2137 = vpow.pop %v2136
    %v2138 = vmul.f32 %v2118, 1.442695
    %v2139 = vpow.pop %v2138
    %v2140 = vmul.f32 %v2119, 1.442695
    %v2141 = vpow.pop %v2140
    %v2142 = vmul.f32 %v2120, 1.442695
    %v2143 = vpow.pop %v2142
    %v2144 = vmul.f32 %v2121, 1.442695
    %v2145 = vpow.pop %v2144
    %v2146 = vmul.f32 %v2122, 1.442695
    %v2147 = vpow.pop %v2146
    %v2148 = vmul.f32 %v2123, 1.442695
    %v2149 = vpow.pop %v2148
    %v2150 = vmul.f32 %v2124, 1.442695
    %v2151 = vpow.pop %v2150
    %v2152 = vmul.f32 %v2125, 1.442695
    %v2153 = vpow.pop %v2152
    %v2154 = vmul.f32 %v2126, 1.442695
    %v2155 = vpow.pop %v2154
    %v2156 = vmul.f32 %v2127, 1.442695
    %v2157 = vpow.pop %v2156
    %v2158 = vmul.f32 %v2128, 1.442695
    %v2159 = vpow.pop %v2158
    %v2160 = vmul.f32 %v2129, 1.442695
    %v2161 = vpow.pop %v2160
    %v2162 = vadd.f32 %v2131, 1.0
    %v2163 = vadd.f32 %v2133, 1.0
    %v2164 = vadd.f32 %v2135, 1.0
    %v2165 = vadd.f32 %v2137, 1.0
    %v2166 = vadd.f32 %v2139, 1.0
    %v2167 = vadd.f32 %v2141, 1.0
    %v2168 = vadd.f32 %v2143, 1.0
    %v2169 = vadd.f32 %v2145, 1.0
    %v2170 = vadd.f32 %v2147, 1.0
    %v2171 = vadd.f32 %v2149, 1.0
    %v2172 = vadd.f32 %v2151, 1.0
    %v2173 = vadd.f32 %v2153, 1.0
    %v2174 = vadd.f32 %v2155, 1.0
    %v2175 = vadd.f32 %v2157, 1.0
    %v2176 = vadd.f32 %v2159, 1.0
    %v2177 = vadd.f32 %v2161, 1.0
    %v2178 = vrcp.pop %v2162
    %v2179 = vmul.f32 1.0, %v2178
    %v2180 = vrcp.pop %v2163
    %v2181 = vmul.f32 1.0, %v2180
    %v2182 = vrcp.pop %v2164
    %v2183 = vmul.f32 1.0, %v2182
    %v2184 = vrcp.pop %v2165
    %v2185 = vmul.f32 1.0, %v2184
    %v2186 = vrcp.pop %v2166
    %v2187 = vmul.f32 1.0, %v2186
    %v2188 = vrcp.pop %v2167
    %v2189 = vmul.f32 1.0, %v2188
    %v2190 = vrcp.pop %v2168
    %v2191 = vmul.f32 1.0, %v2190
    %v2192 = vrcp.pop %v2169
    %v2193 = vmul.f32 1.0, %v2192
    %v2194 = vrcp.pop %v2170
    %v2195 = vmul.f32 1.0, %v2194
    %v2196 = vrcp.pop %v2171
    %v2197 = vmul.f32 1.0, %v2196
    %v2198 = vrcp.pop %v2172
    %v2199 = vmul.f32 1.0, %v2198
    %v2200 = vrcp.pop %v2173
    %v2201 = vmul.f32 1.0, %v2200
    %v2202 = vrcp.pop %v2174
    %v2203 = vmul.f32 1.0, %v2202
    %v2204 = vrcp.pop %v2175
    %v2205 = vmul.f32 1.0, %v2204
    %v2206 = vrcp.pop %v2176
    %v2207 = vmul.f32 1.0, %v2206
    %v2208 = vrcp.pop %v2177
    %v2209 = vmul.f32 1.0, %v2208
    %v2210 = vadd.f32 %v1571, %v1925
    %v2211 = vadd.f32 %v1575, %v1929
    %v2212 = vadd.f32 %v1581, %v1935
    %v2213 = vadd.f32 %v1585, %v1939
    %v2214 = vadd.f32 %v1591, %v1945
    %v2215 = vadd.f32 %v1595, %v1949
    %v2216 = vadd.f32 %v1601, %v1955
    %v2217 = vadd.f32 %v1605, %v1959
    %v2218 = vadd.f32 %v1611, %v1965
    %v2219 = vadd.f32 %v1615, %v1969
    %v2220 = vadd.f32 %v1621, %v1975
    %v2221 = vadd.f32 %v1625, %v1979
    %v2222 = vadd.f32 %v1631, %v1985
    %v2223 = vadd.f32 %v1635, %v1989
    %v2224 = vadd.f32 %v1641, %v1995
    %v2225 = vadd.f32 %v1645, %v1999
    %v2226 = vxor.u32 %v2210, 2147483648
    %v2227 = vxor.u32 %v2211, 2147483648
    %v2228 = vxor.u32 %v2212, 2147483648
    %v2229 = vxor.u32 %v2213, 2147483648
    %v2230 = vxor.u32 %v2214, 2147483648
    %v2231 = vxor.u32 %v2215, 2147483648
    %v2232 = vxor.u32 %v2216, 2147483648
    %v2233 = vxor.u32 %v2217, 2147483648
    %v2234 = vxor.u32 %v2218, 2147483648
    %v2235 = vxor.u32 %v2219, 2147483648
    %v2236 = vxor.u32 %v2220, 2147483648
    %v2237 = vxor.u32 %v2221, 2147483648
    %v2238 = vxor.u32 %v2222, 2147483648
    %v2239 = vxor.u32 %v2223, 2147483648
    %v2240 = vxor.u32 %v2224, 2147483648
    %v2241 = vxor.u32 %v2225, 2147483648
    %v2242 = vmul.f32 %v2226, 1.442695
    %v2243 = vpow.pop %v2242
    %v2244 = vmul.f32 %v2227, 1.442695
    %v2245 = vpow.pop %v2244
    %v2246 = vmul.f32 %v2228, 1.442695
    %v2247 = vpow.pop %v2246
    %v2248 = vmul.f32 %v2229, 1.442695
    %v2249 = vpow.pop %v2248
    %v2250 = vmul.f32 %v2230, 1.442695
    %v2251 = vpow.pop %v2250
    %v2252 = vmul.f32 %v2231, 1.442695
    %v2253 = vpow.pop %v2252
    %v2254 = vmul.f32 %v2232, 1.442695
    %v2255 = vpow.pop %v2254
    %v2256 = vmul.f32 %v2233, 1.442695
    %v2257 = vpow.pop %v2256
    %v2258 = vmul.f32 %v2234, 1.442695
    %v2259 = vpow.pop %v2258
    %v2260 = vmul.f32 %v2235, 1.442695
    %v2261 = vpow.pop %v2260
    %v2262 = vmul.f32 %v2236, 1.442695
    %v2263 = vpow.pop %v2262
    %v2264 = vmul.f32 %v2237, 1.442695
    %v2265 = vpow.pop %v2264
    %v2266 = vmul.f32 %v2238, 1.442695
    %v2267 = vpow.pop %v2266
    %v2268 = vmul.f32 %v2239, 1.442695
    %v2269 = vpow.pop %v2268
    %v2270 = vmul.f32 %v2240, 1.442695
    %v2271 = vpow.pop %v2270
    %v2272 = vmul.f32 %v2241, 1.442695
    %v2273 = vpow.pop %v2272
    %v2274 = vadd.f32 %v2243, 1.0
    %v2275 = vadd.f32 %v2245, 1.0
    %v2276 = vadd.f32 %v2247, 1.0
    %v2277 = vadd.f32 %v2249, 1.0
    %v2278 = vadd.f32 %v2251, 1.0
    %v2279 = vadd.f32 %v2253, 1.0
    %v2280 = vadd.f32 %v2255, 1.0
    %v2281 = vadd.f32 %v2257, 1.0
    %v2282 = vadd.f32 %v2259, 1.0
    %v2283 = vadd.f32 %v2261, 1.0
    %v2284 = vadd.f32 %v2263, 1.0
    %v2285 = vadd.f32 %v2265, 1.0
    %v2286 = vadd.f32 %v2267, 1.0
    %v2287 = vadd.f32 %v2269, 1.0
    %v2288 = vadd.f32 %v2271, 1.0
    %v2289 = vadd.f32 %v2273, 1.0
    %v2290 = vrcp.pop %v2274
    %v2291 = vmul.f32 1.0, %v2290
    %v2292 = vrcp.pop %v2275
    %v2293 = vmul.f32 1.0, %v2292
    %v2294 = vrcp.pop %v2276
    %v2295 = vmul.f32 1.0, %v2294
    %v2296 = vrcp.pop %v2277
    %v2297 = vmul.f32 1.0, %v2296
    %v2298 = vrcp.pop %v2278
    %v2299 = vmul.f32 1.0, %v2298
    %v2300 = vrcp.pop %v2279
    %v2301 = vmul.f32 1.0, %v2300
    %v2302 = vrcp.pop %v2280
    %v2303 = vmul.f32 1.0, %v2302
    %v2304 = vrcp.pop %v2281
    %v2305 = vmul.f32 1.0, %v2304
    %v2306 = vrcp.pop %v2282
    %v2307 = vmul.f32 1.0, %v2306
    %v2308 = vrcp.pop %v2283
    %v2309 = vmul.f32 1.0, %v2308
    %v2310 = vrcp.pop %v2284
    %v2311 = vmul.f32 1.0, %v2310
    %v2312 = vrcp.pop %v2285
    %v2313 = vmul.f32 1.0, %v2312
    %v2314 = vrcp.pop %v2286
    %v2315 = vmul.f32 1.0, %v2314
    %v2316 = vrcp.pop %v2287
    %v2317 = vmul.f32 1.0, %v2316
    %v2318 = vrcp.pop %v2288
    %v2319 = vmul.f32 1.0, %v2318
    %v2320 = vrcp.pop %v2289
    %v2321 = vmul.f32 1.0, %v2320
    %v2322 = vmul.f32 %v2179, %v2036
    %v2323 = vmul.f32 %v2181, %v2039
    %v2324 = vmul.f32 %v2183, %v2044
    %v2325 = vmul.f32 %v2185, %v2047
    %v2326 = vmul.f32 %v2187, %v2052
    %v2327 = vmul.f32 %v2189, %v2055
    %v2328 = vmul.f32 %v2191, %v2060
    %v2329 = vmul.f32 %v2193, %v2063
    %v2330 = vmul.f32 %v2195, %v2068
    %v2331 = vmul.f32 %v2197, %v2071
    %v2332 = vmul.f32 %v2199, %v2076
    %v2333 = vmul.f32 %v2201, %v2079
    %v2334 = vmul.f32 %v2203, %v2084
    %v2335 = vmul.f32 %v2205, %v2087
    %v2336 = vmul.f32 %v2207, %v2092
    %v2337 = vmul.f32 %v2209, %v2095
    %v2338 = vadd.f32 %v1682, %v2322
    %v2339 = vadd.f32 %v1685, %v2323
    %v2340 = vadd.f32 %v1690, %v2324
    %v2341 = vadd.f32 %v1693, %v2325
    %v2342 = vadd.f32 %v1698, %v2326
    %v2343 = vadd.f32 %v1701, %v2327
    %v2344 = vadd.f32 %v1706, %v2328
    %v2345 = vadd.f32 %v1709, %v2329
    %v2346 = vadd.f32 %v1714, %v2330
    %v2347 = vadd.f32 %v1717, %v2331
    %v2348 = vadd.f32 %v1722, %v2332
    %v2349 = vadd.f32 %v1725, %v2333
    %v2350 = vadd.f32 %v1730, %v2334
    %v2351 = vadd.f32 %v1733, %v2335
    %v2352 = vadd.f32 %v1738, %v2336
    %v2353 = vadd.f32 %v1741, %v2337
    %v2354 = vtanh.pop %v2338
    %v2355 = vtanh.pop %v2339
    %v2356 = vtanh.pop %v2340
    %v2357 = vtanh.pop %v2341
    %v2358 = vtanh.pop %v2342
    %v2359 = vtanh.pop %v2343
    %v2360 = vtanh.pop %v2344
    %v2361 = vtanh.pop %v2345
    %v2362 = vtanh.pop %v2346
    %v2363 = vtanh.pop %v2347
    %v2364 = vtanh.pop %v2348
    %v2365 = vtanh.pop %v2349
    %v2366 = vtanh.pop %v2350
    %v2367 = vtanh.pop %v2351
    %v2368 = vtanh.pop %v2352
    %v2369 = vtanh.pop %v2353
    %v2370 = vsub.f32 1.0, %v2291
    %v2371 = vsub.f32 1.0, %v2293
    %v2372 = vsub.f32 1.0, %v2295
    %v2373 = vsub.f32 1.0, %v2297
    %v2374 = vsub.f32 1.0, %v2299
    %v2375 = vsub.f32 1.0, %v2301
    %v2376 = vsub.f32 1.0, %v2303
    %v2377 = vsub.f32 1.0, %v2305
    %v2378 = vsub.f32 1.0, %v2307
    %v2379 = vsub.f32 1.0, %v2309
    %v2380 = vsub.f32 1.0, %v2311
    %v2381 = vsub.f32 1.0, %v2313
    %v2382 = vsub.f32 1.0, %v2315
    %v2383 = vsub.f32 1.0, %v2317
    %v2384 = vsub.f32 1.0, %v2319
    %v2385 = vsub.f32 1.0, %v2321
    %v2386 = vmul.f32 %v2370, %v2354
    %v2387 = vmul.f32 %v2371, %v2355
    %v2388 = vmul.f32 %v2372, %v2356
    %v2389 = vmul.f32 %v2373, %v2357
    %v2390 = vmul.f32 %v2374, %v2358
    %v2391 = vmul.f32 %v2375, %v2359
    %v2392 = vmul.f32 %v2376, %v2360
    %v2393 = vmul.f32 %v2377, %v2361
    %v2394 = vmul.f32 %v2378, %v2362
    %v2395 = vmul.f32 %v2379, %v2363
    %v2396 = vmul.f32 %v2380, %v2364
    %v2397 = vmul.f32 %v2381, %v2365
    %v2398 = vmul.f32 %v2382, %v2366
    %v2399 = vmul.f32 %v2383, %v2367
    %v2400 = vmul.f32 %v2384, %v2368
    %v2401 = vmul.f32 %v2385, %v2369
    %v2402 = vmul.f32 %v2291, %v833
    %v2403 = vmul.f32 %v2293, %v836
    %v2404 = vmul.f32 %v2295, %v841
    %v2405 = vmul.f32 %v2297, %v844
    %v2406 = vmul.f32 %v2299, %v849
    %v2407 = vmul.f32 %v2301, %v852
    %v2408 = vmul.f32 %v2303, %v857
    %v2409 = vmul.f32 %v2305, %v860
    %v2410 = vmul.f32 %v2307, %v865
    %v2411 = vmul.f32 %v2309, %v868
    %v2412 = vmul.f32 %v2311, %v873
    %v2413 = vmul.f32 %v2313, %v876
    %v2414 = vmul.f32 %v2315, %v881
    %v2415 = vmul.f32 %v2317, %v884
    %v2416 = vmul.f32 %v2319, %v889
    %v2417 = vmul.f32 %v2321, %v892
    %v2418 = vadd.f32 %v2386, %v2402
    %v2419 = vadd.f32 %v2387, %v2403
    %v2420 = vadd.f32 %v2388, %v2404
    %v2421 = vadd.f32 %v2389, %v2405
    %v2422 = vadd.f32 %v2390, %v2406
    %v2423 = vadd.f32 %v2391, %v2407
    %v2424 = vadd.f32 %v2392, %v2408
    %v2425 = vadd.f32 %v2393, %v2409
    %v2426 = vadd.f32 %v2394, %v2410
    %v2427 = vadd.f32 %v2395, %v2411
    %v2428 = vadd.f32 %v2396, %v2412
    %v2429 = vadd.f32 %v2397, %v2413
    %v2430 = vadd.f32 %v2398, %v2414
    %v2431 = vadd.f32 %v2399, %v2415
    %v2432 = vadd.f32 %v2400, %v2416
    %v2433 = vadd.f32 %v2401, %v2417
    %v2434 = vpack.c.bf16 %v2419, %v2418
    %v2435 = vpack.c.bf16 %v2421, %v2420
    %v2436 = vpack.c.bf16 %v2423, %v2422
    %v2437 = vpack.c.bf16 %v2425, %v2424
    %v2438 = vpack.c.bf16 %v2427, %v2426
    %v2439 = vpack.c.bf16 %v2429, %v2428
    %v2440 = vpack.c.bf16 %v2431, %v2430
    %v2441 = vpack.c.bf16 %v2433, %v2432
    %v2443 = vlaneseq
    %v2444 = vshrl.u32 %v2443, 7
    %v2445 = vsub.s32 0, %v2444
    %v2446 = vrot.slane %v377, %v2445
    %v2464 = vunpack.c.l.b16 %v361
    %v2465 = vunpack.c.l.b16 %v362
    %v2466 = vunpack.c.l.b16 %v363
    %v2467 = vunpack.c.l.b16 %v364
    %v2468 = vunpack.c.l.b16 %v365
    %v2469 = vunpack.c.l.b16 %v366
    %v2470 = vunpack.c.l.b16 %v367
    %v2471 = vunpack.c.l.b16 %v368
    %v2472 = vunpack.c.l.b16 %v369
    %v2473 = vunpack.c.l.b16 %v370
    %v2474 = vunpack.c.l.b16 %v371
    %v2475 = vunpack.c.l.b16 %v372
    %v2476 = vunpack.c.l.b16 %v373
    %v2477 = vunpack.c.l.b16 %v374
    %v2478 = vunpack.c.l.b16 %v375
    %v2479 = vunpack.c.l.b16 %v376
    %v2480 = vpack.c.b16 %v2465, %v2464
    %v2481 = vpack.c.b16 %v2467, %v2466
    %v2482 = vpack.c.b16 %v2469, %v2468
    %v2483 = vpack.c.b16 %v2471, %v2470
    %v2484 = vpack.c.b16 %v2473, %v2472
    %v2485 = vpack.c.b16 %v2475, %v2474
    %v2486 = vpack.c.b16 %v2477, %v2476
    %v2487 = vpack.c.b16 %v2479, %v2478
    %2496 = vmatprep.subr.bf16.mxu0 0
    %2497 = vmatpush1.bf16.msra.mxu0 %v2480
    %2498 = vmatprep.subr.bf16.mxu0 0
    %2499 = vmatpush1.bf16.msra.mxu0 %v2481
    %2500 = vmatprep.subr.bf16.mxu0 0
    %2501 = vmatpush1.bf16.msra.mxu0 %v2482
    %2502 = vmatprep.subr.bf16.mxu0 0
    %2503 = vmatpush1.bf16.msra.mxu0 %v2483
    %2504 = vmatprep.subr.bf16.mxu0 0
    %2505 = vmatpush1.bf16.msra.mxu0 %v2484
    %2506 = vmatprep.subr.bf16.mxu0 0
    %2507 = vmatpush1.bf16.msra.mxu0 %v2485
    %2508 = vmatprep.subr.bf16.mxu0 0
    %2509 = vmatpush1.bf16.msra.mxu0 %v2486
    %2510 = vmatprep.subr.bf16.mxu0 0
    %2511 = vmatpush1.bf16.msra.mxu0 %v2487
    %2512 = vmatprep.subr.bf16.mxu0 0
    %2513 = vmatpush1.bf16.msra.mxu0 0
    %2514 = vmatprep.subr.bf16.mxu0 0
    %2515 = vmatpush1.bf16.msra.mxu0 0
    %2516 = vmatprep.subr.bf16.mxu0 0
    %2517 = vmatpush1.bf16.msra.mxu0 0
    %2518 = vmatprep.subr.bf16.mxu0 0
    %2519 = vmatpush1.bf16.msra.mxu0 0
    %2520 = vmatprep.subr.bf16.mxu0 0
    %2521 = vmatpush1.bf16.msra.mxu0 0
    %2522 = vmatprep.subr.bf16.mxu0 0
    %2523 = vmatpush1.bf16.msra.mxu0 0
    %2524 = vmatprep.subr.bf16.mxu0 0
    %2525 = vmatpush1.bf16.msra.mxu0 0
    %2526 = vmatprep.subr.bf16.mxu0 0
    %2527 = vmatpush1.bf16.msra.mxu0 0
    %2528 = vmatprep.mubr.bf16.mxu0 0
    %2529 = vmatmul.mubr.bf16.gmra.mrb[0].mxu0 %v2434
    %v2530 = vpop.f32.mrb[0].mxu0
    %v2531 = vadd.f32 %v2446, %v2530
    %v2532 = vpop.f32.mrb[0].mxu0
    %v2533 = vpop.f32.mrb[0].mxu0
    %v2534 = vadd.f32 %v2446, %v2533
    %v2535 = vpop.f32.mrb[0].mxu0
    %2536 = vmatprep.mubr.bf16.mxu0 0
    %2537 = vmatmul.mubr.bf16.gmra.mrb[0].mxu0 %v2435
    %v2538 = vpop.f32.mrb[0].mxu0
    %v2539 = vadd.f32 %v2446, %v2538
    %v2540 = vpop.f32.mrb[0].mxu0
    %v2541 = vpop.f32.mrb[0].mxu0
    %v2542 = vadd.f32 %v2446, %v2541
    %v2543 = vpop.f32.mrb[0].mxu0
    %2544 = vmatprep.mubr.bf16.mxu0 0
    %2545 = vmatmul.mubr.bf16.gmra.mrb[0].mxu0 %v2436
    %v2546 = vpop.f32.mrb[0].mxu0
    %v2547 = vadd.f32 %v2446, %v2546
    %v2548 = vpop.f32.mrb[0].mxu0
    %v2549 = vpop.f32.mrb[0].mxu0
    %v2550 = vadd.f32 %v2446, %v2549
    %v2551 = vpop.f32.mrb[0].mxu0
    %2552 = vmatprep.mubr.bf16.mxu0 0
    %2553 = vmatmul.mubr.bf16.gmra.mrb[0].mxu0 %v2437
    %v2554 = vpop.f32.mrb[0].mxu0
    %v2555 = vadd.f32 %v2446, %v2554
    %v2556 = vpop.f32.mrb[0].mxu0
    %v2557 = vpop.f32.mrb[0].mxu0
    %v2558 = vadd.f32 %v2446, %v2557
    %v2559 = vpop.f32.mrb[0].mxu0
    %2560 = vmatprep.mubr.bf16.mxu0 0
    %2561 = vmatmul.mubr.bf16.gmra.mrb[0].mxu0 %v2438
    %v2562 = vpop.f32.mrb[0].mxu0
    %v2563 = vadd.f32 %v2446, %v2562
    %v2564 = vpop.f32.mrb[0].mxu0
    %v2565 = vpop.f32.mrb[0].mxu0
    %v2566 = vadd.f32 %v2446, %v2565
    %v2567 = vpop.f32.mrb[0].mxu0
    %2568 = vmatprep.mubr.bf16.mxu0 0
    %2569 = vmatmul.mubr.bf16.gmra.mrb[0].mxu0 %v2439
    %v2570 = vpop.f32.mrb[0].mxu0
    %v2571 = vadd.f32 %v2446, %v2570
    %v2572 = vpop.f32.mrb[0].mxu0
    %v2573 = vpop.f32.mrb[0].mxu0
    %v2574 = vadd.f32 %v2446, %v2573
    %v2575 = vpop.f32.mrb[0].mxu0
    %2576 = vmatprep.mubr.bf16.mxu0 0
    %2577 = vmatmul.mubr.bf16.gmra.mrb[0].mxu0 %v2440
    %v2578 = vpop.f32.mrb[0].mxu0
    %v2579 = vadd.f32 %v2446, %v2578
    %v2580 = vpop.f32.mrb[0].mxu0
    %v2581 = vpop.f32.mrb[0].mxu0
    %v2582 = vadd.f32 %v2446, %v2581
    %v2583 = vpop.f32.mrb[0].mxu0
    %2584 = vmatprep.mubr.bf16.mxu0 0
    %2585 = vmatmul.mubr.bf16.gmra.mrb[0].mxu0 %v2441
    %v2586 = vpop.f32.mrb[0].mxu0
    %v2587 = vadd.f32 %v2446, %v2586
    %v2588 = vpop.f32.mrb[0].mxu0
    %v2589 = vpop.f32.mrb[0].mxu0
    %v2590 = vadd.f32 %v2446, %v2589
    %v2591 = vpop.f32.mrb[0].mxu0
    %2592 = vdwg.mxu0
    %v2593 = vmax.f32 %v2531, 0.0
    %v2594 = vmax.f32 %v2534, 0.0
    %v2595 = vmax.f32 %v2539, 0.0
    %v2596 = vmax.f32 %v2542, 0.0
    %v2597 = vmax.f32 %v2547, 0.0
    %v2598 = vmax.f32 %v2550, 0.0
    %v2599 = vmax.f32 %v2555, 0.0
    %v2600 = vmax.f32 %v2558, 0.0
    %v2601 = vmax.f32 %v2563, 0.0
    %v2602 = vmax.f32 %v2566, 0.0
    %v2603 = vmax.f32 %v2571, 0.0
    %v2604 = vmax.f32 %v2574, 0.0
    %v2605 = vmax.f32 %v2579, 0.0
    %v2606 = vmax.f32 %v2582, 0.0
    %v2607 = vmax.f32 %v2587, 0.0
    %v2608 = vmax.f32 %v2590, 0.0
    %v2609 = vpack.c.bf16 %v2594, %v2593
    %v2610 = vpack.c.bf16 %v2596, %v2595
    %v2611 = vpack.c.bf16 %v2598, %v2597
    %v2612 = vpack.c.bf16 %v2600, %v2599
    %v2613 = vpack.c.bf16 %v2602, %v2601
    %v2614 = vpack.c.bf16 %v2604, %v2603
    %v2615 = vpack.c.bf16 %v2606, %v2605
    %v2616 = vpack.c.bf16 %v2608, %v2607
    %v2618 = vlaneseq
    %v2619 = vshrl.u32 %v2618, 7
    %v2620 = vsub.s32 0, %v2619
    %v2621 = vrot.slane %v394, %v2620
    %v2639 = vunpack.c.l.b16 %v378
    %v2640 = vunpack.c.l.b16 %v379
    %v2641 = vunpack.c.l.b16 %v380
    %v2642 = vunpack.c.l.b16 %v381
    %v2643 = vunpack.c.l.b16 %v382
    %v2644 = vunpack.c.l.b16 %v383
    %v2645 = vunpack.c.l.b16 %v384
    %v2646 = vunpack.c.l.b16 %v385
    %v2647 = vunpack.c.l.b16 %v386
    %v2648 = vunpack.c.l.b16 %v387
    %v2649 = vunpack.c.l.b16 %v388
    %v2650 = vunpack.c.l.b16 %v389
    %v2651 = vunpack.c.l.b16 %v390
    %v2652 = vunpack.c.l.b16 %v391
    %v2653 = vunpack.c.l.b16 %v392
    %v2654 = vunpack.c.l.b16 %v393
    %v2655 = vpack.c.b16 %v2640, %v2639
    %v2656 = vpack.c.b16 %v2642, %v2641
    %v2657 = vpack.c.b16 %v2644, %v2643
    %v2658 = vpack.c.b16 %v2646, %v2645
    %v2659 = vpack.c.b16 %v2648, %v2647
    %v2660 = vpack.c.b16 %v2650, %v2649
    %v2661 = vpack.c.b16 %v2652, %v2651
    %v2662 = vpack.c.b16 %v2654, %v2653
    %2671 = vmatprep.subr.bf16.mxu0 0
    %2672 = vmatpush1.bf16.msra.mxu0 %v2655
    %2673 = vmatprep.subr.bf16.mxu0 0
    %2674 = vmatpush1.bf16.msra.mxu0 %v2656
    %2675 = vmatprep.subr.bf16.mxu0 0
    %2676 = vmatpush1.bf16.msra.mxu0 %v2657
    %2677 = vmatprep.subr.bf16.mxu0 0
    %2678 = vmatpush1.bf16.msra.mxu0 %v2658
    %2679 = vmatprep.subr.bf16.mxu0 0
    %2680 = vmatpush1.bf16.msra.mxu0 %v2659
    %2681 = vmatprep.subr.bf16.mxu0 0
    %2682 = vmatpush1.bf16.msra.mxu0 %v2660
    %2683 = vmatprep.subr.bf16.mxu0 0
    %2684 = vmatpush1.bf16.msra.mxu0 %v2661
    %2685 = vmatprep.subr.bf16.mxu0 0
    %2686 = vmatpush1.bf16.msra.mxu0 %v2662
    %2687 = vmatprep.subr.bf16.mxu0 0
    %2688 = vmatpush1.bf16.msra.mxu0 0
    %2689 = vmatprep.subr.bf16.mxu0 0
    %2690 = vmatpush1.bf16.msra.mxu0 0
    %2691 = vmatprep.subr.bf16.mxu0 0
    %2692 = vmatpush1.bf16.msra.mxu0 0
    %2693 = vmatprep.subr.bf16.mxu0 0
    %2694 = vmatpush1.bf16.msra.mxu0 0
    %2695 = vmatprep.subr.bf16.mxu0 0
    %2696 = vmatpush1.bf16.msra.mxu0 0
    %2697 = vmatprep.subr.bf16.mxu0 0
    %2698 = vmatpush1.bf16.msra.mxu0 0
    %2699 = vmatprep.subr.bf16.mxu0 0
    %2700 = vmatpush1.bf16.msra.mxu0 0
    %2701 = vmatprep.subr.bf16.mxu0 0
    %2702 = vmatpush1.bf16.msra.mxu0 0
    %2703 = vmatprep.mubr.bf16.mxu0 0
    %2704 = vmatmul.mubr.bf16.gmra.mrb[0].mxu0 %v2609
    %v2705 = vpop.f32.mrb[0].mxu0
    %v2706 = vadd.f32 %v2621, %v2705
    %v2707 = vpop.f32.mrb[0].mxu0
    %v2708 = vpop.f32.mrb[0].mxu0
    %v2709 = vadd.f32 %v2621, %v2708
    %v2710 = vpop.f32.mrb[0].mxu0
    %2711 = vmatprep.mubr.bf16.mxu0 0
    %2712 = vmatmul.mubr.bf16.gmra.mrb[0].mxu0 %v2610
    %v2713 = vpop.f32.mrb[0].mxu0
    %v2714 = vadd.f32 %v2621, %v2713
    %v2715 = vpop.f32.mrb[0].mxu0
    %v2716 = vpop.f32.mrb[0].mxu0
    %v2717 = vadd.f32 %v2621, %v2716
    %v2718 = vpop.f32.mrb[0].mxu0
    %2719 = vmatprep.mubr.bf16.mxu0 0
    %2720 = vmatmul.mubr.bf16.gmra.mrb[0].mxu0 %v2611
    %v2721 = vpop.f32.mrb[0].mxu0
    %v2722 = vadd.f32 %v2621, %v2721
    %v2723 = vpop.f32.mrb[0].mxu0
    %v2724 = vpop.f32.mrb[0].mxu0
    %v2725 = vadd.f32 %v2621, %v2724
    %v2726 = vpop.f32.mrb[0].mxu0
    %2727 = vmatprep.mubr.bf16.mxu0 0
    %2728 = vmatmul.mubr.bf16.gmra.mrb[0].mxu0 %v2612
    %v2729 = vpop.f32.mrb[0].mxu0
    %v2730 = vadd.f32 %v2621, %v2729
    %v2731 = vpop.f32.mrb[0].mxu0
    %v2732 = vpop.f32.mrb[0].mxu0
    %v2733 = vadd.f32 %v2621, %v2732
    %v2734 = vpop.f32.mrb[0].mxu0
    %2735 = vmatprep.mubr.bf16.mxu0 0
    %2736 = vmatmul.mubr.bf16.gmra.mrb[0].mxu0 %v2613
    %v2737 = vpop.f32.mrb[0].mxu0
    %v2738 = vadd.f32 %v2621, %v2737
    %v2739 = vpop.f32.mrb[0].mxu0
    %v2740 = vpop.f32.mrb[0].mxu0
    %v2741 = vadd.f32 %v2621, %v2740
    %v2742 = vpop.f32.mrb[0].mxu0
    %2743 = vmatprep.mubr.bf16.mxu0 0
    %2744 = vmatmul.mubr.bf16.gmra.mrb[0].mxu0 %v2614
    %v2745 = vpop.f32.mrb[0].mxu0
    %v2746 = vadd.f32 %v2621, %v2745
    %v2747 = vpop.f32.mrb[0].mxu0
    %v2748 = vpop.f32.mrb[0].mxu0
    %v2749 = vadd.f32 %v2621, %v2748
    %v2750 = vpop.f32.mrb[0].mxu0
    %2751 = vmatprep.mubr.bf16.mxu0 0
    %2752 = vmatmul.mubr.bf16.gmra.mrb[0].mxu0 %v2615
    %v2753 = vpop.f32.mrb[0].mxu0
    %v2754 = vadd.f32 %v2621, %v2753
    %v2755 = vpop.f32.mrb[0].mxu0
    %v2756 = vpop.f32.mrb[0].mxu0
    %v2757 = vadd.f32 %v2621, %v2756
    %v2758 = vpop.f32.mrb[0].mxu0
    %2759 = vmatprep.mubr.bf16.mxu0 0
    %2760 = vmatmul.mubr.bf16.gmra.mrb[0].mxu0 %v2616
    %v2761 = vpop.f32.mrb[0].mxu0
    %v2762 = vadd.f32 %v2621, %v2761
    %v2763 = vpop.f32.mrb[0].mxu0
    %v2764 = vpop.f32.mrb[0].mxu0
    %v2765 = vadd.f32 %v2621, %v2764
    %v2766 = vpop.f32.mrb[0].mxu0
    %2767 = vdwg.mxu0
    %2768 = vxpose.xlu0.b32.start [1/16] %v2706, 128
    %2769 = vxpose.xlu0.b32.cont [2/16] %v2709, 128
    %2770 = vxpose.xlu0.b32.cont [3/16] %v2714, 128
    %2771 = vxpose.xlu0.b32.cont [4/16] %v2717, 128
    %2772 = vxpose.xlu0.b32.cont [5/16] %v2722, 128
    %2773 = vxpose.xlu0.b32.cont [6/16] %v2725, 128
    %2774 = vxpose.xlu0.b32.cont [7/16] %v2730, 128
    %2775 = vxpose.xlu0.b32.cont [8/16] %v2733, 128
    %2776 = vxpose.xlu0.b32.cont [9/16] %v2738, 128
    %2777 = vxpose.xlu0.b32.cont [10/16] %v2741, 128
    %2778 = vxpose.xlu0.b32.cont [11/16] %v2746, 128
    %2779 = vxpose.xlu0.b32.cont [12/16] %v2749, 128
    %2780 = vxpose.xlu0.b32.cont [13/16] %v2754, 128
    %2781 = vxpose.xlu0.b32.cont [14/16] %v2757, 128
    %2782 = vxpose.xlu0.b32.cont [15/16] %v2762, 128
    %2783 = vxpose.xlu0.b32.end [16/16] %v2765, 128
    %v2784 = vpop.trf.xlu0
    %v2785 = vpop.trf.xlu0
    %v2786 = vpop.trf.xlu0
    %v2787 = vpop.trf.xlu0
    %v2788 = vpop.trf.xlu0
    %v2789 = vpop.trf.xlu0
    %v2790 = vpop.trf.xlu0
    %v2791 = vpop.trf.xlu0
    %v2792 = vpop.trf.xlu0
    %v2793 = vpop.trf.xlu0
    %v2794 = vpop.trf.xlu0
    %v2795 = vpop.trf.xlu0
    %v2796 = vpop.trf.xlu0
    %v2797 = vpop.trf.xlu0
    %v2798 = vpop.trf.xlu0
    %v2799 = vpop.trf.xlu0
    %v2800 = vpack.c.bf16 %v2785, %v2784
    %v2801 = vpack.c.bf16 %v2787, %v2786
    %v2802 = vpack.c.bf16 %v2789, %v2788
    %v2803 = vpack.c.bf16 %v2791, %v2790
    %v2804 = vpack.c.bf16 %v2793, %v2792
    %v2805 = vpack.c.bf16 %v2795, %v2794
    %v2806 = vpack.c.bf16 %v2797, %v2796
    %v2807 = vpack.c.bf16 %v2799, %v2798
    %2808 = vmatprep.subr.bf16.mxu0 0
    %2809 = vmatpush1.bf16.msra.mxu0 %v1269
    %2810 = vmatprep.subr.bf16.mxu0 0
    %2811 = vmatpush1.bf16.msra.mxu0 %v1270
    %2812 = vmatprep.subr.bf16.mxu0 0
    %2813 = vmatpush1.bf16.msra.mxu0 %v1271
    %2814 = vmatprep.subr.bf16.mxu0 0
    %2815 = vmatpush1.bf16.msra.mxu0 %v1272
    %2816 = vmatprep.subr.bf16.mxu0 0
    %2817 = vmatpush1.bf16.msra.mxu0 %v1273
    %2818 = vmatprep.subr.bf16.mxu0 0
    %2819 = vmatpush1.bf16.msra.mxu0 %v1274
    %2820 = vmatprep.subr.bf16.mxu0 0
    %2821 = vmatpush1.bf16.msra.mxu0 %v1275
    %2822 = vmatprep.subr.bf16.mxu0 0
    %2823 = vmatpush1.bf16.msra.mxu0 %v1276
    %2824 = vmatprep.subr.bf16.mxu0 0
    %2825 = vmatpush1.bf16.msra.mxu0 0
    %2826 = vmatprep.subr.bf16.mxu0 0
    %2827 = vmatpush1.bf16.msra.mxu0 0
    %2828 = vmatprep.subr.bf16.mxu0 0
    %2829 = vmatpush1.bf16.msra.mxu0 0
    %2830 = vmatprep.subr.bf16.mxu0 0
    %2831 = vmatpush1.bf16.msra.mxu0 0
    %2832 = vmatprep.subr.bf16.mxu0 0
    %2833 = vmatpush1.bf16.msra.mxu0 0
    %2834 = vmatprep.subr.bf16.mxu0 0
    %2835 = vmatpush1.bf16.msra.mxu0 0
    %2836 = vmatprep.subr.bf16.mxu0 0
    %2837 = vmatpush1.bf16.msra.mxu0 0
    %2838 = vmatprep.subr.bf16.mxu0 0
    %2839 = vmatpush1.bf16.msra.mxu0 0
    %2840 = vmatprep.mubr.bf16.mxu0 0
    %2841 = vmatmul.mubr.bf16.gmra.mrb[0].mxu0 %v2800
    %v2842 = vpop.f32.mrb[0].mxu0
    %v2843 = vadd.f32 0.0, %v2842
    %v2844 = vpop.f32.mrb[0].mxu0
    %v2845 = vpop.f32.mrb[0].mxu0
    %v2846 = vadd.f32 0.0, %v2845
    %v2847 = vpop.f32.mrb[0].mxu0
    %2848 = vmatprep.mubr.bf16.mxu0 0
    %2849 = vmatmul.mubr.bf16.gmra.mrb[0].mxu0 %v2801
    %v2850 = vpop.f32.mrb[0].mxu0
    %v2851 = vadd.f32 0.0, %v2850
    %v2852 = vpop.f32.mrb[0].mxu0
    %v2853 = vpop.f32.mrb[0].mxu0
    %v2854 = vadd.f32 0.0, %v2853
    %v2855 = vpop.f32.mrb[0].mxu0
    %2856 = vmatprep.mubr.bf16.mxu0 0
    %2857 = vmatmul.mubr.bf16.gmra.mrb[0].mxu0 %v2802
    %v2858 = vpop.f32.mrb[0].mxu0
    %v2859 = vadd.f32 0.0, %v2858
    %v2860 = vpop.f32.mrb[0].mxu0
    %v2861 = vpop.f32.mrb[0].mxu0
    %v2862 = vadd.f32 0.0, %v2861
    %v2863 = vpop.f32.mrb[0].mxu0
    %2864 = vmatprep.mubr.bf16.mxu0 0
    %2865 = vmatmul.mubr.bf16.gmra.mrb[0].mxu0 %v2803
    %v2866 = vpop.f32.mrb[0].mxu0
    %v2867 = vadd.f32 0.0, %v2866
    %v2868 = vpop.f32.mrb[0].mxu0
    %v2869 = vpop.f32.mrb[0].mxu0
    %v2870 = vadd.f32 0.0, %v2869
    %v2871 = vpop.f32.mrb[0].mxu0
    %2872 = vmatprep.mubr.bf16.mxu0 0
    %2873 = vmatmul.mubr.bf16.gmra.mrb[0].mxu0 %v2804
    %v2874 = vpop.f32.mrb[0].mxu0
    %v2875 = vadd.f32 0.0, %v2874
    %v2876 = vpop.f32.mrb[0].mxu0
    %v2877 = vpop.f32.mrb[0].mxu0
    %v2878 = vadd.f32 0.0, %v2877
    %v2879 = vpop.f32.mrb[0].mxu0
    %2880 = vmatprep.mubr.bf16.mxu0 0
    %2881 = vmatmul.mubr.bf16.gmra.mrb[0].mxu0 %v2805
    %v2882 = vpop.f32.mrb[0].mxu0
    %v2883 = vadd.f32 0.0, %v2882
    %v2884 = vpop.f32.mrb[0].mxu0
    %v2885 = vpop.f32.mrb[0].mxu0
    %v2886 = vadd.f32 0.0, %v2885
    %v2887 = vpop.f32.mrb[0].mxu0
    %2888 = vmatprep.mubr.bf16.mxu0 0
    %2889 = vmatmul.mubr.bf16.gmra.mrb[0].mxu0 %v2806
    %v2890 = vpop.f32.mrb[0].mxu0
    %v2891 = vadd.f32 0.0, %v2890
    %v2892 = vpop.f32.mrb[0].mxu0
    %v2893 = vpop.f32.mrb[0].mxu0
    %v2894 = vadd.f32 0.0, %v2893
    %v2895 = vpop.f32.mrb[0].mxu0
    %2896 = vmatprep.mubr.bf16.mxu0 0
    %2897 = vmatmul.mubr.bf16.gmra.mrb[0].mxu0 %v2807
    %v2898 = vpop.f32.mrb[0].mxu0
    %v2899 = vadd.f32 0.0, %v2898
    %v2900 = vpop.f32.mrb[0].mxu0
    %v2901 = vpop.f32.mrb[0].mxu0
    %v2902 = vadd.f32 0.0, %v2901
    %v2903 = vpop.f32.mrb[0].mxu0
    %2904 = vdwg.mxu0
    %2905 = vxpose.xlu0.b32.start [1/16] %v2843, 128
    %2906 = vxpose.xlu0.b32.cont [2/16] %v2846, 128
    %2907 = vxpose.xlu0.b32.cont [3/16] %v2851, 128
    %2908 = vxpose.xlu0.b32.cont [4/16] %v2854, 128
    %2909 = vxpose.xlu0.b32.cont [5/16] %v2859, 128
    %2910 = vxpose.xlu0.b32.cont [6/16] %v2862, 128
    %2911 = vxpose.xlu0.b32.cont [7/16] %v2867, 128
    %2912 = vxpose.xlu0.b32.cont [8/16] %v2870, 128
    %2913 = vxpose.xlu0.b32.cont [9/16] %v2875, 128
    %2914 = vxpose.xlu0.b32.cont [10/16] %v2878, 128
    %2915 = vxpose.xlu0.b32.cont [11/16] %v2883, 128
    %2916 = vxpose.xlu0.b32.cont [12/16] %v2886, 128
    %2917 = vxpose.xlu0.b32.cont [13/16] %v2891, 128
    %2918 = vxpose.xlu0.b32.cont [14/16] %v2894, 128
    %2919 = vxpose.xlu0.b32.cont [15/16] %v2899, 128
    %2920 = vxpose.xlu0.b32.end [16/16] %v2902, 128
    %v2921 = vpop.trf.xlu0
    %v2922 = vpop.trf.xlu0
    %v2923 = vpop.trf.xlu0
    %v2924 = vpop.trf.xlu0
    %v2925 = vpop.trf.xlu0
    %v2926 = vpop.trf.xlu0
    %v2927 = vpop.trf.xlu0
    %v2928 = vpop.trf.xlu0
    %v2929 = vpop.trf.xlu0
    %v2930 = vpop.trf.xlu0
    %v2931 = vpop.trf.xlu0
    %v2932 = vpop.trf.xlu0
    %v2933 = vpop.trf.xlu0
    %v2934 = vpop.trf.xlu0
    %v2935 = vpop.trf.xlu0
    %v2936 = vpop.trf.xlu0
    %v2937 = vpack.c.bf16 %v2922, %v2921
    %v2938 = vpack.c.bf16 %v2924, %v2923
    %v2939 = vpack.c.bf16 %v2926, %v2925
    %v2940 = vpack.c.bf16 %v2928, %v2927
    %v2941 = vpack.c.bf16 %v2930, %v2929
    %v2942 = vpack.c.bf16 %v2932, %v2931
    %v2943 = vpack.c.bf16 %v2934, %v2933
    %v2944 = vpack.c.bf16 %v2936, %v2935
    %v2946 = vlaneseq
    %v2947 = vshrl.u32 %v2946, 7
    %v2948 = vsub.s32 0, %v2947
    %v2949 = vrot.slane %v525, %v2948
    %v2950 = vlaneseq
    %v2951 = vshrl.u32 %v2950, 7
    %v2952 = vsub.s32 1, %v2951
    %v2953 = vrot.slane %v525, %v2952
    %v2954 = vlaneseq
    %v2955 = vshrl.u32 %v2954, 7
    %v2956 = vsub.s32 2, %v2955
    %v2957 = vrot.slane %v525, %v2956
    %v2993 = vunpack.c.l.b16 %v461
    %v2994 = vunpack.c.h.b16 %v461
    %v2995 = vunpack.c.l.b16 %v462
    %v2996 = vunpack.c.l.b16 %v463
    %v2997 = vunpack.c.h.b16 %v463
    %v2998 = vunpack.c.l.b16 %v464
    %v2999 = vunpack.c.l.b16 %v465
    %v3000 = vunpack.c.h.b16 %v465
    %v3001 = vunpack.c.l.b16 %v466
    %v3002 = vunpack.c.l.b16 %v467
    %v3003 = vunpack.c.h.b16 %v467
    %v3004 = vunpack.c.l.b16 %v468
    %v3005 = vunpack.c.l.b16 %v469
    %v3006 = vunpack.c.h.b16 %v469
    %v3007 = vunpack.c.l.b16 %v470
    %v3008 = vunpack.c.l.b16 %v471
    %v3009 = vunpack.c.h.b16 %v471
    %v3010 = vunpack.c.l.b16 %v472
    %v3011 = vunpack.c.l.b16 %v473
    %v3012 = vunpack.c.h.b16 %v473
    %v3013 = vunpack.c.l.b16 %v474
    %v3014 = vunpack.c.l.b16 %v475
    %v3015 = vunpack.c.h.b16 %v475
    %v3016 = vunpack.c.l.b16 %v476
    %v3017 = vunpack.c.l.b16 %v477
    %v3018 = vunpack.c.h.b16 %v477
    %v3019 = vunpack.c.l.b16 %v478
    %v3020 = vunpack.c.l.b16 %v479
    %v3021 = vunpack.c.h.b16 %v479
    %v3022 = vunpack.c.l.b16 %v480
    %v3023 = vunpack.c.l.b16 %v481
    %v3024 = vunpack.c.h.b16 %v481
    %v3025 = vunpack.c.l.b16 %v482
    %v3026 = vunpack.c.l.b16 %v483
    %v3027 = vunpack.c.h.b16 %v483
    %v3028 = vunpack.c.l.b16 %v484
    %v3029 = vunpack.c.l.b16 %v485
    %v3030 = vunpack.c.h.b16 %v485
    %v3031 = vunpack.c.l.b16 %v486
    %v3032 = vunpack.c.l.b16 %v487
    %v3033 = vunpack.c.h.b16 %v487
    %v3034 = vunpack.c.l.b16 %v488
    %v3035 = vunpack.c.l.b16 %v489
    %v3036 = vunpack.c.h.b16 %v489
    %v3037 = vunpack.c.l.b16 %v490
    %v3038 = vunpack.c.l.b16 %v491
    %v3039 = vunpack.c.h.b16 %v491
    %v3040 = vunpack.c.l.b16 %v492
    %v3041 = vpack.c.b16 %v2996, %v2993
    %v3042 = vpack.c.b16 %v2997, %v2994
    %v3043 = vpack.c.b16 %v2998, %v2995
    %v3044 = vpack.c.b16 %v3002, %v2999
    %v3045 = vpack.c.b16 %v3003, %v3000
    %v3046 = vpack.c.b16 %v3004, %v3001
    %v3047 = vpack.c.b16 %v3008, %v3005
    %v3048 = vpack.c.b16 %v3009, %v3006
    %v3049 = vpack.c.b16 %v3010, %v3007
    %v3050 = vpack.c.b16 %v3014, %v3011
    %v3051 = vpack.c.b16 %v3015, %v3012
    %v3052 = vpack.c.b16 %v3016, %v3013
    %v3053 = vpack.c.b16 %v3020, %v3017
    %v3054 = vpack.c.b16 %v3021, %v3018
    %v3055 = vpack.c.b16 %v3022, %v3019
    %v3056 = vpack.c.b16 %v3026, %v3023
    %v3057 = vpack.c.b16 %v3027, %v3024
    %v3058 = vpack.c.b16 %v3028, %v3025
    %v3059 = vpack.c.b16 %v3032, %v3029
    %v3060 = vpack.c.b16 %v3033, %v3030
    %v3061 = vpack.c.b16 %v3034, %v3031
    %v3062 = vpack.c.b16 %v3038, %v3035
    %v3063 = vpack.c.b16 %v3039, %v3036
    %v3064 = vpack.c.b16 %v3040, %v3037
    %3089 = vmatprep.subr.bf16.mxu0 %v3042
    %3090 = vmatpush1.bf16.msra.mxu0 %v3041
    %3091 = vmatprep.subr.bf16.mxu0 %v3045
    %3092 = vmatpush1.bf16.msra.mxu0 %v3044
    %3093 = vmatprep.subr.bf16.mxu0 %v3048
    %3094 = vmatpush1.bf16.msra.mxu0 %v3047
    %3095 = vmatprep.subr.bf16.mxu0 %v3051
    %3096 = vmatpush1.bf16.msra.mxu0 %v3050
    %3097 = vmatprep.subr.bf16.mxu0 %v3054
    %3098 = vmatpush1.bf16.msra.mxu0 %v3053
    %3099 = vmatprep.subr.bf16.mxu0 %v3057
    %3100 = vmatpush1.bf16.msra.mxu0 %v3056
    %3101 = vmatprep.subr.bf16.mxu0 %v3060
    %3102 = vmatpush1.bf16.msra.mxu0 %v3059
    %3103 = vmatprep.subr.bf16.mxu0 %v3063
    %3104 = vmatpush1.bf16.msra.mxu0 %v3062
    %3105 = vmatprep.subr.bf16.mxu0 0
    %3106 = vmatpush1.bf16.msra.mxu0 0
    %3107 = vmatprep.subr.bf16.mxu0 0
    %3108 = vmatpush1.bf16.msra.mxu0 0
    %3109 = vmatprep.subr.bf16.mxu0 0
    %3110 = vmatpush1.bf16.msra.mxu0 0
    %3111 = vmatprep.subr.bf16.mxu0 0
    %3112 = vmatpush1.bf16.msra.mxu0 0
    %3113 = vmatprep.subr.bf16.mxu0 0
    %3114 = vmatpush1.bf16.msra.mxu0 0
    %3115 = vmatprep.subr.bf16.mxu0 0
    %3116 = vmatpush1.bf16.msra.mxu0 0
    %3117 = vmatprep.subr.bf16.mxu0 0
    %3118 = vmatpush1.bf16.msra.mxu0 0
    %3119 = vmatprep.subr.bf16.mxu0 0
    %3120 = vmatpush1.bf16.msra.mxu0 0
    %3121 = vmatprep.mubr.bf16.mxu0 0
    %3122 = vmatmul.mubr.bf16.gmra.mrb[0].mxu0 %v2937
    %v3123 = vpop.f32.mrb[0].mxu0
    %v3124 = vadd.f32 %v2949, %v3123
    %v3125 = vpop.f32.mrb[0].mxu0
    %v3126 = vadd.f32 %v2953, %v3125
    %v3127 = vpop.f32.mrb[0].mxu0
    %v3128 = vadd.f32 %v2949, %v3127
    %v3129 = vpop.f32.mrb[0].mxu0
    %v3130 = vadd.f32 %v2953, %v3129
    %3131 = vmatprep.mubr.bf16.mxu0 0
    %3132 = vmatmul.mubr.bf16.gmra.mrb[0].mxu0 %v2938
    %v3133 = vpop.f32.mrb[0].mxu0
    %v3134 = vadd.f32 %v2949, %v3133
    %v3135 = vpop.f32.mrb[0].mxu0
    %v3136 = vadd.f32 %v2953, %v3135
    %v3137 = vpop.f32.mrb[0].mxu0
    %v3138 = vadd.f32 %v2949, %v3137
    %v3139 = vpop.f32.mrb[0].mxu0
    %v3140 = vadd.f32 %v2953, %v3139
    %3141 = vmatprep.mubr.bf16.mxu0 0
    %3142 = vmatmul.mubr.bf16.gmra.mrb[0].mxu0 %v2939
    %v3143 = vpop.f32.mrb[0].mxu0
    %v3144 = vadd.f32 %v2949, %v3143
    %v3145 = vpop.f32.mrb[0].mxu0
    %v3146 = vadd.f32 %v2953, %v3145
    %v3147 = vpop.f32.mrb[0].mxu0
    %v3148 = vadd.f32 %v2949, %v3147
    %v3149 = vpop.f32.mrb[0].mxu0
    %v3150 = vadd.f32 %v2953, %v3149
    %3151 = vmatprep.mubr.bf16.mxu0 0
    %3152 = vmatmul.mubr.bf16.gmra.mrb[0].mxu0 %v2940
    %v3153 = vpop.f32.mrb[0].mxu0
    %v3154 = vadd.f32 %v2949, %v3153
    %v3155 = vpop.f32.mrb[0].mxu0
    %v3156 = vadd.f32 %v2953, %v3155
    %v3157 = vpop.f32.mrb[0].mxu0
    %v3158 = vadd.f32 %v2949, %v3157
    %v3159 = vpop.f32.mrb[0].mxu0
    %v3160 = vadd.f32 %v2953, %v3159
    %3161 = vmatprep.mubr.bf16.mxu0 0
    %3162 = vmatmul.mubr.bf16.gmra.mrb[0].mxu0 %v2941
    %v3163 = vpop.f32.mrb[0].mxu0
    %v3164 = vadd.f32 %v2949, %v3163
    %v3165 = vpop.f32.mrb[0].mxu0
    %v3166 = vadd.f32 %v2953, %v3165
    %v3167 = vpop.f32.mrb[0].mxu0
    %v3168 = vadd.f32 %v2949, %v3167
    %v3169 = vpop.f32.mrb[0].mxu0
    %v3170 = vadd.f32 %v2953, %v3169
    %3171 = vmatprep.mubr.bf16.mxu0 0
    %3172 = vmatmul.mubr.bf16.gmra.mrb[0].mxu0 %v2942
    %v3173 = vpop.f32.mrb[0].mxu0
    %v3174 = vadd.f32 %v2949, %v3173
    %v3175 = vpop.f32.mrb[0].mxu0
    %v3176 = vadd.f32 %v2953, %v3175
    %v3177 = vpop.f32.mrb[0].mxu0
    %v3178 = vadd.f32 %v2949, %v3177
    %v3179 = vpop.f32.mrb[0].mxu0
    %v3180 = vadd.f32 %v2953, %v3179
    %3181 = vmatprep.mubr.bf16.mxu0 0
    %3182 = vmatmul.mubr.bf16.gmra.mrb[0].mxu0 %v2943
    %v3183 = vpop.f32.mrb[0].mxu0
    %v3184 = vadd.f32 %v2949, %v3183
    %v3185 = vpop.f32.mrb[0].mxu0
    %v3186 = vadd.f32 %v2953, %v3185
    %v3187 = vpop.f32.mrb[0].mxu0
    %v3188 = vadd.f32 %v2949, %v3187
    %v3189 = vpop.f32.mrb[0].mxu0
    %v3190 = vadd.f32 %v2953, %v3189
    %3191 = vmatprep.mubr.bf16.mxu0 0
    %3192 = vmatmul.mubr.bf16.gmra.mrb[0].mxu0 %v2944
    %v3193 = vpop.f32.mrb[0].mxu0
    %v3194 = vadd.f32 %v2949, %v3193
    %v3195 = vpop.f32.mrb[0].mxu0
    %v3196 = vadd.f32 %v2953, %v3195
    %v3197 = vpop.f32.mrb[0].mxu0
    %v3198 = vadd.f32 %v2949, %v3197
    %v3199 = vpop.f32.mrb[0].mxu0
    %v3200 = vadd.f32 %v2953, %v3199
    %3201 = vdwg.mxu0
    %3202 = vmatprep.subr.bf16.mxu0 0
    %3203 = vmatpush1.bf16.msra.mxu0 %v3043
    %3204 = vmatprep.subr.bf16.mxu0 0
    %3205 = vmatpush1.bf16.msra.mxu0 %v3046
    %3206 = vmatprep.subr.bf16.mxu0 0
    %3207 = vmatpush1.bf16.msra.mxu0 %v3049
    %3208 = vmatprep.subr.bf16.mxu0 0
    %3209 = vmatpush1.bf16.msra.mxu0 %v3052
    %3210 = vmatprep.subr.bf16.mxu0 0
    %3211 = vmatpush1.bf16.msra.mxu0 %v3055
    %3212 = vmatprep.subr.bf16.mxu0 0
    %3213 = vmatpush1.bf16.msra.mxu0 %v3058
    %3214 = vmatprep.subr.bf16.mxu0 0
    %3215 = vmatpush1.bf16.msra.mxu0 %v3061
    %3216 = vmatprep.subr.bf16.mxu0 0
    %3217 = vmatpush1.bf16.msra.mxu0 %v3064
    %3218 = vmatprep.subr.bf16.mxu0 0
    %3219 = vmatpush1.bf16.msra.mxu0 0
    %3220 = vmatprep.subr.bf16.mxu0 0
    %3221 = vmatpush1.bf16.msra.mxu0 0
    %3222 = vmatprep.subr.bf16.mxu0 0
    %3223 = vmatpush1.bf16.msra.mxu0 0
    %3224 = vmatprep.subr.bf16.mxu0 0
    %3225 = vmatpush1.bf16.msra.mxu0 0
    %3226 = vmatprep.subr.bf16.mxu0 0
    %3227 = vmatpush1.bf16.msra.mxu0 0
    %3228 = vmatprep.subr.bf16.mxu0 0
    %3229 = vmatpush1.bf16.msra.mxu0 0
    %3230 = vmatprep.subr.bf16.mxu0 0
    %3231 = vmatpush1.bf16.msra.mxu0 0
    %3232 = vmatprep.subr.bf16.mxu0 0
    %3233 = vmatpush1.bf16.msra.mxu0 0
    %3234 = vmatprep.mubr.bf16.mxu0 0
    %3235 = vmatmul.mubr.bf16.gmra.mrb[0].mxu0 %v2937
    %v3236 = vpop.f32.mrb[0].mxu0
    %v3237 = vadd.f32 %v2957, %v3236
    %v3238 = vpop.f32.mrb[0].mxu0
    %v3239 = vpop.f32.mrb[0].mxu0
    %v3240 = vadd.f32 %v2957, %v3239
    %v3241 = vpop.f32.mrb[0].mxu0
    %3242 = vmatprep.mubr.bf16.mxu0 0
    %3243 = vmatmul.mubr.bf16.gmra.mrb[0].mxu0 %v2938
    %v3244 = vpop.f32.mrb[0].mxu0
    %v3245 = vadd.f32 %v2957, %v3244
    %v3246 = vpop.f32.mrb[0].mxu0
    %v3247 = vpop.f32.mrb[0].mxu0
    %v3248 = vadd.f32 %v2957, %v3247
    %v3249 = vpop.f32.mrb[0].mxu0
    %3250 = vmatprep.mubr.bf16.mxu0 0
    %3251 = vmatmul.mubr.bf16.gmra.mrb[0].mxu0 %v2939
    %v3252 = vpop.f32.mrb[0].mxu0
    %v3253 = vadd.f32 %v2957, %v3252
    %v3254 = vpop.f32.mrb[0].mxu0
    %v3255 = vpop.f32.mrb[0].mxu0
    %v3256 = vadd.f32 %v2957, %v3255
    %v3257 = vpop.f32.mrb[0].mxu0
    %3258 = vmatprep.mubr.bf16.mxu0 0
    %3259 = vmatmul.mubr.bf16.gmra.mrb[0].mxu0 %v2940
    %v3260 = vpop.f32.mrb[0].mxu0
    %v3261 = vadd.f32 %v2957, %v3260
    %v3262 = vpop.f32.mrb[0].mxu0
    %v3263 = vpop.f32.mrb[0].mxu0
    %v3264 = vadd.f32 %v2957, %v3263
    %v3265 = vpop.f32.mrb[0].mxu0
    %3266 = vmatprep.mubr.bf16.mxu0 0
    %3267 = vmatmul.mubr.bf16.gmra.mrb[0].mxu0 %v2941
    %v3268 = vpop.f32.mrb[0].mxu0
    %v3269 = vadd.f32 %v2957, %v3268
    %v3270 = vpop.f32.mrb[0].mxu0
    %v3271 = vpop.f32.mrb[0].mxu0
    %v3272 = vadd.f32 %v2957, %v3271
    %v3273 = vpop.f32.mrb[0].mxu0
    %3274 = vmatprep.mubr.bf16.mxu0 0
    %3275 = vmatmul.mubr.bf16.gmra.mrb[0].mxu0 %v2942
    %v3276 = vpop.f32.mrb[0].mxu0
    %v3277 = vadd.f32 %v2957, %v3276
    %v3278 = vpop.f32.mrb[0].mxu0
    %v3279 = vpop.f32.mrb[0].mxu0
    %v3280 = vadd.f32 %v2957, %v3279
    %v3281 = vpop.f32.mrb[0].mxu0
    %3282 = vmatprep.mubr.bf16.mxu0 0
    %3283 = vmatmul.mubr.bf16.gmra.mrb[0].mxu0 %v2943
    %v3284 = vpop.f32.mrb[0].mxu0
    %v3285 = vadd.f32 %v2957, %v3284
    %v3286 = vpop.f32.mrb[0].mxu0
    %v3287 = vpop.f32.mrb[0].mxu0
    %v3288 = vadd.f32 %v2957, %v3287
    %v3289 = vpop.f32.mrb[0].mxu0
    %3290 = vmatprep.mubr.bf16.mxu0 0
    %3291 = vmatmul.mubr.bf16.gmra.mrb[0].mxu0 %v2944
    %v3292 = vpop.f32.mrb[0].mxu0
    %v3293 = vadd.f32 %v2957, %v3292
    %v3294 = vpop.f32.mrb[0].mxu0
    %v3295 = vpop.f32.mrb[0].mxu0
    %v3296 = vadd.f32 %v2957, %v3295
    %v3297 = vpop.f32.mrb[0].mxu0
    %3298 = vdwg.mxu0
    %v3300 = vlaneseq
    %v3301 = vshrl.u32 %v3300, 7
    %v3302 = vsub.s32 0, %v3301
    %v3303 = vrot.slane %v526, %v3302
    %v3304 = vlaneseq
    %v3305 = vshrl.u32 %v3304, 7
    %v3306 = vsub.s32 1, %v3305
    %v3307 = vrot.slane %v526, %v3306
    %v3308 = vlaneseq
    %v3309 = vshrl.u32 %v3308, 7
    %v3310 = vsub.s32 2, %v3309
    %v3311 = vrot.slane %v526, %v3310
    %v3347 = vunpack.c.l.b16 %v493
    %v3348 = vunpack.c.h.b16 %v493
    %v3349 = vunpack.c.l.b16 %v494
    %v3350 = vunpack.c.l.b16 %v495
    %v3351 = vunpack.c.h.b16 %v495
    %v3352 = vunpack.c.l.b16 %v496
    %v3353 = vunpack.c.l.b16 %v497
    %v3354 = vunpack.c.h.b16 %v497
    %v3355 = vunpack.c.l.b16 %v498
    %v3356 = vunpack.c.l.b16 %v499
    %v3357 = vunpack.c.h.b16 %v499
    %v3358 = vunpack.c.l.b16 %v500
    %v3359 = vunpack.c.l.b16 %v501
    %v3360 = vunpack.c.h.b16 %v501
    %v3361 = vunpack.c.l.b16 %v502
    %v3362 = vunpack.c.l.b16 %v503
    %v3363 = vunpack.c.h.b16 %v503
    %v3364 = vunpack.c.l.b16 %v504
    %v3365 = vunpack.c.l.b16 %v505
    %v3366 = vunpack.c.h.b16 %v505
    %v3367 = vunpack.c.l.b16 %v506
    %v3368 = vunpack.c.l.b16 %v507
    %v3369 = vunpack.c.h.b16 %v507
    %v3370 = vunpack.c.l.b16 %v508
    %v3371 = vunpack.c.l.b16 %v509
    %v3372 = vunpack.c.h.b16 %v509
    %v3373 = vunpack.c.l.b16 %v510
    %v3374 = vunpack.c.l.b16 %v511
    %v3375 = vunpack.c.h.b16 %v511
    %v3376 = vunpack.c.l.b16 %v512
    %v3377 = vunpack.c.l.b16 %v513
    %v3378 = vunpack.c.h.b16 %v513
    %v3379 = vunpack.c.l.b16 %v514
    %v3380 = vunpack.c.l.b16 %v515
    %v3381 = vunpack.c.h.b16 %v515
    %v3382 = vunpack.c.l.b16 %v516
    %v3383 = vunpack.c.l.b16 %v517
    %v3384 = vunpack.c.h.b16 %v517
    %v3385 = vunpack.c.l.b16 %v518
    %v3386 = vunpack.c.l.b16 %v519
    %v3387 = vunpack.c.h.b16 %v519
    %v3388 = vunpack.c.l.b16 %v520
    %v3389 = vunpack.c.l.b16 %v521
    %v3390 = vunpack.c.h.b16 %v521
    %v3391 = vunpack.c.l.b16 %v522
    %v3392 = vunpack.c.l.b16 %v523
    %v3393 = vunpack.c.h.b16 %v523
    %v3394 = vunpack.c.l.b16 %v524
    %v3395 = vpack.c.b16 %v3350, %v3347
    %v3396 = vpack.c.b16 %v3351, %v3348
    %v3397 = vpack.c.b16 %v3352, %v3349
    %v3398 = vpack.c.b16 %v3356, %v3353
    %v3399 = vpack.c.b16 %v3357, %v3354
    %v3400 = vpack.c.b16 %v3358, %v3355
    %v3401 = vpack.c.b16 %v3362, %v3359
    %v3402 = vpack.c.b16 %v3363, %v3360
    %v3403 = vpack.c.b16 %v3364, %v3361
    %v3404 = vpack.c.b16 %v3368, %v3365
    %v3405 = vpack.c.b16 %v3369, %v3366
    %v3406 = vpack.c.b16 %v3370, %v3367
    %v3407 = vpack.c.b16 %v3374, %v3371
    %v3408 = vpack.c.b16 %v3375, %v3372
    %v3409 = vpack.c.b16 %v3376, %v3373
    %v3410 = vpack.c.b16 %v3380, %v3377
    %v3411 = vpack.c.b16 %v3381, %v3378
    %v3412 = vpack.c.b16 %v3382, %v3379
    %v3413 = vpack.c.b16 %v3386, %v3383
    %v3414 = vpack.c.b16 %v3387, %v3384
    %v3415 = vpack.c.b16 %v3388, %v3385
    %v3416 = vpack.c.b16 %v3392, %v3389
    %v3417 = vpack.c.b16 %v3393, %v3390
    %v3418 = vpack.c.b16 %v3394, %v3391
    %3443 = vmatprep.subr.bf16.mxu0 %v3396
    %3444 = vmatpush1.bf16.msra.mxu0 %v3395
    %3445 = vmatprep.subr.bf16.mxu0 %v3399
    %3446 = vmatpush1.bf16.msra.mxu0 %v3398
    %3447 = vmatprep.subr.bf16.mxu0 %v3402
    %3448 = vmatpush1.bf16.msra.mxu0 %v3401
    %3449 = vmatprep.subr.bf16.mxu0 %v3405
    %3450 = vmatpush1.bf16.msra.mxu0 %v3404
    %3451 = vmatprep.subr.bf16.mxu0 %v3408
    %3452 = vmatpush1.bf16.msra.mxu0 %v3407
    %3453 = vmatprep.subr.bf16.mxu0 %v3411
    %3454 = vmatpush1.bf16.msra.mxu0 %v3410
    %3455 = vmatprep.subr.bf16.mxu0 %v3414
    %3456 = vmatpush1.bf16.msra.mxu0 %v3413
    %3457 = vmatprep.subr.bf16.mxu0 %v3417
    %3458 = vmatpush1.bf16.msra.mxu0 %v3416
    %3459 = vmatprep.subr.bf16.mxu0 0
    %3460 = vmatpush1.bf16.msra.mxu0 0
    %3461 = vmatprep.subr.bf16.mxu0 0
    %3462 = vmatpush1.bf16.msra.mxu0 0
    %3463 = vmatprep.subr.bf16.mxu0 0
    %3464 = vmatpush1.bf16.msra.mxu0 0
    %3465 = vmatprep.subr.bf16.mxu0 0
    %3466 = vmatpush1.bf16.msra.mxu0 0
    %3467 = vmatprep.subr.bf16.mxu0 0
    %3468 = vmatpush1.bf16.msra.mxu0 0
    %3469 = vmatprep.subr.bf16.mxu0 0
    %3470 = vmatpush1.bf16.msra.mxu0 0
    %3471 = vmatprep.subr.bf16.mxu0 0
    %3472 = vmatpush1.bf16.msra.mxu0 0
    %3473 = vmatprep.subr.bf16.mxu0 0
    %3474 = vmatpush1.bf16.msra.mxu0 0
    %3475 = vmatprep.mubr.bf16.mxu0 0
    %3476 = vmatmul.mubr.bf16.gmra.mrb[0].mxu0 %v2434
    %v3477 = vpop.f32.mrb[0].mxu0
    %v3478 = vadd.f32 %v3303, %v3477
    %v3479 = vpop.f32.mrb[0].mxu0
    %v3480 = vadd.f32 %v3307, %v3479
    %v3481 = vpop.f32.mrb[0].mxu0
    %v3482 = vadd.f32 %v3303, %v3481
    %v3483 = vpop.f32.mrb[0].mxu0
    %v3484 = vadd.f32 %v3307, %v3483
    %3485 = vmatprep.mubr.bf16.mxu0 0
    %3486 = vmatmul.mubr.bf16.gmra.mrb[0].mxu0 %v2435
    %v3487 = vpop.f32.mrb[0].mxu0
    %v3488 = vadd.f32 %v3303, %v3487
    %v3489 = vpop.f32.mrb[0].mxu0
    %v3490 = vadd.f32 %v3307, %v3489
    %v3491 = vpop.f32.mrb[0].mxu0
    %v3492 = vadd.f32 %v3303, %v3491
    %v3493 = vpop.f32.mrb[0].mxu0
    %v3494 = vadd.f32 %v3307, %v3493
    %3495 = vmatprep.mubr.bf16.mxu0 0
    %3496 = vmatmul.mubr.bf16.gmra.mrb[0].mxu0 %v2436
    %v3497 = vpop.f32.mrb[0].mxu0
    %v3498 = vadd.f32 %v3303, %v3497
    %v3499 = vpop.f32.mrb[0].mxu0
    %v3500 = vadd.f32 %v3307, %v3499
    %v3501 = vpop.f32.mrb[0].mxu0
    %v3502 = vadd.f32 %v3303, %v3501
    %v3503 = vpop.f32.mrb[0].mxu0
    %v3504 = vadd.f32 %v3307, %v3503
    %3505 = vmatprep.mubr.bf16.mxu0 0
    %3506 = vmatmul.mubr.bf16.gmra.mrb[0].mxu0 %v2437
    %v3507 = vpop.f32.mrb[0].mxu0
    %v3508 = vadd.f32 %v3303, %v3507
    %v3509 = vpop.f32.mrb[0].mxu0
    %v3510 = vadd.f32 %v3307, %v3509
    %v3511 = vpop.f32.mrb[0].mxu0
    %v3512 = vadd.f32 %v3303, %v3511
    %v3513 = vpop.f32.mrb[0].mxu0
    %v3514 = vadd.f32 %v3307, %v3513
    %3515 = vmatprep.mubr.bf16.mxu0 0
    %3516 = vmatmul.mubr.bf16.gmra.mrb[0].mxu0 %v2438
    %v3517 = vpop.f32.mrb[0].mxu0
    %v3518 = vadd.f32 %v3303, %v3517
    %v3519 = vpop.f32.mrb[0].mxu0
    %v3520 = vadd.f32 %v3307, %v3519
    %v3521 = vpop.f32.mrb[0].mxu0
    %v3522 = vadd.f32 %v3303, %v3521
    %v3523 = vpop.f32.mrb[0].mxu0
    %v3524 = vadd.f32 %v3307, %v3523
    %3525 = vmatprep.mubr.bf16.mxu0 0
    %3526 = vmatmul.mubr.bf16.gmra.mrb[0].mxu0 %v2439
    %v3527 = vpop.f32.mrb[0].mxu0
    %v3528 = vadd.f32 %v3303, %v3527
    %v3529 = vpop.f32.mrb[0].mxu0
    %v3530 = vadd.f32 %v3307, %v3529
    %v3531 = vpop.f32.mrb[0].mxu0
    %v3532 = vadd.f32 %v3303, %v3531
    %v3533 = vpop.f32.mrb[0].mxu0
    %v3534 = vadd.f32 %v3307, %v3533
    %3535 = vmatprep.mubr.bf16.mxu0 0
    %3536 = vmatmul.mubr.bf16.gmra.mrb[0].mxu0 %v2440
    %v3537 = vpop.f32.mrb[0].mxu0
    %v3538 = vadd.f32 %v3303, %v3537
    %v3539 = vpop.f32.mrb[0].mxu0
    %v3540 = vadd.f32 %v3307, %v3539
    %v3541 = vpop.f32.mrb[0].mxu0
    %v3542 = vadd.f32 %v3303, %v3541
    %v3543 = vpop.f32.mrb[0].mxu0
    %v3544 = vadd.f32 %v3307, %v3543
    %3545 = vmatprep.mubr.bf16.mxu0 0
    %3546 = vmatmul.mubr.bf16.gmra.mrb[0].mxu0 %v2441
    %v3547 = vpop.f32.mrb[0].mxu0
    %v3548 = vadd.f32 %v3303, %v3547
    %v3549 = vpop.f32.mrb[0].mxu0
    %v3550 = vadd.f32 %v3307, %v3549
    %v3551 = vpop.f32.mrb[0].mxu0
    %v3552 = vadd.f32 %v3303, %v3551
    %v3553 = vpop.f32.mrb[0].mxu0
    %v3554 = vadd.f32 %v3307, %v3553
    %3555 = vdwg.mxu0
    %3556 = vmatprep.subr.bf16.mxu0 0
    %3557 = vmatpush1.bf16.msra.mxu0 %v3397
    %3558 = vmatprep.subr.bf16.mxu0 0
    %3559 = vmatpush1.bf16.msra.mxu0 %v3400
    %3560 = vmatprep.subr.bf16.mxu0 0
    %3561 = vmatpush1.bf16.msra.mxu0 %v3403
    %3562 = vmatprep.subr.bf16.mxu0 0
    %3563 = vmatpush1.bf16.msra.mxu0 %v3406
    %3564 = vmatprep.subr.bf16.mxu0 0
    %3565 = vmatpush1.bf16.msra.mxu0 %v3409
    %3566 = vmatprep.subr.bf16.mxu0 0
    %3567 = vmatpush1.bf16.msra.mxu0 %v3412
    %3568 = vmatprep.subr.bf16.mxu0 0
    %3569 = vmatpush1.bf16.msra.mxu0 %v3415
    %3570 = vmatprep.subr.bf16.mxu0 0
    %3571 = vmatpush1.bf16.msra.mxu0 %v3418
    %3572 = vmatprep.subr.bf16.mxu0 0
    %3573 = vmatpush1.bf16.msra.mxu0 0
    %3574 = vmatprep.subr.bf16.mxu0 0
    %3575 = vmatpush1.bf16.msra.mxu0 0
    %3576 = vmatprep.subr.bf16.mxu0 0
    %3577 = vmatpush1.bf16.msra.mxu0 0
    %3578 = vmatprep.subr.bf16.mxu0 0
    %3579 = vmatpush1.bf16.msra.mxu0 0
    %3580 = vmatprep.subr.bf16.mxu0 0
    %3581 = vmatpush1.bf16.msra.mxu0 0
    %3582 = vmatprep.subr.bf16.mxu0 0
    %3583 = vmatpush1.bf16.msra.mxu0 0
    %3584 = vmatprep.subr.bf16.mxu0 0
    %3585 = vmatpush1.bf16.msra.mxu0 0
    %3586 = vmatprep.subr.bf16.mxu0 0
    %3587 = vmatpush1.bf16.msra.mxu0 0
    %3588 = vmatprep.mubr.bf16.mxu0 0
    %3589 = vmatmul.mubr.bf16.gmra.mrb[0].mxu0 %v2434
    %v3590 = vpop.f32.mrb[0].mxu0
    %v3591 = vadd.f32 %v3311, %v3590
    %v3592 = vpop.f32.mrb[0].mxu0
    %v3593 = vpop.f32.mrb[0].mxu0
    %v3594 = vadd.f32 %v3311, %v3593
    %v3595 = vpop.f32.mrb[0].mxu0
    %3596 = vmatprep.mubr.bf16.mxu0 0
    %3597 = vmatmul.mubr.bf16.gmra.mrb[0].mxu0 %v2435
    %v3598 = vpop.f32.mrb[0].mxu0
    %v3599 = vadd.f32 %v3311, %v3598
    %v3600 = vpop.f32.mrb[0].mxu0
    %v3601 = vpop.f32.mrb[0].mxu0
    %v3602 = vadd.f32 %v3311, %v3601
    %v3603 = vpop.f32.mrb[0].mxu0
    %3604 = vmatprep.mubr.bf16.mxu0 0
    %3605 = vmatmul.mubr.bf16.gmra.mrb[0].mxu0 %v2436
    %v3606 = vpop.f32.mrb[0].mxu0
    %v3607 = vadd.f32 %v3311, %v3606
    %v3608 = vpop.f32.mrb[0].mxu0
    %v3609 = vpop.f32.mrb[0].mxu0
    %v3610 = vadd.f32 %v3311, %v3609
    %v3611 = vpop.f32.mrb[0].mxu0
    %3612 = vmatprep.mubr.bf16.mxu0 0
    %3613 = vmatmul.mubr.bf16.gmra.mrb[0].mxu0 %v2437
    %v3614 = vpop.f32.mrb[0].mxu0
    %v3615 = vadd.f32 %v3311, %v3614
    %v3616 = vpop.f32.mrb[0].mxu0
    %v3617 = vpop.f32.mrb[0].mxu0
    %v3618 = vadd.f32 %v3311, %v3617
    %v3619 = vpop.f32.mrb[0].mxu0
    %3620 = vmatprep.mubr.bf16.mxu0 0
    %3621 = vmatmul.mubr.bf16.gmra.mrb[0].mxu0 %v2438
    %v3622 = vpop.f32.mrb[0].mxu0
    %v3623 = vadd.f32 %v3311, %v3622
    %v3624 = vpop.f32.mrb[0].mxu0
    %v3625 = vpop.f32.mrb[0].mxu0
    %v3626 = vadd.f32 %v3311, %v3625
    %v3627 = vpop.f32.mrb[0].mxu0
    %3628 = vmatprep.mubr.bf16.mxu0 0
    %3629 = vmatmul.mubr.bf16.gmra.mrb[0].mxu0 %v2439
    %v3630 = vpop.f32.mrb[0].mxu0
    %v3631 = vadd.f32 %v3311, %v3630
    %v3632 = vpop.f32.mrb[0].mxu0
    %v3633 = vpop.f32.mrb[0].mxu0
    %v3634 = vadd.f32 %v3311, %v3633
    %v3635 = vpop.f32.mrb[0].mxu0
    %3636 = vmatprep.mubr.bf16.mxu0 0
    %3637 = vmatmul.mubr.bf16.gmra.mrb[0].mxu0 %v2440
    %v3638 = vpop.f32.mrb[0].mxu0
    %v3639 = vadd.f32 %v3311, %v3638
    %v3640 = vpop.f32.mrb[0].mxu0
    %v3641 = vpop.f32.mrb[0].mxu0
    %v3642 = vadd.f32 %v3311, %v3641
    %v3643 = vpop.f32.mrb[0].mxu0
    %3644 = vmatprep.mubr.bf16.mxu0 0
    %3645 = vmatmul.mubr.bf16.gmra.mrb[0].mxu0 %v2441
    %v3646 = vpop.f32.mrb[0].mxu0
    %v3647 = vadd.f32 %v3311, %v3646
    %v3648 = vpop.f32.mrb[0].mxu0
    %v3649 = vpop.f32.mrb[0].mxu0
    %v3650 = vadd.f32 %v3311, %v3649
    %v3651 = vpop.f32.mrb[0].mxu0
    %3652 = vdwg.mxu0
    %v3653 = vadd.f32 %v3124, %v3478
    %v3654 = vadd.f32 %v3128, %v3482
    %v3655 = vadd.f32 %v3134, %v3488
    %v3656 = vadd.f32 %v3138, %v3492
    %v3657 = vadd.f32 %v3144, %v3498
    %v3658 = vadd.f32 %v3148, %v3502
    %v3659 = vadd.f32 %v3154, %v3508
    %v3660 = vadd.f32 %v3158, %v3512
    %v3661 = vadd.f32 %v3164, %v3518
    %v3662 = vadd.f32 %v3168, %v3522
    %v3663 = vadd.f32 %v3174, %v3528
    %v3664 = vadd.f32 %v3178, %v3532
    %v3665 = vadd.f32 %v3184, %v3538
    %v3666 = vadd.f32 %v3188, %v3542
    %v3667 = vadd.f32 %v3194, %v3548
    %v3668 = vadd.f32 %v3198, %v3552
    %v3669 = vxor.u32 %v3653, 2147483648
    %v3670 = vxor.u32 %v3654, 2147483648
    %v3671 = vxor.u32 %v3655, 2147483648
    %v3672 = vxor.u32 %v3656, 2147483648
    %v3673 = vxor.u32 %v3657, 2147483648
    %v3674 = vxor.u32 %v3658, 2147483648
    %v3675 = vxor.u32 %v3659, 2147483648
    %v3676 = vxor.u32 %v3660, 2147483648
    %v3677 = vxor.u32 %v3661, 2147483648
    %v3678 = vxor.u32 %v3662, 2147483648
    %v3679 = vxor.u32 %v3663, 2147483648
    %v3680 = vxor.u32 %v3664, 2147483648
    %v3681 = vxor.u32 %v3665, 2147483648
    %v3682 = vxor.u32 %v3666, 2147483648
    %v3683 = vxor.u32 %v3667, 2147483648
    %v3684 = vxor.u32 %v3668, 2147483648
    %v3685 = vmul.f32 %v3669, 1.442695
    %v3686 = vpow.pop %v3685
    %v3687 = vmul.f32 %v3670, 1.442695
    %v3688 = vpow.pop %v3687
    %v3689 = vmul.f32 %v3671, 1.442695
    %v3690 = vpow.pop %v3689
    %v3691 = vmul.f32 %v3672, 1.442695
    %v3692 = vpow.pop %v3691
    %v3693 = vmul.f32 %v3673, 1.442695
    %v3694 = vpow.pop %v3693
    %v3695 = vmul.f32 %v3674, 1.442695
    %v3696 = vpow.pop %v3695
    %v3697 = vmul.f32 %v3675, 1.442695
    %v3698 = vpow.pop %v3697
    %v3699 = vmul.f32 %v3676, 1.442695
    %v3700 = vpow.pop %v3699
    %v3701 = vmul.f32 %v3677, 1.442695
    %v3702 = vpow.pop %v3701
    %v3703 = vmul.f32 %v3678, 1.442695
    %v3704 = vpow.pop %v3703
    %v3705 = vmul.f32 %v3679, 1.442695
    %v3706 = vpow.pop %v3705
    %v3707 = vmul.f32 %v3680, 1.442695
    %v3708 = vpow.pop %v3707
    %v3709 = vmul.f32 %v3681, 1.442695
    %v3710 = vpow.pop %v3709
    %v3711 = vmul.f32 %v3682, 1.442695
    %v3712 = vpow.pop %v3711
    %v3713 = vmul.f32 %v3683, 1.442695
    %v3714 = vpow.pop %v3713
    %v3715 = vmul.f32 %v3684, 1.442695
    %v3716 = vpow.pop %v3715
    %v3717 = vadd.f32 %v3686, 1.0
    %v3718 = vadd.f32 %v3688, 1.0
    %v3719 = vadd.f32 %v3690, 1.0
    %v3720 = vadd.f32 %v3692, 1.0
    %v3721 = vadd.f32 %v3694, 1.0
    %v3722 = vadd.f32 %v3696, 1.0
    %v3723 = vadd.f32 %v3698, 1.0
    %v3724 = vadd.f32 %v3700, 1.0
    %v3725 = vadd.f32 %v3702, 1.0
    %v3726 = vadd.f32 %v3704, 1.0
    %v3727 = vadd.f32 %v3706, 1.0
    %v3728 = vadd.f32 %v3708, 1.0
    %v3729 = vadd.f32 %v3710, 1.0
    %v3730 = vadd.f32 %v3712, 1.0
    %v3731 = vadd.f32 %v3714, 1.0
    %v3732 = vadd.f32 %v3716, 1.0
    %v3733 = vrcp.pop %v3717
    %v3734 = vmul.f32 1.0, %v3733
    %v3735 = vrcp.pop %v3718
    %v3736 = vmul.f32 1.0, %v3735
    %v3737 = vrcp.pop %v3719
    %v3738 = vmul.f32 1.0, %v3737
    %v3739 = vrcp.pop %v3720
    %v3740 = vmul.f32 1.0, %v3739
    %v3741 = vrcp.pop %v3721
    %v3742 = vmul.f32 1.0, %v3741
    %v3743 = vrcp.pop %v3722
    %v3744 = vmul.f32 1.0, %v3743
    %v3745 = vrcp.pop %v3723
    %v3746 = vmul.f32 1.0, %v3745
    %v3747 = vrcp.pop %v3724
    %v3748 = vmul.f32 1.0, %v3747
    %v3749 = vrcp.pop %v3725
    %v3750 = vmul.f32 1.0, %v3749
    %v3751 = vrcp.pop %v3726
    %v3752 = vmul.f32 1.0, %v3751
    %v3753 = vrcp.pop %v3727
    %v3754 = vmul.f32 1.0, %v3753
    %v3755 = vrcp.pop %v3728
    %v3756 = vmul.f32 1.0, %v3755
    %v3757 = vrcp.pop %v3729
    %v3758 = vmul.f32 1.0, %v3757
    %v3759 = vrcp.pop %v3730
    %v3760 = vmul.f32 1.0, %v3759
    %v3761 = vrcp.pop %v3731
    %v3762 = vmul.f32 1.0, %v3761
    %v3763 = vrcp.pop %v3732
    %v3764 = vmul.f32 1.0, %v3763
    %v3765 = vadd.f32 %v3126, %v3480
    %v3766 = vadd.f32 %v3130, %v3484
    %v3767 = vadd.f32 %v3136, %v3490
    %v3768 = vadd.f32 %v3140, %v3494
    %v3769 = vadd.f32 %v3146, %v3500
    %v3770 = vadd.f32 %v3150, %v3504
    %v3771 = vadd.f32 %v3156, %v3510
    %v3772 = vadd.f32 %v3160, %v3514
    %v3773 = vadd.f32 %v3166, %v3520
    %v3774 = vadd.f32 %v3170, %v3524
    %v3775 = vadd.f32 %v3176, %v3530
    %v3776 = vadd.f32 %v3180, %v3534
    %v3777 = vadd.f32 %v3186, %v3540
    %v3778 = vadd.f32 %v3190, %v3544
    %v3779 = vadd.f32 %v3196, %v3550
    %v3780 = vadd.f32 %v3200, %v3554
    %v3781 = vxor.u32 %v3765, 2147483648
    %v3782 = vxor.u32 %v3766, 2147483648
    %v3783 = vxor.u32 %v3767, 2147483648
    %v3784 = vxor.u32 %v3768, 2147483648
    %v3785 = vxor.u32 %v3769, 2147483648
    %v3786 = vxor.u32 %v3770, 2147483648
    %v3787 = vxor.u32 %v3771, 2147483648
    %v3788 = vxor.u32 %v3772, 2147483648
    %v3789 = vxor.u32 %v3773, 2147483648
    %v3790 = vxor.u32 %v3774, 2147483648
    %v3791 = vxor.u32 %v3775, 2147483648
    %v3792 = vxor.u32 %v3776, 2147483648
    %v3793 = vxor.u32 %v3777, 2147483648
    %v3794 = vxor.u32 %v3778, 2147483648
    %v3795 = vxor.u32 %v3779, 2147483648
    %v3796 = vxor.u32 %v3780, 2147483648
    %v3797 = vmul.f32 %v3781, 1.442695
    %v3798 = vpow.pop %v3797
    %v3799 = vmul.f32 %v3782, 1.442695
    %v3800 = vpow.pop %v3799
    %v3801 = vmul.f32 %v3783, 1.442695
    %v3802 = vpow.pop %v3801
    %v3803 = vmul.f32 %v3784, 1.442695
    %v3804 = vpow.pop %v3803
    %v3805 = vmul.f32 %v3785, 1.442695
    %v3806 = vpow.pop %v3805
    %v3807 = vmul.f32 %v3786, 1.442695
    %v3808 = vpow.pop %v3807
    %v3809 = vmul.f32 %v3787, 1.442695
    %v3810 = vpow.pop %v3809
    %v3811 = vmul.f32 %v3788, 1.442695
    %v3812 = vpow.pop %v3811
    %v3813 = vmul.f32 %v3789, 1.442695
    %v3814 = vpow.pop %v3813
    %v3815 = vmul.f32 %v3790, 1.442695
    %v3816 = vpow.pop %v3815
    %v3817 = vmul.f32 %v3791, 1.442695
    %v3818 = vpow.pop %v3817
    %v3819 = vmul.f32 %v3792, 1.442695
    %v3820 = vpow.pop %v3819
    %v3821 = vmul.f32 %v3793, 1.442695
    %v3822 = vpow.pop %v3821
    %v3823 = vmul.f32 %v3794, 1.442695
    %v3824 = vpow.pop %v3823
    %v3825 = vmul.f32 %v3795, 1.442695
    %v3826 = vpow.pop %v3825
    %v3827 = vmul.f32 %v3796, 1.442695
    %v3828 = vpow.pop %v3827
    %v3829 = vadd.f32 %v3798, 1.0
    %v3830 = vadd.f32 %v3800, 1.0
    %v3831 = vadd.f32 %v3802, 1.0
    %v3832 = vadd.f32 %v3804, 1.0
    %v3833 = vadd.f32 %v3806, 1.0
    %v3834 = vadd.f32 %v3808, 1.0
    %v3835 = vadd.f32 %v3810, 1.0
    %v3836 = vadd.f32 %v3812, 1.0
    %v3837 = vadd.f32 %v3814, 1.0
    %v3838 = vadd.f32 %v3816, 1.0
    %v3839 = vadd.f32 %v3818, 1.0
    %v3840 = vadd.f32 %v3820, 1.0
    %v3841 = vadd.f32 %v3822, 1.0
    %v3842 = vadd.f32 %v3824, 1.0
    %v3843 = vadd.f32 %v3826, 1.0
    %v3844 = vadd.f32 %v3828, 1.0
    %v3845 = vrcp.pop %v3829
    %v3846 = vmul.f32 1.0, %v3845
    %v3847 = vrcp.pop %v3830
    %v3848 = vmul.f32 1.0, %v3847
    %v3849 = vrcp.pop %v3831
    %v3850 = vmul.f32 1.0, %v3849
    %v3851 = vrcp.pop %v3832
    %v3852 = vmul.f32 1.0, %v3851
    %v3853 = vrcp.pop %v3833
    %v3854 = vmul.f32 1.0, %v3853
    %v3855 = vrcp.pop %v3834
    %v3856 = vmul.f32 1.0, %v3855
    %v3857 = vrcp.pop %v3835
    %v3858 = vmul.f32 1.0, %v3857
    %v3859 = vrcp.pop %v3836
    %v3860 = vmul.f32 1.0, %v3859
    %v3861 = vrcp.pop %v3837
    %v3862 = vmul.f32 1.0, %v3861
    %v3863 = vrcp.pop %v3838
    %v3864 = vmul.f32 1.0, %v3863
    %v3865 = vrcp.pop %v3839
    %v3866 = vmul.f32 1.0, %v3865
    %v3867 = vrcp.pop %v3840
    %v3868 = vmul.f32 1.0, %v3867
    %v3869 = vrcp.pop %v3841
    %v3870 = vmul.f32 1.0, %v3869
    %v3871 = vrcp.pop %v3842
    %v3872 = vmul.f32 1.0, %v3871
    %v3873 = vrcp.pop %v3843
    %v3874 = vmul.f32 1.0, %v3873
    %v3875 = vrcp.pop %v3844
    %v3876 = vmul.f32 1.0, %v3875
    %v3877 = vmul.f32 %v3734, %v3591
    %v3878 = vmul.f32 %v3736, %v3594
    %v3879 = vmul.f32 %v3738, %v3599
    %v3880 = vmul.f32 %v3740, %v3602
    %v3881 = vmul.f32 %v3742, %v3607
    %v3882 = vmul.f32 %v3744, %v3610
    %v3883 = vmul.f32 %v3746, %v3615
    %v3884 = vmul.f32 %v3748, %v3618
    %v3885 = vmul.f32 %v3750, %v3623
    %v3886 = vmul.f32 %v3752, %v3626
    %v3887 = vmul.f32 %v3754, %v3631
    %v3888 = vmul.f32 %v3756, %v3634
    %v3889 = vmul.f32 %v3758, %v3639
    %v3890 = vmul.f32 %v3760, %v3642
    %v3891 = vmul.f32 %v3762, %v3647
    %v3892 = vmul.f32 %v3764, %v3650
    %v3893 = vadd.f32 %v3237, %v3877
    %v3894 = vadd.f32 %v3240, %v3878
    %v3895 = vadd.f32 %v3245, %v3879
    %v3896 = vadd.f32 %v3248, %v3880
    %v3897 = vadd.f32 %v3253, %v3881
    %v3898 = vadd.f32 %v3256, %v3882
    %v3899 = vadd.f32 %v3261, %v3883
    %v3900 = vadd.f32 %v3264, %v3884
    %v3901 = vadd.f32 %v3269, %v3885
    %v3902 = vadd.f32 %v3272, %v3886
    %v3903 = vadd.f32 %v3277, %v3887
    %v3904 = vadd.f32 %v3280, %v3888
    %v3905 = vadd.f32 %v3285, %v3889
    %v3906 = vadd.f32 %v3288, %v3890
    %v3907 = vadd.f32 %v3293, %v3891
    %v3908 = vadd.f32 %v3296, %v3892
    %v3909 = vtanh.pop %v3893
    %v3910 = vtanh.pop %v3894
    %v3911 = vtanh.pop %v3895
    %v3912 = vtanh.pop %v3896
    %v3913 = vtanh.pop %v3897
    %v3914 = vtanh.pop %v3898
    %v3915 = vtanh.pop %v3899
    %v3916 = vtanh.pop %v3900
    %v3917 = vtanh.pop %v3901
    %v3918 = vtanh.pop %v3902
    %v3919 = vtanh.pop %v3903
    %v3920 = vtanh.pop %v3904
    %v3921 = vtanh.pop %v3905
    %v3922 = vtanh.pop %v3906
    %v3923 = vtanh.pop %v3907
    %v3924 = vtanh.pop %v3908
    %v3925 = vsub.f32 1.0, %v3846
    %v3926 = vsub.f32 1.0, %v3848
    %v3927 = vsub.f32 1.0, %v3850
    %v3928 = vsub.f32 1.0, %v3852
    %v3929 = vsub.f32 1.0, %v3854
    %v3930 = vsub.f32 1.0, %v3856
    %v3931 = vsub.f32 1.0, %v3858
    %v3932 = vsub.f32 1.0, %v3860
    %v3933 = vsub.f32 1.0, %v3862
    %v3934 = vsub.f32 1.0, %v3864
    %v3935 = vsub.f32 1.0, %v3866
    %v3936 = vsub.f32 1.0, %v3868
    %v3937 = vsub.f32 1.0, %v3870
    %v3938 = vsub.f32 1.0, %v3872
    %v3939 = vsub.f32 1.0, %v3874
    %v3940 = vsub.f32 1.0, %v3876
    %v3941 = vmul.f32 %v3925, %v3909
    %v3942 = vmul.f32 %v3926, %v3910
    %v3943 = vmul.f32 %v3927, %v3911
    %v3944 = vmul.f32 %v3928, %v3912
    %v3945 = vmul.f32 %v3929, %v3913
    %v3946 = vmul.f32 %v3930, %v3914
    %v3947 = vmul.f32 %v3931, %v3915
    %v3948 = vmul.f32 %v3932, %v3916
    %v3949 = vmul.f32 %v3933, %v3917
    %v3950 = vmul.f32 %v3934, %v3918
    %v3951 = vmul.f32 %v3935, %v3919
    %v3952 = vmul.f32 %v3936, %v3920
    %v3953 = vmul.f32 %v3937, %v3921
    %v3954 = vmul.f32 %v3938, %v3922
    %v3955 = vmul.f32 %v3939, %v3923
    %v3956 = vmul.f32 %v3940, %v3924
    %v3957 = vmul.f32 %v3846, %v2418
    %v3958 = vmul.f32 %v3848, %v2419
    %v3959 = vmul.f32 %v3850, %v2420
    %v3960 = vmul.f32 %v3852, %v2421
    %v3961 = vmul.f32 %v3854, %v2422
    %v3962 = vmul.f32 %v3856, %v2423
    %v3963 = vmul.f32 %v3858, %v2424
    %v3964 = vmul.f32 %v3860, %v2425
    %v3965 = vmul.f32 %v3862, %v2426
    %v3966 = vmul.f32 %v3864, %v2427
    %v3967 = vmul.f32 %v3866, %v2428
    %v3968 = vmul.f32 %v3868, %v2429
    %v3969 = vmul.f32 %v3870, %v2430
    %v3970 = vmul.f32 %v3872, %v2431
    %v3971 = vmul.f32 %v3874, %v2432
    %v3972 = vmul.f32 %v3876, %v2433
    %v3973 = vadd.f32 %v3941, %v3957
    %v3974 = vadd.f32 %v3942, %v3958
    %v3975 = vadd.f32 %v3943, %v3959
    %v3976 = vadd.f32 %v3944, %v3960
    %v3977 = vadd.f32 %v3945, %v3961
    %v3978 = vadd.f32 %v3946, %v3962
    %v3979 = vadd.f32 %v3947, %v3963
    %v3980 = vadd.f32 %v3948, %v3964
    %v3981 = vadd.f32 %v3949, %v3965
    %v3982 = vadd.f32 %v3950, %v3966
    %v3983 = vadd.f32 %v3951, %v3967
    %v3984 = vadd.f32 %v3952, %v3968
    %v3985 = vadd.f32 %v3953, %v3969
    %v3986 = vadd.f32 %v3954, %v3970
    %v3987 = vadd.f32 %v3955, %v3971
    %v3988 = vadd.f32 %v3956, %v3972
    %v3989 = vpack.c.bf16 %v3974, %v3973
    %v3990 = vpack.c.bf16 %v3976, %v3975
    %v3991 = vpack.c.bf16 %v3978, %v3977
    %v3992 = vpack.c.bf16 %v3980, %v3979
    %v3993 = vpack.c.bf16 %v3982, %v3981
    %v3994 = vpack.c.bf16 %v3984, %v3983
    %v3995 = vpack.c.bf16 %v3986, %v3985
    %v3996 = vpack.c.bf16 %v3988, %v3987
    %3997 = vmatprep.subr.bf16.mxu0 0
    %3998 = vmatpush1.bf16.msra.mxu0 %v941
    %3999 = vmatprep.subr.bf16.mxu0 0
    %4000 = vmatpush1.bf16.msra.mxu0 %v942
    %4001 = vmatprep.subr.bf16.mxu0 0
    %4002 = vmatpush1.bf16.msra.mxu0 %v943
    %4003 = vmatprep.subr.bf16.mxu0 0
    %4004 = vmatpush1.bf16.msra.mxu0 %v944
    %4005 = vmatprep.subr.bf16.mxu0 0
    %4006 = vmatpush1.bf16.msra.mxu0 %v945
    %4007 = vmatprep.subr.bf16.mxu0 0
    %4008 = vmatpush1.bf16.msra.mxu0 %v946
    %4009 = vmatprep.subr.bf16.mxu0 0
    %4010 = vmatpush1.bf16.msra.mxu0 %v947
    %4011 = vmatprep.subr.bf16.mxu0 0
    %4012 = vmatpush1.bf16.msra.mxu0 %v948
    %4013 = vmatprep.subr.bf16.mxu0 0
    %4014 = vmatpush1.bf16.msra.mxu0 0
    %4015 = vmatprep.subr.bf16.mxu0 0
    %4016 = vmatpush1.bf16.msra.mxu0 0
    %4017 = vmatprep.subr.bf16.mxu0 0
    %4018 = vmatpush1.bf16.msra.mxu0 0
    %4019 = vmatprep.subr.bf16.mxu0 0
    %4020 = vmatpush1.bf16.msra.mxu0 0
    %4021 = vmatprep.subr.bf16.mxu0 0
    %4022 = vmatpush1.bf16.msra.mxu0 0
    %4023 = vmatprep.subr.bf16.mxu0 0
    %4024 = vmatpush1.bf16.msra.mxu0 0
    %4025 = vmatprep.subr.bf16.mxu0 0
    %4026 = vmatpush1.bf16.msra.mxu0 0
    %4027 = vmatprep.subr.bf16.mxu0 0
    %4028 = vmatpush1.bf16.msra.mxu0 0
    %4029 = vmatprep.mubr.bf16.mxu0 0
    %4030 = vmatmul.mubr.bf16.gmra.mrb[0].mxu0 %v3989
    %v4031 = vpop.f32.mrb[0].mxu0
    %v4032 = vadd.f32 %v907, %v4031
    %v4033 = vpop.f32.mrb[0].mxu0
    %v4034 = vpop.f32.mrb[0].mxu0
    %v4035 = vadd.f32 %v907, %v4034
    %v4036 = vpop.f32.mrb[0].mxu0
    %4037 = vmatprep.mubr.bf16.mxu0 0
    %4038 = vmatmul.mubr.bf16.gmra.mrb[0].mxu0 %v3990
    %v4039 = vpop.f32.mrb[0].mxu0
    %v4040 = vadd.f32 %v907, %v4039
    %v4041 = vpop.f32.mrb[0].mxu0
    %v4042 = vpop.f32.mrb[0].mxu0
    %v4043 = vadd.f32 %v907, %v4042
    %v4044 = vpop.f32.mrb[0].mxu0
    %4045 = vmatprep.mubr.bf16.mxu0 0
    %4046 = vmatmul.mubr.bf16.gmra.mrb[0].mxu0 %v3991
    %v4047 = vpop.f32.mrb[0].mxu0
    %v4048 = vadd.f32 %v907, %v4047
    %v4049 = vpop.f32.mrb[0].mxu0
    %v4050 = vpop.f32.mrb[0].mxu0
    %v4051 = vadd.f32 %v907, %v4050
    %v4052 = vpop.f32.mrb[0].mxu0
    %4053 = vmatprep.mubr.bf16.mxu0 0
    %4054 = vmatmul.mubr.bf16.gmra.mrb[0].mxu0 %v3992
    %v4055 = vpop.f32.mrb[0].mxu0
    %v4056 = vadd.f32 %v907, %v4055
    %v4057 = vpop.f32.mrb[0].mxu0
    %v4058 = vpop.f32.mrb[0].mxu0
    %v4059 = vadd.f32 %v907, %v4058
    %v4060 = vpop.f32.mrb[0].mxu0
    %4061 = vmatprep.mubr.bf16.mxu0 0
    %4062 = vmatmul.mubr.bf16.gmra.mrb[0].mxu0 %v3993
    %v4063 = vpop.f32.mrb[0].mxu0
    %v4064 = vadd.f32 %v907, %v4063
    %v4065 = vpop.f32.mrb[0].mxu0
    %v4066 = vpop.f32.mrb[0].mxu0
    %v4067 = vadd.f32 %v907, %v4066
    %v4068 = vpop.f32.mrb[0].mxu0
    %4069 = vmatprep.mubr.bf16.mxu0 0
    %4070 = vmatmul.mubr.bf16.gmra.mrb[0].mxu0 %v3994
    %v4071 = vpop.f32.mrb[0].mxu0
    %v4072 = vadd.f32 %v907, %v4071
    %v4073 = vpop.f32.mrb[0].mxu0
    %v4074 = vpop.f32.mrb[0].mxu0
    %v4075 = vadd.f32 %v907, %v4074
    %v4076 = vpop.f32.mrb[0].mxu0
    %4077 = vmatprep.mubr.bf16.mxu0 0
    %4078 = vmatmul.mubr.bf16.gmra.mrb[0].mxu0 %v3995
    %v4079 = vpop.f32.mrb[0].mxu0
    %v4080 = vadd.f32 %v907, %v4079
    %v4081 = vpop.f32.mrb[0].mxu0
    %v4082 = vpop.f32.mrb[0].mxu0
    %v4083 = vadd.f32 %v907, %v4082
    %v4084 = vpop.f32.mrb[0].mxu0
    %4085 = vmatprep.mubr.bf16.mxu0 0
    %4086 = vmatmul.mubr.bf16.gmra.mrb[0].mxu0 %v3996
    %v4087 = vpop.f32.mrb[0].mxu0
    %v4088 = vadd.f32 %v907, %v4087
    %v4089 = vpop.f32.mrb[0].mxu0
    %v4090 = vpop.f32.mrb[0].mxu0
    %v4091 = vadd.f32 %v907, %v4090
    %v4092 = vpop.f32.mrb[0].mxu0
    %4093 = vdwg.mxu0
    %v4094 = vmax.f32 %v4032, 0.0
    %v4095 = vmax.f32 %v4035, 0.0
    %v4096 = vmax.f32 %v4040, 0.0
    %v4097 = vmax.f32 %v4043, 0.0
    %v4098 = vmax.f32 %v4048, 0.0
    %v4099 = vmax.f32 %v4051, 0.0
    %v4100 = vmax.f32 %v4056, 0.0
    %v4101 = vmax.f32 %v4059, 0.0
    %v4102 = vmax.f32 %v4064, 0.0
    %v4103 = vmax.f32 %v4067, 0.0
    %v4104 = vmax.f32 %v4072, 0.0
    %v4105 = vmax.f32 %v4075, 0.0
    %v4106 = vmax.f32 %v4080, 0.0
    %v4107 = vmax.f32 %v4083, 0.0
    %v4108 = vmax.f32 %v4088, 0.0
    %v4109 = vmax.f32 %v4091, 0.0
    %v4110 = vpack.c.bf16 %v4095, %v4094
    %v4111 = vpack.c.bf16 %v4097, %v4096
    %v4112 = vpack.c.bf16 %v4099, %v4098
    %v4113 = vpack.c.bf16 %v4101, %v4100
    %v4114 = vpack.c.bf16 %v4103, %v4102
    %v4115 = vpack.c.bf16 %v4105, %v4104
    %v4116 = vpack.c.bf16 %v4107, %v4106
    %v4117 = vpack.c.bf16 %v4109, %v4108
    %4118 = vmatprep.subr.bf16.mxu0 0
    %4119 = vmatpush1.bf16.msra.mxu0 %v1116
    %4120 = vmatprep.subr.bf16.mxu0 0
    %4121 = vmatpush1.bf16.msra.mxu0 %v1117
    %4122 = vmatprep.subr.bf16.mxu0 0
    %4123 = vmatpush1.bf16.msra.mxu0 %v1118
    %4124 = vmatprep.subr.bf16.mxu0 0
    %4125 = vmatpush1.bf16.msra.mxu0 %v1119
    %4126 = vmatprep.subr.bf16.mxu0 0
    %4127 = vmatpush1.bf16.msra.mxu0 %v1120
    %4128 = vmatprep.subr.bf16.mxu0 0
    %4129 = vmatpush1.bf16.msra.mxu0 %v1121
    %4130 = vmatprep.subr.bf16.mxu0 0
    %4131 = vmatpush1.bf16.msra.mxu0 %v1122
    %4132 = vmatprep.subr.bf16.mxu0 0
    %4133 = vmatpush1.bf16.msra.mxu0 %v1123
    %4134 = vmatprep.subr.bf16.mxu0 0
    %4135 = vmatpush1.bf16.msra.mxu0 0
    %4136 = vmatprep.subr.bf16.mxu0 0
    %4137 = vmatpush1.bf16.msra.mxu0 0
    %4138 = vmatprep.subr.bf16.mxu0 0
    %4139 = vmatpush1.bf16.msra.mxu0 0
    %4140 = vmatprep.subr.bf16.mxu0 0
    %4141 = vmatpush1.bf16.msra.mxu0 0
    %4142 = vmatprep.subr.bf16.mxu0 0
    %4143 = vmatpush1.bf16.msra.mxu0 0
    %4144 = vmatprep.subr.bf16.mxu0 0
    %4145 = vmatpush1.bf16.msra.mxu0 0
    %4146 = vmatprep.subr.bf16.mxu0 0
    %4147 = vmatpush1.bf16.msra.mxu0 0
    %4148 = vmatprep.subr.bf16.mxu0 0
    %4149 = vmatpush1.bf16.msra.mxu0 0
    %4150 = vmatprep.mubr.bf16.mxu0 0
    %4151 = vmatmul.mubr.bf16.gmra.mrb[0].mxu0 %v4110
    %v4152 = vpop.f32.mrb[0].mxu0
    %v4153 = vadd.f32 %v1082, %v4152
    %v4154 = vpop.f32.mrb[0].mxu0
    %v4155 = vpop.f32.mrb[0].mxu0
    %v4156 = vadd.f32 %v1082, %v4155
    %v4157 = vpop.f32.mrb[0].mxu0
    %4158 = vmatprep.mubr.bf16.mxu0 0
    %4159 = vmatmul.mubr.bf16.gmra.mrb[0].mxu0 %v4111
    %v4160 = vpop.f32.mrb[0].mxu0
    %v4161 = vadd.f32 %v1082, %v4160
    %v4162 = vpop.f32.mrb[0].mxu0
    %v4163 = vpop.f32.mrb[0].mxu0
    %v4164 = vadd.f32 %v1082, %v4163
    %v4165 = vpop.f32.mrb[0].mxu0
    %4166 = vmatprep.mubr.bf16.mxu0 0
    %4167 = vmatmul.mubr.bf16.gmra.mrb[0].mxu0 %v4112
    %v4168 = vpop.f32.mrb[0].mxu0
    %v4169 = vadd.f32 %v1082, %v4168
    %v4170 = vpop.f32.mrb[0].mxu0
    %v4171 = vpop.f32.mrb[0].mxu0
    %v4172 = vadd.f32 %v1082, %v4171
    %v4173 = vpop.f32.mrb[0].mxu0
    %4174 = vmatprep.mubr.bf16.mxu0 0
    %4175 = vmatmul.mubr.bf16.gmra.mrb[0].mxu0 %v4113
    %v4176 = vpop.f32.mrb[0].mxu0
    %v4177 = vadd.f32 %v1082, %v4176
    %v4178 = vpop.f32.mrb[0].mxu0
    %v4179 = vpop.f32.mrb[0].mxu0
    %v4180 = vadd.f32 %v1082, %v4179
    %v4181 = vpop.f32.mrb[0].mxu0
    %4182 = vmatprep.mubr.bf16.mxu0 0
    %4183 = vmatmul.mubr.bf16.gmra.mrb[0].mxu0 %v4114
    %v4184 = vpop.f32.mrb[0].mxu0
    %v4185 = vadd.f32 %v1082, %v4184
    %v4186 = vpop.f32.mrb[0].mxu0
    %v4187 = vpop.f32.mrb[0].mxu0
    %v4188 = vadd.f32 %v1082, %v4187
    %v4189 = vpop.f32.mrb[0].mxu0
    %4190 = vmatprep.mubr.bf16.mxu0 0
    %4191 = vmatmul.mubr.bf16.gmra.mrb[0].mxu0 %v4115
    %v4192 = vpop.f32.mrb[0].mxu0
    %v4193 = vadd.f32 %v1082, %v4192
    %v4194 = vpop.f32.mrb[0].mxu0
    %v4195 = vpop.f32.mrb[0].mxu0
    %v4196 = vadd.f32 %v1082, %v4195
    %v4197 = vpop.f32.mrb[0].mxu0
    %4198 = vmatprep.mubr.bf16.mxu0 0
    %4199 = vmatmul.mubr.bf16.gmra.mrb[0].mxu0 %v4116
    %v4200 = vpop.f32.mrb[0].mxu0
    %v4201 = vadd.f32 %v1082, %v4200
    %v4202 = vpop.f32.mrb[0].mxu0
    %v4203 = vpop.f32.mrb[0].mxu0
    %v4204 = vadd.f32 %v1082, %v4203
    %v4205 = vpop.f32.mrb[0].mxu0
    %4206 = vmatprep.mubr.bf16.mxu0 0
    %4207 = vmatmul.mubr.bf16.gmra.mrb[0].mxu0 %v4117
    %v4208 = vpop.f32.mrb[0].mxu0
    %v4209 = vadd.f32 %v1082, %v4208
    %v4210 = vpop.f32.mrb[0].mxu0
    %v4211 = vpop.f32.mrb[0].mxu0
    %v4212 = vadd.f32 %v1082, %v4211
    %v4213 = vpop.f32.mrb[0].mxu0
    %4214 = vdwg.mxu0
    %v4215 = vpack.c.bf16 %v4156, %v4153
    %v4216 = vpack.c.bf16 %v4164, %v4161
    %v4217 = vpack.c.bf16 %v4172, %v4169
    %v4218 = vpack.c.bf16 %v4180, %v4177
    %v4219 = vpack.c.bf16 %v4188, %v4185
    %v4220 = vpack.c.bf16 %v4196, %v4193
    %v4221 = vpack.c.bf16 %v4204, %v4201
    %v4222 = vpack.c.bf16 %v4212, %v4209
    %4223 = vmatprep.subr.bf16.mxu0 0
    %4224 = vmatpush1.bf16.msra.mxu0 %v4215
    %4225 = vmatprep.subr.bf16.mxu0 0
    %4226 = vmatpush1.bf16.msra.mxu0 %v4216
    %4227 = vmatprep.subr.bf16.mxu0 0
    %4228 = vmatpush1.bf16.msra.mxu0 %v4217
    %4229 = vmatprep.subr.bf16.mxu0 0
    %4230 = vmatpush1.bf16.msra.mxu0 %v4218
    %4231 = vmatprep.subr.bf16.mxu0 0
    %4232 = vmatpush1.bf16.msra.mxu0 %v4219
    %4233 = vmatprep.subr.bf16.mxu0 0
    %4234 = vmatpush1.bf16.msra.mxu0 %v4220
    %4235 = vmatprep.subr.bf16.mxu0 0
    %4236 = vmatpush1.bf16.msra.mxu0 %v4221
    %4237 = vmatprep.subr.bf16.mxu0 0
    %4238 = vmatpush1.bf16.msra.mxu0 %v4222
    %4239 = vmatprep.subr.bf16.mxu0 0
    %4240 = vmatpush1.bf16.msra.mxu0 0
    %4241 = vmatprep.subr.bf16.mxu0 0
    %4242 = vmatpush1.bf16.msra.mxu0 0
    %4243 = vmatprep.subr.bf16.mxu0 0
    %4244 = vmatpush1.bf16.msra.mxu0 0
    %4245 = vmatprep.subr.bf16.mxu0 0
    %4246 = vmatpush1.bf16.msra.mxu0 0
    %4247 = vmatprep.subr.bf16.mxu0 0
    %4248 = vmatpush1.bf16.msra.mxu0 0
    %4249 = vmatprep.subr.bf16.mxu0 0
    %4250 = vmatpush1.bf16.msra.mxu0 0
    %4251 = vmatprep.subr.bf16.mxu0 0
    %4252 = vmatpush1.bf16.msra.mxu0 0
    %4253 = vmatprep.subr.bf16.mxu0 0
    %4254 = vmatpush1.bf16.msra.mxu0 0
    %4255 = vmatprep.mubr.bf16.mxu0 0
    %4256 = vmatmul.mubr.bf16.gmra.mrb[0].mxu0 %v1269
    %v4257 = vpop.f32.mrb[0].mxu0
    %v4258 = vadd.f32 0.0, %v4257
    %v4259 = vpop.f32.mrb[0].mxu0
    %v4260 = vpop.f32.mrb[0].mxu0
    %v4261 = vadd.f32 0.0, %v4260
    %v4262 = vpop.f32.mrb[0].mxu0
    %4263 = vmatprep.mubr.bf16.mxu0 0
    %4264 = vmatmul.mubr.bf16.gmra.mrb[0].mxu0 %v1270
    %v4265 = vpop.f32.mrb[0].mxu0
    %v4266 = vadd.f32 0.0, %v4265
    %v4267 = vpop.f32.mrb[0].mxu0
    %v4268 = vpop.f32.mrb[0].mxu0
    %v4269 = vadd.f32 0.0, %v4268
    %v4270 = vpop.f32.mrb[0].mxu0
    %4271 = vmatprep.mubr.bf16.mxu0 0
    %4272 = vmatmul.mubr.bf16.gmra.mrb[0].mxu0 %v1271
    %v4273 = vpop.f32.mrb[0].mxu0
    %v4274 = vadd.f32 0.0, %v4273
    %v4275 = vpop.f32.mrb[0].mxu0
    %v4276 = vpop.f32.mrb[0].mxu0
    %v4277 = vadd.f32 0.0, %v4276
    %v4278 = vpop.f32.mrb[0].mxu0
    %4279 = vmatprep.mubr.bf16.mxu0 0
    %4280 = vmatmul.mubr.bf16.gmra.mrb[0].mxu0 %v1272
    %v4281 = vpop.f32.mrb[0].mxu0
    %v4282 = vadd.f32 0.0, %v4281
    %v4283 = vpop.f32.mrb[0].mxu0
    %v4284 = vpop.f32.mrb[0].mxu0
    %v4285 = vadd.f32 0.0, %v4284
    %v4286 = vpop.f32.mrb[0].mxu0
    %4287 = vmatprep.mubr.bf16.mxu0 0
    %4288 = vmatmul.mubr.bf16.gmra.mrb[0].mxu0 %v1273
    %v4289 = vpop.f32.mrb[0].mxu0
    %v4290 = vadd.f32 0.0, %v4289
    %v4291 = vpop.f32.mrb[0].mxu0
    %v4292 = vpop.f32.mrb[0].mxu0
    %v4293 = vadd.f32 0.0, %v4292
    %v4294 = vpop.f32.mrb[0].mxu0
    %4295 = vmatprep.mubr.bf16.mxu0 0
    %4296 = vmatmul.mubr.bf16.gmra.mrb[0].mxu0 %v1274
    %v4297 = vpop.f32.mrb[0].mxu0
    %v4298 = vadd.f32 0.0, %v4297
    %v4299 = vpop.f32.mrb[0].mxu0
    %v4300 = vpop.f32.mrb[0].mxu0
    %v4301 = vadd.f32 0.0, %v4300
    %v4302 = vpop.f32.mrb[0].mxu0
    %4303 = vmatprep.mubr.bf16.mxu0 0
    %4304 = vmatmul.mubr.bf16.gmra.mrb[0].mxu0 %v1275
    %v4305 = vpop.f32.mrb[0].mxu0
    %v4306 = vadd.f32 0.0, %v4305
    %v4307 = vpop.f32.mrb[0].mxu0
    %v4308 = vpop.f32.mrb[0].mxu0
    %v4309 = vadd.f32 0.0, %v4308
    %v4310 = vpop.f32.mrb[0].mxu0
    %4311 = vmatprep.mubr.bf16.mxu0 0
    %4312 = vmatmul.mubr.bf16.gmra.mrb[0].mxu0 %v1276
    %v4313 = vpop.f32.mrb[0].mxu0
    %v4314 = vadd.f32 0.0, %v4313
    %v4315 = vpop.f32.mrb[0].mxu0
    %v4316 = vpop.f32.mrb[0].mxu0
    %v4317 = vadd.f32 0.0, %v4316
    %v4318 = vpop.f32.mrb[0].mxu0
    %4319 = vdwg.mxu0
    %v4320 = vpack.c.bf16 %v4261, %v4258
    %v4321 = vpack.c.bf16 %v4269, %v4266
    %v4322 = vpack.c.bf16 %v4277, %v4274
    %v4323 = vpack.c.bf16 %v4285, %v4282
    %v4324 = vpack.c.bf16 %v4293, %v4290
    %v4325 = vpack.c.bf16 %v4301, %v4298
    %v4326 = vpack.c.bf16 %v4309, %v4306
    %v4327 = vpack.c.bf16 %v4317, %v4314
    %4328 = vmatprep.subr.bf16.mxu0 %v1487
    %4329 = vmatpush1.bf16.msra.mxu0 %v1486
    %4330 = vmatprep.subr.bf16.mxu0 %v1490
    %4331 = vmatpush1.bf16.msra.mxu0 %v1489
    %4332 = vmatprep.subr.bf16.mxu0 %v1493
    %4333 = vmatpush1.bf16.msra.mxu0 %v1492
    %4334 = vmatprep.subr.bf16.mxu0 %v1496
    %4335 = vmatpush1.bf16.msra.mxu0 %v1495
    %4336 = vmatprep.subr.bf16.mxu0 %v1499
    %4337 = vmatpush1.bf16.msra.mxu0 %v1498
    %4338 = vmatprep.subr.bf16.mxu0 %v1502
    %4339 = vmatpush1.bf16.msra.mxu0 %v1501
    %4340 = vmatprep.subr.bf16.mxu0 %v1505
    %4341 = vmatpush1.bf16.msra.mxu0 %v1504
    %4342 = vmatprep.subr.bf16.mxu0 %v1508
    %4343 = vmatpush1.bf16.msra.mxu0 %v1507
    %4344 = vmatprep.subr.bf16.mxu0 0
    %4345 = vmatpush1.bf16.msra.mxu0 0
    %4346 = vmatprep.subr.bf16.mxu0 0
    %4347 = vmatpush1.bf16.msra.mxu0 0
    %4348 = vmatprep.subr.bf16.mxu0 0
    %4349 = vmatpush1.bf16.msra.mxu0 0
    %4350 = vmatprep.subr.bf16.mxu0 0
    %4351 = vmatpush1.bf16.msra.mxu0 0
    %4352 = vmatprep.subr.bf16.mxu0 0
    %4353 = vmatpush1.bf16.msra.mxu0 0
    %4354 = vmatprep.subr.bf16.mxu0 0
    %4355 = vmatpush1.bf16.msra.mxu0 0
    %4356 = vmatprep.subr.bf16.mxu0 0
    %4357 = vmatpush1.bf16.msra.mxu0 0
    %4358 = vmatprep.subr.bf16.mxu0 0
    %4359 = vmatpush1.bf16.msra.mxu0 0
    %4360 = vmatprep.mubr.bf16.mxu0 0
    %4361 = vmatmul.mubr.bf16.gmra.mrb[0].mxu0 %v4320
    %v4362 = vpop.f32.mrb[0].mxu0
    %v4363 = vadd.f32 %v1394, %v4362
    %v4364 = vpop.f32.mrb[0].mxu0
    %v4365 = vadd.f32 %v1398, %v4364
    %v4366 = vpop.f32.mrb[0].mxu0
    %v4367 = vadd.f32 %v1394, %v4366
    %v4368 = vpop.f32.mrb[0].mxu0
    %v4369 = vadd.f32 %v1398, %v4368
    %4370 = vmatprep.mubr.bf16.mxu0 0
    %4371 = vmatmul.mubr.bf16.gmra.mrb[0].mxu0 %v4321
    %v4372 = vpop.f32.mrb[0].mxu0
    %v4373 = vadd.f32 %v1394, %v4372
    %v4374 = vpop.f32.mrb[0].mxu0
    %v4375 = vadd.f32 %v1398, %v4374
    %v4376 = vpop.f32.mrb[0].mxu0
    %v4377 = vadd.f32 %v1394, %v4376
    %v4378 = vpop.f32.mrb[0].mxu0
    %v4379 = vadd.f32 %v1398, %v4378
    %4380 = vmatprep.mubr.bf16.mxu0 0
    %4381 = vmatmul.mubr.bf16.gmra.mrb[0].mxu0 %v4322
    %v4382 = vpop.f32.mrb[0].mxu0
    %v4383 = vadd.f32 %v1394, %v4382
    %v4384 = vpop.f32.mrb[0].mxu0
    %v4385 = vadd.f32 %v1398, %v4384
    %v4386 = vpop.f32.mrb[0].mxu0
    %v4387 = vadd.f32 %v1394, %v4386
    %v4388 = vpop.f32.mrb[0].mxu0
    %v4389 = vadd.f32 %v1398, %v4388
    %4390 = vmatprep.mubr.bf16.mxu0 0
    %4391 = vmatmul.mubr.bf16.gmra.mrb[0].mxu0 %v4323
    %v4392 = vpop.f32.mrb[0].mxu0
    %v4393 = vadd.f32 %v1394, %v4392
    %v4394 = vpop.f32.mrb[0].mxu0
    %v4395 = vadd.f32 %v1398, %v4394
    %v4396 = vpop.f32.mrb[0].mxu0
    %v4397 = vadd.f32 %v1394, %v4396
    %v4398 = vpop.f32.mrb[0].mxu0
    %v4399 = vadd.f32 %v1398, %v4398
    %4400 = vmatprep.mubr.bf16.mxu0 0
    %4401 = vmatmul.mubr.bf16.gmra.mrb[0].mxu0 %v4324
    %v4402 = vpop.f32.mrb[0].mxu0
    %v4403 = vadd.f32 %v1394, %v4402
    %v4404 = vpop.f32.mrb[0].mxu0
    %v4405 = vadd.f32 %v1398, %v4404
    %v4406 = vpop.f32.mrb[0].mxu0
    %v4407 = vadd.f32 %v1394, %v4406
    %v4408 = vpop.f32.mrb[0].mxu0
    %v4409 = vadd.f32 %v1398, %v4408
    %4410 = vmatprep.mubr.bf16.mxu0 0
    %4411 = vmatmul.mubr.bf16.gmra.mrb[0].mxu0 %v4325
    %v4412 = vpop.f32.mrb[0].mxu0
    %v4413 = vadd.f32 %v1394, %v4412
    %v4414 = vpop.f32.mrb[0].mxu0
    %v4415 = vadd.f32 %v1398, %v4414
    %v4416 = vpop.f32.mrb[0].mxu0
    %v4417 = vadd.f32 %v1394, %v4416
    %v4418 = vpop.f32.mrb[0].mxu0
    %v4419 = vadd.f32 %v1398, %v4418
    %4420 = vmatprep.mubr.bf16.mxu0 0
    %4421 = vmatmul.mubr.bf16.gmra.mrb[0].mxu0 %v4326
    %v4422 = vpop.f32.mrb[0].mxu0
    %v4423 = vadd.f32 %v1394, %v4422
    %v4424 = vpop.f32.mrb[0].mxu0
    %v4425 = vadd.f32 %v1398, %v4424
    %v4426 = vpop.f32.mrb[0].mxu0
    %v4427 = vadd.f32 %v1394, %v4426
    %v4428 = vpop.f32.mrb[0].mxu0
    %v4429 = vadd.f32 %v1398, %v4428
    %4430 = vmatprep.mubr.bf16.mxu0 0
    %4431 = vmatmul.mubr.bf16.gmra.mrb[0].mxu0 %v4327
    %v4432 = vpop.f32.mrb[0].mxu0
    %v4433 = vadd.f32 %v1394, %v4432
    %v4434 = vpop.f32.mrb[0].mxu0
    %v4435 = vadd.f32 %v1398, %v4434
    %v4436 = vpop.f32.mrb[0].mxu0
    %v4437 = vadd.f32 %v1394, %v4436
    %v4438 = vpop.f32.mrb[0].mxu0
    %v4439 = vadd.f32 %v1398, %v4438
    %4440 = vdwg.mxu0
    %4441 = vmatprep.subr.bf16.mxu0 0
    %4442 = vmatpush1.bf16.msra.mxu0 %v1488
    %4443 = vmatprep.subr.bf16.mxu0 0
    %4444 = vmatpush1.bf16.msra.mxu0 %v1491
    %4445 = vmatprep.subr.bf16.mxu0 0
    %4446 = vmatpush1.bf16.msra.mxu0 %v1494
    %4447 = vmatprep.subr.bf16.mxu0 0
    %4448 = vmatpush1.bf16.msra.mxu0 %v1497
    %4449 = vmatprep.subr.bf16.mxu0 0
    %4450 = vmatpush1.bf16.msra.mxu0 %v1500
    %4451 = vmatprep.subr.bf16.mxu0 0
    %4452 = vmatpush1.bf16.msra.mxu0 %v1503
    %4453 = vmatprep.subr.bf16.mxu0 0
    %4454 = vmatpush1.bf16.msra.mxu0 %v1506
    %4455 = vmatprep.subr.bf16.mxu0 0
    %4456 = vmatpush1.bf16.msra.mxu0 %v1509
    %4457 = vmatprep.subr.bf16.mxu0 0
    %4458 = vmatpush1.bf16.msra.mxu0 0
    %4459 = vmatprep.subr.bf16.mxu0 0
    %4460 = vmatpush1.bf16.msra.mxu0 0
    %4461 = vmatprep.subr.bf16.mxu0 0
    %4462 = vmatpush1.bf16.msra.mxu0 0
    %4463 = vmatprep.subr.bf16.mxu0 0
    %4464 = vmatpush1.bf16.msra.mxu0 0
    %4465 = vmatprep.subr.bf16.mxu0 0
    %4466 = vmatpush1.bf16.msra.mxu0 0
    %4467 = vmatprep.subr.bf16.mxu0 0
    %4468 = vmatpush1.bf16.msra.mxu0 0
    %4469 = vmatprep.subr.bf16.mxu0 0
    %4470 = vmatpush1.bf16.msra.mxu0 0
    %4471 = vmatprep.subr.bf16.mxu0 0
    %4472 = vmatpush1.bf16.msra.mxu0 0
    %4473 = vmatprep.mubr.bf16.mxu0 0
    %4474 = vmatmul.mubr.bf16.gmra.mrb[0].mxu0 %v4320
    %v4475 = vpop.f32.mrb[0].mxu0
    %v4476 = vadd.f32 %v1402, %v4475
    %v4477 = vpop.f32.mrb[0].mxu0
    %v4478 = vpop.f32.mrb[0].mxu0
    %v4479 = vadd.f32 %v1402, %v4478
    %v4480 = vpop.f32.mrb[0].mxu0
    %4481 = vmatprep.mubr.bf16.mxu0 0
    %4482 = vmatmul.mubr.bf16.gmra.mrb[0].mxu0 %v4321
    %v4483 = vpop.f32.mrb[0].mxu0
    %v4484 = vadd.f32 %v1402, %v4483
    %v4485 = vpop.f32.mrb[0].mxu0
    %v4486 = vpop.f32.mrb[0].mxu0
    %v4487 = vadd.f32 %v1402, %v4486
    %v4488 = vpop.f32.mrb[0].mxu0
    %4489 = vmatprep.mubr.bf16.mxu0 0
    %4490 = vmatmul.mubr.bf16.gmra.mrb[0].mxu0 %v4322
    %v4491 = vpop.f32.mrb[0].mxu0
    %v4492 = vadd.f32 %v1402, %v4491
    %v4493 = vpop.f32.mrb[0].mxu0
    %v4494 = vpop.f32.mrb[0].mxu0
    %v4495 = vadd.f32 %v1402, %v4494
    %v4496 = vpop.f32.mrb[0].mxu0
    %4497 = vmatprep.mubr.bf16.mxu0 0
    %4498 = vmatmul.mubr.bf16.gmra.mrb[0].mxu0 %v4323
    %v4499 = vpop.f32.mrb[0].mxu0
    %v4500 = vadd.f32 %v1402, %v4499
    %v4501 = vpop.f32.mrb[0].mxu0
    %v4502 = vpop.f32.mrb[0].mxu0
    %v4503 = vadd.f32 %v1402, %v4502
    %v4504 = vpop.f32.mrb[0].mxu0
    %4505 = vmatprep.mubr.bf16.mxu0 0
    %4506 = vmatmul.mubr.bf16.gmra.mrb[0].mxu0 %v4324
    %v4507 = vpop.f32.mrb[0].mxu0
    %v4508 = vadd.f32 %v1402, %v4507
    %v4509 = vpop.f32.mrb[0].mxu0
    %v4510 = vpop.f32.mrb[0].mxu0
    %v4511 = vadd.f32 %v1402, %v4510
    %v4512 = vpop.f32.mrb[0].mxu0
    %4513 = vmatprep.mubr.bf16.mxu0 0
    %4514 = vmatmul.mubr.bf16.gmra.mrb[0].mxu0 %v4325
    %v4515 = vpop.f32.mrb[0].mxu0
    %v4516 = vadd.f32 %v1402, %v4515
    %v4517 = vpop.f32.mrb[0].mxu0
    %v4518 = vpop.f32.mrb[0].mxu0
    %v4519 = vadd.f32 %v1402, %v4518
    %v4520 = vpop.f32.mrb[0].mxu0
    %4521 = vmatprep.mubr.bf16.mxu0 0
    %4522 = vmatmul.mubr.bf16.gmra.mrb[0].mxu0 %v4326
    %v4523 = vpop.f32.mrb[0].mxu0
    %v4524 = vadd.f32 %v1402, %v4523
    %v4525 = vpop.f32.mrb[0].mxu0
    %v4526 = vpop.f32.mrb[0].mxu0
    %v4527 = vadd.f32 %v1402, %v4526
    %v4528 = vpop.f32.mrb[0].mxu0
    %4529 = vmatprep.mubr.bf16.mxu0 0
    %4530 = vmatmul.mubr.bf16.gmra.mrb[0].mxu0 %v4327
    %v4531 = vpop.f32.mrb[0].mxu0
    %v4532 = vadd.f32 %v1402, %v4531
    %v4533 = vpop.f32.mrb[0].mxu0
    %v4534 = vpop.f32.mrb[0].mxu0
    %v4535 = vadd.f32 %v1402, %v4534
    %v4536 = vpop.f32.mrb[0].mxu0
    %4537 = vdwg.mxu0
    %4538 = vmatprep.subr.bf16.mxu0 %v1841
    %4539 = vmatpush1.bf16.msra.mxu0 %v1840
    %4540 = vmatprep.subr.bf16.mxu0 %v1844
    %4541 = vmatpush1.bf16.msra.mxu0 %v1843
    %4542 = vmatprep.subr.bf16.mxu0 %v1847
    %4543 = vmatpush1.bf16.msra.mxu0 %v1846
    %4544 = vmatprep.subr.bf16.mxu0 %v1850
    %4545 = vmatpush1.bf16.msra.mxu0 %v1849
    %4546 = vmatprep.subr.bf16.mxu0 %v1853
    %4547 = vmatpush1.bf16.msra.mxu0 %v1852
    %4548 = vmatprep.subr.bf16.mxu0 %v1856
    %4549 = vmatpush1.bf16.msra.mxu0 %v1855
    %4550 = vmatprep.subr.bf16.mxu0 %v1859
    %4551 = vmatpush1.bf16.msra.mxu0 %v1858
    %4552 = vmatprep.subr.bf16.mxu0 %v1862
    %4553 = vmatpush1.bf16.msra.mxu0 %v1861
    %4554 = vmatprep.subr.bf16.mxu0 0
    %4555 = vmatpush1.bf16.msra.mxu0 0
    %4556 = vmatprep.subr.bf16.mxu0 0
    %4557 = vmatpush1.bf16.msra.mxu0 0
    %4558 = vmatprep.subr.bf16.mxu0 0
    %4559 = vmatpush1.bf16.msra.mxu0 0
    %4560 = vmatprep.subr.bf16.mxu0 0
    %4561 = vmatpush1.bf16.msra.mxu0 0
    %4562 = vmatprep.subr.bf16.mxu0 0
    %4563 = vmatpush1.bf16.msra.mxu0 0
    %4564 = vmatprep.subr.bf16.mxu0 0
    %4565 = vmatpush1.bf16.msra.mxu0 0
    %4566 = vmatprep.subr.bf16.mxu0 0
    %4567 = vmatpush1.bf16.msra.mxu0 0
    %4568 = vmatprep.subr.bf16.mxu0 0
    %4569 = vmatpush1.bf16.msra.mxu0 0
    %4570 = vmatprep.mubr.bf16.mxu0 0
    %4571 = vmatmul.mubr.bf16.gmra.mrb[0].mxu0 %v3989
    %v4572 = vpop.f32.mrb[0].mxu0
    %v4573 = vadd.f32 %v1748, %v4572
    %v4574 = vpop.f32.mrb[0].mxu0
    %v4575 = vadd.f32 %v1752, %v4574
    %v4576 = vpop.f32.mrb[0].mxu0
    %v4577 = vadd.f32 %v1748, %v4576
    %v4578 = vpop.f32.mrb[0].mxu0
    %v4579 = vadd.f32 %v1752, %v4578
    %4580 = vmatprep.mubr.bf16.mxu0 0
    %4581 = vmatmul.mubr.bf16.gmra.mrb[0].mxu0 %v3990
    %v4582 = vpop.f32.mrb[0].mxu0
    %v4583 = vadd.f32 %v1748, %v4582
    %v4584 = vpop.f32.mrb[0].mxu0
    %v4585 = vadd.f32 %v1752, %v4584
    %v4586 = vpop.f32.mrb[0].mxu0
    %v4587 = vadd.f32 %v1748, %v4586
    %v4588 = vpop.f32.mrb[0].mxu0
    %v4589 = vadd.f32 %v1752, %v4588
    %4590 = vmatprep.mubr.bf16.mxu0 0
    %4591 = vmatmul.mubr.bf16.gmra.mrb[0].mxu0 %v3991
    %v4592 = vpop.f32.mrb[0].mxu0
    %v4593 = vadd.f32 %v1748, %v4592
    %v4594 = vpop.f32.mrb[0].mxu0
    %v4595 = vadd.f32 %v1752, %v4594
    %v4596 = vpop.f32.mrb[0].mxu0
    %v4597 = vadd.f32 %v1748, %v4596
    %v4598 = vpop.f32.mrb[0].mxu0
    %v4599 = vadd.f32 %v1752, %v4598
    %4600 = vmatprep.mubr.bf16.mxu0 0
    %4601 = vmatmul.mubr.bf16.gmra.mrb[0].mxu0 %v3992
    %v4602 = vpop.f32.mrb[0].mxu0
    %v4603 = vadd.f32 %v1748, %v4602
    %v4604 = vpop.f32.mrb[0].mxu0
    %v4605 = vadd.f32 %v1752, %v4604
    %v4606 = vpop.f32.mrb[0].mxu0
    %v4607 = vadd.f32 %v1748, %v4606
    %v4608 = vpop.f32.mrb[0].mxu0
    %v4609 = vadd.f32 %v1752, %v4608
    %4610 = vmatprep.mubr.bf16.mxu0 0
    %4611 = vmatmul.mubr.bf16.gmra.mrb[0].mxu0 %v3993
    %v4612 = vpop.f32.mrb[0].mxu0
    %v4613 = vadd.f32 %v1748, %v4612
    %v4614 = vpop.f32.mrb[0].mxu0
    %v4615 = vadd.f32 %v1752, %v4614
    %v4616 = vpop.f32.mrb[0].mxu0
    %v4617 = vadd.f32 %v1748, %v4616
    %v4618 = vpop.f32.mrb[0].mxu0
    %v4619 = vadd.f32 %v1752, %v4618
    %4620 = vmatprep.mubr.bf16.mxu0 0
    %4621 = vmatmul.mubr.bf16.gmra.mrb[0].mxu0 %v3994
    %v4622 = vpop.f32.mrb[0].mxu0
    %v4623 = vadd.f32 %v1748, %v4622
    %v4624 = vpop.f32.mrb[0].mxu0
    %v4625 = vadd.f32 %v1752, %v4624
    %v4626 = vpop.f32.mrb[0].mxu0
    %v4627 = vadd.f32 %v1748, %v4626
    %v4628 = vpop.f32.mrb[0].mxu0
    %v4629 = vadd.f32 %v1752, %v4628
    %4630 = vmatprep.mubr.bf16.mxu0 0
    %4631 = vmatmul.mubr.bf16.gmra.mrb[0].mxu0 %v3995
    %v4632 = vpop.f32.mrb[0].mxu0
    %v4633 = vadd.f32 %v1748, %v4632
    %v4634 = vpop.f32.mrb[0].mxu0
    %v4635 = vadd.f32 %v1752, %v4634
    %v4636 = vpop.f32.mrb[0].mxu0
    %v4637 = vadd.f32 %v1748, %v4636
    %v4638 = vpop.f32.mrb[0].mxu0
    %v4639 = vadd.f32 %v1752, %v4638
    %4640 = vmatprep.mubr.bf16.mxu0 0
    %4641 = vmatmul.mubr.bf16.gmra.mrb[0].mxu0 %v3996
    %v4642 = vpop.f32.mrb[0].mxu0
    %v4643 = vadd.f32 %v1748, %v4642
    %v4644 = vpop.f32.mrb[0].mxu0
    %v4645 = vadd.f32 %v1752, %v4644
    %v4646 = vpop.f32.mrb[0].mxu0
    %v4647 = vadd.f32 %v1748, %v4646
    %v4648 = vpop.f32.mrb[0].mxu0
    %v4649 = vadd.f32 %v1752, %v4648
    %4650 = vdwg.mxu0
    %4651 = vmatprep.subr.bf16.mxu0 0
    %4652 = vmatpush1.bf16.msra.mxu0 %v1842
    %4653 = vmatprep.subr.bf16.mxu0 0
    %4654 = vmatpush1.bf16.msra.mxu0 %v1845
    %4655 = vmatprep.subr.bf16.mxu0 0
    %4656 = vmatpush1.bf16.msra.mxu0 %v1848
    %4657 = vmatprep.subr.bf16.mxu0 0
    %4658 = vmatpush1.bf16.msra.mxu0 %v1851
    %4659 = vmatprep.subr.bf16.mxu0 0
    %4660 = vmatpush1.bf16.msra.mxu0 %v1854
    %4661 = vmatprep.subr.bf16.mxu0 0
    %4662 = vmatpush1.bf16.msra.mxu0 %v1857
    %4663 = vmatprep.subr.bf16.mxu0 0
    %4664 = vmatpush1.bf16.msra.mxu0 %v1860
    %4665 = vmatprep.subr.bf16.mxu0 0
    %4666 = vmatpush1.bf16.msra.mxu0 %v1863
    %4667 = vmatprep.subr.bf16.mxu0 0
    %4668 = vmatpush1.bf16.msra.mxu0 0
    %4669 = vmatprep.subr.bf16.mxu0 0
    %4670 = vmatpush1.bf16.msra.mxu0 0
    %4671 = vmatprep.subr.bf16.mxu0 0
    %4672 = vmatpush1.bf16.msra.mxu0 0
    %4673 = vmatprep.subr.bf16.mxu0 0
    %4674 = vmatpush1.bf16.msra.mxu0 0
    %4675 = vmatprep.subr.bf16.mxu0 0
    %4676 = vmatpush1.bf16.msra.mxu0 0
    %4677 = vmatprep.subr.bf16.mxu0 0
    %4678 = vmatpush1.bf16.msra.mxu0 0
    %4679 = vmatprep.subr.bf16.mxu0 0
    %4680 = vmatpush1.bf16.msra.mxu0 0
    %4681 = vmatprep.subr.bf16.mxu0 0
    %4682 = vmatpush1.bf16.msra.mxu0 0
    %4683 = vmatprep.mubr.bf16.mxu0 0
    %4684 = vmatmul.mubr.bf16.gmra.mrb[0].mxu0 %v3989
    %v4685 = vpop.f32.mrb[0].mxu0
    %v4686 = vadd.f32 %v1756, %v4685
    %v4687 = vpop.f32.mrb[0].mxu0
    %v4688 = vpop.f32.mrb[0].mxu0
    %v4689 = vadd.f32 %v1756, %v4688
    %v4690 = vpop.f32.mrb[0].mxu0
    %4691 = vmatprep.mubr.bf16.mxu0 0
    %4692 = vmatmul.mubr.bf16.gmra.mrb[0].mxu0 %v3990
    %v4693 = vpop.f32.mrb[0].mxu0
    %v4694 = vadd.f32 %v1756, %v4693
    %v4695 = vpop.f32.mrb[0].mxu0
    %v4696 = vpop.f32.mrb[0].mxu0
    %v4697 = vadd.f32 %v1756, %v4696
    %v4698 = vpop.f32.mrb[0].mxu0
    %4699 = vmatprep.mubr.bf16.mxu0 0
    %4700 = vmatmul.mubr.bf16.gmra.mrb[0].mxu0 %v3991
    %v4701 = vpop.f32.mrb[0].mxu0
    %v4702 = vadd.f32 %v1756, %v4701
    %v4703 = vpop.f32.mrb[0].mxu0
    %v4704 = vpop.f32.mrb[0].mxu0
    %v4705 = vadd.f32 %v1756, %v4704
    %v4706 = vpop.f32.mrb[0].mxu0
    %4707 = vmatprep.mubr.bf16.mxu0 0
    %4708 = vmatmul.mubr.bf16.gmra.mrb[0].mxu0 %v3992
    %v4709 = vpop.f32.mrb[0].mxu0
    %v4710 = vadd.f32 %v1756, %v4709
    %v4711 = vpop.f32.mrb[0].mxu0
    %v4712 = vpop.f32.mrb[0].mxu0
    %v4713 = vadd.f32 %v1756, %v4712
    %v4714 = vpop.f32.mrb[0].mxu0
    %4715 = vmatprep.mubr.bf16.mxu0 0
    %4716 = vmatmul.mubr.bf16.gmra.mrb[0].mxu0 %v3993
    %v4717 = vpop.f32.mrb[0].mxu0
    %v4718 = vadd.f32 %v1756, %v4717
    %v4719 = vpop.f32.mrb[0].mxu0
    %v4720 = vpop.f32.mrb[0].mxu0
    %v4721 = vadd.f32 %v1756, %v4720
    %v4722 = vpop.f32.mrb[0].mxu0
    %4723 = vmatprep.mubr.bf16.mxu0 0
    %4724 = vmatmul.mubr.bf16.gmra.mrb[0].mxu0 %v3994
    %v4725 = vpop.f32.mrb[0].mxu0
    %v4726 = vadd.f32 %v1756, %v4725
    %v4727 = vpop.f32.mrb[0].mxu0
    %v4728 = vpop.f32.mrb[0].mxu0
    %v4729 = vadd.f32 %v1756, %v4728
    %v4730 = vpop.f32.mrb[0].mxu0
    %4731 = vmatprep.mubr.bf16.mxu0 0
    %4732 = vmatmul.mubr.bf16.gmra.mrb[0].mxu0 %v3995
    %v4733 = vpop.f32.mrb[0].mxu0
    %v4734 = vadd.f32 %v1756, %v4733
    %v4735 = vpop.f32.mrb[0].mxu0
    %v4736 = vpop.f32.mrb[0].mxu0
    %v4737 = vadd.f32 %v1756, %v4736
    %v4738 = vpop.f32.mrb[0].mxu0
    %4739 = vmatprep.mubr.bf16.mxu0 0
    %4740 = vmatmul.mubr.bf16.gmra.mrb[0].mxu0 %v3996
    %v4741 = vpop.f32.mrb[0].mxu0
    %v4742 = vadd.f32 %v1756, %v4741
    %v4743 = vpop.f32.mrb[0].mxu0
    %v4744 = vpop.f32.mrb[0].mxu0
    %v4745 = vadd.f32 %v1756, %v4744
    %v4746 = vpop.f32.mrb[0].mxu0
    %4747 = vdwg.mxu0
    %v4748 = vadd.f32 %v4363, %v4573
    %v4749 = vadd.f32 %v4367, %v4577
    %v4750 = vadd.f32 %v4373, %v4583
    %v4751 = vadd.f32 %v4377, %v4587
    %v4752 = vadd.f32 %v4383, %v4593
    %v4753 = vadd.f32 %v4387, %v4597
    %v4754 = vadd.f32 %v4393, %v4603
    %v4755 = vadd.f32 %v4397, %v4607
    %v4756 = vadd.f32 %v4403, %v4613
    %v4757 = vadd.f32 %v4407, %v4617
    %v4758 = vadd.f32 %v4413, %v4623
    %v4759 = vadd.f32 %v4417, %v4627
    %v4760 = vadd.f32 %v4423, %v4633
    %v4761 = vadd.f32 %v4427, %v4637
    %v4762 = vadd.f32 %v4433, %v4643
    %v4763 = vadd.f32 %v4437, %v4647
    %v4764 = vxor.u32 %v4748, 2147483648
    %v4765 = vxor.u32 %v4749, 2147483648
    %v4766 = vxor.u32 %v4750, 2147483648
    %v4767 = vxor.u32 %v4751, 2147483648
    %v4768 = vxor.u32 %v4752, 2147483648
    %v4769 = vxor.u32 %v4753, 2147483648
    %v4770 = vxor.u32 %v4754, 2147483648
    %v4771 = vxor.u32 %v4755, 2147483648
    %v4772 = vxor.u32 %v4756, 2147483648
    %v4773 = vxor.u32 %v4757, 2147483648
    %v4774 = vxor.u32 %v4758, 2147483648
    %v4775 = vxor.u32 %v4759, 2147483648
    %v4776 = vxor.u32 %v4760, 2147483648
    %v4777 = vxor.u32 %v4761, 2147483648
    %v4778 = vxor.u32 %v4762, 2147483648
    %v4779 = vxor.u32 %v4763, 2147483648
    %v4780 = vmul.f32 %v4764, 1.442695
    %v4781 = vpow.pop %v4780
    %v4782 = vmul.f32 %v4765, 1.442695
    %v4783 = vpow.pop %v4782
    %v4784 = vmul.f32 %v4766, 1.442695
    %v4785 = vpow.pop %v4784
    %v4786 = vmul.f32 %v4767, 1.442695
    %v4787 = vpow.pop %v4786
    %v4788 = vmul.f32 %v4768, 1.442695
    %v4789 = vpow.pop %v4788
    %v4790 = vmul.f32 %v4769, 1.442695
    %v4791 = vpow.pop %v4790
    %v4792 = vmul.f32 %v4770, 1.442695
    %v4793 = vpow.pop %v4792
    %v4794 = vmul.f32 %v4771, 1.442695
    %v4795 = vpow.pop %v4794
    %v4796 = vmul.f32 %v4772, 1.442695
    %v4797 = vpow.pop %v4796
    %v4798 = vmul.f32 %v4773, 1.442695
    %v4799 = vpow.pop %v4798
    %v4800 = vmul.f32 %v4774, 1.442695
    %v4801 = vpow.pop %v4800
    %v4802 = vmul.f32 %v4775, 1.442695
    %v4803 = vpow.pop %v4802
    %v4804 = vmul.f32 %v4776, 1.442695
    %v4805 = vpow.pop %v4804
    %v4806 = vmul.f32 %v4777, 1.442695
    %v4807 = vpow.pop %v4806
    %v4808 = vmul.f32 %v4778, 1.442695
    %v4809 = vpow.pop %v4808
    %v4810 = vmul.f32 %v4779, 1.442695
    %v4811 = vpow.pop %v4810
    %v4812 = vadd.f32 %v4781, 1.0
    %v4813 = vadd.f32 %v4783, 1.0
    %v4814 = vadd.f32 %v4785, 1.0
    %v4815 = vadd.f32 %v4787, 1.0
    %v4816 = vadd.f32 %v4789, 1.0
    %v4817 = vadd.f32 %v4791, 1.0
    %v4818 = vadd.f32 %v4793, 1.0
    %v4819 = vadd.f32 %v4795, 1.0
    %v4820 = vadd.f32 %v4797, 1.0
    %v4821 = vadd.f32 %v4799, 1.0
    %v4822 = vadd.f32 %v4801, 1.0
    %v4823 = vadd.f32 %v4803, 1.0
    %v4824 = vadd.f32 %v4805, 1.0
    %v4825 = vadd.f32 %v4807, 1.0
    %v4826 = vadd.f32 %v4809, 1.0
    %v4827 = vadd.f32 %v4811, 1.0
    %v4828 = vrcp.pop %v4812
    %v4829 = vmul.f32 1.0, %v4828
    %v4830 = vrcp.pop %v4813
    %v4831 = vmul.f32 1.0, %v4830
    %v4832 = vrcp.pop %v4814
    %v4833 = vmul.f32 1.0, %v4832
    %v4834 = vrcp.pop %v4815
    %v4835 = vmul.f32 1.0, %v4834
    %v4836 = vrcp.pop %v4816
    %v4837 = vmul.f32 1.0, %v4836
    %v4838 = vrcp.pop %v4817
    %v4839 = vmul.f32 1.0, %v4838
    %v4840 = vrcp.pop %v4818
    %v4841 = vmul.f32 1.0, %v4840
    %v4842 = vrcp.pop %v4819
    %v4843 = vmul.f32 1.0, %v4842
    %v4844 = vrcp.pop %v4820
    %v4845 = vmul.f32 1.0, %v4844
    %v4846 = vrcp.pop %v4821
    %v4847 = vmul.f32 1.0, %v4846
    %v4848 = vrcp.pop %v4822
    %v4849 = vmul.f32 1.0, %v4848
    %v4850 = vrcp.pop %v4823
    %v4851 = vmul.f32 1.0, %v4850
    %v4852 = vrcp.pop %v4824
    %v4853 = vmul.f32 1.0, %v4852
    %v4854 = vrcp.pop %v4825
    %v4855 = vmul.f32 1.0, %v4854
    %v4856 = vrcp.pop %v4826
    %v4857 = vmul.f32 1.0, %v4856
    %v4858 = vrcp.pop %v4827
    %v4859 = vmul.f32 1.0, %v4858
    %v4860 = vadd.f32 %v4365, %v4575
    %v4861 = vadd.f32 %v4369, %v4579
    %v4862 = vadd.f32 %v4375, %v4585
    %v4863 = vadd.f32 %v4379, %v4589
    %v4864 = vadd.f32 %v4385, %v4595
    %v4865 = vadd.f32 %v4389, %v4599
    %v4866 = vadd.f32 %v4395, %v4605
    %v4867 = vadd.f32 %v4399, %v4609
    %v4868 = vadd.f32 %v4405, %v4615
    %v4869 = vadd.f32 %v4409, %v4619
    %v4870 = vadd.f32 %v4415, %v4625
    %v4871 = vadd.f32 %v4419, %v4629
    %v4872 = vadd.f32 %v4425, %v4635
    %v4873 = vadd.f32 %v4429, %v4639
    %v4874 = vadd.f32 %v4435, %v4645
    %v4875 = vadd.f32 %v4439, %v4649
    %v4876 = vxor.u32 %v4860, 2147483648
    %v4877 = vxor.u32 %v4861, 2147483648
    %v4878 = vxor.u32 %v4862, 2147483648
    %v4879 = vxor.u32 %v4863, 2147483648
    %v4880 = vxor.u32 %v4864, 2147483648
    %v4881 = vxor.u32 %v4865, 2147483648
    %v4882 = vxor.u32 %v4866, 2147483648
    %v4883 = vxor.u32 %v4867, 2147483648
    %v4884 = vxor.u32 %v4868, 2147483648
    %v4885 = vxor.u32 %v4869, 2147483648
    %v4886 = vxor.u32 %v4870, 2147483648
    %v4887 = vxor.u32 %v4871, 2147483648
    %v4888 = vxor.u32 %v4872, 2147483648
    %v4889 = vxor.u32 %v4873, 2147483648
    %v4890 = vxor.u32 %v4874, 2147483648
    %v4891 = vxor.u32 %v4875, 2147483648
    %v4892 = vmul.f32 %v4876, 1.442695
    %v4893 = vpow.pop %v4892
    %v4894 = vmul.f32 %v4877, 1.442695
    %v4895 = vpow.pop %v4894
    %v4896 = vmul.f32 %v4878, 1.442695
    %v4897 = vpow.pop %v4896
    %v4898 = vmul.f32 %v4879, 1.442695
    %v4899 = vpow.pop %v4898
    %v4900 = vmul.f32 %v4880, 1.442695
    %v4901 = vpow.pop %v4900
    %v4902 = vmul.f32 %v4881, 1.442695
    %v4903 = vpow.pop %v4902
    %v4904 = vmul.f32 %v4882, 1.442695
    %v4905 = vpow.pop %v4904
    %v4906 = vmul.f32 %v4883, 1.442695
    %v4907 = vpow.pop %v4906
    %v4908 = vmul.f32 %v4884, 1.442695
    %v4909 = vpow.pop %v4908
    %v4910 = vmul.f32 %v4885, 1.442695
    %v4911 = vpow.pop %v4910
    %v4912 = vmul.f32 %v4886, 1.442695
    %v4913 = vpow.pop %v4912
    %v4914 = vmul.f32 %v4887, 1.442695
    %v4915 = vpow.pop %v4914
    %v4916 = vmul.f32 %v4888, 1.442695
    %v4917 = vpow.pop %v4916
    %v4918 = vmul.f32 %v4889, 1.442695
    %v4919 = vpow.pop %v4918
    %v4920 = vmul.f32 %v4890, 1.442695
    %v4921 = vpow.pop %v4920
    %v4922 = vmul.f32 %v4891, 1.442695
    %v4923 = vpow.pop %v4922
    %v4924 = vadd.f32 %v4893, 1.0
    %v4925 = vadd.f32 %v4895, 1.0
    %v4926 = vadd.f32 %v4897, 1.0
    %v4927 = vadd.f32 %v4899, 1.0
    %v4928 = vadd.f32 %v4901, 1.0
    %v4929 = vadd.f32 %v4903, 1.0
    %v4930 = vadd.f32 %v4905, 1.0
    %v4931 = vadd.f32 %v4907, 1.0
    %v4932 = vadd.f32 %v4909, 1.0
    %v4933 = vadd.f32 %v4911, 1.0
    %v4934 = vadd.f32 %v4913, 1.0
    %v4935 = vadd.f32 %v4915, 1.0
    %v4936 = vadd.f32 %v4917, 1.0
    %v4937 = vadd.f32 %v4919, 1.0
    %v4938 = vadd.f32 %v4921, 1.0
    %v4939 = vadd.f32 %v4923, 1.0
    %v4940 = vrcp.pop %v4924
    %v4941 = vmul.f32 1.0, %v4940
    %v4942 = vrcp.pop %v4925
    %v4943 = vmul.f32 1.0, %v4942
    %v4944 = vrcp.pop %v4926
    %v4945 = vmul.f32 1.0, %v4944
    %v4946 = vrcp.pop %v4927
    %v4947 = vmul.f32 1.0, %v4946
    %v4948 = vrcp.pop %v4928
    %v4949 = vmul.f32 1.0, %v4948
    %v4950 = vrcp.pop %v4929
    %v4951 = vmul.f32 1.0, %v4950
    %v4952 = vrcp.pop %v4930
    %v4953 = vmul.f32 1.0, %v4952
    %v4954 = vrcp.pop %v4931
    %v4955 = vmul.f32 1.0, %v4954
    %v4956 = vrcp.pop %v4932
    %v4957 = vmul.f32 1.0, %v4956
    %v4958 = vrcp.pop %v4933
    %v4959 = vmul.f32 1.0, %v4958
    %v4960 = vrcp.pop %v4934
    %v4961 = vmul.f32 1.0, %v4960
    %v4962 = vrcp.pop %v4935
    %v4963 = vmul.f32 1.0, %v4962
    %v4964 = vrcp.pop %v4936
    %v4965 = vmul.f32 1.0, %v4964
    %v4966 = vrcp.pop %v4937
    %v4967 = vmul.f32 1.0, %v4966
    %v4968 = vrcp.pop %v4938
    %v4969 = vmul.f32 1.0, %v4968
    %v4970 = vrcp.pop %v4939
    %v4971 = vmul.f32 1.0, %v4970
    %v4972 = vmul.f32 %v4829, %v4686
    %v4973 = vmul.f32 %v4831, %v4689
    %v4974 = vmul.f32 %v4833, %v4694
    %v4975 = vmul.f32 %v4835, %v4697
    %v4976 = vmul.f32 %v4837, %v4702
    %v4977 = vmul.f32 %v4839, %v4705
    %v4978 = vmul.f32 %v4841, %v4710
    %v4979 = vmul.f32 %v4843, %v4713
    %v4980 = vmul.f32 %v4845, %v4718
    %v4981 = vmul.f32 %v4847, %v4721
    %v4982 = vmul.f32 %v4849, %v4726
    %v4983 = vmul.f32 %v4851, %v4729
    %v4984 = vmul.f32 %v4853, %v4734
    %v4985 = vmul.f32 %v4855, %v4737
    %v4986 = vmul.f32 %v4857, %v4742
    %v4987 = vmul.f32 %v4859, %v4745
    %v4988 = vadd.f32 %v4476, %v4972
    %v4989 = vadd.f32 %v4479, %v4973
    %v4990 = vadd.f32 %v4484, %v4974
    %v4991 = vadd.f32 %v4487, %v4975
    %v4992 = vadd.f32 %v4492, %v4976
    %v4993 = vadd.f32 %v4495, %v4977
    %v4994 = vadd.f32 %v4500, %v4978
    %v4995 = vadd.f32 %v4503, %v4979
    %v4996 = vadd.f32 %v4508, %v4980
    %v4997 = vadd.f32 %v4511, %v4981
    %v4998 = vadd.f32 %v4516, %v4982
    %v4999 = vadd.f32 %v4519, %v4983
    %v5000 = vadd.f32 %v4524, %v4984
    %v5001 = vadd.f32 %v4527, %v4985
    %v5002 = vadd.f32 %v4532, %v4986
    %v5003 = vadd.f32 %v4535, %v4987
    %v5004 = vtanh.pop %v4988
    %v5005 = vtanh.pop %v4989
    %v5006 = vtanh.pop %v4990
    %v5007 = vtanh.pop %v4991
    %v5008 = vtanh.pop %v4992
    %v5009 = vtanh.pop %v4993
    %v5010 = vtanh.pop %v4994
    %v5011 = vtanh.pop %v4995
    %v5012 = vtanh.pop %v4996
    %v5013 = vtanh.pop %v4997
    %v5014 = vtanh.pop %v4998
    %v5015 = vtanh.pop %v4999
    %v5016 = vtanh.pop %v5000
    %v5017 = vtanh.pop %v5001
    %v5018 = vtanh.pop %v5002
    %v5019 = vtanh.pop %v5003
    %v5020 = vsub.f32 1.0, %v4941
    %v5021 = vsub.f32 1.0, %v4943
    %v5022 = vsub.f32 1.0, %v4945
    %v5023 = vsub.f32 1.0, %v4947
    %v5024 = vsub.f32 1.0, %v4949
    %v5025 = vsub.f32 1.0, %v4951
    %v5026 = vsub.f32 1.0, %v4953
    %v5027 = vsub.f32 1.0, %v4955
    %v5028 = vsub.f32 1.0, %v4957
    %v5029 = vsub.f32 1.0, %v4959
    %v5030 = vsub.f32 1.0, %v4961
    %v5031 = vsub.f32 1.0, %v4963
    %v5032 = vsub.f32 1.0, %v4965
    %v5033 = vsub.f32 1.0, %v4967
    %v5034 = vsub.f32 1.0, %v4969
    %v5035 = vsub.f32 1.0, %v4971
    %v5036 = vmul.f32 %v5020, %v5004
    %v5037 = vmul.f32 %v5021, %v5005
    %v5038 = vmul.f32 %v5022, %v5006
    %v5039 = vmul.f32 %v5023, %v5007
    %v5040 = vmul.f32 %v5024, %v5008
    %v5041 = vmul.f32 %v5025, %v5009
    %v5042 = vmul.f32 %v5026, %v5010
    %v5043 = vmul.f32 %v5027, %v5011
    %v5044 = vmul.f32 %v5028, %v5012
    %v5045 = vmul.f32 %v5029, %v5013
    %v5046 = vmul.f32 %v5030, %v5014
    %v5047 = vmul.f32 %v5031, %v5015
    %v5048 = vmul.f32 %v5032, %v5016
    %v5049 = vmul.f32 %v5033, %v5017
    %v5050 = vmul.f32 %v5034, %v5018
    %v5051 = vmul.f32 %v5035, %v5019
    %v5052 = vmul.f32 %v4941, %v3973
    %v5053 = vmul.f32 %v4943, %v3974
    %v5054 = vmul.f32 %v4945, %v3975
    %v5055 = vmul.f32 %v4947, %v3976
    %v5056 = vmul.f32 %v4949, %v3977
    %v5057 = vmul.f32 %v4951, %v3978
    %v5058 = vmul.f32 %v4953, %v3979
    %v5059 = vmul.f32 %v4955, %v3980
    %v5060 = vmul.f32 %v4957, %v3981
    %v5061 = vmul.f32 %v4959, %v3982
    %v5062 = vmul.f32 %v4961, %v3983
    %v5063 = vmul.f32 %v4963, %v3984
    %v5064 = vmul.f32 %v4965, %v3985
    %v5065 = vmul.f32 %v4967, %v3986
    %v5066 = vmul.f32 %v4969, %v3987
    %v5067 = vmul.f32 %v4971, %v3988
    %v5068 = vadd.f32 %v5036, %v5052
    %v5069 = vadd.f32 %v5037, %v5053
    %v5070 = vadd.f32 %v5038, %v5054
    %v5071 = vadd.f32 %v5039, %v5055
    %v5072 = vadd.f32 %v5040, %v5056
    %v5073 = vadd.f32 %v5041, %v5057
    %v5074 = vadd.f32 %v5042, %v5058
    %v5075 = vadd.f32 %v5043, %v5059
    %v5076 = vadd.f32 %v5044, %v5060
    %v5077 = vadd.f32 %v5045, %v5061
    %v5078 = vadd.f32 %v5046, %v5062
    %v5079 = vadd.f32 %v5047, %v5063
    %v5080 = vadd.f32 %v5048, %v5064
    %v5081 = vadd.f32 %v5049, %v5065
    %v5082 = vadd.f32 %v5050, %v5066
    %v5083 = vadd.f32 %v5051, %v5067
    %v5084 = vpack.c.bf16 %v5069, %v5068
    %v5085 = vpack.c.bf16 %v5071, %v5070
    %v5086 = vpack.c.bf16 %v5073, %v5072
    %v5087 = vpack.c.bf16 %v5075, %v5074
    %v5088 = vpack.c.bf16 %v5077, %v5076
    %v5089 = vpack.c.bf16 %v5079, %v5078
    %v5090 = vpack.c.bf16 %v5081, %v5080
    %v5091 = vpack.c.bf16 %v5083, %v5082
    %5092 = vmatprep.subr.bf16.mxu0 0
    %5093 = vmatpush1.bf16.msra.mxu0 %v2480
    %5094 = vmatprep.subr.bf16.mxu0 0
    %5095 = vmatpush1.bf16.msra.mxu0 %v2481
    %5096 = vmatprep.subr.bf16.mxu0 0
    %5097 = vmatpush1.bf16.msra.mxu0 %v2482
    %5098 = vmatprep.subr.bf16.mxu0 0
    %5099 = vmatpush1.bf16.msra.mxu0 %v2483
    %5100 = vmatprep.subr.bf16.mxu0 0
    %5101 = vmatpush1.bf16.msra.mxu0 %v2484
    %5102 = vmatprep.subr.bf16.mxu0 0
    %5103 = vmatpush1.bf16.msra.mxu0 %v2485
    %5104 = vmatprep.subr.bf16.mxu0 0
    %5105 = vmatpush1.bf16.msra.mxu0 %v2486
    %5106 = vmatprep.subr.bf16.mxu0 0
    %5107 = vmatpush1.bf16.msra.mxu0 %v2487
    %5108 = vmatprep.subr.bf16.mxu0 0
    %5109 = vmatpush1.bf16.msra.mxu0 0
    %5110 = vmatprep.subr.bf16.mxu0 0
    %5111 = vmatpush1.bf16.msra.mxu0 0
    %5112 = vmatprep.subr.bf16.mxu0 0
    %5113 = vmatpush1.bf16.msra.mxu0 0
    %5114 = vmatprep.subr.bf16.mxu0 0
    %5115 = vmatpush1.bf16.msra.mxu0 0
    %5116 = vmatprep.subr.bf16.mxu0 0
    %5117 = vmatpush1.bf16.msra.mxu0 0
    %5118 = vmatprep.subr.bf16.mxu0 0
    %5119 = vmatpush1.bf16.msra.mxu0 0
    %5120 = vmatprep.subr.bf16.mxu0 0
    %5121 = vmatpush1.bf16.msra.mxu0 0
    %5122 = vmatprep.subr.bf16.mxu0 0
    %5123 = vmatpush1.bf16.msra.mxu0 0
    %5124 = vmatprep.mubr.bf16.mxu0 0
    %5125 = vmatmul.mubr.bf16.gmra.mrb[0].mxu0 %v5084
    %v5126 = vpop.f32.mrb[0].mxu0
    %v5127 = vadd.f32 %v2446, %v5126
    %v5128 = vpop.f32.mrb[0].mxu0
    %v5129 = vpop.f32.mrb[0].mxu0
    %v5130 = vadd.f32 %v2446, %v5129
    %v5131 = vpop.f32.mrb[0].mxu0
    %5132 = vmatprep.mubr.bf16.mxu0 0
    %5133 = vmatmul.mubr.bf16.gmra.mrb[0].mxu0 %v5085
    %v5134 = vpop.f32.mrb[0].mxu0
    %v5135 = vadd.f32 %v2446, %v5134
    %v5136 = vpop.f32.mrb[0].mxu0
    %v5137 = vpop.f32.mrb[0].mxu0
    %v5138 = vadd.f32 %v2446, %v5137
    %v5139 = vpop.f32.mrb[0].mxu0
    %5140 = vmatprep.mubr.bf16.mxu0 0
    %5141 = vmatmul.mubr.bf16.gmra.mrb[0].mxu0 %v5086
    %v5142 = vpop.f32.mrb[0].mxu0
    %v5143 = vadd.f32 %v2446, %v5142
    %v5144 = vpop.f32.mrb[0].mxu0
    %v5145 = vpop.f32.mrb[0].mxu0
    %v5146 = vadd.f32 %v2446, %v5145
    %v5147 = vpop.f32.mrb[0].mxu0
    %5148 = vmatprep.mubr.bf16.mxu0 0
    %5149 = vmatmul.mubr.bf16.gmra.mrb[0].mxu0 %v5087
    %v5150 = vpop.f32.mrb[0].mxu0
    %v5151 = vadd.f32 %v2446, %v5150
    %v5152 = vpop.f32.mrb[0].mxu0
    %v5153 = vpop.f32.mrb[0].mxu0
    %v5154 = vadd.f32 %v2446, %v5153
    %v5155 = vpop.f32.mrb[0].mxu0
    %5156 = vmatprep.mubr.bf16.mxu0 0
    %5157 = vmatmul.mubr.bf16.gmra.mrb[0].mxu0 %v5088
    %v5158 = vpop.f32.mrb[0].mxu0
    %v5159 = vadd.f32 %v2446, %v5158
    %v5160 = vpop.f32.mrb[0].mxu0
    %v5161 = vpop.f32.mrb[0].mxu0
    %v5162 = vadd.f32 %v2446, %v5161
    %v5163 = vpop.f32.mrb[0].mxu0
    %5164 = vmatprep.mubr.bf16.mxu0 0
    %5165 = vmatmul.mubr.bf16.gmra.mrb[0].mxu0 %v5089
    %v5166 = vpop.f32.mrb[0].mxu0
    %v5167 = vadd.f32 %v2446, %v5166
    %v5168 = vpop.f32.mrb[0].mxu0
    %v5169 = vpop.f32.mrb[0].mxu0
    %v5170 = vadd.f32 %v2446, %v5169
    %v5171 = vpop.f32.mrb[0].mxu0
    %5172 = vmatprep.mubr.bf16.mxu0 0
    %5173 = vmatmul.mubr.bf16.gmra.mrb[0].mxu0 %v5090
    %v5174 = vpop.f32.mrb[0].mxu0
    %v5175 = vadd.f32 %v2446, %v5174
    %v5176 = vpop.f32.mrb[0].mxu0
    %v5177 = vpop.f32.mrb[0].mxu0
    %v5178 = vadd.f32 %v2446, %v5177
    %v5179 = vpop.f32.mrb[0].mxu0
    %5180 = vmatprep.mubr.bf16.mxu0 0
    %5181 = vmatmul.mubr.bf16.gmra.mrb[0].mxu0 %v5091
    %v5182 = vpop.f32.mrb[0].mxu0
    %v5183 = vadd.f32 %v2446, %v5182
    %v5184 = vpop.f32.mrb[0].mxu0
    %v5185 = vpop.f32.mrb[0].mxu0
    %v5186 = vadd.f32 %v2446, %v5185
    %v5187 = vpop.f32.mrb[0].mxu0
    %5188 = vdwg.mxu0
    %v5189 = vmax.f32 %v5127, 0.0
    %v5190 = vmax.f32 %v5130, 0.0
    %v5191 = vmax.f32 %v5135, 0.0
    %v5192 = vmax.f32 %v5138, 0.0
    %v5193 = vmax.f32 %v5143, 0.0
    %v5194 = vmax.f32 %v5146, 0.0
    %v5195 = vmax.f32 %v5151, 0.0
    %v5196 = vmax.f32 %v5154, 0.0
    %v5197 = vmax.f32 %v5159, 0.0
    %v5198 = vmax.f32 %v5162, 0.0
    %v5199 = vmax.f32 %v5167, 0.0
    %v5200 = vmax.f32 %v5170, 0.0
    %v5201 = vmax.f32 %v5175, 0.0
    %v5202 = vmax.f32 %v5178, 0.0
    %v5203 = vmax.f32 %v5183, 0.0
    %v5204 = vmax.f32 %v5186, 0.0
    %v5205 = vpack.c.bf16 %v5190, %v5189
    %v5206 = vpack.c.bf16 %v5192, %v5191
    %v5207 = vpack.c.bf16 %v5194, %v5193
    %v5208 = vpack.c.bf16 %v5196, %v5195
    %v5209 = vpack.c.bf16 %v5198, %v5197
    %v5210 = vpack.c.bf16 %v5200, %v5199
    %v5211 = vpack.c.bf16 %v5202, %v5201
    %v5212 = vpack.c.bf16 %v5204, %v5203
    %5213 = vmatprep.subr.bf16.mxu0 0
    %5214 = vmatpush1.bf16.msra.mxu0 %v2655
    %5215 = vmatprep.subr.bf16.mxu0 0
    %5216 = vmatpush1.bf16.msra.mxu0 %v2656
    %5217 = vmatprep.subr.bf16.mxu0 0
    %5218 = vmatpush1.bf16.msra.mxu0 %v2657
    %5219 = vmatprep.subr.bf16.mxu0 0
    %5220 = vmatpush1.bf16.msra.mxu0 %v2658
    %5221 = vmatprep.subr.bf16.mxu0 0
    %5222 = vmatpush1.bf16.msra.mxu0 %v2659
    %5223 = vmatprep.subr.bf16.mxu0 0
    %5224 = vmatpush1.bf16.msra.mxu0 %v2660
    %5225 = vmatprep.subr.bf16.mxu0 0
    %5226 = vmatpush1.bf16.msra.mxu0 %v2661
    %5227 = vmatprep.subr.bf16.mxu0 0
    %5228 = vmatpush1.bf16.msra.mxu0 %v2662
    %5229 = vmatprep.subr.bf16.mxu0 0
    %5230 = vmatpush1.bf16.msra.mxu0 0
    %5231 = vmatprep.subr.bf16.mxu0 0
    %5232 = vmatpush1.bf16.msra.mxu0 0
    %5233 = vmatprep.subr.bf16.mxu0 0
    %5234 = vmatpush1.bf16.msra.mxu0 0
    %5235 = vmatprep.subr.bf16.mxu0 0
    %5236 = vmatpush1.bf16.msra.mxu0 0
    %5237 = vmatprep.subr.bf16.mxu0 0
    %5238 = vmatpush1.bf16.msra.mxu0 0
    %5239 = vmatprep.subr.bf16.mxu0 0
    %5240 = vmatpush1.bf16.msra.mxu0 0
    %5241 = vmatprep.subr.bf16.mxu0 0
    %5242 = vmatpush1.bf16.msra.mxu0 0
    %5243 = vmatprep.subr.bf16.mxu0 0
    %5244 = vmatpush1.bf16.msra.mxu0 0
    %5245 = vmatprep.mubr.bf16.mxu0 0
    %5246 = vmatmul.mubr.bf16.gmra.mrb[0].mxu0 %v5205
    %v5247 = vpop.f32.mrb[0].mxu0
    %v5248 = vadd.f32 %v2621, %v5247
    %v5249 = vpop.f32.mrb[0].mxu0
    %v5250 = vpop.f32.mrb[0].mxu0
    %v5251 = vadd.f32 %v2621, %v5250
    %v5252 = vpop.f32.mrb[0].mxu0
    %5253 = vmatprep.mubr.bf16.mxu0 0
    %5254 = vmatmul.mubr.bf16.gmra.mrb[0].mxu0 %v5206
    %v5255 = vpop.f32.mrb[0].mxu0
    %v5256 = vadd.f32 %v2621, %v5255
    %v5257 = vpop.f32.mrb[0].mxu0
    %v5258 = vpop.f32.mrb[0].mxu0
    %v5259 = vadd.f32 %v2621, %v5258
    %v5260 = vpop.f32.mrb[0].mxu0
    %5261 = vmatprep.mubr.bf16.mxu0 0
    %5262 = vmatmul.mubr.bf16.gmra.mrb[0].mxu0 %v5207
    %v5263 = vpop.f32.mrb[0].mxu0
    %v5264 = vadd.f32 %v2621, %v5263
    %v5265 = vpop.f32.mrb[0].mxu0
    %v5266 = vpop.f32.mrb[0].mxu0
    %v5267 = vadd.f32 %v2621, %v5266
    %v5268 = vpop.f32.mrb[0].mxu0
    %5269 = vmatprep.mubr.bf16.mxu0 0
    %5270 = vmatmul.mubr.bf16.gmra.mrb[0].mxu0 %v5208
    %v5271 = vpop.f32.mrb[0].mxu0
    %v5272 = vadd.f32 %v2621, %v5271
    %v5273 = vpop.f32.mrb[0].mxu0
    %v5274 = vpop.f32.mrb[0].mxu0
    %v5275 = vadd.f32 %v2621, %v5274
    %v5276 = vpop.f32.mrb[0].mxu0
    %5277 = vmatprep.mubr.bf16.mxu0 0
    %5278 = vmatmul.mubr.bf16.gmra.mrb[0].mxu0 %v5209
    %v5279 = vpop.f32.mrb[0].mxu0
    %v5280 = vadd.f32 %v2621, %v5279
    %v5281 = vpop.f32.mrb[0].mxu0
    %v5282 = vpop.f32.mrb[0].mxu0
    %v5283 = vadd.f32 %v2621, %v5282
    %v5284 = vpop.f32.mrb[0].mxu0
    %5285 = vmatprep.mubr.bf16.mxu0 0
    %5286 = vmatmul.mubr.bf16.gmra.mrb[0].mxu0 %v5210
    %v5287 = vpop.f32.mrb[0].mxu0
    %v5288 = vadd.f32 %v2621, %v5287
    %v5289 = vpop.f32.mrb[0].mxu0
    %v5290 = vpop.f32.mrb[0].mxu0
    %v5291 = vadd.f32 %v2621, %v5290
    %v5292 = vpop.f32.mrb[0].mxu0
    %5293 = vmatprep.mubr.bf16.mxu0 0
    %5294 = vmatmul.mubr.bf16.gmra.mrb[0].mxu0 %v5211
    %v5295 = vpop.f32.mrb[0].mxu0
    %v5296 = vadd.f32 %v2621, %v5295
    %v5297 = vpop.f32.mrb[0].mxu0
    %v5298 = vpop.f32.mrb[0].mxu0
    %v5299 = vadd.f32 %v2621, %v5298
    %v5300 = vpop.f32.mrb[0].mxu0
    %5301 = vmatprep.mubr.bf16.mxu0 0
    %5302 = vmatmul.mubr.bf16.gmra.mrb[0].mxu0 %v5212
    %v5303 = vpop.f32.mrb[0].mxu0
    %v5304 = vadd.f32 %v2621, %v5303
    %v5305 = vpop.f32.mrb[0].mxu0
    %v5306 = vpop.f32.mrb[0].mxu0
    %v5307 = vadd.f32 %v2621, %v5306
    %v5308 = vpop.f32.mrb[0].mxu0
    %5309 = vdwg.mxu0
    %5310 = vxpose.xlu0.b32.start [1/16] %v5248, 128
    %5311 = vxpose.xlu0.b32.cont [2/16] %v5251, 128
    %5312 = vxpose.xlu0.b32.cont [3/16] %v5256, 128
    %5313 = vxpose.xlu0.b32.cont [4/16] %v5259, 128
    %5314 = vxpose.xlu0.b32.cont [5/16] %v5264, 128
    %5315 = vxpose.xlu0.b32.cont [6/16] %v5267, 128
    %5316 = vxpose.xlu0.b32.cont [7/16] %v5272, 128
    %5317 = vxpose.xlu0.b32.cont [8/16] %v5275, 128
    %5318 = vxpose.xlu0.b32.cont [9/16] %v5280, 128
    %5319 = vxpose.xlu0.b32.cont [10/16] %v5283, 128
    %5320 = vxpose.xlu0.b32.cont [11/16] %v5288, 128
    %5321 = vxpose.xlu0.b32.cont [12/16] %v5291, 128
    %5322 = vxpose.xlu0.b32.cont [13/16] %v5296, 128
    %5323 = vxpose.xlu0.b32.cont [14/16] %v5299, 128
    %5324 = vxpose.xlu0.b32.cont [15/16] %v5304, 128
    %5325 = vxpose.xlu0.b32.end [16/16] %v5307, 128
    %v5326 = vpop.trf.xlu0
    %v5327 = vpop.trf.xlu0
    %v5328 = vpop.trf.xlu0
    %v5329 = vpop.trf.xlu0
    %v5330 = vpop.trf.xlu0
    %v5331 = vpop.trf.xlu0
    %v5332 = vpop.trf.xlu0
    %v5333 = vpop.trf.xlu0
    %v5334 = vpop.trf.xlu0
    %v5335 = vpop.trf.xlu0
    %v5336 = vpop.trf.xlu0
    %v5337 = vpop.trf.xlu0
    %v5338 = vpop.trf.xlu0
    %v5339 = vpop.trf.xlu0
    %v5340 = vpop.trf.xlu0
    %v5341 = vpop.trf.xlu0
    %v5342 = vpack.c.bf16 %v5327, %v5326
    %v5343 = vpack.c.bf16 %v5329, %v5328
    %v5344 = vpack.c.bf16 %v5331, %v5330
    %v5345 = vpack.c.bf16 %v5333, %v5332
    %v5346 = vpack.c.bf16 %v5335, %v5334
    %v5347 = vpack.c.bf16 %v5337, %v5336
    %v5348 = vpack.c.bf16 %v5339, %v5338
    %v5349 = vpack.c.bf16 %v5341, %v5340
    %5350 = vmatprep.subr.bf16.mxu0 0
    %5351 = vmatpush1.bf16.msra.mxu0 %v1269
    %5352 = vmatprep.subr.bf16.mxu0 0
    %5353 = vmatpush1.bf16.msra.mxu0 %v1270
    %5354 = vmatprep.subr.bf16.mxu0 0
    %5355 = vmatpush1.bf16.msra.mxu0 %v1271
    %5356 = vmatprep.subr.bf16.mxu0 0
    %5357 = vmatpush1.bf16.msra.mxu0 %v1272
    %5358 = vmatprep.subr.bf16.mxu0 0
    %5359 = vmatpush1.bf16.msra.mxu0 %v1273
    %5360 = vmatprep.subr.bf16.mxu0 0
    %5361 = vmatpush1.bf16.msra.mxu0 %v1274
    %5362 = vmatprep.subr.bf16.mxu0 0
    %5363 = vmatpush1.bf16.msra.mxu0 %v1275
    %5364 = vmatprep.subr.bf16.mxu0 0
    %5365 = vmatpush1.bf16.msra.mxu0 %v1276
    %5366 = vmatprep.subr.bf16.mxu0 0
    %5367 = vmatpush1.bf16.msra.mxu0 0
    %5368 = vmatprep.subr.bf16.mxu0 0
    %5369 = vmatpush1.bf16.msra.mxu0 0
    %5370 = vmatprep.subr.bf16.mxu0 0
    %5371 = vmatpush1.bf16.msra.mxu0 0
    %5372 = vmatprep.subr.bf16.mxu0 0
    %5373 = vmatpush1.bf16.msra.mxu0 0
    %5374 = vmatprep.subr.bf16.mxu0 0
    %5375 = vmatpush1.bf16.msra.mxu0 0
    %5376 = vmatprep.subr.bf16.mxu0 0
    %5377 = vmatpush1.bf16.msra.mxu0 0
    %5378 = vmatprep.subr.bf16.mxu0 0
    %5379 = vmatpush1.bf16.msra.mxu0 0
    %5380 = vmatprep.subr.bf16.mxu0 0
    %5381 = vmatpush1.bf16.msra.mxu0 0
    %5382 = vmatprep.mubr.bf16.mxu0 0
    %5383 = vmatmul.mubr.bf16.gmra.mrb[0].mxu0 %v5342
    %v5384 = vpop.f32.mrb[0].mxu0
    %v5385 = vadd.f32 0.0, %v5384
    %v5386 = vpop.f32.mrb[0].mxu0
    %v5387 = vpop.f32.mrb[0].mxu0
    %v5388 = vadd.f32 0.0, %v5387
    %v5389 = vpop.f32.mrb[0].mxu0
    %5390 = vmatprep.mubr.bf16.mxu0 0
    %5391 = vmatmul.mubr.bf16.gmra.mrb[0].mxu0 %v5343
    %v5392 = vpop.f32.mrb[0].mxu0
    %v5393 = vadd.f32 0.0, %v5392
    %v5394 = vpop.f32.mrb[0].mxu0
    %v5395 = vpop.f32.mrb[0].mxu0
    %v5396 = vadd.f32 0.0, %v5395
    %v5397 = vpop.f32.mrb[0].mxu0
    %5398 = vmatprep.mubr.bf16.mxu0 0
    %5399 = vmatmul.mubr.bf16.gmra.mrb[0].mxu0 %v5344
    %v5400 = vpop.f32.mrb[0].mxu0
    %v5401 = vadd.f32 0.0, %v5400
    %v5402 = vpop.f32.mrb[0].mxu0
    %v5403 = vpop.f32.mrb[0].mxu0
    %v5404 = vadd.f32 0.0, %v5403
    %v5405 = vpop.f32.mrb[0].mxu0
    %5406 = vmatprep.mubr.bf16.mxu0 0
    %5407 = vmatmul.mubr.bf16.gmra.mrb[0].mxu0 %v5345
    %v5408 = vpop.f32.mrb[0].mxu0
    %v5409 = vadd.f32 0.0, %v5408
    %v5410 = vpop.f32.mrb[0].mxu0
    %v5411 = vpop.f32.mrb[0].mxu0
    %v5412 = vadd.f32 0.0, %v5411
    %v5413 = vpop.f32.mrb[0].mxu0
    %5414 = vmatprep.mubr.bf16.mxu0 0
    %5415 = vmatmul.mubr.bf16.gmra.mrb[0].mxu0 %v5346
    %v5416 = vpop.f32.mrb[0].mxu0
    %v5417 = vadd.f32 0.0, %v5416
    %v5418 = vpop.f32.mrb[0].mxu0
    %v5419 = vpop.f32.mrb[0].mxu0
    %v5420 = vadd.f32 0.0, %v5419
    %v5421 = vpop.f32.mrb[0].mxu0
    %5422 = vmatprep.mubr.bf16.mxu0 0
    %5423 = vmatmul.mubr.bf16.gmra.mrb[0].mxu0 %v5347
    %v5424 = vpop.f32.mrb[0].mxu0
    %v5425 = vadd.f32 0.0, %v5424
    %v5426 = vpop.f32.mrb[0].mxu0
    %v5427 = vpop.f32.mrb[0].mxu0
    %v5428 = vadd.f32 0.0, %v5427
    %v5429 = vpop.f32.mrb[0].mxu0
    %5430 = vmatprep.mubr.bf16.mxu0 0
    %5431 = vmatmul.mubr.bf16.gmra.mrb[0].mxu0 %v5348
    %v5432 = vpop.f32.mrb[0].mxu0
    %v5433 = vadd.f32 0.0, %v5432
    %v5434 = vpop.f32.mrb[0].mxu0
    %v5435 = vpop.f32.mrb[0].mxu0
    %v5436 = vadd.f32 0.0, %v5435
    %v5437 = vpop.f32.mrb[0].mxu0
    %5438 = vmatprep.mubr.bf16.mxu0 0
    %5439 = vmatmul.mubr.bf16.gmra.mrb[0].mxu0 %v5349
    %v5440 = vpop.f32.mrb[0].mxu0
    %v5441 = vadd.f32 0.0, %v5440
    %v5442 = vpop.f32.mrb[0].mxu0
    %v5443 = vpop.f32.mrb[0].mxu0
    %v5444 = vadd.f32 0.0, %v5443
    %v5445 = vpop.f32.mrb[0].mxu0
    %5446 = vdwg.mxu0
    %5447 = vxpose.xlu0.b32.start [1/16] %v5385, 128
    %5448 = vxpose.xlu0.b32.cont [2/16] %v5388, 128
    %5449 = vxpose.xlu0.b32.cont [3/16] %v5393, 128
    %5450 = vxpose.xlu0.b32.cont [4/16] %v5396, 128
    %5451 = vxpose.xlu0.b32.cont [5/16] %v5401, 128
    %5452 = vxpose.xlu0.b32.cont [6/16] %v5404, 128
    %5453 = vxpose.xlu0.b32.cont [7/16] %v5409, 128
    %5454 = vxpose.xlu0.b32.cont [8/16] %v5412, 128
    %5455 = vxpose.xlu0.b32.cont [9/16] %v5417, 128
    %5456 = vxpose.xlu0.b32.cont [10/16] %v5420, 128
    %5457 = vxpose.xlu0.b32.cont [11/16] %v5425, 128
    %5458 = vxpose.xlu0.b32.cont [12/16] %v5428, 128
    %5459 = vxpose.xlu0.b32.cont [13/16] %v5433, 128
    %5460 = vxpose.xlu0.b32.cont [14/16] %v5436, 128
    %5461 = vxpose.xlu0.b32.cont [15/16] %v5441, 128
    %5462 = vxpose.xlu0.b32.end [16/16] %v5444, 128
    %v5463 = vpop.trf.xlu0
    %v5464 = vpop.trf.xlu0
    %v5465 = vpop.trf.xlu0
    %v5466 = vpop.trf.xlu0
    %v5467 = vpop.trf.xlu0
    %v5468 = vpop.trf.xlu0
    %v5469 = vpop.trf.xlu0
    %v5470 = vpop.trf.xlu0
    %v5471 = vpop.trf.xlu0
    %v5472 = vpop.trf.xlu0
    %v5473 = vpop.trf.xlu0
    %v5474 = vpop.trf.xlu0
    %v5475 = vpop.trf.xlu0
    %v5476 = vpop.trf.xlu0
    %v5477 = vpop.trf.xlu0
    %v5478 = vpop.trf.xlu0
    %v5479 = vpack.c.bf16 %v5464, %v5463
    %v5480 = vpack.c.bf16 %v5466, %v5465
    %v5481 = vpack.c.bf16 %v5468, %v5467
    %v5482 = vpack.c.bf16 %v5470, %v5469
    %v5483 = vpack.c.bf16 %v5472, %v5471
    %v5484 = vpack.c.bf16 %v5474, %v5473
    %v5485 = vpack.c.bf16 %v5476, %v5475
    %v5486 = vpack.c.bf16 %v5478, %v5477
    %5487 = vmatprep.subr.bf16.mxu0 %v3042
    %5488 = vmatpush1.bf16.msra.mxu0 %v3041
    %5489 = vmatprep.subr.bf16.mxu0 %v3045
    %5490 = vmatpush1.bf16.msra.mxu0 %v3044
    %5491 = vmatprep.subr.bf16.mxu0 %v3048
    %5492 = vmatpush1.bf16.msra.mxu0 %v3047
    %5493 = vmatprep.subr.bf16.mxu0 %v3051
    %5494 = vmatpush1.bf16.msra.mxu0 %v3050
    %5495 = vmatprep.subr.bf16.mxu0 %v3054
    %5496 = vmatpush1.bf16.msra.mxu0 %v3053
    %5497 = vmatprep.subr.bf16.mxu0 %v3057
    %5498 = vmatpush1.bf16.msra.mxu0 %v3056
    %5499 = vmatprep.subr.bf16.mxu0 %v3060
    %5500 = vmatpush1.bf16.msra.mxu0 %v3059
    %5501 = vmatprep.subr.bf16.mxu0 %v3063
    %5502 = vmatpush1.bf16.msra.mxu0 %v3062
    %5503 = vmatprep.subr.bf16.mxu0 0
    %5504 = vmatpush1.bf16.msra.mxu0 0
    %5505 = vmatprep.subr.bf16.mxu0 0
    %5506 = vmatpush1.bf16.msra.mxu0 0
    %5507 = vmatprep.subr.bf16.mxu0 0
    %5508 = vmatpush1.bf16.msra.mxu0 0
    %5509 = vmatprep.subr.bf16.mxu0 0
    %5510 = vmatpush1.bf16.msra.mxu0 0
    %5511 = vmatprep.subr.bf16.mxu0 0
    %5512 = vmatpush1.bf16.msra.mxu0 0
    %5513 = vmatprep.subr.bf16.mxu0 0
    %5514 = vmatpush1.bf16.msra.mxu0 0
    %5515 = vmatprep.subr.bf16.mxu0 0
    %5516 = vmatpush1.bf16.msra.mxu0 0
    %5517 = vmatprep.subr.bf16.mxu0 0
    %5518 = vmatpush1.bf16.msra.mxu0 0
    %5519 = vmatprep.mubr.bf16.mxu0 0
    %5520 = vmatmul.mubr.bf16.gmra.mrb[0].mxu0 %v5479
    %v5521 = vpop.f32.mrb[0].mxu0
    %v5522 = vadd.f32 %v2949, %v5521
    %v5523 = vpop.f32.mrb[0].mxu0
    %v5524 = vadd.f32 %v2953, %v5523
    %v5525 = vpop.f32.mrb[0].mxu0
    %v5526 = vadd.f32 %v2949, %v5525
    %v5527 = vpop.f32.mrb[0].mxu0
    %v5528 = vadd.f32 %v2953, %v5527
    %5529 = vmatprep.mubr.bf16.mxu0 0
    %5530 = vmatmul.mubr.bf16.gmra.mrb[0].mxu0 %v5480
    %v5531 = vpop.f32.mrb[0].mxu0
    %v5532 = vadd.f32 %v2949, %v5531
    %v5533 = vpop.f32.mrb[0].mxu0
    %v5534 = vadd.f32 %v2953, %v5533
    %v5535 = vpop.f32.mrb[0].mxu0
    %v5536 = vadd.f32 %v2949, %v5535
    %v5537 = vpop.f32.mrb[0].mxu0
    %v5538 = vadd.f32 %v2953, %v5537
    %5539 = vmatprep.mubr.bf16.mxu0 0
    %5540 = vmatmul.mubr.bf16.gmra.mrb[0].mxu0 %v5481
    %v5541 = vpop.f32.mrb[0].mxu0
    %v5542 = vadd.f32 %v2949, %v5541
    %v5543 = vpop.f32.mrb[0].mxu0
    %v5544 = vadd.f32 %v2953, %v5543
    %v5545 = vpop.f32.mrb[0].mxu0
    %v5546 = vadd.f32 %v2949, %v5545
    %v5547 = vpop.f32.mrb[0].mxu0
    %v5548 = vadd.f32 %v2953, %v5547
    %5549 = vmatprep.mubr.bf16.mxu0 0
    %5550 = vmatmul.mubr.bf16.gmra.mrb[0].mxu0 %v5482
    %v5551 = vpop.f32.mrb[0].mxu0
    %v5552 = vadd.f32 %v2949, %v5551
    %v5553 = vpop.f32.mrb[0].mxu0
    %v5554 = vadd.f32 %v2953, %v5553
    %v5555 = vpop.f32.mrb[0].mxu0
    %v5556 = vadd.f32 %v2949, %v5555
    %v5557 = vpop.f32.mrb[0].mxu0
    %v5558 = vadd.f32 %v2953, %v5557
    %5559 = vmatprep.mubr.bf16.mxu0 0
    %5560 = vmatmul.mubr.bf16.gmra.mrb[0].mxu0 %v5483
    %v5561 = vpop.f32.mrb[0].mxu0
    %v5562 = vadd.f32 %v2949, %v5561
    %v5563 = vpop.f32.mrb[0].mxu0
    %v5564 = vadd.f32 %v2953, %v5563
    %v5565 = vpop.f32.mrb[0].mxu0
    %v5566 = vadd.f32 %v2949, %v5565
    %v5567 = vpop.f32.mrb[0].mxu0
    %v5568 = vadd.f32 %v2953, %v5567
    %5569 = vmatprep.mubr.bf16.mxu0 0
    %5570 = vmatmul.mubr.bf16.gmra.mrb[0].mxu0 %v5484
    %v5571 = vpop.f32.mrb[0].mxu0
    %v5572 = vadd.f32 %v2949, %v5571
    %v5573 = vpop.f32.mrb[0].mxu0
    %v5574 = vadd.f32 %v2953, %v5573
    %v5575 = vpop.f32.mrb[0].mxu0
    %v5576 = vadd.f32 %v2949, %v5575
    %v5577 = vpop.f32.mrb[0].mxu0
    %v5578 = vadd.f32 %v2953, %v5577
    %5579 = vmatprep.mubr.bf16.mxu0 0
    %5580 = vmatmul.mubr.bf16.gmra.mrb[0].mxu0 %v5485
    %v5581 = vpop.f32.mrb[0].mxu0
    %v5582 = vadd.f32 %v2949, %v5581
    %v5583 = vpop.f32.mrb[0].mxu0
    %v5584 = vadd.f32 %v2953, %v5583
    %v5585 = vpop.f32.mrb[0].mxu0
    %v5586 = vadd.f32 %v2949, %v5585
    %v5587 = vpop.f32.mrb[0].mxu0
    %v5588 = vadd.f32 %v2953, %v5587
    %5589 = vmatprep.mubr.bf16.mxu0 0
    %5590 = vmatmul.mubr.bf16.gmra.mrb[0].mxu0 %v5486
    %v5591 = vpop.f32.mrb[0].mxu0
    %v5592 = vadd.f32 %v2949, %v5591
    %v5593 = vpop.f32.mrb[0].mxu0
    %v5594 = vadd.f32 %v2953, %v5593
    %v5595 = vpop.f32.mrb[0].mxu0
    %v5596 = vadd.f32 %v2949, %v5595
    %v5597 = vpop.f32.mrb[0].mxu0
    %v5598 = vadd.f32 %v2953, %v5597
    %5599 = vdwg.mxu0
    %5600 = vmatprep.subr.bf16.mxu0 0
    %5601 = vmatpush1.bf16.msra.mxu0 %v3043
    %5602 = vmatprep.subr.bf16.mxu0 0
    %5603 = vmatpush1.bf16.msra.mxu0 %v3046
    %5604 = vmatprep.subr.bf16.mxu0 0
    %5605 = vmatpush1.bf16.msra.mxu0 %v3049
    %5606 = vmatprep.subr.bf16.mxu0 0
    %5607 = vmatpush1.bf16.msra.mxu0 %v3052
    %5608 = vmatprep.subr.bf16.mxu0 0
    %5609 = vmatpush1.bf16.msra.mxu0 %v3055
    %5610 = vmatprep.subr.bf16.mxu0 0
    %5611 = vmatpush1.bf16.msra.mxu0 %v3058
    %5612 = vmatprep.subr.bf16.mxu0 0
    %5613 = vmatpush1.bf16.msra.mxu0 %v3061
    %5614 = vmatprep.subr.bf16.mxu0 0
    %5615 = vmatpush1.bf16.msra.mxu0 %v3064
    %5616 = vmatprep.subr.bf16.mxu0 0
    %5617 = vmatpush1.bf16.msra.mxu0 0
    %5618 = vmatprep.subr.bf16.mxu0 0
    %5619 = vmatpush1.bf16.msra.mxu0 0
    %5620 = vmatprep.subr.bf16.mxu0 0
    %5621 = vmatpush1.bf16.msra.mxu0 0
    %5622 = vmatprep.subr.bf16.mxu0 0
    %5623 = vmatpush1.bf16.msra.mxu0 0
    %5624 = vmatprep.subr.bf16.mxu0 0
    %5625 = vmatpush1.bf16.msra.mxu0 0
    %5626 = vmatprep.subr.bf16.mxu0 0
    %5627 = vmatpush1.bf16.msra.mxu0 0
    %5628 = vmatprep.subr.bf16.mxu0 0
    %5629 = vmatpush1.bf16.msra.mxu0 0
    %5630 = vmatprep.subr.bf16.mxu0 0
    %5631 = vmatpush1.bf16.msra.mxu0 0
    %5632 = vmatprep.mubr.bf16.mxu0 0
    %5633 = vmatmul.mubr.bf16.gmra.mrb[0].mxu0 %v5479
    %v5634 = vpop.f32.mrb[0].mxu0
    %v5635 = vadd.f32 %v2957, %v5634
    %v5636 = vpop.f32.mrb[0].mxu0
    %v5637 = vpop.f32.mrb[0].mxu0
    %v5638 = vadd.f32 %v2957, %v5637
    %v5639 = vpop.f32.mrb[0].mxu0
    %5640 = vmatprep.mubr.bf16.mxu0 0
    %5641 = vmatmul.mubr.bf16.gmra.mrb[0].mxu0 %v5480
    %v5642 = vpop.f32.mrb[0].mxu0
    %v5643 = vadd.f32 %v2957, %v5642
    %v5644 = vpop.f32.mrb[0].mxu0
    %v5645 = vpop.f32.mrb[0].mxu0
    %v5646 = vadd.f32 %v2957, %v5645
    %v5647 = vpop.f32.mrb[0].mxu0
    %5648 = vmatprep.mubr.bf16.mxu0 0
    %5649 = vmatmul.mubr.bf16.gmra.mrb[0].mxu0 %v5481
    %v5650 = vpop.f32.mrb[0].mxu0
    %v5651 = vadd.f32 %v2957, %v5650
    %v5652 = vpop.f32.mrb[0].mxu0
    %v5653 = vpop.f32.mrb[0].mxu0
    %v5654 = vadd.f32 %v2957, %v5653
    %v5655 = vpop.f32.mrb[0].mxu0
    %5656 = vmatprep.mubr.bf16.mxu0 0
    %5657 = vmatmul.mubr.bf16.gmra.mrb[0].mxu0 %v5482
    %v5658 = vpop.f32.mrb[0].mxu0
    %v5659 = vadd.f32 %v2957, %v5658
    %v5660 = vpop.f32.mrb[0].mxu0
    %v5661 = vpop.f32.mrb[0].mxu0
    %v5662 = vadd.f32 %v2957, %v5661
    %v5663 = vpop.f32.mrb[0].mxu0
    %5664 = vmatprep.mubr.bf16.mxu0 0
    %5665 = vmatmul.mubr.bf16.gmra.mrb[0].mxu0 %v5483
    %v5666 = vpop.f32.mrb[0].mxu0
    %v5667 = vadd.f32 %v2957, %v5666
    %v5668 = vpop.f32.mrb[0].mxu0
    %v5669 = vpop.f32.mrb[0].mxu0
    %v5670 = vadd.f32 %v2957, %v5669
    %v5671 = vpop.f32.mrb[0].mxu0
    %5672 = vmatprep.mubr.bf16.mxu0 0
    %5673 = vmatmul.mubr.bf16.gmra.mrb[0].mxu0 %v5484
    %v5674 = vpop.f32.mrb[0].mxu0
    %v5675 = vadd.f32 %v2957, %v5674
    %v5676 = vpop.f32.mrb[0].mxu0
    %v5677 = vpop.f32.mrb[0].mxu0
    %v5678 = vadd.f32 %v2957, %v5677
    %v5679 = vpop.f32.mrb[0].mxu0
    %5680 = vmatprep.mubr.bf16.mxu0 0
    %5681 = vmatmul.mubr.bf16.gmra.mrb[0].mxu0 %v5485
    %v5682 = vpop.f32.mrb[0].mxu0
    %v5683 = vadd.f32 %v2957, %v5682
    %v5684 = vpop.f32.mrb[0].mxu0
    %v5685 = vpop.f32.mrb[0].mxu0
    %v5686 = vadd.f32 %v2957, %v5685
    %v5687 = vpop.f32.mrb[0].mxu0
    %5688 = vmatprep.mubr.bf16.mxu0 0
    %5689 = vmatmul.mubr.bf16.gmra.mrb[0].mxu0 %v5486
    %v5690 = vpop.f32.mrb[0].mxu0
    %v5691 = vadd.f32 %v2957, %v5690
    %v5692 = vpop.f32.mrb[0].mxu0
    %v5693 = vpop.f32.mrb[0].mxu0
    %v5694 = vadd.f32 %v2957, %v5693
    %v5695 = vpop.f32.mrb[0].mxu0
    %5696 = vdwg.mxu0
    %5697 = vmatprep.subr.bf16.mxu0 %v3396
    %5698 = vmatpush1.bf16.msra.mxu0 %v3395
    %5699 = vmatprep.subr.bf16.mxu0 %v3399
    %5700 = vmatpush1.bf16.msra.mxu0 %v3398
    %5701 = vmatprep.subr.bf16.mxu0 %v3402
    %5702 = vmatpush1.bf16.msra.mxu0 %v3401
    %5703 = vmatprep.subr.bf16.mxu0 %v3405
    %5704 = vmatpush1.bf16.msra.mxu0 %v3404
    %5705 = vmatprep.subr.bf16.mxu0 %v3408
    %5706 = vmatpush1.bf16.msra.mxu0 %v3407
    %5707 = vmatprep.subr.bf16.mxu0 %v3411
    %5708 = vmatpush1.bf16.msra.mxu0 %v3410
    %5709 = vmatprep.subr.bf16.mxu0 %v3414
    %5710 = vmatpush1.bf16.msra.mxu0 %v3413
    %5711 = vmatprep.subr.bf16.mxu0 %v3417
    %5712 = vmatpush1.bf16.msra.mxu0 %v3416
    %5713 = vmatprep.subr.bf16.mxu0 0
    %5714 = vmatpush1.bf16.msra.mxu0 0
    %5715 = vmatprep.subr.bf16.mxu0 0
    %5716 = vmatpush1.bf16.msra.mxu0 0
    %5717 = vmatprep.subr.bf16.mxu0 0
    %5718 = vmatpush1.bf16.msra.mxu0 0
    %5719 = vmatprep.subr.bf16.mxu0 0
    %5720 = vmatpush1.bf16.msra.mxu0 0
    %5721 = vmatprep.subr.bf16.mxu0 0
    %5722 = vmatpush1.bf16.msra.mxu0 0
    %5723 = vmatprep.subr.bf16.mxu0 0
    %5724 = vmatpush1.bf16.msra.mxu0 0
    %5725 = vmatprep.subr.bf16.mxu0 0
    %5726 = vmatpush1.bf16.msra.mxu0 0
    %5727 = vmatprep.subr.bf16.mxu0 0
    %5728 = vmatpush1.bf16.msra.mxu0 0
    %5729 = vmatprep.mubr.bf16.mxu0 0
    %5730 = vmatmul.mubr.bf16.gmra.mrb[0].mxu0 %v5084
    %v5731 = vpop.f32.mrb[0].mxu0
    %v5732 = vadd.f32 %v3303, %v5731
    %v5733 = vpop.f32.mrb[0].mxu0
    %v5734 = vadd.f32 %v3307, %v5733
    %v5735 = vpop.f32.mrb[0].mxu0
    %v5736 = vadd.f32 %v3303, %v5735
    %v5737 = vpop.f32.mrb[0].mxu0
    %v5738 = vadd.f32 %v3307, %v5737
    %5739 = vmatprep.mubr.bf16.mxu0 0
    %5740 = vmatmul.mubr.bf16.gmra.mrb[0].mxu0 %v5085
    %v5741 = vpop.f32.mrb[0].mxu0
    %v5742 = vadd.f32 %v3303, %v5741
    %v5743 = vpop.f32.mrb[0].mxu0
    %v5744 = vadd.f32 %v3307, %v5743
    %v5745 = vpop.f32.mrb[0].mxu0
    %v5746 = vadd.f32 %v3303, %v5745
    %v5747 = vpop.f32.mrb[0].mxu0
    %v5748 = vadd.f32 %v3307, %v5747
    %5749 = vmatprep.mubr.bf16.mxu0 0
    %5750 = vmatmul.mubr.bf16.gmra.mrb[0].mxu0 %v5086
    %v5751 = vpop.f32.mrb[0].mxu0
    %v5752 = vadd.f32 %v3303, %v5751
    %v5753 = vpop.f32.mrb[0].mxu0
    %v5754 = vadd.f32 %v3307, %v5753
    %v5755 = vpop.f32.mrb[0].mxu0
    %v5756 = vadd.f32 %v3303, %v5755
    %v5757 = vpop.f32.mrb[0].mxu0
    %v5758 = vadd.f32 %v3307, %v5757
    %5759 = vmatprep.mubr.bf16.mxu0 0
    %5760 = vmatmul.mubr.bf16.gmra.mrb[0].mxu0 %v5087
    %v5761 = vpop.f32.mrb[0].mxu0
    %v5762 = vadd.f32 %v3303, %v5761
    %v5763 = vpop.f32.mrb[0].mxu0
    %v5764 = vadd.f32 %v3307, %v5763
    %v5765 = vpop.f32.mrb[0].mxu0
    %v5766 = vadd.f32 %v3303, %v5765
    %v5767 = vpop.f32.mrb[0].mxu0
    %v5768 = vadd.f32 %v3307, %v5767
    %5769 = vmatprep.mubr.bf16.mxu0 0
    %5770 = vmatmul.mubr.bf16.gmra.mrb[0].mxu0 %v5088
    %v5771 = vpop.f32.mrb[0].mxu0
    %v5772 = vadd.f32 %v3303, %v5771
    %v5773 = vpop.f32.mrb[0].mxu0
    %v5774 = vadd.f32 %v3307, %v5773
    %v5775 = vpop.f32.mrb[0].mxu0
    %v5776 = vadd.f32 %v3303, %v5775
    %v5777 = vpop.f32.mrb[0].mxu0
    %v5778 = vadd.f32 %v3307, %v5777
    %5779 = vmatprep.mubr.bf16.mxu0 0
    %5780 = vmatmul.mubr.bf16.gmra.mrb[0].mxu0 %v5089
    %v5781 = vpop.f32.mrb[0].mxu0
    %v5782 = vadd.f32 %v3303, %v5781
    %v5783 = vpop.f32.mrb[0].mxu0
    %v5784 = vadd.f32 %v3307, %v5783
    %v5785 = vpop.f32.mrb[0].mxu0
    %v5786 = vadd.f32 %v3303, %v5785
    %v5787 = vpop.f32.mrb[0].mxu0
    %v5788 = vadd.f32 %v3307, %v5787
    %5789 = vmatprep.mubr.bf16.mxu0 0
    %5790 = vmatmul.mubr.bf16.gmra.mrb[0].mxu0 %v5090
    %v5791 = vpop.f32.mrb[0].mxu0
    %v5792 = vadd.f32 %v3303, %v5791
    %v5793 = vpop.f32.mrb[0].mxu0
    %v5794 = vadd.f32 %v3307, %v5793
    %v5795 = vpop.f32.mrb[0].mxu0
    %v5796 = vadd.f32 %v3303, %v5795
    %v5797 = vpop.f32.mrb[0].mxu0
    %v5798 = vadd.f32 %v3307, %v5797
    %5799 = vmatprep.mubr.bf16.mxu0 0
    %5800 = vmatmul.mubr.bf16.gmra.mrb[0].mxu0 %v5091
    %v5801 = vpop.f32.mrb[0].mxu0
    %v5802 = vadd.f32 %v3303, %v5801
    %v5803 = vpop.f32.mrb[0].mxu0
    %v5804 = vadd.f32 %v3307, %v5803
    %v5805 = vpop.f32.mrb[0].mxu0
    %v5806 = vadd.f32 %v3303, %v5805
    %v5807 = vpop.f32.mrb[0].mxu0
    %v5808 = vadd.f32 %v3307, %v5807
    %5809 = vdwg.mxu0
    %5810 = vmatprep.subr.bf16.mxu0 0
    %5811 = vmatpush1.bf16.msra.mxu0 %v3397
    %5812 = vmatprep.subr.bf16.mxu0 0
    %5813 = vmatpush1.bf16.msra.mxu0 %v3400
    %5814 = vmatprep.subr.bf16.mxu0 0
    %5815 = vmatpush1.bf16.msra.mxu0 %v3403
    %5816 = vmatprep.subr.bf16.mxu0 0
    %5817 = vmatpush1.bf16.msra.mxu0 %v3406
    %5818 = vmatprep.subr.bf16.mxu0 0
    %5819 = vmatpush1.bf16.msra.mxu0 %v3409
    %5820 = vmatprep.subr.bf16.mxu0 0
    %5821 = vmatpush1.bf16.msra.mxu0 %v3412
    %5822 = vmatprep.subr.bf16.mxu0 0
    %5823 = vmatpush1.bf16.msra.mxu0 %v3415
    %5824 = vmatprep.subr.bf16.mxu0 0
    %5825 = vmatpush1.bf16.msra.mxu0 %v3418
    %5826 = vmatprep.subr.bf16.mxu0 0
    %5827 = vmatpush1.bf16.msra.mxu0 0
    %5828 = vmatprep.subr.bf16.mxu0 0
    %5829 = vmatpush1.bf16.msra.mxu0 0
    %5830 = vmatprep.subr.bf16.mxu0 0
    %5831 = vmatpush1.bf16.msra.mxu0 0
    %5832 = vmatprep.subr.bf16.mxu0 0
    %5833 = vmatpush1.bf16.msra.mxu0 0
    %5834 = vmatprep.subr.bf16.mxu0 0
    %5835 = vmatpush1.bf16.msra.mxu0 0
    %5836 = vmatprep.subr.bf16.mxu0 0
    %5837 = vmatpush1.bf16.msra.mxu0 0
    %5838 = vmatprep.subr.bf16.mxu0 0
    %5839 = vmatpush1.bf16.msra.mxu0 0
    %5840 = vmatprep.subr.bf16.mxu0 0
    %5841 = vmatpush1.bf16.msra.mxu0 0
    %5842 = vmatprep.mubr.bf16.mxu0 0
    %5843 = vmatmul.mubr.bf16.gmra.mrb[0].mxu0 %v5084
    %v5844 = vpop.f32.mrb[0].mxu0
    %v5845 = vadd.f32 %v3311, %v5844
    %v5846 = vpop.f32.mrb[0].mxu0
    %v5847 = vpop.f32.mrb[0].mxu0
    %v5848 = vadd.f32 %v3311, %v5847
    %v5849 = vpop.f32.mrb[0].mxu0
    %5850 = vmatprep.mubr.bf16.mxu0 0
    %5851 = vmatmul.mubr.bf16.gmra.mrb[0].mxu0 %v5085
    %v5852 = vpop.f32.mrb[0].mxu0
    %v5853 = vadd.f32 %v3311, %v5852
    %v5854 = vpop.f32.mrb[0].mxu0
    %v5855 = vpop.f32.mrb[0].mxu0
    %v5856 = vadd.f32 %v3311, %v5855
    %v5857 = vpop.f32.mrb[0].mxu0
    %5858 = vmatprep.mubr.bf16.mxu0 0
    %5859 = vmatmul.mubr.bf16.gmra.mrb[0].mxu0 %v5086
    %v5860 = vpop.f32.mrb[0].mxu0
    %v5861 = vadd.f32 %v3311, %v5860
    %v5862 = vpop.f32.mrb[0].mxu0
    %v5863 = vpop.f32.mrb[0].mxu0
    %v5864 = vadd.f32 %v3311, %v5863
    %v5865 = vpop.f32.mrb[0].mxu0
    %5866 = vmatprep.mubr.bf16.mxu0 0
    %5867 = vmatmul.mubr.bf16.gmra.mrb[0].mxu0 %v5087
    %v5868 = vpop.f32.mrb[0].mxu0
    %v5869 = vadd.f32 %v3311, %v5868
    %v5870 = vpop.f32.mrb[0].mxu0
    %v5871 = vpop.f32.mrb[0].mxu0
    %v5872 = vadd.f32 %v3311, %v5871
    %v5873 = vpop.f32.mrb[0].mxu0
    %5874 = vmatprep.mubr.bf16.mxu0 0
    %5875 = vmatmul.mubr.bf16.gmra.mrb[0].mxu0 %v5088
    %v5876 = vpop.f32.mrb[0].mxu0
    %v5877 = vadd.f32 %v3311, %v5876
    %v5878 = vpop.f32.mrb[0].mxu0
    %v5879 = vpop.f32.mrb[0].mxu0
    %v5880 = vadd.f32 %v3311, %v5879
    %v5881 = vpop.f32.mrb[0].mxu0
    %5882 = vmatprep.mubr.bf16.mxu0 0
    %5883 = vmatmul.mubr.bf16.gmra.mrb[0].mxu0 %v5089
    %v5884 = vpop.f32.mrb[0].mxu0
    %v5885 = vadd.f32 %v3311, %v5884
    %v5886 = vpop.f32.mrb[0].mxu0
    %v5887 = vpop.f32.mrb[0].mxu0
    %v5888 = vadd.f32 %v3311, %v5887
    %v5889 = vpop.f32.mrb[0].mxu0
    %5890 = vmatprep.mubr.bf16.mxu0 0
    %5891 = vmatmul.mubr.bf16.gmra.mrb[0].mxu0 %v5090
    %v5892 = vpop.f32.mrb[0].mxu0
    %v5893 = vadd.f32 %v3311, %v5892
    %v5894 = vpop.f32.mrb[0].mxu0
    %v5895 = vpop.f32.mrb[0].mxu0
    %v5896 = vadd.f32 %v3311, %v5895
    %v5897 = vpop.f32.mrb[0].mxu0
    %5898 = vmatprep.mubr.bf16.mxu0 0
    %5899 = vmatmul.mubr.bf16.gmra.mrb[0].mxu0 %v5091
    %v5900 = vpop.f32.mrb[0].mxu0
    %v5901 = vadd.f32 %v3311, %v5900
    %v5902 = vpop.f32.mrb[0].mxu0
    %v5903 = vpop.f32.mrb[0].mxu0
    %v5904 = vadd.f32 %v3311, %v5903
    %v5905 = vpop.f32.mrb[0].mxu0
    %5906 = vdwg.mxu0
    %v5907 = vadd.f32 %v5522, %v5732
    %v5908 = vadd.f32 %v5526, %v5736
    %v5909 = vadd.f32 %v5532, %v5742
    %v5910 = vadd.f32 %v5536, %v5746
    %v5911 = vadd.f32 %v5542, %v5752
    %v5912 = vadd.f32 %v5546, %v5756
    %v5913 = vadd.f32 %v5552, %v5762
    %v5914 = vadd.f32 %v5556, %v5766
    %v5915 = vadd.f32 %v5562, %v5772
    %v5916 = vadd.f32 %v5566, %v5776
    %v5917 = vadd.f32 %v5572, %v5782
    %v5918 = vadd.f32 %v5576, %v5786
    %v5919 = vadd.f32 %v5582, %v5792
    %v5920 = vadd.f32 %v5586, %v5796
    %v5921 = vadd.f32 %v5592, %v5802
    %v5922 = vadd.f32 %v5596, %v5806
    %v5923 = vxor.u32 %v5907, 2147483648
    %v5924 = vxor.u32 %v5908, 2147483648
    %v5925 = vxor.u32 %v5909, 2147483648
    %v5926 = vxor.u32 %v5910, 2147483648
    %v5927 = vxor.u32 %v5911, 2147483648
    %v5928 = vxor.u32 %v5912, 2147483648
    %v5929 = vxor.u32 %v5913, 2147483648
    %v5930 = vxor.u32 %v5914, 2147483648
    %v5931 = vxor.u32 %v5915, 2147483648
    %v5932 = vxor.u32 %v5916, 2147483648
    %v5933 = vxor.u32 %v5917, 2147483648
    %v5934 = vxor.u32 %v5918, 2147483648
    %v5935 = vxor.u32 %v5919, 2147483648
    %v5936 = vxor.u32 %v5920, 2147483648
    %v5937 = vxor.u32 %v5921, 2147483648
    %v5938 = vxor.u32 %v5922, 2147483648
    %v5939 = vmul.f32 %v5923, 1.442695
    %v5940 = vpow.pop %v5939
    %v5941 = vmul.f32 %v5924, 1.442695
    %v5942 = vpow.pop %v5941
    %v5943 = vmul.f32 %v5925, 1.442695
    %v5944 = vpow.pop %v5943
    %v5945 = vmul.f32 %v5926, 1.442695
    %v5946 = vpow.pop %v5945
    %v5947 = vmul.f32 %v5927, 1.442695
    %v5948 = vpow.pop %v5947
    %v5949 = vmul.f32 %v5928, 1.442695
    %v5950 = vpow.pop %v5949
    %v5951 = vmul.f32 %v5929, 1.442695
    %v5952 = vpow.pop %v5951
    %v5953 = vmul.f32 %v5930, 1.442695
    %v5954 = vpow.pop %v5953
    %v5955 = vmul.f32 %v5931, 1.442695
    %v5956 = vpow.pop %v5955
    %v5957 = vmul.f32 %v5932, 1.442695
    %v5958 = vpow.pop %v5957
    %v5959 = vmul.f32 %v5933, 1.442695
    %v5960 = vpow.pop %v5959
    %v5961 = vmul.f32 %v5934, 1.442695
    %v5962 = vpow.pop %v5961
    %v5963 = vmul.f32 %v5935, 1.442695
    %v5964 = vpow.pop %v5963
    %v5965 = vmul.f32 %v5936, 1.442695
    %v5966 = vpow.pop %v5965
    %v5967 = vmul.f32 %v5937, 1.442695
    %v5968 = vpow.pop %v5967
    %v5969 = vmul.f32 %v5938, 1.442695
    %v5970 = vpow.pop %v5969
    %v5971 = vadd.f32 %v5940, 1.0
    %v5972 = vadd.f32 %v5942, 1.0
    %v5973 = vadd.f32 %v5944, 1.0
    %v5974 = vadd.f32 %v5946, 1.0
    %v5975 = vadd.f32 %v5948, 1.0
    %v5976 = vadd.f32 %v5950, 1.0
    %v5977 = vadd.f32 %v5952, 1.0
    %v5978 = vadd.f32 %v5954, 1.0
    %v5979 = vadd.f32 %v5956, 1.0
    %v5980 = vadd.f32 %v5958, 1.0
    %v5981 = vadd.f32 %v5960, 1.0
    %v5982 = vadd.f32 %v5962, 1.0
    %v5983 = vadd.f32 %v5964, 1.0
    %v5984 = vadd.f32 %v5966, 1.0
    %v5985 = vadd.f32 %v5968, 1.0
    %v5986 = vadd.f32 %v5970, 1.0
    %v5987 = vrcp.pop %v5971
    %v5988 = vmul.f32 1.0, %v5987
    %v5989 = vrcp.pop %v5972
    %v5990 = vmul.f32 1.0, %v5989
    %v5991 = vrcp.pop %v5973
    %v5992 = vmul.f32 1.0, %v5991
    %v5993 = vrcp.pop %v5974
    %v5994 = vmul.f32 1.0, %v5993
    %v5995 = vrcp.pop %v5975
    %v5996 = vmul.f32 1.0, %v5995
    %v5997 = vrcp.pop %v5976
    %v5998 = vmul.f32 1.0, %v5997
    %v5999 = vrcp.pop %v5977
    %v6000 = vmul.f32 1.0, %v5999
    %v6001 = vrcp.pop %v5978
    %v6002 = vmul.f32 1.0, %v6001
    %v6003 = vrcp.pop %v5979
    %v6004 = vmul.f32 1.0, %v6003
    %v6005 = vrcp.pop %v5980
    %v6006 = vmul.f32 1.0, %v6005
    %v6007 = vrcp.pop %v5981
    %v6008 = vmul.f32 1.0, %v6007
    %v6009 = vrcp.pop %v5982
    %v6010 = vmul.f32 1.0, %v6009
    %v6011 = vrcp.pop %v5983
    %v6012 = vmul.f32 1.0, %v6011
    %v6013 = vrcp.pop %v5984
    %v6014 = vmul.f32 1.0, %v6013
    %v6015 = vrcp.pop %v5985
    %v6016 = vmul.f32 1.0, %v6015
    %v6017 = vrcp.pop %v5986
    %v6018 = vmul.f32 1.0, %v6017
    %v6019 = vadd.f32 %v5524, %v5734
    %v6020 = vadd.f32 %v5528, %v5738
    %v6021 = vadd.f32 %v5534, %v5744
    %v6022 = vadd.f32 %v5538, %v5748
    %v6023 = vadd.f32 %v5544, %v5754
    %v6024 = vadd.f32 %v5548, %v5758
    %v6025 = vadd.f32 %v5554, %v5764
    %v6026 = vadd.f32 %v5558, %v5768
    %v6027 = vadd.f32 %v5564, %v5774
    %v6028 = vadd.f32 %v5568, %v5778
    %v6029 = vadd.f32 %v5574, %v5784
    %v6030 = vadd.f32 %v5578, %v5788
    %v6031 = vadd.f32 %v5584, %v5794
    %v6032 = vadd.f32 %v5588, %v5798
    %v6033 = vadd.f32 %v5594, %v5804
    %v6034 = vadd.f32 %v5598, %v5808
    %v6035 = vxor.u32 %v6019, 2147483648
    %v6036 = vxor.u32 %v6020, 2147483648
    %v6037 = vxor.u32 %v6021, 2147483648
    %v6038 = vxor.u32 %v6022, 2147483648
    %v6039 = vxor.u32 %v6023, 2147483648
    %v6040 = vxor.u32 %v6024, 2147483648
    %v6041 = vxor.u32 %v6025, 2147483648
    %v6042 = vxor.u32 %v6026, 2147483648
    %v6043 = vxor.u32 %v6027, 2147483648
    %v6044 = vxor.u32 %v6028, 2147483648
    %v6045 = vxor.u32 %v6029, 2147483648
    %v6046 = vxor.u32 %v6030, 2147483648
    %v6047 = vxor.u32 %v6031, 2147483648
    %v6048 = vxor.u32 %v6032, 2147483648
    %v6049 = vxor.u32 %v6033, 2147483648
    %v6050 = vxor.u32 %v6034, 2147483648
    %v6051 = vmul.f32 %v6035, 1.442695
    %v6052 = vpow.pop %v6051
    %v6053 = vmul.f32 %v6036, 1.442695
    %v6054 = vpow.pop %v6053
    %v6055 = vmul.f32 %v6037, 1.442695
    %v6056 = vpow.pop %v6055
    %v6057 = vmul.f32 %v6038, 1.442695
    %v6058 = vpow.pop %v6057
    %v6059 = vmul.f32 %v6039, 1.442695
    %v6060 = vpow.pop %v6059
    %v6061 = vmul.f32 %v6040, 1.442695
    %v6062 = vpow.pop %v6061
    %v6063 = vmul.f32 %v6041, 1.442695
    %v6064 = vpow.pop %v6063
    %v6065 = vmul.f32 %v6042, 1.442695
    %v6066 = vpow.pop %v6065
    %v6067 = vmul.f32 %v6043, 1.442695
    %v6068 = vpow.pop %v6067
    %v6069 = vmul.f32 %v6044, 1.442695
    %v6070 = vpow.pop %v6069
    %v6071 = vmul.f32 %v6045, 1.442695
    %v6072 = vpow.pop %v6071
    %v6073 = vmul.f32 %v6046, 1.442695
    %v6074 = vpow.pop %v6073
    %v6075 = vmul.f32 %v6047, 1.442695
    %v6076 = vpow.pop %v6075
    %v6077 = vmul.f32 %v6048, 1.442695
    %v6078 = vpow.pop %v6077
    %v6079 = vmul.f32 %v6049, 1.442695
    %v6080 = vpow.pop %v6079
    %v6081 = vmul.f32 %v6050, 1.442695
    %v6082 = vpow.pop %v6081
    %v6083 = vadd.f32 %v6052, 1.0
    %v6084 = vadd.f32 %v6054, 1.0
    %v6085 = vadd.f32 %v6056, 1.0
    %v6086 = vadd.f32 %v6058, 1.0
    %v6087 = vadd.f32 %v6060, 1.0
    %v6088 = vadd.f32 %v6062, 1.0
    %v6089 = vadd.f32 %v6064, 1.0
    %v6090 = vadd.f32 %v6066, 1.0
    %v6091 = vadd.f32 %v6068, 1.0
    %v6092 = vadd.f32 %v6070, 1.0
    %v6093 = vadd.f32 %v6072, 1.0
    %v6094 = vadd.f32 %v6074, 1.0
    %v6095 = vadd.f32 %v6076, 1.0
    %v6096 = vadd.f32 %v6078, 1.0
    %v6097 = vadd.f32 %v6080, 1.0
    %v6098 = vadd.f32 %v6082, 1.0
    %v6099 = vrcp.pop %v6083
    %v6100 = vmul.f32 1.0, %v6099
    %v6101 = vrcp.pop %v6084
    %v6102 = vmul.f32 1.0, %v6101
    %v6103 = vrcp.pop %v6085
    %v6104 = vmul.f32 1.0, %v6103
    %v6105 = vrcp.pop %v6086
    %v6106 = vmul.f32 1.0, %v6105
    %v6107 = vrcp.pop %v6087
    %v6108 = vmul.f32 1.0, %v6107
    %v6109 = vrcp.pop %v6088
    %v6110 = vmul.f32 1.0, %v6109
    %v6111 = vrcp.pop %v6089
    %v6112 = vmul.f32 1.0, %v6111
    %v6113 = vrcp.pop %v6090
    %v6114 = vmul.f32 1.0, %v6113
    %v6115 = vrcp.pop %v6091
    %v6116 = vmul.f32 1.0, %v6115
    %v6117 = vrcp.pop %v6092
    %v6118 = vmul.f32 1.0, %v6117
    %v6119 = vrcp.pop %v6093
    %v6120 = vmul.f32 1.0, %v6119
    %v6121 = vrcp.pop %v6094
    %v6122 = vmul.f32 1.0, %v6121
    %v6123 = vrcp.pop %v6095
    %v6124 = vmul.f32 1.0, %v6123
    %v6125 = vrcp.pop %v6096
    %v6126 = vmul.f32 1.0, %v6125
    %v6127 = vrcp.pop %v6097
    %v6128 = vmul.f32 1.0, %v6127
    %v6129 = vrcp.pop %v6098
    %v6130 = vmul.f32 1.0, %v6129
    %v6131 = vmul.f32 %v5988, %v5845
    %v6132 = vmul.f32 %v5990, %v5848
    %v6133 = vmul.f32 %v5992, %v5853
    %v6134 = vmul.f32 %v5994, %v5856
    %v6135 = vmul.f32 %v5996, %v5861
    %v6136 = vmul.f32 %v5998, %v5864
    %v6137 = vmul.f32 %v6000, %v5869
    %v6138 = vmul.f32 %v6002, %v5872
    %v6139 = vmul.f32 %v6004, %v5877
    %v6140 = vmul.f32 %v6006, %v5880
    %v6141 = vmul.f32 %v6008, %v5885
    %v6142 = vmul.f32 %v6010, %v5888
    %v6143 = vmul.f32 %v6012, %v5893
    %v6144 = vmul.f32 %v6014, %v5896
    %v6145 = vmul.f32 %v6016, %v5901
    %v6146 = vmul.f32 %v6018, %v5904
    %v6147 = vadd.f32 %v5635, %v6131
    %v6148 = vadd.f32 %v5638, %v6132
    %v6149 = vadd.f32 %v5643, %v6133
    %v6150 = vadd.f32 %v5646, %v6134
    %v6151 = vadd.f32 %v5651, %v6135
    %v6152 = vadd.f32 %v5654, %v6136
    %v6153 = vadd.f32 %v5659, %v6137
    %v6154 = vadd.f32 %v5662, %v6138
    %v6155 = vadd.f32 %v5667, %v6139
    %v6156 = vadd.f32 %v5670, %v6140
    %v6157 = vadd.f32 %v5675, %v6141
    %v6158 = vadd.f32 %v5678, %v6142
    %v6159 = vadd.f32 %v5683, %v6143
    %v6160 = vadd.f32 %v5686, %v6144
    %v6161 = vadd.f32 %v5691, %v6145
    %v6162 = vadd.f32 %v5694, %v6146
    %v6163 = vtanh.pop %v6147
    %v6164 = vtanh.pop %v6148
    %v6165 = vtanh.pop %v6149
    %v6166 = vtanh.pop %v6150
    %v6167 = vtanh.pop %v6151
    %v6168 = vtanh.pop %v6152
    %v6169 = vtanh.pop %v6153
    %v6170 = vtanh.pop %v6154
    %v6171 = vtanh.pop %v6155
    %v6172 = vtanh.pop %v6156
    %v6173 = vtanh.pop %v6157
    %v6174 = vtanh.pop %v6158
    %v6175 = vtanh.pop %v6159
    %v6176 = vtanh.pop %v6160
    %v6177 = vtanh.pop %v6161
    %v6178 = vtanh.pop %v6162
    %v6179 = vsub.f32 1.0, %v6100
    %v6180 = vsub.f32 1.0, %v6102
    %v6181 = vsub.f32 1.0, %v6104
    %v6182 = vsub.f32 1.0, %v6106
    %v6183 = vsub.f32 1.0, %v6108
    %v6184 = vsub.f32 1.0, %v6110
    %v6185 = vsub.f32 1.0, %v6112
    %v6186 = vsub.f32 1.0, %v6114
    %v6187 = vsub.f32 1.0, %v6116
    %v6188 = vsub.f32 1.0, %v6118
    %v6189 = vsub.f32 1.0, %v6120
    %v6190 = vsub.f32 1.0, %v6122
    %v6191 = vsub.f32 1.0, %v6124
    %v6192 = vsub.f32 1.0, %v6126
    %v6193 = vsub.f32 1.0, %v6128
    %v6194 = vsub.f32 1.0, %v6130
    %v6195 = vmul.f32 %v6179, %v6163
    %v6196 = vmul.f32 %v6180, %v6164
    %v6197 = vmul.f32 %v6181, %v6165
    %v6198 = vmul.f32 %v6182, %v6166
    %v6199 = vmul.f32 %v6183, %v6167
    %v6200 = vmul.f32 %v6184, %v6168
    %v6201 = vmul.f32 %v6185, %v6169
    %v6202 = vmul.f32 %v6186, %v6170
    %v6203 = vmul.f32 %v6187, %v6171
    %v6204 = vmul.f32 %v6188, %v6172
    %v6205 = vmul.f32 %v6189, %v6173
    %v6206 = vmul.f32 %v6190, %v6174
    %v6207 = vmul.f32 %v6191, %v6175
    %v6208 = vmul.f32 %v6192, %v6176
    %v6209 = vmul.f32 %v6193, %v6177
    %v6210 = vmul.f32 %v6194, %v6178
    %v6211 = vmul.f32 %v6100, %v5068
    %v6212 = vmul.f32 %v6102, %v5069
    %v6213 = vmul.f32 %v6104, %v5070
    %v6214 = vmul.f32 %v6106, %v5071
    %v6215 = vmul.f32 %v6108, %v5072
    %v6216 = vmul.f32 %v6110, %v5073
    %v6217 = vmul.f32 %v6112, %v5074
    %v6218 = vmul.f32 %v6114, %v5075
    %v6219 = vmul.f32 %v6116, %v5076
    %v6220 = vmul.f32 %v6118, %v5077
    %v6221 = vmul.f32 %v6120, %v5078
    %v6222 = vmul.f32 %v6122, %v5079
    %v6223 = vmul.f32 %v6124, %v5080
    %v6224 = vmul.f32 %v6126, %v5081
    %v6225 = vmul.f32 %v6128, %v5082
    %v6226 = vmul.f32 %v6130, %v5083
    %v6227 = vadd.f32 %v6195, %v6211
    %v6228 = vadd.f32 %v6196, %v6212
    %v6229 = vadd.f32 %v6197, %v6213
    %v6230 = vadd.f32 %v6198, %v6214
    %v6231 = vadd.f32 %v6199, %v6215
    %v6232 = vadd.f32 %v6200, %v6216
    %v6233 = vadd.f32 %v6201, %v6217
    %v6234 = vadd.f32 %v6202, %v6218
    %v6235 = vadd.f32 %v6203, %v6219
    %v6236 = vadd.f32 %v6204, %v6220
    %v6237 = vadd.f32 %v6205, %v6221
    %v6238 = vadd.f32 %v6206, %v6222
    %v6239 = vadd.f32 %v6207, %v6223
    %v6240 = vadd.f32 %v6208, %v6224
    %v6241 = vadd.f32 %v6209, %v6225
    %v6242 = vadd.f32 %v6210, %v6226
    %v6243 = vpack.c.bf16 %v6228, %v6227
    %v6244 = vpack.c.bf16 %v6230, %v6229
    %v6245 = vpack.c.bf16 %v6232, %v6231
    %v6246 = vpack.c.bf16 %v6234, %v6233
    %v6247 = vpack.c.bf16 %v6236, %v6235
    %v6248 = vpack.c.bf16 %v6238, %v6237
    %v6249 = vpack.c.bf16 %v6240, %v6239
    %v6250 = vpack.c.bf16 %v6242, %v6241
    %6251 = vmatprep.subr.bf16.mxu0 0
    %6252 = vmatpush1.bf16.msra.mxu0 %v941
    %6253 = vmatprep.subr.bf16.mxu0 0
    %6254 = vmatpush1.bf16.msra.mxu0 %v942
    %6255 = vmatprep.subr.bf16.mxu0 0
    %6256 = vmatpush1.bf16.msra.mxu0 %v943
    %6257 = vmatprep.subr.bf16.mxu0 0
    %6258 = vmatpush1.bf16.msra.mxu0 %v944
    %6259 = vmatprep.subr.bf16.mxu0 0
    %6260 = vmatpush1.bf16.msra.mxu0 %v945
    %6261 = vmatprep.subr.bf16.mxu0 0
    %6262 = vmatpush1.bf16.msra.mxu0 %v946
    %6263 = vmatprep.subr.bf16.mxu0 0
    %6264 = vmatpush1.bf16.msra.mxu0 %v947
    %6265 = vmatprep.subr.bf16.mxu0 0
    %6266 = vmatpush1.bf16.msra.mxu0 %v948
    %6267 = vmatprep.subr.bf16.mxu0 0
    %6268 = vmatpush1.bf16.msra.mxu0 0
    %6269 = vmatprep.subr.bf16.mxu0 0
    %6270 = vmatpush1.bf16.msra.mxu0 0
    %6271 = vmatprep.subr.bf16.mxu0 0
    %6272 = vmatpush1.bf16.msra.mxu0 0
    %6273 = vmatprep.subr.bf16.mxu0 0
    %6274 = vmatpush1.bf16.msra.mxu0 0
    %6275 = vmatprep.subr.bf16.mxu0 0
    %6276 = vmatpush1.bf16.msra.mxu0 0
    %6277 = vmatprep.subr.bf16.mxu0 0
    %6278 = vmatpush1.bf16.msra.mxu0 0
    %6279 = vmatprep.subr.bf16.mxu0 0
    %6280 = vmatpush1.bf16.msra.mxu0 0
    %6281 = vmatprep.subr.bf16.mxu0 0
    %6282 = vmatpush1.bf16.msra.mxu0 0
    %6283 = vmatprep.mubr.bf16.mxu0 0
    %6284 = vmatmul.mubr.bf16.gmra.mrb[0].mxu0 %v6243
    %v6285 = vpop.f32.mrb[0].mxu0
    %v6286 = vadd.f32 %v907, %v6285
    %v6287 = vpop.f32.mrb[0].mxu0
    %v6288 = vpop.f32.mrb[0].mxu0
    %v6289 = vadd.f32 %v907, %v6288
    %v6290 = vpop.f32.mrb[0].mxu0
    %6291 = vmatprep.mubr.bf16.mxu0 0
    %6292 = vmatmul.mubr.bf16.gmra.mrb[0].mxu0 %v6244
    %v6293 = vpop.f32.mrb[0].mxu0
    %v6294 = vadd.f32 %v907, %v6293
    %v6295 = vpop.f32.mrb[0].mxu0
    %v6296 = vpop.f32.mrb[0].mxu0
    %v6297 = vadd.f32 %v907, %v6296
    %v6298 = vpop.f32.mrb[0].mxu0
    %6299 = vmatprep.mubr.bf16.mxu0 0
    %6300 = vmatmul.mubr.bf16.gmra.mrb[0].mxu0 %v6245
    %v6301 = vpop.f32.mrb[0].mxu0
    %v6302 = vadd.f32 %v907, %v6301
    %v6303 = vpop.f32.mrb[0].mxu0
    %v6304 = vpop.f32.mrb[0].mxu0
    %v6305 = vadd.f32 %v907, %v6304
    %v6306 = vpop.f32.mrb[0].mxu0
    %6307 = vmatprep.mubr.bf16.mxu0 0
    %6308 = vmatmul.mubr.bf16.gmra.mrb[0].mxu0 %v6246
    %v6309 = vpop.f32.mrb[0].mxu0
    %v6310 = vadd.f32 %v907, %v6309
    %v6311 = vpop.f32.mrb[0].mxu0
    %v6312 = vpop.f32.mrb[0].mxu0
    %v6313 = vadd.f32 %v907, %v6312
    %v6314 = vpop.f32.mrb[0].mxu0
    %6315 = vmatprep.mubr.bf16.mxu0 0
    %6316 = vmatmul.mubr.bf16.gmra.mrb[0].mxu0 %v6247
    %v6317 = vpop.f32.mrb[0].mxu0
    %v6318 = vadd.f32 %v907, %v6317
    %v6319 = vpop.f32.mrb[0].mxu0
    %v6320 = vpop.f32.mrb[0].mxu0
    %v6321 = vadd.f32 %v907, %v6320
    %v6322 = vpop.f32.mrb[0].mxu0
    %6323 = vmatprep.mubr.bf16.mxu0 0
    %6324 = vmatmul.mubr.bf16.gmra.mrb[0].mxu0 %v6248
    %v6325 = vpop.f32.mrb[0].mxu0
    %v6326 = vadd.f32 %v907, %v6325
    %v6327 = vpop.f32.mrb[0].mxu0
    %v6328 = vpop.f32.mrb[0].mxu0
    %v6329 = vadd.f32 %v907, %v6328
    %v6330 = vpop.f32.mrb[0].mxu0
    %6331 = vmatprep.mubr.bf16.mxu0 0
    %6332 = vmatmul.mubr.bf16.gmra.mrb[0].mxu0 %v6249
    %v6333 = vpop.f32.mrb[0].mxu0
    %v6334 = vadd.f32 %v907, %v6333
    %v6335 = vpop.f32.mrb[0].mxu0
    %v6336 = vpop.f32.mrb[0].mxu0
    %v6337 = vadd.f32 %v907, %v6336
    %v6338 = vpop.f32.mrb[0].mxu0
    %6339 = vmatprep.mubr.bf16.mxu0 0
    %6340 = vmatmul.mubr.bf16.gmra.mrb[0].mxu0 %v6250
    %v6341 = vpop.f32.mrb[0].mxu0
    %v6342 = vadd.f32 %v907, %v6341
    %v6343 = vpop.f32.mrb[0].mxu0
    %v6344 = vpop.f32.mrb[0].mxu0
    %v6345 = vadd.f32 %v907, %v6344
    %v6346 = vpop.f32.mrb[0].mxu0
    %6347 = vdwg.mxu0
    %v6348 = vmax.f32 %v6286, 0.0
    %v6349 = vmax.f32 %v6289, 0.0
    %v6350 = vmax.f32 %v6294, 0.0
    %v6351 = vmax.f32 %v6297, 0.0
    %v6352 = vmax.f32 %v6302, 0.0
    %v6353 = vmax.f32 %v6305, 0.0
    %v6354 = vmax.f32 %v6310, 0.0
    %v6355 = vmax.f32 %v6313, 0.0
    %v6356 = vmax.f32 %v6318, 0.0
    %v6357 = vmax.f32 %v6321, 0.0
    %v6358 = vmax.f32 %v6326, 0.0
    %v6359 = vmax.f32 %v6329, 0.0
    %v6360 = vmax.f32 %v6334, 0.0
    %v6361 = vmax.f32 %v6337, 0.0
    %v6362 = vmax.f32 %v6342, 0.0
    %v6363 = vmax.f32 %v6345, 0.0
    %v6364 = vpack.c.bf16 %v6349, %v6348
    %v6365 = vpack.c.bf16 %v6351, %v6350
    %v6366 = vpack.c.bf16 %v6353, %v6352
    %v6367 = vpack.c.bf16 %v6355, %v6354
    %v6368 = vpack.c.bf16 %v6357, %v6356
    %v6369 = vpack.c.bf16 %v6359, %v6358
    %v6370 = vpack.c.bf16 %v6361, %v6360
    %v6371 = vpack.c.bf16 %v6363, %v6362
    %6372 = vmatprep.subr.bf16.mxu0 0
    %6373 = vmatpush1.bf16.msra.mxu0 %v1116
    %6374 = vmatprep.subr.bf16.mxu0 0
    %6375 = vmatpush1.bf16.msra.mxu0 %v1117
    %6376 = vmatprep.subr.bf16.mxu0 0
    %6377 = vmatpush1.bf16.msra.mxu0 %v1118
    %6378 = vmatprep.subr.bf16.mxu0 0
    %6379 = vmatpush1.bf16.msra.mxu0 %v1119
    %6380 = vmatprep.subr.bf16.mxu0 0
    %6381 = vmatpush1.bf16.msra.mxu0 %v1120
    %6382 = vmatprep.subr.bf16.mxu0 0
    %6383 = vmatpush1.bf16.msra.mxu0 %v1121
    %6384 = vmatprep.subr.bf16.mxu0 0
    %6385 = vmatpush1.bf16.msra.mxu0 %v1122
    %6386 = vmatprep.subr.bf16.mxu0 0
    %6387 = vmatpush1.bf16.msra.mxu0 %v1123
    %6388 = vmatprep.subr.bf16.mxu0 0
    %6389 = vmatpush1.bf16.msra.mxu0 0
    %6390 = vmatprep.subr.bf16.mxu0 0
    %6391 = vmatpush1.bf16.msra.mxu0 0
    %6392 = vmatprep.subr.bf16.mxu0 0
    %6393 = vmatpush1.bf16.msra.mxu0 0
    %6394 = vmatprep.subr.bf16.mxu0 0
    %6395 = vmatpush1.bf16.msra.mxu0 0
    %6396 = vmatprep.subr.bf16.mxu0 0
    %6397 = vmatpush1.bf16.msra.mxu0 0
    %6398 = vmatprep.subr.bf16.mxu0 0
    %6399 = vmatpush1.bf16.msra.mxu0 0
    %6400 = vmatprep.subr.bf16.mxu0 0
    %6401 = vmatpush1.bf16.msra.mxu0 0
    %6402 = vmatprep.subr.bf16.mxu0 0
    %6403 = vmatpush1.bf16.msra.mxu0 0
    %6404 = vmatprep.mubr.bf16.mxu0 0
    %6405 = vmatmul.mubr.bf16.gmra.mrb[0].mxu0 %v6364
    %v6406 = vpop.f32.mrb[0].mxu0
    %v6407 = vadd.f32 %v1082, %v6406
    %v6408 = vpop.f32.mrb[0].mxu0
    %v6409 = vpop.f32.mrb[0].mxu0
    %v6410 = vadd.f32 %v1082, %v6409
    %v6411 = vpop.f32.mrb[0].mxu0
    %6412 = vmatprep.mubr.bf16.mxu0 0
    %6413 = vmatmul.mubr.bf16.gmra.mrb[0].mxu0 %v6365
    %v6414 = vpop.f32.mrb[0].mxu0
    %v6415 = vadd.f32 %v1082, %v6414
    %v6416 = vpop.f32.mrb[0].mxu0
    %v6417 = vpop.f32.mrb[0].mxu0
    %v6418 = vadd.f32 %v1082, %v6417
    %v6419 = vpop.f32.mrb[0].mxu0
    %6420 = vmatprep.mubr.bf16.mxu0 0
    %6421 = vmatmul.mubr.bf16.gmra.mrb[0].mxu0 %v6366
    %v6422 = vpop.f32.mrb[0].mxu0
    %v6423 = vadd.f32 %v1082, %v6422
    %v6424 = vpop.f32.mrb[0].mxu0
    %v6425 = vpop.f32.mrb[0].mxu0
    %v6426 = vadd.f32 %v1082, %v6425
    %v6427 = vpop.f32.mrb[0].mxu0
    %6428 = vmatprep.mubr.bf16.mxu0 0
    %6429 = vmatmul.mubr.bf16.gmra.mrb[0].mxu0 %v6367
    %v6430 = vpop.f32.mrb[0].mxu0
    %v6431 = vadd.f32 %v1082, %v6430
    %v6432 = vpop.f32.mrb[0].mxu0
    %v6433 = vpop.f32.mrb[0].mxu0
    %v6434 = vadd.f32 %v1082, %v6433
    %v6435 = vpop.f32.mrb[0].mxu0
    %6436 = vmatprep.mubr.bf16.mxu0 0
    %6437 = vmatmul.mubr.bf16.gmra.mrb[0].mxu0 %v6368
    %v6438 = vpop.f32.mrb[0].mxu0
    %v6439 = vadd.f32 %v1082, %v6438
    %v6440 = vpop.f32.mrb[0].mxu0
    %v6441 = vpop.f32.mrb[0].mxu0
    %v6442 = vadd.f32 %v1082, %v6441
    %v6443 = vpop.f32.mrb[0].mxu0
    %6444 = vmatprep.mubr.bf16.mxu0 0
    %6445 = vmatmul.mubr.bf16.gmra.mrb[0].mxu0 %v6369
    %v6446 = vpop.f32.mrb[0].mxu0
    %v6447 = vadd.f32 %v1082, %v6446
    %v6448 = vpop.f32.mrb[0].mxu0
    %v6449 = vpop.f32.mrb[0].mxu0
    %v6450 = vadd.f32 %v1082, %v6449
    %v6451 = vpop.f32.mrb[0].mxu0
    %6452 = vmatprep.mubr.bf16.mxu0 0
    %6453 = vmatmul.mubr.bf16.gmra.mrb[0].mxu0 %v6370
    %v6454 = vpop.f32.mrb[0].mxu0
    %v6455 = vadd.f32 %v1082, %v6454
    %v6456 = vpop.f32.mrb[0].mxu0
    %v6457 = vpop.f32.mrb[0].mxu0
    %v6458 = vadd.f32 %v1082, %v6457
    %v6459 = vpop.f32.mrb[0].mxu0
    %6460 = vmatprep.mubr.bf16.mxu0 0
    %6461 = vmatmul.mubr.bf16.gmra.mrb[0].mxu0 %v6371
    %v6462 = vpop.f32.mrb[0].mxu0
    %v6463 = vadd.f32 %v1082, %v6462
    %v6464 = vpop.f32.mrb[0].mxu0
    %v6465 = vpop.f32.mrb[0].mxu0
    %v6466 = vadd.f32 %v1082, %v6465
    %v6467 = vpop.f32.mrb[0].mxu0
    %6468 = vdwg.mxu0
    %v6469 = vpack.c.bf16 %v6410, %v6407
    %v6470 = vpack.c.bf16 %v6418, %v6415
    %v6471 = vpack.c.bf16 %v6426, %v6423
    %v6472 = vpack.c.bf16 %v6434, %v6431
    %v6473 = vpack.c.bf16 %v6442, %v6439
    %v6474 = vpack.c.bf16 %v6450, %v6447
    %v6475 = vpack.c.bf16 %v6458, %v6455
    %v6476 = vpack.c.bf16 %v6466, %v6463
    %6477 = vmatprep.subr.bf16.mxu0 0
    %6478 = vmatpush1.bf16.msra.mxu0 %v6469
    %6479 = vmatprep.subr.bf16.mxu0 0
    %6480 = vmatpush1.bf16.msra.mxu0 %v6470
    %6481 = vmatprep.subr.bf16.mxu0 0
    %6482 = vmatpush1.bf16.msra.mxu0 %v6471
    %6483 = vmatprep.subr.bf16.mxu0 0
    %6484 = vmatpush1.bf16.msra.mxu0 %v6472
    %6485 = vmatprep.subr.bf16.mxu0 0
    %6486 = vmatpush1.bf16.msra.mxu0 %v6473
    %6487 = vmatprep.subr.bf16.mxu0 0
    %6488 = vmatpush1.bf16.msra.mxu0 %v6474
    %6489 = vmatprep.subr.bf16.mxu0 0
    %6490 = vmatpush1.bf16.msra.mxu0 %v6475
    %6491 = vmatprep.subr.bf16.mxu0 0
    %6492 = vmatpush1.bf16.msra.mxu0 %v6476
    %6493 = vmatprep.subr.bf16.mxu0 0
    %6494 = vmatpush1.bf16.msra.mxu0 0
    %6495 = vmatprep.subr.bf16.mxu0 0
    %6496 = vmatpush1.bf16.msra.mxu0 0
    %6497 = vmatprep.subr.bf16.mxu0 0
    %6498 = vmatpush1.bf16.msra.mxu0 0
    %6499 = vmatprep.subr.bf16.mxu0 0
    %6500 = vmatpush1.bf16.msra.mxu0 0
    %6501 = vmatprep.subr.bf16.mxu0 0
    %6502 = vmatpush1.bf16.msra.mxu0 0
    %6503 = vmatprep.subr.bf16.mxu0 0
    %6504 = vmatpush1.bf16.msra.mxu0 0
    %6505 = vmatprep.subr.bf16.mxu0 0
    %6506 = vmatpush1.bf16.msra.mxu0 0
    %6507 = vmatprep.subr.bf16.mxu0 0
    %6508 = vmatpush1.bf16.msra.mxu0 0
    %6509 = vmatprep.mubr.bf16.mxu0 0
    %6510 = vmatmul.mubr.bf16.gmra.mrb[0].mxu0 %v1269
    %v6511 = vpop.f32.mrb[0].mxu0
    %v6512 = vadd.f32 0.0, %v6511
    %v6513 = vpop.f32.mrb[0].mxu0
    %v6514 = vpop.f32.mrb[0].mxu0
    %v6515 = vadd.f32 0.0, %v6514
    %v6516 = vpop.f32.mrb[0].mxu0
    %6517 = vmatprep.mubr.bf16.mxu0 0
    %6518 = vmatmul.mubr.bf16.gmra.mrb[0].mxu0 %v1270
    %v6519 = vpop.f32.mrb[0].mxu0
    %v6520 = vadd.f32 0.0, %v6519
    %v6521 = vpop.f32.mrb[0].mxu0
    %v6522 = vpop.f32.mrb[0].mxu0
    %v6523 = vadd.f32 0.0, %v6522
    %v6524 = vpop.f32.mrb[0].mxu0
    %6525 = vmatprep.mubr.bf16.mxu0 0
    %6526 = vmatmul.mubr.bf16.gmra.mrb[0].mxu0 %v1271
    %v6527 = vpop.f32.mrb[0].mxu0
    %v6528 = vadd.f32 0.0, %v6527
    %v6529 = vpop.f32.mrb[0].mxu0
    %v6530 = vpop.f32.mrb[0].mxu0
    %v6531 = vadd.f32 0.0, %v6530
    %v6532 = vpop.f32.mrb[0].mxu0
    %6533 = vmatprep.mubr.bf16.mxu0 0
    %6534 = vmatmul.mubr.bf16.gmra.mrb[0].mxu0 %v1272
    %v6535 = vpop.f32.mrb[0].mxu0
    %v6536 = vadd.f32 0.0, %v6535
    %v6537 = vpop.f32.mrb[0].mxu0
    %v6538 = vpop.f32.mrb[0].mxu0
    %v6539 = vadd.f32 0.0, %v6538
    %v6540 = vpop.f32.mrb[0].mxu0
    %6541 = vmatprep.mubr.bf16.mxu0 0
    %6542 = vmatmul.mubr.bf16.gmra.mrb[0].mxu0 %v1273
    %v6543 = vpop.f32.mrb[0].mxu0
    %v6544 = vadd.f32 0.0, %v6543
    %v6545 = vpop.f32.mrb[0].mxu0
    %v6546 = vpop.f32.mrb[0].mxu0
    %v6547 = vadd.f32 0.0, %v6546
    %v6548 = vpop.f32.mrb[0].mxu0
    %6549 = vmatprep.mubr.bf16.mxu0 0
    %6550 = vmatmul.mubr.bf16.gmra.mrb[0].mxu0 %v1274
    %v6551 = vpop.f32.mrb[0].mxu0
    %v6552 = vadd.f32 0.0, %v6551
    %v6553 = vpop.f32.mrb[0].mxu0
    %v6554 = vpop.f32.mrb[0].mxu0
    %v6555 = vadd.f32 0.0, %v6554
    %v6556 = vpop.f32.mrb[0].mxu0
    %6557 = vmatprep.mubr.bf16.mxu0 0
    %6558 = vmatmul.mubr.bf16.gmra.mrb[0].mxu0 %v1275
    %v6559 = vpop.f32.mrb[0].mxu0
    %v6560 = vadd.f32 0.0, %v6559
    %v6561 = vpop.f32.mrb[0].mxu0
    %v6562 = vpop.f32.mrb[0].mxu0
    %v6563 = vadd.f32 0.0, %v6562
    %v6564 = vpop.f32.mrb[0].mxu0
    %6565 = vmatprep.mubr.bf16.mxu0 0
    %6566 = vmatmul.mubr.bf16.gmra.mrb[0].mxu0 %v1276
    %v6567 = vpop.f32.mrb[0].mxu0
    %v6568 = vadd.f32 0.0, %v6567
    %v6569 = vpop.f32.mrb[0].mxu0
    %v6570 = vpop.f32.mrb[0].mxu0
    %v6571 = vadd.f32 0.0, %v6570
    %v6572 = vpop.f32.mrb[0].mxu0
    %6573 = vdwg.mxu0
    %v6574 = vpack.c.bf16 %v6515, %v6512
    %v6575 = vpack.c.bf16 %v6523, %v6520
    %v6576 = vpack.c.bf16 %v6531, %v6528
    %v6577 = vpack.c.bf16 %v6539, %v6536
    %v6578 = vpack.c.bf16 %v6547, %v6544
    %v6579 = vpack.c.bf16 %v6555, %v6552
    %v6580 = vpack.c.bf16 %v6563, %v6560
    %v6581 = vpack.c.bf16 %v6571, %v6568
    %6582 = vmatprep.subr.bf16.mxu0 %v1487
    %6583 = vmatpush1.bf16.msra.mxu0 %v1486
    %6584 = vmatprep.subr.bf16.mxu0 %v1490
    %6585 = vmatpush1.bf16.msra.mxu0 %v1489
    %6586 = vmatprep.subr.bf16.mxu0 %v1493
    %6587 = vmatpush1.bf16.msra.mxu0 %v1492
    %6588 = vmatprep.subr.bf16.mxu0 %v1496
    %6589 = vmatpush1.bf16.msra.mxu0 %v1495
    %6590 = vmatprep.subr.bf16.mxu0 %v1499
    %6591 = vmatpush1.bf16.msra.mxu0 %v1498
    %6592 = vmatprep.subr.bf16.mxu0 %v1502
    %6593 = vmatpush1.bf16.msra.mxu0 %v1501
    %6594 = vmatprep.subr.bf16.mxu0 %v1505
    %6595 = vmatpush1.bf16.msra.mxu0 %v1504
    %6596 = vmatprep.subr.bf16.mxu0 %v1508
    %6597 = vmatpush1.bf16.msra.mxu0 %v1507
    %6598 = vmatprep.subr.bf16.mxu0 0
    %6599 = vmatpush1.bf16.msra.mxu0 0
    %6600 = vmatprep.subr.bf16.mxu0 0
    %6601 = vmatpush1.bf16.msra.mxu0 0
    %6602 = vmatprep.subr.bf16.mxu0 0
    %6603 = vmatpush1.bf16.msra.mxu0 0
    %6604 = vmatprep.subr.bf16.mxu0 0
    %6605 = vmatpush1.bf16.msra.mxu0 0
    %6606 = vmatprep.subr.bf16.mxu0 0
    %6607 = vmatpush1.bf16.msra.mxu0 0
    %6608 = vmatprep.subr.bf16.mxu0 0
    %6609 = vmatpush1.bf16.msra.mxu0 0
    %6610 = vmatprep.subr.bf16.mxu0 0
    %6611 = vmatpush1.bf16.msra.mxu0 0
    %6612 = vmatprep.subr.bf16.mxu0 0
    %6613 = vmatpush1.bf16.msra.mxu0 0
    %6614 = vmatprep.mubr.bf16.mxu0 0
    %6615 = vmatmul.mubr.bf16.gmra.mrb[0].mxu0 %v6574
    %v6616 = vpop.f32.mrb[0].mxu0
    %v6617 = vadd.f32 %v1394, %v6616
    %v6618 = vpop.f32.mrb[0].mxu0
    %v6619 = vadd.f32 %v1398, %v6618
    %v6620 = vpop.f32.mrb[0].mxu0
    %v6621 = vadd.f32 %v1394, %v6620
    %v6622 = vpop.f32.mrb[0].mxu0
    %v6623 = vadd.f32 %v1398, %v6622
    %6624 = vmatprep.mubr.bf16.mxu0 0
    %6625 = vmatmul.mubr.bf16.gmra.mrb[0].mxu0 %v6575
    %v6626 = vpop.f32.mrb[0].mxu0
    %v6627 = vadd.f32 %v1394, %v6626
    %v6628 = vpop.f32.mrb[0].mxu0
    %v6629 = vadd.f32 %v1398, %v6628
    %v6630 = vpop.f32.mrb[0].mxu0
    %v6631 = vadd.f32 %v1394, %v6630
    %v6632 = vpop.f32.mrb[0].mxu0
    %v6633 = vadd.f32 %v1398, %v6632
    %6634 = vmatprep.mubr.bf16.mxu0 0
    %6635 = vmatmul.mubr.bf16.gmra.mrb[0].mxu0 %v6576
    %v6636 = vpop.f32.mrb[0].mxu0
    %v6637 = vadd.f32 %v1394, %v6636
    %v6638 = vpop.f32.mrb[0].mxu0
    %v6639 = vadd.f32 %v1398, %v6638
    %v6640 = vpop.f32.mrb[0].mxu0
    %v6641 = vadd.f32 %v1394, %v6640
    %v6642 = vpop.f32.mrb[0].mxu0
    %v6643 = vadd.f32 %v1398, %v6642
    %6644 = vmatprep.mubr.bf16.mxu0 0
    %6645 = vmatmul.mubr.bf16.gmra.mrb[0].mxu0 %v6577
    %v6646 = vpop.f32.mrb[0].mxu0
    %v6647 = vadd.f32 %v1394, %v6646
    %v6648 = vpop.f32.mrb[0].mxu0
    %v6649 = vadd.f32 %v1398, %v6648
    %v6650 = vpop.f32.mrb[0].mxu0
    %v6651 = vadd.f32 %v1394, %v6650
    %v6652 = vpop.f32.mrb[0].mxu0
    %v6653 = vadd.f32 %v1398, %v6652
    %6654 = vmatprep.mubr.bf16.mxu0 0
    %6655 = vmatmul.mubr.bf16.gmra.mrb[0].mxu0 %v6578
    %v6656 = vpop.f32.mrb[0].mxu0
    %v6657 = vadd.f32 %v1394, %v6656
    %v6658 = vpop.f32.mrb[0].mxu0
    %v6659 = vadd.f32 %v1398, %v6658
    %v6660 = vpop.f32.mrb[0].mxu0
    %v6661 = vadd.f32 %v1394, %v6660
    %v6662 = vpop.f32.mrb[0].mxu0
    %v6663 = vadd.f32 %v1398, %v6662
    %6664 = vmatprep.mubr.bf16.mxu0 0
    %6665 = vmatmul.mubr.bf16.gmra.mrb[0].mxu0 %v6579
    %v6666 = vpop.f32.mrb[0].mxu0
    %v6667 = vadd.f32 %v1394, %v6666
    %v6668 = vpop.f32.mrb[0].mxu0
    %v6669 = vadd.f32 %v1398, %v6668
    %v6670 = vpop.f32.mrb[0].mxu0
    %v6671 = vadd.f32 %v1394, %v6670
    %v6672 = vpop.f32.mrb[0].mxu0
    %v6673 = vadd.f32 %v1398, %v6672
    %6674 = vmatprep.mubr.bf16.mxu0 0
    %6675 = vmatmul.mubr.bf16.gmra.mrb[0].mxu0 %v6580
    %v6676 = vpop.f32.mrb[0].mxu0
    %v6677 = vadd.f32 %v1394, %v6676
    %v6678 = vpop.f32.mrb[0].mxu0
    %v6679 = vadd.f32 %v1398, %v6678
    %v6680 = vpop.f32.mrb[0].mxu0
    %v6681 = vadd.f32 %v1394, %v6680
    %v6682 = vpop.f32.mrb[0].mxu0
    %v6683 = vadd.f32 %v1398, %v6682
    %6684 = vmatprep.mubr.bf16.mxu0 0
    %6685 = vmatmul.mubr.bf16.gmra.mrb[0].mxu0 %v6581
    %v6686 = vpop.f32.mrb[0].mxu0
    %v6687 = vadd.f32 %v1394, %v6686
    %v6688 = vpop.f32.mrb[0].mxu0
    %v6689 = vadd.f32 %v1398, %v6688
    %v6690 = vpop.f32.mrb[0].mxu0
    %v6691 = vadd.f32 %v1394, %v6690
    %v6692 = vpop.f32.mrb[0].mxu0
    %v6693 = vadd.f32 %v1398, %v6692
    %6694 = vdwg.mxu0
    %6695 = vmatprep.subr.bf16.mxu0 0
    %6696 = vmatpush1.bf16.msra.mxu0 %v1488
    %6697 = vmatprep.subr.bf16.mxu0 0
    %6698 = vmatpush1.bf16.msra.mxu0 %v1491
    %6699 = vmatprep.subr.bf16.mxu0 0
    %6700 = vmatpush1.bf16.msra.mxu0 %v1494
    %6701 = vmatprep.subr.bf16.mxu0 0
    %6702 = vmatpush1.bf16.msra.mxu0 %v1497
    %6703 = vmatprep.subr.bf16.mxu0 0
    %6704 = vmatpush1.bf16.msra.mxu0 %v1500
    %6705 = vmatprep.subr.bf16.mxu0 0
    %6706 = vmatpush1.bf16.msra.mxu0 %v1503
    %6707 = vmatprep.subr.bf16.mxu0 0
    %6708 = vmatpush1.bf16.msra.mxu0 %v1506
    %6709 = vmatprep.subr.bf16.mxu0 0
    %6710 = vmatpush1.bf16.msra.mxu0 %v1509
    %6711 = vmatprep.subr.bf16.mxu0 0
    %6712 = vmatpush1.bf16.msra.mxu0 0
    %6713 = vmatprep.subr.bf16.mxu0 0
    %6714 = vmatpush1.bf16.msra.mxu0 0
    %6715 = vmatprep.subr.bf16.mxu0 0
    %6716 = vmatpush1.bf16.msra.mxu0 0
    %6717 = vmatprep.subr.bf16.mxu0 0
    %6718 = vmatpush1.bf16.msra.mxu0 0
    %6719 = vmatprep.subr.bf16.mxu0 0
    %6720 = vmatpush1.bf16.msra.mxu0 0
    %6721 = vmatprep.subr.bf16.mxu0 0
    %6722 = vmatpush1.bf16.msra.mxu0 0
    %6723 = vmatprep.subr.bf16.mxu0 0
    %6724 = vmatpush1.bf16.msra.mxu0 0
    %6725 = vmatprep.subr.bf16.mxu0 0
    %6726 = vmatpush1.bf16.msra.mxu0 0
    %6727 = vmatprep.mubr.bf16.mxu0 0
    %6728 = vmatmul.mubr.bf16.gmra.mrb[0].mxu0 %v6574
    %v6729 = vpop.f32.mrb[0].mxu0
    %v6730 = vadd.f32 %v1402, %v6729
    %v6731 = vpop.f32.mrb[0].mxu0
    %v6732 = vpop.f32.mrb[0].mxu0
    %v6733 = vadd.f32 %v1402, %v6732
    %v6734 = vpop.f32.mrb[0].mxu0
    %6735 = vmatprep.mubr.bf16.mxu0 0
    %6736 = vmatmul.mubr.bf16.gmra.mrb[0].mxu0 %v6575
    %v6737 = vpop.f32.mrb[0].mxu0
    %v6738 = vadd.f32 %v1402, %v6737
    %v6739 = vpop.f32.mrb[0].mxu0
    %v6740 = vpop.f32.mrb[0].mxu0
    %v6741 = vadd.f32 %v1402, %v6740
    %v6742 = vpop.f32.mrb[0].mxu0
    %6743 = vmatprep.mubr.bf16.mxu0 0
    %6744 = vmatmul.mubr.bf16.gmra.mrb[0].mxu0 %v6576
    %v6745 = vpop.f32.mrb[0].mxu0
    %v6746 = vadd.f32 %v1402, %v6745
    %v6747 = vpop.f32.mrb[0].mxu0
    %v6748 = vpop.f32.mrb[0].mxu0
    %v6749 = vadd.f32 %v1402, %v6748
    %v6750 = vpop.f32.mrb[0].mxu0
    %6751 = vmatprep.mubr.bf16.mxu0 0
    %6752 = vmatmul.mubr.bf16.gmra.mrb[0].mxu0 %v6577
    %v6753 = vpop.f32.mrb[0].mxu0
    %v6754 = vadd.f32 %v1402, %v6753
    %v6755 = vpop.f32.mrb[0].mxu0
    %v6756 = vpop.f32.mrb[0].mxu0
    %v6757 = vadd.f32 %v1402, %v6756
    %v6758 = vpop.f32.mrb[0].mxu0
    %6759 = vmatprep.mubr.bf16.mxu0 0
    %6760 = vmatmul.mubr.bf16.gmra.mrb[0].mxu0 %v6578
    %v6761 = vpop.f32.mrb[0].mxu0
    %v6762 = vadd.f32 %v1402, %v6761
    %v6763 = vpop.f32.mrb[0].mxu0
    %v6764 = vpop.f32.mrb[0].mxu0
    %v6765 = vadd.f32 %v1402, %v6764
    %v6766 = vpop.f32.mrb[0].mxu0
    %6767 = vmatprep.mubr.bf16.mxu0 0
    %6768 = vmatmul.mubr.bf16.gmra.mrb[0].mxu0 %v6579
    %v6769 = vpop.f32.mrb[0].mxu0
    %v6770 = vadd.f32 %v1402, %v6769
    %v6771 = vpop.f32.mrb[0].mxu0
    %v6772 = vpop.f32.mrb[0].mxu0
    %v6773 = vadd.f32 %v1402, %v6772
    %v6774 = vpop.f32.mrb[0].mxu0
    %6775 = vmatprep.mubr.bf16.mxu0 0
    %6776 = vmatmul.mubr.bf16.gmra.mrb[0].mxu0 %v6580
    %v6777 = vpop.f32.mrb[0].mxu0
    %v6778 = vadd.f32 %v1402, %v6777
    %v6779 = vpop.f32.mrb[0].mxu0
    %v6780 = vpop.f32.mrb[0].mxu0
    %v6781 = vadd.f32 %v1402, %v6780
    %v6782 = vpop.f32.mrb[0].mxu0
    %6783 = vmatprep.mubr.bf16.mxu0 0
    %6784 = vmatmul.mubr.bf16.gmra.mrb[0].mxu0 %v6581
    %v6785 = vpop.f32.mrb[0].mxu0
    %v6786 = vadd.f32 %v1402, %v6785
    %v6787 = vpop.f32.mrb[0].mxu0
    %v6788 = vpop.f32.mrb[0].mxu0
    %v6789 = vadd.f32 %v1402, %v6788
    %v6790 = vpop.f32.mrb[0].mxu0
    %6791 = vdwg.mxu0
    %6792 = vmatprep.subr.bf16.mxu0 %v1841
    %6793 = vmatpush1.bf16.msra.mxu0 %v1840
    %6794 = vmatprep.subr.bf16.mxu0 %v1844
    %6795 = vmatpush1.bf16.msra.mxu0 %v1843
    %6796 = vmatprep.subr.bf16.mxu0 %v1847
    %6797 = vmatpush1.bf16.msra.mxu0 %v1846
    %6798 = vmatprep.subr.bf16.mxu0 %v1850
    %6799 = vmatpush1.bf16.msra.mxu0 %v1849
    %6800 = vmatprep.subr.bf16.mxu0 %v1853
    %6801 = vmatpush1.bf16.msra.mxu0 %v1852
    %6802 = vmatprep.subr.bf16.mxu0 %v1856
    %6803 = vmatpush1.bf16.msra.mxu0 %v1855
    %6804 = vmatprep.subr.bf16.mxu0 %v1859
    %6805 = vmatpush1.bf16.msra.mxu0 %v1858
    %6806 = vmatprep.subr.bf16.mxu0 %v1862
    %6807 = vmatpush1.bf16.msra.mxu0 %v1861
    %6808 = vmatprep.subr.bf16.mxu0 0
    %6809 = vmatpush1.bf16.msra.mxu0 0
    %6810 = vmatprep.subr.bf16.mxu0 0
    %6811 = vmatpush1.bf16.msra.mxu0 0
    %6812 = vmatprep.subr.bf16.mxu0 0
    %6813 = vmatpush1.bf16.msra.mxu0 0
    %6814 = vmatprep.subr.bf16.mxu0 0
    %6815 = vmatpush1.bf16.msra.mxu0 0
    %6816 = vmatprep.subr.bf16.mxu0 0
    %6817 = vmatpush1.bf16.msra.mxu0 0
    %6818 = vmatprep.subr.bf16.mxu0 0
    %6819 = vmatpush1.bf16.msra.mxu0 0
    %6820 = vmatprep.subr.bf16.mxu0 0
    %6821 = vmatpush1.bf16.msra.mxu0 0
    %6822 = vmatprep.subr.bf16.mxu0 0
    %6823 = vmatpush1.bf16.msra.mxu0 0
    %6824 = vmatprep.mubr.bf16.mxu0 0
    %6825 = vmatmul.mubr.bf16.gmra.mrb[0].mxu0 %v6243
    %v6826 = vpop.f32.mrb[0].mxu0
    %v6827 = vadd.f32 %v1748, %v6826
    %v6828 = vpop.f32.mrb[0].mxu0
    %v6829 = vadd.f32 %v1752, %v6828
    %v6830 = vpop.f32.mrb[0].mxu0
    %v6831 = vadd.f32 %v1748, %v6830
    %v6832 = vpop.f32.mrb[0].mxu0
    %v6833 = vadd.f32 %v1752, %v6832
    %6834 = vmatprep.mubr.bf16.mxu0 0
    %6835 = vmatmul.mubr.bf16.gmra.mrb[0].mxu0 %v6244
    %v6836 = vpop.f32.mrb[0].mxu0
    %v6837 = vadd.f32 %v1748, %v6836
    %v6838 = vpop.f32.mrb[0].mxu0
    %v6839 = vadd.f32 %v1752, %v6838
    %v6840 = vpop.f32.mrb[0].mxu0
    %v6841 = vadd.f32 %v1748, %v6840
    %v6842 = vpop.f32.mrb[0].mxu0
    %v6843 = vadd.f32 %v1752, %v6842
    %6844 = vmatprep.mubr.bf16.mxu0 0
    %6845 = vmatmul.mubr.bf16.gmra.mrb[0].mxu0 %v6245
    %v6846 = vpop.f32.mrb[0].mxu0
    %v6847 = vadd.f32 %v1748, %v6846
    %v6848 = vpop.f32.mrb[0].mxu0
    %v6849 = vadd.f32 %v1752, %v6848
    %v6850 = vpop.f32.mrb[0].mxu0
    %v6851 = vadd.f32 %v1748, %v6850
    %v6852 = vpop.f32.mrb[0].mxu0
    %v6853 = vadd.f32 %v1752, %v6852
    %6854 = vmatprep.mubr.bf16.mxu0 0
    %6855 = vmatmul.mubr.bf16.gmra.mrb[0].mxu0 %v6246
    %v6856 = vpop.f32.mrb[0].mxu0
    %v6857 = vadd.f32 %v1748, %v6856
    %v6858 = vpop.f32.mrb[0].mxu0
    %v6859 = vadd.f32 %v1752, %v6858
    %v6860 = vpop.f32.mrb[0].mxu0
    %v6861 = vadd.f32 %v1748, %v6860
    %v6862 = vpop.f32.mrb[0].mxu0
    %v6863 = vadd.f32 %v1752, %v6862
    %6864 = vmatprep.mubr.bf16.mxu0 0
    %6865 = vmatmul.mubr.bf16.gmra.mrb[0].mxu0 %v6247
    %v6866 = vpop.f32.mrb[0].mxu0
    %v6867 = vadd.f32 %v1748, %v6866
    %v6868 = vpop.f32.mrb[0].mxu0
    %v6869 = vadd.f32 %v1752, %v6868
    %v6870 = vpop.f32.mrb[0].mxu0
    %v6871 = vadd.f32 %v1748, %v6870
    %v6872 = vpop.f32.mrb[0].mxu0
    %v6873 = vadd.f32 %v1752, %v6872
    %6874 = vmatprep.mubr.bf16.mxu0 0
    %6875 = vmatmul.mubr.bf16.gmra.mrb[0].mxu0 %v6248
    %v6876 = vpop.f32.mrb[0].mxu0
    %v6877 = vadd.f32 %v1748, %v6876
    %v6878 = vpop.f32.mrb[0].mxu0
    %v6879 = vadd.f32 %v1752, %v6878
    %v6880 = vpop.f32.mrb[0].mxu0
    %v6881 = vadd.f32 %v1748, %v6880
    %v6882 = vpop.f32.mrb[0].mxu0
    %v6883 = vadd.f32 %v1752, %v6882
    %6884 = vmatprep.mubr.bf16.mxu0 0
    %6885 = vmatmul.mubr.bf16.gmra.mrb[0].mxu0 %v6249
    %v6886 = vpop.f32.mrb[0].mxu0
    %v6887 = vadd.f32 %v1748, %v6886
    %v6888 = vpop.f32.mrb[0].mxu0
    %v6889 = vadd.f32 %v1752, %v6888
    %v6890 = vpop.f32.mrb[0].mxu0
    %v6891 = vadd.f32 %v1748, %v6890
    %v6892 = vpop.f32.mrb[0].mxu0
    %v6893 = vadd.f32 %v1752, %v6892
    %6894 = vmatprep.mubr.bf16.mxu0 0
    %6895 = vmatmul.mubr.bf16.gmra.mrb[0].mxu0 %v6250
    %v6896 = vpop.f32.mrb[0].mxu0
    %v6897 = vadd.f32 %v1748, %v6896
    %v6898 = vpop.f32.mrb[0].mxu0
    %v6899 = vadd.f32 %v1752, %v6898
    %v6900 = vpop.f32.mrb[0].mxu0
    %v6901 = vadd.f32 %v1748, %v6900
    %v6902 = vpop.f32.mrb[0].mxu0
    %v6903 = vadd.f32 %v1752, %v6902
    %6904 = vdwg.mxu0
    %6905 = vmatprep.subr.bf16.mxu0 0
    %6906 = vmatpush1.bf16.msra.mxu0 %v1842
    %6907 = vmatprep.subr.bf16.mxu0 0
    %6908 = vmatpush1.bf16.msra.mxu0 %v1845
    %6909 = vmatprep.subr.bf16.mxu0 0
    %6910 = vmatpush1.bf16.msra.mxu0 %v1848
    %6911 = vmatprep.subr.bf16.mxu0 0
    %6912 = vmatpush1.bf16.msra.mxu0 %v1851
    %6913 = vmatprep.subr.bf16.mxu0 0
    %6914 = vmatpush1.bf16.msra.mxu0 %v1854
    %6915 = vmatprep.subr.bf16.mxu0 0
    %6916 = vmatpush1.bf16.msra.mxu0 %v1857
    %6917 = vmatprep.subr.bf16.mxu0 0
    %6918 = vmatpush1.bf16.msra.mxu0 %v1860
    %6919 = vmatprep.subr.bf16.mxu0 0
    %6920 = vmatpush1.bf16.msra.mxu0 %v1863
    %6921 = vmatprep.subr.bf16.mxu0 0
    %6922 = vmatpush1.bf16.msra.mxu0 0
    %6923 = vmatprep.subr.bf16.mxu0 0
    %6924 = vmatpush1.bf16.msra.mxu0 0
    %6925 = vmatprep.subr.bf16.mxu0 0
    %6926 = vmatpush1.bf16.msra.mxu0 0
    %6927 = vmatprep.subr.bf16.mxu0 0
    %6928 = vmatpush1.bf16.msra.mxu0 0
    %6929 = vmatprep.subr.bf16.mxu0 0
    %6930 = vmatpush1.bf16.msra.mxu0 0
    %6931 = vmatprep.subr.bf16.mxu0 0
    %6932 = vmatpush1.bf16.msra.mxu0 0
    %6933 = vmatprep.subr.bf16.mxu0 0
    %6934 = vmatpush1.bf16.msra.mxu0 0
    %6935 = vmatprep.subr.bf16.mxu0 0
    %6936 = vmatpush1.bf16.msra.mxu0 0
    %6937 = vmatprep.mubr.bf16.mxu0 0
    %6938 = vmatmul.mubr.bf16.gmra.mrb[0].mxu0 %v6243
    %v6939 = vpop.f32.mrb[0].mxu0
    %v6940 = vadd.f32 %v1756, %v6939
    %v6941 = vpop.f32.mrb[0].mxu0
    %v6942 = vpop.f32.mrb[0].mxu0
    %v6943 = vadd.f32 %v1756, %v6942
    %v6944 = vpop.f32.mrb[0].mxu0
    %6945 = vmatprep.mubr.bf16.mxu0 0
    %6946 = vmatmul.mubr.bf16.gmra.mrb[0].mxu0 %v6244
    %v6947 = vpop.f32.mrb[0].mxu0
    %v6948 = vadd.f32 %v1756, %v6947
    %v6949 = vpop.f32.mrb[0].mxu0
    %v6950 = vpop.f32.mrb[0].mxu0
    %v6951 = vadd.f32 %v1756, %v6950
    %v6952 = vpop.f32.mrb[0].mxu0
    %6953 = vmatprep.mubr.bf16.mxu0 0
    %6954 = vmatmul.mubr.bf16.gmra.mrb[0].mxu0 %v6245
    %v6955 = vpop.f32.mrb[0].mxu0
    %v6956 = vadd.f32 %v1756, %v6955
    %v6957 = vpop.f32.mrb[0].mxu0
    %v6958 = vpop.f32.mrb[0].mxu0
    %v6959 = vadd.f32 %v1756, %v6958
    %v6960 = vpop.f32.mrb[0].mxu0
    %6961 = vmatprep.mubr.bf16.mxu0 0
    %6962 = vmatmul.mubr.bf16.gmra.mrb[0].mxu0 %v6246
    %v6963 = vpop.f32.mrb[0].mxu0
    %v6964 = vadd.f32 %v1756, %v6963
    %v6965 = vpop.f32.mrb[0].mxu0
    %v6966 = vpop.f32.mrb[0].mxu0
    %v6967 = vadd.f32 %v1756, %v6966
    %v6968 = vpop.f32.mrb[0].mxu0
    %6969 = vmatprep.mubr.bf16.mxu0 0
    %6970 = vmatmul.mubr.bf16.gmra.mrb[0].mxu0 %v6247
    %v6971 = vpop.f32.mrb[0].mxu0
    %v6972 = vadd.f32 %v1756, %v6971
    %v6973 = vpop.f32.mrb[0].mxu0
    %v6974 = vpop.f32.mrb[0].mxu0
    %v6975 = vadd.f32 %v1756, %v6974
    %v6976 = vpop.f32.mrb[0].mxu0
    %6977 = vmatprep.mubr.bf16.mxu0 0
    %6978 = vmatmul.mubr.bf16.gmra.mrb[0].mxu0 %v6248
    %v6979 = vpop.f32.mrb[0].mxu0
    %v6980 = vadd.f32 %v1756, %v6979
    %v6981 = vpop.f32.mrb[0].mxu0
    %v6982 = vpop.f32.mrb[0].mxu0
    %v6983 = vadd.f32 %v1756, %v6982
    %v6984 = vpop.f32.mrb[0].mxu0
    %6985 = vmatprep.mubr.bf16.mxu0 0
    %6986 = vmatmul.mubr.bf16.gmra.mrb[0].mxu0 %v6249
    %v6987 = vpop.f32.mrb[0].mxu0
    %v6988 = vadd.f32 %v1756, %v6987
    %v6989 = vpop.f32.mrb[0].mxu0
    %v6990 = vpop.f32.mrb[0].mxu0
    %v6991 = vadd.f32 %v1756, %v6990
    %v6992 = vpop.f32.mrb[0].mxu0
    %6993 = vmatprep.mubr.bf16.mxu0 0
    %6994 = vmatmul.mubr.bf16.gmra.mrb[0].mxu0 %v6250
    %v6995 = vpop.f32.mrb[0].mxu0
    %v6996 = vadd.f32 %v1756, %v6995
    %v6997 = vpop.f32.mrb[0].mxu0
    %v6998 = vpop.f32.mrb[0].mxu0
    %v6999 = vadd.f32 %v1756, %v6998
    %v7000 = vpop.f32.mrb[0].mxu0
    %7001 = vdwg.mxu0
    %v7002 = vadd.f32 %v6617, %v6827
    %v7003 = vadd.f32 %v6621, %v6831
    %v7004 = vadd.f32 %v6627, %v6837
    %v7005 = vadd.f32 %v6631, %v6841
    %v7006 = vadd.f32 %v6637, %v6847
    %v7007 = vadd.f32 %v6641, %v6851
    %v7008 = vadd.f32 %v6647, %v6857
    %v7009 = vadd.f32 %v6651, %v6861
    %v7010 = vadd.f32 %v6657, %v6867
    %v7011 = vadd.f32 %v6661, %v6871
    %v7012 = vadd.f32 %v6667, %v6877
    %v7013 = vadd.f32 %v6671, %v6881
    %v7014 = vadd.f32 %v6677, %v6887
    %v7015 = vadd.f32 %v6681, %v6891
    %v7016 = vadd.f32 %v6687, %v6897
    %v7017 = vadd.f32 %v6691, %v6901
    %v7018 = vxor.u32 %v7002, 2147483648
    %v7019 = vxor.u32 %v7003, 2147483648
    %v7020 = vxor.u32 %v7004, 2147483648
    %v7021 = vxor.u32 %v7005, 2147483648
    %v7022 = vxor.u32 %v7006, 2147483648
    %v7023 = vxor.u32 %v7007, 2147483648
    %v7024 = vxor.u32 %v7008, 2147483648
    %v7025 = vxor.u32 %v7009, 2147483648
    %v7026 = vxor.u32 %v7010, 2147483648
    %v7027 = vxor.u32 %v7011, 2147483648
    %v7028 = vxor.u32 %v7012, 2147483648
    %v7029 = vxor.u32 %v7013, 2147483648
    %v7030 = vxor.u32 %v7014, 2147483648
    %v7031 = vxor.u32 %v7015, 2147483648
    %v7032 = vxor.u32 %v7016, 2147483648
    %v7033 = vxor.u32 %v7017, 2147483648
    %v7034 = vmul.f32 %v7018, 1.442695
    %v7035 = vpow.pop %v7034
    %v7036 = vmul.f32 %v7019, 1.442695
    %v7037 = vpow.pop %v7036
    %v7038 = vmul.f32 %v7020, 1.442695
    %v7039 = vpow.pop %v7038
    %v7040 = vmul.f32 %v7021, 1.442695
    %v7041 = vpow.pop %v7040
    %v7042 = vmul.f32 %v7022, 1.442695
    %v7043 = vpow.pop %v7042
    %v7044 = vmul.f32 %v7023, 1.442695
    %v7045 = vpow.pop %v7044
    %v7046 = vmul.f32 %v7024, 1.442695
    %v7047 = vpow.pop %v7046
    %v7048 = vmul.f32 %v7025, 1.442695
    %v7049 = vpow.pop %v7048
    %v7050 = vmul.f32 %v7026, 1.442695
    %v7051 = vpow.pop %v7050
    %v7052 = vmul.f32 %v7027, 1.442695
    %v7053 = vpow.pop %v7052
    %v7054 = vmul.f32 %v7028, 1.442695
    %v7055 = vpow.pop %v7054
    %v7056 = vmul.f32 %v7029, 1.442695
    %v7057 = vpow.pop %v7056
    %v7058 = vmul.f32 %v7030, 1.442695
    %v7059 = vpow.pop %v7058
    %v7060 = vmul.f32 %v7031, 1.442695
    %v7061 = vpow.pop %v7060
    %v7062 = vmul.f32 %v7032, 1.442695
    %v7063 = vpow.pop %v7062
    %v7064 = vmul.f32 %v7033, 1.442695
    %v7065 = vpow.pop %v7064
    %v7066 = vadd.f32 %v7035, 1.0
    %v7067 = vadd.f32 %v7037, 1.0
    %v7068 = vadd.f32 %v7039, 1.0
    %v7069 = vadd.f32 %v7041, 1.0
    %v7070 = vadd.f32 %v7043, 1.0
    %v7071 = vadd.f32 %v7045, 1.0
    %v7072 = vadd.f32 %v7047, 1.0
    %v7073 = vadd.f32 %v7049, 1.0
    %v7074 = vadd.f32 %v7051, 1.0
    %v7075 = vadd.f32 %v7053, 1.0
    %v7076 = vadd.f32 %v7055, 1.0
    %v7077 = vadd.f32 %v7057, 1.0
    %v7078 = vadd.f32 %v7059, 1.0
    %v7079 = vadd.f32 %v7061, 1.0
    %v7080 = vadd.f32 %v7063, 1.0
    %v7081 = vadd.f32 %v7065, 1.0
    %v7082 = vrcp.pop %v7066
    %v7083 = vmul.f32 1.0, %v7082
    %v7084 = vrcp.pop %v7067
    %v7085 = vmul.f32 1.0, %v7084
    %v7086 = vrcp.pop %v7068
    %v7087 = vmul.f32 1.0, %v7086
    %v7088 = vrcp.pop %v7069
    %v7089 = vmul.f32 1.0, %v7088
    %v7090 = vrcp.pop %v7070
    %v7091 = vmul.f32 1.0, %v7090
    %v7092 = vrcp.pop %v7071
    %v7093 = vmul.f32 1.0, %v7092
    %v7094 = vrcp.pop %v7072
    %v7095 = vmul.f32 1.0, %v7094
    %v7096 = vrcp.pop %v7073
    %v7097 = vmul.f32 1.0, %v7096
    %v7098 = vrcp.pop %v7074
    %v7099 = vmul.f32 1.0, %v7098
    %v7100 = vrcp.pop %v7075
    %v7101 = vmul.f32 1.0, %v7100
    %v7102 = vrcp.pop %v7076
    %v7103 = vmul.f32 1.0, %v7102
    %v7104 = vrcp.pop %v7077
    %v7105 = vmul.f32 1.0, %v7104
    %v7106 = vrcp.pop %v7078
    %v7107 = vmul.f32 1.0, %v7106
    %v7108 = vrcp.pop %v7079
    %v7109 = vmul.f32 1.0, %v7108
    %v7110 = vrcp.pop %v7080
    %v7111 = vmul.f32 1.0, %v7110
    %v7112 = vrcp.pop %v7081
    %v7113 = vmul.f32 1.0, %v7112
    %v7114 = vadd.f32 %v6619, %v6829
    %v7115 = vadd.f32 %v6623, %v6833
    %v7116 = vadd.f32 %v6629, %v6839
    %v7117 = vadd.f32 %v6633, %v6843
    %v7118 = vadd.f32 %v6639, %v6849
    %v7119 = vadd.f32 %v6643, %v6853
    %v7120 = vadd.f32 %v6649, %v6859
    %v7121 = vadd.f32 %v6653, %v6863
    %v7122 = vadd.f32 %v6659, %v6869
    %v7123 = vadd.f32 %v6663, %v6873
    %v7124 = vadd.f32 %v6669, %v6879
    %v7125 = vadd.f32 %v6673, %v6883
    %v7126 = vadd.f32 %v6679, %v6889
    %v7127 = vadd.f32 %v6683, %v6893
    %v7128 = vadd.f32 %v6689, %v6899
    %v7129 = vadd.f32 %v6693, %v6903
    %v7130 = vxor.u32 %v7114, 2147483648
    %v7131 = vxor.u32 %v7115, 2147483648
    %v7132 = vxor.u32 %v7116, 2147483648
    %v7133 = vxor.u32 %v7117, 2147483648
    %v7134 = vxor.u32 %v7118, 2147483648
    %v7135 = vxor.u32 %v7119, 2147483648
    %v7136 = vxor.u32 %v7120, 2147483648
    %v7137 = vxor.u32 %v7121, 2147483648
    %v7138 = vxor.u32 %v7122, 2147483648
    %v7139 = vxor.u32 %v7123, 2147483648
    %v7140 = vxor.u32 %v7124, 2147483648
    %v7141 = vxor.u32 %v7125, 2147483648
    %v7142 = vxor.u32 %v7126, 2147483648
    %v7143 = vxor.u32 %v7127, 2147483648
    %v7144 = vxor.u32 %v7128, 2147483648
    %v7145 = vxor.u32 %v7129, 2147483648
    %v7146 = vmul.f32 %v7130, 1.442695
    %v7147 = vpow.pop %v7146
    %v7148 = vmul.f32 %v7131, 1.442695
    %v7149 = vpow.pop %v7148
    %v7150 = vmul.f32 %v7132, 1.442695
    %v7151 = vpow.pop %v7150
    %v7152 = vmul.f32 %v7133, 1.442695
    %v7153 = vpow.pop %v7152
    %v7154 = vmul.f32 %v7134, 1.442695
    %v7155 = vpow.pop %v7154
    %v7156 = vmul.f32 %v7135, 1.442695
    %v7157 = vpow.pop %v7156
    %v7158 = vmul.f32 %v7136, 1.442695
    %v7159 = vpow.pop %v7158
    %v7160 = vmul.f32 %v7137, 1.442695
    %v7161 = vpow.pop %v7160
    %v7162 = vmul.f32 %v7138, 1.442695
    %v7163 = vpow.pop %v7162
    %v7164 = vmul.f32 %v7139, 1.442695
    %v7165 = vpow.pop %v7164
    %v7166 = vmul.f32 %v7140, 1.442695
    %v7167 = vpow.pop %v7166
    %v7168 = vmul.f32 %v7141, 1.442695
    %v7169 = vpow.pop %v7168
    %v7170 = vmul.f32 %v7142, 1.442695
    %v7171 = vpow.pop %v7170
    %v7172 = vmul.f32 %v7143, 1.442695
    %v7173 = vpow.pop %v7172
    %v7174 = vmul.f32 %v7144, 1.442695
    %v7175 = vpow.pop %v7174
    %v7176 = vmul.f32 %v7145, 1.442695
    %v7177 = vpow.pop %v7176
    %v7178 = vadd.f32 %v7147, 1.0
    %v7179 = vadd.f32 %v7149, 1.0
    %v7180 = vadd.f32 %v7151, 1.0
    %v7181 = vadd.f32 %v7153, 1.0
    %v7182 = vadd.f32 %v7155, 1.0
    %v7183 = vadd.f32 %v7157, 1.0
    %v7184 = vadd.f32 %v7159, 1.0
    %v7185 = vadd.f32 %v7161, 1.0
    %v7186 = vadd.f32 %v7163, 1.0
    %v7187 = vadd.f32 %v7165, 1.0
    %v7188 = vadd.f32 %v7167, 1.0
    %v7189 = vadd.f32 %v7169, 1.0
    %v7190 = vadd.f32 %v7171, 1.0
    %v7191 = vadd.f32 %v7173, 1.0
    %v7192 = vadd.f32 %v7175, 1.0
    %v7193 = vadd.f32 %v7177, 1.0
    %v7194 = vrcp.pop %v7178
    %v7195 = vmul.f32 1.0, %v7194
    %v7196 = vrcp.pop %v7179
    %v7197 = vmul.f32 1.0, %v7196
    %v7198 = vrcp.pop %v7180
    %v7199 = vmul.f32 1.0, %v7198
    %v7200 = vrcp.pop %v7181
    %v7201 = vmul.f32 1.0, %v7200
    %v7202 = vrcp.pop %v7182
    %v7203 = vmul.f32 1.0, %v7202
    %v7204 = vrcp.pop %v7183
    %v7205 = vmul.f32 1.0, %v7204
    %v7206 = vrcp.pop %v7184
    %v7207 = vmul.f32 1.0, %v7206
    %v7208 = vrcp.pop %v7185
    %v7209 = vmul.f32 1.0, %v7208
    %v7210 = vrcp.pop %v7186
    %v7211 = vmul.f32 1.0, %v7210
    %v7212 = vrcp.pop %v7187
    %v7213 = vmul.f32 1.0, %v7212
    %v7214 = vrcp.pop %v7188
    %v7215 = vmul.f32 1.0, %v7214
    %v7216 = vrcp.pop %v7189
    %v7217 = vmul.f32 1.0, %v7216
    %v7218 = vrcp.pop %v7190
    %v7219 = vmul.f32 1.0, %v7218
    %v7220 = vrcp.pop %v7191
    %v7221 = vmul.f32 1.0, %v7220
    %v7222 = vrcp.pop %v7192
    %v7223 = vmul.f32 1.0, %v7222
    %v7224 = vrcp.pop %v7193
    %v7225 = vmul.f32 1.0, %v7224
    %v7226 = vmul.f32 %v7083, %v6940
    %v7227 = vmul.f32 %v7085, %v6943
    %v7228 = vmul.f32 %v7087, %v6948
    %v7229 = vmul.f32 %v7089, %v6951
    %v7230 = vmul.f32 %v7091, %v6956
    %v7231 = vmul.f32 %v7093, %v6959
    %v7232 = vmul.f32 %v7095, %v6964
    %v7233 = vmul.f32 %v7097, %v6967
    %v7234 = vmul.f32 %v7099, %v6972
    %v7235 = vmul.f32 %v7101, %v6975
    %v7236 = vmul.f32 %v7103, %v6980
    %v7237 = vmul.f32 %v7105, %v6983
    %v7238 = vmul.f32 %v7107, %v6988
    %v7239 = vmul.f32 %v7109, %v6991
    %v7240 = vmul.f32 %v7111, %v6996
    %v7241 = vmul.f32 %v7113, %v6999
    %v7242 = vadd.f32 %v6730, %v7226
    %v7243 = vadd.f32 %v6733, %v7227
    %v7244 = vadd.f32 %v6738, %v7228
    %v7245 = vadd.f32 %v6741, %v7229
    %v7246 = vadd.f32 %v6746, %v7230
    %v7247 = vadd.f32 %v6749, %v7231
    %v7248 = vadd.f32 %v6754, %v7232
    %v7249 = vadd.f32 %v6757, %v7233
    %v7250 = vadd.f32 %v6762, %v7234
    %v7251 = vadd.f32 %v6765, %v7235
    %v7252 = vadd.f32 %v6770, %v7236
    %v7253 = vadd.f32 %v6773, %v7237
    %v7254 = vadd.f32 %v6778, %v7238
    %v7255 = vadd.f32 %v6781, %v7239
    %v7256 = vadd.f32 %v6786, %v7240
    %v7257 = vadd.f32 %v6789, %v7241
    %v7258 = vtanh.pop %v7242
    %v7259 = vtanh.pop %v7243
    %v7260 = vtanh.pop %v7244
    %v7261 = vtanh.pop %v7245
    %v7262 = vtanh.pop %v7246
    %v7263 = vtanh.pop %v7247
    %v7264 = vtanh.pop %v7248
    %v7265 = vtanh.pop %v7249
    %v7266 = vtanh.pop %v7250
    %v7267 = vtanh.pop %v7251
    %v7268 = vtanh.pop %v7252
    %v7269 = vtanh.pop %v7253
    %v7270 = vtanh.pop %v7254
    %v7271 = vtanh.pop %v7255
    %v7272 = vtanh.pop %v7256
    %v7273 = vtanh.pop %v7257
    %v7274 = vsub.f32 1.0, %v7195
    %v7275 = vsub.f32 1.0, %v7197
    %v7276 = vsub.f32 1.0, %v7199
    %v7277 = vsub.f32 1.0, %v7201
    %v7278 = vsub.f32 1.0, %v7203
    %v7279 = vsub.f32 1.0, %v7205
    %v7280 = vsub.f32 1.0, %v7207
    %v7281 = vsub.f32 1.0, %v7209
    %v7282 = vsub.f32 1.0, %v7211
    %v7283 = vsub.f32 1.0, %v7213
    %v7284 = vsub.f32 1.0, %v7215
    %v7285 = vsub.f32 1.0, %v7217
    %v7286 = vsub.f32 1.0, %v7219
    %v7287 = vsub.f32 1.0, %v7221
    %v7288 = vsub.f32 1.0, %v7223
    %v7289 = vsub.f32 1.0, %v7225
    %v7290 = vmul.f32 %v7274, %v7258
    %v7291 = vmul.f32 %v7275, %v7259
    %v7292 = vmul.f32 %v7276, %v7260
    %v7293 = vmul.f32 %v7277, %v7261
    %v7294 = vmul.f32 %v7278, %v7262
    %v7295 = vmul.f32 %v7279, %v7263
    %v7296 = vmul.f32 %v7280, %v7264
    %v7297 = vmul.f32 %v7281, %v7265
    %v7298 = vmul.f32 %v7282, %v7266
    %v7299 = vmul.f32 %v7283, %v7267
    %v7300 = vmul.f32 %v7284, %v7268
    %v7301 = vmul.f32 %v7285, %v7269
    %v7302 = vmul.f32 %v7286, %v7270
    %v7303 = vmul.f32 %v7287, %v7271
    %v7304 = vmul.f32 %v7288, %v7272
    %v7305 = vmul.f32 %v7289, %v7273
    %v7306 = vmul.f32 %v7195, %v6227
    %v7307 = vmul.f32 %v7197, %v6228
    %v7308 = vmul.f32 %v7199, %v6229
    %v7309 = vmul.f32 %v7201, %v6230
    %v7310 = vmul.f32 %v7203, %v6231
    %v7311 = vmul.f32 %v7205, %v6232
    %v7312 = vmul.f32 %v7207, %v6233
    %v7313 = vmul.f32 %v7209, %v6234
    %v7314 = vmul.f32 %v7211, %v6235
    %v7315 = vmul.f32 %v7213, %v6236
    %v7316 = vmul.f32 %v7215, %v6237
    %v7317 = vmul.f32 %v7217, %v6238
    %v7318 = vmul.f32 %v7219, %v6239
    %v7319 = vmul.f32 %v7221, %v6240
    %v7320 = vmul.f32 %v7223, %v6241
    %v7321 = vmul.f32 %v7225, %v6242
    %v7322 = vadd.f32 %v7290, %v7306
    %v7323 = vadd.f32 %v7291, %v7307
    %v7324 = vadd.f32 %v7292, %v7308
    %v7325 = vadd.f32 %v7293, %v7309
    %v7326 = vadd.f32 %v7294, %v7310
    %v7327 = vadd.f32 %v7295, %v7311
    %v7328 = vadd.f32 %v7296, %v7312
    %v7329 = vadd.f32 %v7297, %v7313
    %v7330 = vadd.f32 %v7298, %v7314
    %v7331 = vadd.f32 %v7299, %v7315
    %v7332 = vadd.f32 %v7300, %v7316
    %v7333 = vadd.f32 %v7301, %v7317
    %v7334 = vadd.f32 %v7302, %v7318
    %v7335 = vadd.f32 %v7303, %v7319
    %v7336 = vadd.f32 %v7304, %v7320
    %v7337 = vadd.f32 %v7305, %v7321
    %v7338 = vpack.c.bf16 %v7323, %v7322
    %v7339 = vpack.c.bf16 %v7325, %v7324
    %v7340 = vpack.c.bf16 %v7327, %v7326
    %v7341 = vpack.c.bf16 %v7329, %v7328
    %v7342 = vpack.c.bf16 %v7331, %v7330
    %v7343 = vpack.c.bf16 %v7333, %v7332
    %v7344 = vpack.c.bf16 %v7335, %v7334
    %v7345 = vpack.c.bf16 %v7337, %v7336
    %7346 = vmatprep.subr.bf16.mxu0 0
    %7347 = vmatpush1.bf16.msra.mxu0 %v2480
    %7348 = vmatprep.subr.bf16.mxu0 0
    %7349 = vmatpush1.bf16.msra.mxu0 %v2481
    %7350 = vmatprep.subr.bf16.mxu0 0
    %7351 = vmatpush1.bf16.msra.mxu0 %v2482
    %7352 = vmatprep.subr.bf16.mxu0 0
    %7353 = vmatpush1.bf16.msra.mxu0 %v2483
    %7354 = vmatprep.subr.bf16.mxu0 0
    %7355 = vmatpush1.bf16.msra.mxu0 %v2484
    %7356 = vmatprep.subr.bf16.mxu0 0
    %7357 = vmatpush1.bf16.msra.mxu0 %v2485
    %7358 = vmatprep.subr.bf16.mxu0 0
    %7359 = vmatpush1.bf16.msra.mxu0 %v2486
    %7360 = vmatprep.subr.bf16.mxu0 0
    %7361 = vmatpush1.bf16.msra.mxu0 %v2487
    %7362 = vmatprep.subr.bf16.mxu0 0
    %7363 = vmatpush1.bf16.msra.mxu0 0
    %7364 = vmatprep.subr.bf16.mxu0 0
    %7365 = vmatpush1.bf16.msra.mxu0 0
    %7366 = vmatprep.subr.bf16.mxu0 0
    %7367 = vmatpush1.bf16.msra.mxu0 0
    %7368 = vmatprep.subr.bf16.mxu0 0
    %7369 = vmatpush1.bf16.msra.mxu0 0
    %7370 = vmatprep.subr.bf16.mxu0 0
    %7371 = vmatpush1.bf16.msra.mxu0 0
    %7372 = vmatprep.subr.bf16.mxu0 0
    %7373 = vmatpush1.bf16.msra.mxu0 0
    %7374 = vmatprep.subr.bf16.mxu0 0
    %7375 = vmatpush1.bf16.msra.mxu0 0
    %7376 = vmatprep.subr.bf16.mxu0 0
    %7377 = vmatpush1.bf16.msra.mxu0 0
    %7378 = vmatprep.mubr.bf16.mxu0 0
    %7379 = vmatmul.mubr.bf16.gmra.mrb[0].mxu0 %v7338
    %v7380 = vpop.f32.mrb[0].mxu0
    %v7381 = vadd.f32 %v2446, %v7380
    %v7382 = vpop.f32.mrb[0].mxu0
    %v7383 = vpop.f32.mrb[0].mxu0
    %v7384 = vadd.f32 %v2446, %v7383
    %v7385 = vpop.f32.mrb[0].mxu0
    %7386 = vmatprep.mubr.bf16.mxu0 0
    %7387 = vmatmul.mubr.bf16.gmra.mrb[0].mxu0 %v7339
    %v7388 = vpop.f32.mrb[0].mxu0
    %v7389 = vadd.f32 %v2446, %v7388
    %v7390 = vpop.f32.mrb[0].mxu0
    %v7391 = vpop.f32.mrb[0].mxu0
    %v7392 = vadd.f32 %v2446, %v7391
    %v7393 = vpop.f32.mrb[0].mxu0
    %7394 = vmatprep.mubr.bf16.mxu0 0
    %7395 = vmatmul.mubr.bf16.gmra.mrb[0].mxu0 %v7340
    %v7396 = vpop.f32.mrb[0].mxu0
    %v7397 = vadd.f32 %v2446, %v7396
    %v7398 = vpop.f32.mrb[0].mxu0
    %v7399 = vpop.f32.mrb[0].mxu0
    %v7400 = vadd.f32 %v2446, %v7399
    %v7401 = vpop.f32.mrb[0].mxu0
    %7402 = vmatprep.mubr.bf16.mxu0 0
    %7403 = vmatmul.mubr.bf16.gmra.mrb[0].mxu0 %v7341
    %v7404 = vpop.f32.mrb[0].mxu0
    %v7405 = vadd.f32 %v2446, %v7404
    %v7406 = vpop.f32.mrb[0].mxu0
    %v7407 = vpop.f32.mrb[0].mxu0
    %v7408 = vadd.f32 %v2446, %v7407
    %v7409 = vpop.f32.mrb[0].mxu0
    %7410 = vmatprep.mubr.bf16.mxu0 0
    %7411 = vmatmul.mubr.bf16.gmra.mrb[0].mxu0 %v7342
    %v7412 = vpop.f32.mrb[0].mxu0
    %v7413 = vadd.f32 %v2446, %v7412
    %v7414 = vpop.f32.mrb[0].mxu0
    %v7415 = vpop.f32.mrb[0].mxu0
    %v7416 = vadd.f32 %v2446, %v7415
    %v7417 = vpop.f32.mrb[0].mxu0
    %7418 = vmatprep.mubr.bf16.mxu0 0
    %7419 = vmatmul.mubr.bf16.gmra.mrb[0].mxu0 %v7343
    %v7420 = vpop.f32.mrb[0].mxu0
    %v7421 = vadd.f32 %v2446, %v7420
    %v7422 = vpop.f32.mrb[0].mxu0
    %v7423 = vpop.f32.mrb[0].mxu0
    %v7424 = vadd.f32 %v2446, %v7423
    %v7425 = vpop.f32.mrb[0].mxu0
    %7426 = vmatprep.mubr.bf16.mxu0 0
    %7427 = vmatmul.mubr.bf16.gmra.mrb[0].mxu0 %v7344
    %v7428 = vpop.f32.mrb[0].mxu0
    %v7429 = vadd.f32 %v2446, %v7428
    %v7430 = vpop.f32.mrb[0].mxu0
    %v7431 = vpop.f32.mrb[0].mxu0
    %v7432 = vadd.f32 %v2446, %v7431
    %v7433 = vpop.f32.mrb[0].mxu0
    %7434 = vmatprep.mubr.bf16.mxu0 0
    %7435 = vmatmul.mubr.bf16.gmra.mrb[0].mxu0 %v7345
    %v7436 = vpop.f32.mrb[0].mxu0
    %v7437 = vadd.f32 %v2446, %v7436
    %v7438 = vpop.f32.mrb[0].mxu0
    %v7439 = vpop.f32.mrb[0].mxu0
    %v7440 = vadd.f32 %v2446, %v7439
    %v7441 = vpop.f32.mrb[0].mxu0
    %7442 = vdwg.mxu0
    %v7443 = vmax.f32 %v7381, 0.0
    %v7444 = vmax.f32 %v7384, 0.0
    %v7445 = vmax.f32 %v7389, 0.0
    %v7446 = vmax.f32 %v7392, 0.0
    %v7447 = vmax.f32 %v7397, 0.0
    %v7448 = vmax.f32 %v7400, 0.0
    %v7449 = vmax.f32 %v7405, 0.0
    %v7450 = vmax.f32 %v7408, 0.0
    %v7451 = vmax.f32 %v7413, 0.0
    %v7452 = vmax.f32 %v7416, 0.0
    %v7453 = vmax.f32 %v7421, 0.0
    %v7454 = vmax.f32 %v7424, 0.0
    %v7455 = vmax.f32 %v7429, 0.0
    %v7456 = vmax.f32 %v7432, 0.0
    %v7457 = vmax.f32 %v7437, 0.0
    %v7458 = vmax.f32 %v7440, 0.0
    %v7459 = vpack.c.bf16 %v7444, %v7443
    %v7460 = vpack.c.bf16 %v7446, %v7445
    %v7461 = vpack.c.bf16 %v7448, %v7447
    %v7462 = vpack.c.bf16 %v7450, %v7449
    %v7463 = vpack.c.bf16 %v7452, %v7451
    %v7464 = vpack.c.bf16 %v7454, %v7453
    %v7465 = vpack.c.bf16 %v7456, %v7455
    %v7466 = vpack.c.bf16 %v7458, %v7457
    %7467 = vmatprep.subr.bf16.mxu0 0
    %7468 = vmatpush1.bf16.msra.mxu0 %v2655
    %7469 = vmatprep.subr.bf16.mxu0 0
    %7470 = vmatpush1.bf16.msra.mxu0 %v2656
    %7471 = vmatprep.subr.bf16.mxu0 0
    %7472 = vmatpush1.bf16.msra.mxu0 %v2657
    %7473 = vmatprep.subr.bf16.mxu0 0
    %7474 = vmatpush1.bf16.msra.mxu0 %v2658
    %7475 = vmatprep.subr.bf16.mxu0 0
    %7476 = vmatpush1.bf16.msra.mxu0 %v2659
    %7477 = vmatprep.subr.bf16.mxu0 0
    %7478 = vmatpush1.bf16.msra.mxu0 %v2660
    %7479 = vmatprep.subr.bf16.mxu0 0
    %7480 = vmatpush1.bf16.msra.mxu0 %v2661
    %7481 = vmatprep.subr.bf16.mxu0 0
    %7482 = vmatpush1.bf16.msra.mxu0 %v2662
    %7483 = vmatprep.subr.bf16.mxu0 0
    %7484 = vmatpush1.bf16.msra.mxu0 0
    %7485 = vmatprep.subr.bf16.mxu0 0
    %7486 = vmatpush1.bf16.msra.mxu0 0
    %7487 = vmatprep.subr.bf16.mxu0 0
    %7488 = vmatpush1.bf16.msra.mxu0 0
    %7489 = vmatprep.subr.bf16.mxu0 0
    %7490 = vmatpush1.bf16.msra.mxu0 0
    %7491 = vmatprep.subr.bf16.mxu0 0
    %7492 = vmatpush1.bf16.msra.mxu0 0
    %7493 = vmatprep.subr.bf16.mxu0 0
    %7494 = vmatpush1.bf16.msra.mxu0 0
    %7495 = vmatprep.subr.bf16.mxu0 0
    %7496 = vmatpush1.bf16.msra.mxu0 0
    %7497 = vmatprep.subr.bf16.mxu0 0
    %7498 = vmatpush1.bf16.msra.mxu0 0
    %7499 = vmatprep.mubr.bf16.mxu0 0
    %7500 = vmatmul.mubr.bf16.gmra.mrb[0].mxu0 %v7459
    %v7501 = vpop.f32.mrb[0].mxu0
    %v7502 = vadd.f32 %v2621, %v7501
    %v7503 = vpop.f32.mrb[0].mxu0
    %v7504 = vpop.f32.mrb[0].mxu0
    %v7505 = vadd.f32 %v2621, %v7504
    %v7506 = vpop.f32.mrb[0].mxu0
    %7507 = vmatprep.mubr.bf16.mxu0 0
    %7508 = vmatmul.mubr.bf16.gmra.mrb[0].mxu0 %v7460
    %v7509 = vpop.f32.mrb[0].mxu0
    %v7510 = vadd.f32 %v2621, %v7509
    %v7511 = vpop.f32.mrb[0].mxu0
    %v7512 = vpop.f32.mrb[0].mxu0
    %v7513 = vadd.f32 %v2621, %v7512
    %v7514 = vpop.f32.mrb[0].mxu0
    %7515 = vmatprep.mubr.bf16.mxu0 0
    %7516 = vmatmul.mubr.bf16.gmra.mrb[0].mxu0 %v7461
    %v7517 = vpop.f32.mrb[0].mxu0
    %v7518 = vadd.f32 %v2621, %v7517
    %v7519 = vpop.f32.mrb[0].mxu0
    %v7520 = vpop.f32.mrb[0].mxu0
    %v7521 = vadd.f32 %v2621, %v7520
    %v7522 = vpop.f32.mrb[0].mxu0
    %7523 = vmatprep.mubr.bf16.mxu0 0
    %7524 = vmatmul.mubr.bf16.gmra.mrb[0].mxu0 %v7462
    %v7525 = vpop.f32.mrb[0].mxu0
    %v7526 = vadd.f32 %v2621, %v7525
    %v7527 = vpop.f32.mrb[0].mxu0
    %v7528 = vpop.f32.mrb[0].mxu0
    %v7529 = vadd.f32 %v2621, %v7528
    %v7530 = vpop.f32.mrb[0].mxu0
    %7531 = vmatprep.mubr.bf16.mxu0 0
    %7532 = vmatmul.mubr.bf16.gmra.mrb[0].mxu0 %v7463
    %v7533 = vpop.f32.mrb[0].mxu0
    %v7534 = vadd.f32 %v2621, %v7533
    %v7535 = vpop.f32.mrb[0].mxu0
    %v7536 = vpop.f32.mrb[0].mxu0
    %v7537 = vadd.f32 %v2621, %v7536
    %v7538 = vpop.f32.mrb[0].mxu0
    %7539 = vmatprep.mubr.bf16.mxu0 0
    %7540 = vmatmul.mubr.bf16.gmra.mrb[0].mxu0 %v7464
    %v7541 = vpop.f32.mrb[0].mxu0
    %v7542 = vadd.f32 %v2621, %v7541
    %v7543 = vpop.f32.mrb[0].mxu0
    %v7544 = vpop.f32.mrb[0].mxu0
    %v7545 = vadd.f32 %v2621, %v7544
    %v7546 = vpop.f32.mrb[0].mxu0
    %7547 = vmatprep.mubr.bf16.mxu0 0
    %7548 = vmatmul.mubr.bf16.gmra.mrb[0].mxu0 %v7465
    %v7549 = vpop.f32.mrb[0].mxu0
    %v7550 = vadd.f32 %v2621, %v7549
    %v7551 = vpop.f32.mrb[0].mxu0
    %v7552 = vpop.f32.mrb[0].mxu0
    %v7553 = vadd.f32 %v2621, %v7552
    %v7554 = vpop.f32.mrb[0].mxu0
    %7555 = vmatprep.mubr.bf16.mxu0 0
    %7556 = vmatmul.mubr.bf16.gmra.mrb[0].mxu0 %v7466
    %v7557 = vpop.f32.mrb[0].mxu0
    %v7558 = vadd.f32 %v2621, %v7557
    %v7559 = vpop.f32.mrb[0].mxu0
    %v7560 = vpop.f32.mrb[0].mxu0
    %v7561 = vadd.f32 %v2621, %v7560
    %v7562 = vpop.f32.mrb[0].mxu0
    %7563 = vdwg.mxu0
    %7564 = vxpose.xlu0.b32.start [1/16] %v7502, 128
    %7565 = vxpose.xlu0.b32.cont [2/16] %v7505, 128
    %7566 = vxpose.xlu0.b32.cont [3/16] %v7510, 128
    %7567 = vxpose.xlu0.b32.cont [4/16] %v7513, 128
    %7568 = vxpose.xlu0.b32.cont [5/16] %v7518, 128
    %7569 = vxpose.xlu0.b32.cont [6/16] %v7521, 128
    %7570 = vxpose.xlu0.b32.cont [7/16] %v7526, 128
    %7571 = vxpose.xlu0.b32.cont [8/16] %v7529, 128
    %7572 = vxpose.xlu0.b32.cont [9/16] %v7534, 128
    %7573 = vxpose.xlu0.b32.cont [10/16] %v7537, 128
    %7574 = vxpose.xlu0.b32.cont [11/16] %v7542, 128
    %7575 = vxpose.xlu0.b32.cont [12/16] %v7545, 128
    %7576 = vxpose.xlu0.b32.cont [13/16] %v7550, 128
    %7577 = vxpose.xlu0.b32.cont [14/16] %v7553, 128
    %7578 = vxpose.xlu0.b32.cont [15/16] %v7558, 128
    %7579 = vxpose.xlu0.b32.end [16/16] %v7561, 128
    %v7580 = vpop.trf.xlu0
    %v7581 = vpop.trf.xlu0
    %v7582 = vpop.trf.xlu0
    %v7583 = vpop.trf.xlu0
    %v7584 = vpop.trf.xlu0
    %v7585 = vpop.trf.xlu0
    %v7586 = vpop.trf.xlu0
    %v7587 = vpop.trf.xlu0
    %v7588 = vpop.trf.xlu0
    %v7589 = vpop.trf.xlu0
    %v7590 = vpop.trf.xlu0
    %v7591 = vpop.trf.xlu0
    %v7592 = vpop.trf.xlu0
    %v7593 = vpop.trf.xlu0
    %v7594 = vpop.trf.xlu0
    %v7595 = vpop.trf.xlu0
    %v7596 = vpack.c.bf16 %v7581, %v7580
    %v7597 = vpack.c.bf16 %v7583, %v7582
    %v7598 = vpack.c.bf16 %v7585, %v7584
    %v7599 = vpack.c.bf16 %v7587, %v7586
    %v7600 = vpack.c.bf16 %v7589, %v7588
    %v7601 = vpack.c.bf16 %v7591, %v7590
    %v7602 = vpack.c.bf16 %v7593, %v7592
    %v7603 = vpack.c.bf16 %v7595, %v7594
    %7604 = vmatprep.subr.bf16.mxu0 0
    %7605 = vmatpush1.bf16.msra.mxu0 %v1269
    %7606 = vmatprep.subr.bf16.mxu0 0
    %7607 = vmatpush1.bf16.msra.mxu0 %v1270
    %7608 = vmatprep.subr.bf16.mxu0 0
    %7609 = vmatpush1.bf16.msra.mxu0 %v1271
    %7610 = vmatprep.subr.bf16.mxu0 0
    %7611 = vmatpush1.bf16.msra.mxu0 %v1272
    %7612 = vmatprep.subr.bf16.mxu0 0
    %7613 = vmatpush1.bf16.msra.mxu0 %v1273
    %7614 = vmatprep.subr.bf16.mxu0 0
    %7615 = vmatpush1.bf16.msra.mxu0 %v1274
    %7616 = vmatprep.subr.bf16.mxu0 0
    %7617 = vmatpush1.bf16.msra.mxu0 %v1275
    %7618 = vmatprep.subr.bf16.mxu0 0
    %7619 = vmatpush1.bf16.msra.mxu0 %v1276
    %7620 = vmatprep.subr.bf16.mxu0 0
    %7621 = vmatpush1.bf16.msra.mxu0 0
    %7622 = vmatprep.subr.bf16.mxu0 0
    %7623 = vmatpush1.bf16.msra.mxu0 0
    %7624 = vmatprep.subr.bf16.mxu0 0
    %7625 = vmatpush1.bf16.msra.mxu0 0
    %7626 = vmatprep.subr.bf16.mxu0 0
    %7627 = vmatpush1.bf16.msra.mxu0 0
    %7628 = vmatprep.subr.bf16.mxu0 0
    %7629 = vmatpush1.bf16.msra.mxu0 0
    %7630 = vmatprep.subr.bf16.mxu0 0
    %7631 = vmatpush1.bf16.msra.mxu0 0
    %7632 = vmatprep.subr.bf16.mxu0 0
    %7633 = vmatpush1.bf16.msra.mxu0 0
    %7634 = vmatprep.subr.bf16.mxu0 0
    %7635 = vmatpush1.bf16.msra.mxu0 0
    %7636 = vmatprep.mubr.bf16.mxu0 0
    %7637 = vmatmul.mubr.bf16.gmra.mrb[0].mxu0 %v7596
    %v7638 = vpop.f32.mrb[0].mxu0
    %v7639 = vadd.f32 0.0, %v7638
    %v7640 = vpop.f32.mrb[0].mxu0
    %v7641 = vpop.f32.mrb[0].mxu0
    %v7642 = vadd.f32 0.0, %v7641
    %v7643 = vpop.f32.mrb[0].mxu0
    %7644 = vmatprep.mubr.bf16.mxu0 0
    %7645 = vmatmul.mubr.bf16.gmra.mrb[0].mxu0 %v7597
    %v7646 = vpop.f32.mrb[0].mxu0
    %v7647 = vadd.f32 0.0, %v7646
    %v7648 = vpop.f32.mrb[0].mxu0
    %v7649 = vpop.f32.mrb[0].mxu0
    %v7650 = vadd.f32 0.0, %v7649
    %v7651 = vpop.f32.mrb[0].mxu0
    %7652 = vmatprep.mubr.bf16.mxu0 0
    %7653 = vmatmul.mubr.bf16.gmra.mrb[0].mxu0 %v7598
    %v7654 = vpop.f32.mrb[0].mxu0
    %v7655 = vadd.f32 0.0, %v7654
    %v7656 = vpop.f32.mrb[0].mxu0
    %v7657 = vpop.f32.mrb[0].mxu0
    %v7658 = vadd.f32 0.0, %v7657
    %v7659 = vpop.f32.mrb[0].mxu0
    %7660 = vmatprep.mubr.bf16.mxu0 0
    %7661 = vmatmul.mubr.bf16.gmra.mrb[0].mxu0 %v7599
    %v7662 = vpop.f32.mrb[0].mxu0
    %v7663 = vadd.f32 0.0, %v7662
    %v7664 = vpop.f32.mrb[0].mxu0
    %v7665 = vpop.f32.mrb[0].mxu0
    %v7666 = vadd.f32 0.0, %v7665
    %v7667 = vpop.f32.mrb[0].mxu0
    %7668 = vmatprep.mubr.bf16.mxu0 0
    %7669 = vmatmul.mubr.bf16.gmra.mrb[0].mxu0 %v7600
    %v7670 = vpop.f32.mrb[0].mxu0
    %v7671 = vadd.f32 0.0, %v7670
    %v7672 = vpop.f32.mrb[0].mxu0
    %v7673 = vpop.f32.mrb[0].mxu0
    %v7674 = vadd.f32 0.0, %v7673
    %v7675 = vpop.f32.mrb[0].mxu0
    %7676 = vmatprep.mubr.bf16.mxu0 0
    %7677 = vmatmul.mubr.bf16.gmra.mrb[0].mxu0 %v7601
    %v7678 = vpop.f32.mrb[0].mxu0
    %v7679 = vadd.f32 0.0, %v7678
    %v7680 = vpop.f32.mrb[0].mxu0
    %v7681 = vpop.f32.mrb[0].mxu0
    %v7682 = vadd.f32 0.0, %v7681
    %v7683 = vpop.f32.mrb[0].mxu0
    %7684 = vmatprep.mubr.bf16.mxu0 0
    %7685 = vmatmul.mubr.bf16.gmra.mrb[0].mxu0 %v7602
    %v7686 = vpop.f32.mrb[0].mxu0
    %v7687 = vadd.f32 0.0, %v7686
    %v7688 = vpop.f32.mrb[0].mxu0
    %v7689 = vpop.f32.mrb[0].mxu0
    %v7690 = vadd.f32 0.0, %v7689
    %v7691 = vpop.f32.mrb[0].mxu0
    %7692 = vmatprep.mubr.bf16.mxu0 0
    %7693 = vmatmul.mubr.bf16.gmra.mrb[0].mxu0 %v7603
    %v7694 = vpop.f32.mrb[0].mxu0
    %v7695 = vadd.f32 0.0, %v7694
    %v7696 = vpop.f32.mrb[0].mxu0
    %v7697 = vpop.f32.mrb[0].mxu0
    %v7698 = vadd.f32 0.0, %v7697
    %v7699 = vpop.f32.mrb[0].mxu0
    %7700 = vdwg.mxu0
    %7701 = vxpose.xlu0.b32.start [1/16] %v7639, 128
    %7702 = vxpose.xlu0.b32.cont [2/16] %v7642, 128
    %7703 = vxpose.xlu0.b32.cont [3/16] %v7647, 128
    %7704 = vxpose.xlu0.b32.cont [4/16] %v7650, 128
    %7705 = vxpose.xlu0.b32.cont [5/16] %v7655, 128
    %7706 = vxpose.xlu0.b32.cont [6/16] %v7658, 128
    %7707 = vxpose.xlu0.b32.cont [7/16] %v7663, 128
    %7708 = vxpose.xlu0.b32.cont [8/16] %v7666, 128
    %7709 = vxpose.xlu0.b32.cont [9/16] %v7671, 128
    %7710 = vxpose.xlu0.b32.cont [10/16] %v7674, 128
    %7711 = vxpose.xlu0.b32.cont [11/16] %v7679, 128
    %7712 = vxpose.xlu0.b32.cont [12/16] %v7682, 128
    %7713 = vxpose.xlu0.b32.cont [13/16] %v7687, 128
    %7714 = vxpose.xlu0.b32.cont [14/16] %v7690, 128
    %7715 = vxpose.xlu0.b32.cont [15/16] %v7695, 128
    %7716 = vxpose.xlu0.b32.end [16/16] %v7698, 128
    %v7717 = vpop.trf.xlu0
    %v7718 = vpop.trf.xlu0
    %v7719 = vpop.trf.xlu0
    %v7720 = vpop.trf.xlu0
    %v7721 = vpop.trf.xlu0
    %v7722 = vpop.trf.xlu0
    %v7723 = vpop.trf.xlu0
    %v7724 = vpop.trf.xlu0
    %v7725 = vpop.trf.xlu0
    %v7726 = vpop.trf.xlu0
    %v7727 = vpop.trf.xlu0
    %v7728 = vpop.trf.xlu0
    %v7729 = vpop.trf.xlu0
    %v7730 = vpop.trf.xlu0
    %v7731 = vpop.trf.xlu0
    %v7732 = vpop.trf.xlu0
    %v7733 = vpack.c.bf16 %v7718, %v7717
    %v7734 = vpack.c.bf16 %v7720, %v7719
    %v7735 = vpack.c.bf16 %v7722, %v7721
    %v7736 = vpack.c.bf16 %v7724, %v7723
    %v7737 = vpack.c.bf16 %v7726, %v7725
    %v7738 = vpack.c.bf16 %v7728, %v7727
    %v7739 = vpack.c.bf16 %v7730, %v7729
    %v7740 = vpack.c.bf16 %v7732, %v7731
    %7741 = vmatprep.subr.bf16.mxu0 %v3042
    %7742 = vmatpush1.bf16.msra.mxu0 %v3041
    %7743 = vmatprep.subr.bf16.mxu0 %v3045
    %7744 = vmatpush1.bf16.msra.mxu0 %v3044
    %7745 = vmatprep.subr.bf16.mxu0 %v3048
    %7746 = vmatpush1.bf16.msra.mxu0 %v3047
    %7747 = vmatprep.subr.bf16.mxu0 %v3051
    %7748 = vmatpush1.bf16.msra.mxu0 %v3050
    %7749 = vmatprep.subr.bf16.mxu0 %v3054
    %7750 = vmatpush1.bf16.msra.mxu0 %v3053
    %7751 = vmatprep.subr.bf16.mxu0 %v3057
    %7752 = vmatpush1.bf16.msra.mxu0 %v3056
    %7753 = vmatprep.subr.bf16.mxu0 %v3060
    %7754 = vmatpush1.bf16.msra.mxu0 %v3059
    %7755 = vmatprep.subr.bf16.mxu0 %v3063
    %7756 = vmatpush1.bf16.msra.mxu0 %v3062
    %7757 = vmatprep.subr.bf16.mxu0 0
    %7758 = vmatpush1.bf16.msra.mxu0 0
    %7759 = vmatprep.subr.bf16.mxu0 0
    %7760 = vmatpush1.bf16.msra.mxu0 0
    %7761 = vmatprep.subr.bf16.mxu0 0
    %7762 = vmatpush1.bf16.msra.mxu0 0
    %7763 = vmatprep.subr.bf16.mxu0 0
    %7764 = vmatpush1.bf16.msra.mxu0 0
    %7765 = vmatprep.subr.bf16.mxu0 0
    %7766 = vmatpush1.bf16.msra.mxu0 0
    %7767 = vmatprep.subr.bf16.mxu0 0
    %7768 = vmatpush1.bf16.msra.mxu0 0
    %7769 = vmatprep.subr.bf16.mxu0 0
    %7770 = vmatpush1.bf16.msra.mxu0 0
    %7771 = vmatprep.subr.bf16.mxu0 0
    %7772 = vmatpush1.bf16.msra.mxu0 0
    %7773 = vmatprep.mubr.bf16.mxu0 0
    %7774 = vmatmul.mubr.bf16.gmra.mrb[0].mxu0 %v7733
    %v7775 = vpop.f32.mrb[0].mxu0
    %v7776 = vadd.f32 %v2949, %v7775
    %v7777 = vpop.f32.mrb[0].mxu0
    %v7778 = vadd.f32 %v2953, %v7777
    %v7779 = vpop.f32.mrb[0].mxu0
    %v7780 = vadd.f32 %v2949, %v7779
    %v7781 = vpop.f32.mrb[0].mxu0
    %v7782 = vadd.f32 %v2953, %v7781
    %7783 = vmatprep.mubr.bf16.mxu0 0
    %7784 = vmatmul.mubr.bf16.gmra.mrb[0].mxu0 %v7734
    %v7785 = vpop.f32.mrb[0].mxu0
    %v7786 = vadd.f32 %v2949, %v7785
    %v7787 = vpop.f32.mrb[0].mxu0
    %v7788 = vadd.f32 %v2953, %v7787
    %v7789 = vpop.f32.mrb[0].mxu0
    %v7790 = vadd.f32 %v2949, %v7789
    %v7791 = vpop.f32.mrb[0].mxu0
    %v7792 = vadd.f32 %v2953, %v7791
    %7793 = vmatprep.mubr.bf16.mxu0 0
    %7794 = vmatmul.mubr.bf16.gmra.mrb[0].mxu0 %v7735
    %v7795 = vpop.f32.mrb[0].mxu0
    %v7796 = vadd.f32 %v2949, %v7795
    %v7797 = vpop.f32.mrb[0].mxu0
    %v7798 = vadd.f32 %v2953, %v7797
    %v7799 = vpop.f32.mrb[0].mxu0
    %v7800 = vadd.f32 %v2949, %v7799
    %v7801 = vpop.f32.mrb[0].mxu0
    %v7802 = vadd.f32 %v2953, %v7801
    %7803 = vmatprep.mubr.bf16.mxu0 0
    %7804 = vmatmul.mubr.bf16.gmra.mrb[0].mxu0 %v7736
    %v7805 = vpop.f32.mrb[0].mxu0
    %v7806 = vadd.f32 %v2949, %v7805
    %v7807 = vpop.f32.mrb[0].mxu0
    %v7808 = vadd.f32 %v2953, %v7807
    %v7809 = vpop.f32.mrb[0].mxu0
    %v7810 = vadd.f32 %v2949, %v7809
    %v7811 = vpop.f32.mrb[0].mxu0
    %v7812 = vadd.f32 %v2953, %v7811
    %7813 = vmatprep.mubr.bf16.mxu0 0
    %7814 = vmatmul.mubr.bf16.gmra.mrb[0].mxu0 %v7737
    %v7815 = vpop.f32.mrb[0].mxu0
    %v7816 = vadd.f32 %v2949, %v7815
    %v7817 = vpop.f32.mrb[0].mxu0
    %v7818 = vadd.f32 %v2953, %v7817
    %v7819 = vpop.f32.mrb[0].mxu0
    %v7820 = vadd.f32 %v2949, %v7819
    %v7821 = vpop.f32.mrb[0].mxu0
    %v7822 = vadd.f32 %v2953, %v7821
    %7823 = vmatprep.mubr.bf16.mxu0 0
    %7824 = vmatmul.mubr.bf16.gmra.mrb[0].mxu0 %v7738
    %v7825 = vpop.f32.mrb[0].mxu0
    %v7826 = vadd.f32 %v2949, %v7825
    %v7827 = vpop.f32.mrb[0].mxu0
    %v7828 = vadd.f32 %v2953, %v7827
    %v7829 = vpop.f32.mrb[0].mxu0
    %v7830 = vadd.f32 %v2949, %v7829
    %v7831 = vpop.f32.mrb[0].mxu0
    %v7832 = vadd.f32 %v2953, %v7831
    %7833 = vmatprep.mubr.bf16.mxu0 0
    %7834 = vmatmul.mubr.bf16.gmra.mrb[0].mxu0 %v7739
    %v7835 = vpop.f32.mrb[0].mxu0
    %v7836 = vadd.f32 %v2949, %v7835
    %v7837 = vpop.f32.mrb[0].mxu0
    %v7838 = vadd.f32 %v2953, %v7837
    %v7839 = vpop.f32.mrb[0].mxu0
    %v7840 = vadd.f32 %v2949, %v7839
    %v7841 = vpop.f32.mrb[0].mxu0
    %v7842 = vadd.f32 %v2953, %v7841
    %7843 = vmatprep.mubr.bf16.mxu0 0
    %7844 = vmatmul.mubr.bf16.gmra.mrb[0].mxu0 %v7740
    %v7845 = vpop.f32.mrb[0].mxu0
    %v7846 = vadd.f32 %v2949, %v7845
    %v7847 = vpop.f32.mrb[0].mxu0
    %v7848 = vadd.f32 %v2953, %v7847
    %v7849 = vpop.f32.mrb[0].mxu0
    %v7850 = vadd.f32 %v2949, %v7849
    %v7851 = vpop.f32.mrb[0].mxu0
    %v7852 = vadd.f32 %v2953, %v7851
    %7853 = vdwg.mxu0
    %7854 = vmatprep.subr.bf16.mxu0 0
    %7855 = vmatpush1.bf16.msra.mxu0 %v3043
    %7856 = vmatprep.subr.bf16.mxu0 0
    %7857 = vmatpush1.bf16.msra.mxu0 %v3046
    %7858 = vmatprep.subr.bf16.mxu0 0
    %7859 = vmatpush1.bf16.msra.mxu0 %v3049
    %7860 = vmatprep.subr.bf16.mxu0 0
    %7861 = vmatpush1.bf16.msra.mxu0 %v3052
    %7862 = vmatprep.subr.bf16.mxu0 0
    %7863 = vmatpush1.bf16.msra.mxu0 %v3055
    %7864 = vmatprep.subr.bf16.mxu0 0
    %7865 = vmatpush1.bf16.msra.mxu0 %v3058
    %7866 = vmatprep.subr.bf16.mxu0 0
    %7867 = vmatpush1.bf16.msra.mxu0 %v3061
    %7868 = vmatprep.subr.bf16.mxu0 0
    %7869 = vmatpush1.bf16.msra.mxu0 %v3064
    %7870 = vmatprep.subr.bf16.mxu0 0
    %7871 = vmatpush1.bf16.msra.mxu0 0
    %7872 = vmatprep.subr.bf16.mxu0 0
    %7873 = vmatpush1.bf16.msra.mxu0 0
    %7874 = vmatprep.subr.bf16.mxu0 0
    %7875 = vmatpush1.bf16.msra.mxu0 0
    %7876 = vmatprep.subr.bf16.mxu0 0
    %7877 = vmatpush1.bf16.msra.mxu0 0
    %7878 = vmatprep.subr.bf16.mxu0 0
    %7879 = vmatpush1.bf16.msra.mxu0 0
    %7880 = vmatprep.subr.bf16.mxu0 0
    %7881 = vmatpush1.bf16.msra.mxu0 0
    %7882 = vmatprep.subr.bf16.mxu0 0
    %7883 = vmatpush1.bf16.msra.mxu0 0
    %7884 = vmatprep.subr.bf16.mxu0 0
    %7885 = vmatpush1.bf16.msra.mxu0 0
    %7886 = vmatprep.mubr.bf16.mxu0 0
    %7887 = vmatmul.mubr.bf16.gmra.mrb[0].mxu0 %v7733
    %v7888 = vpop.f32.mrb[0].mxu0
    %v7889 = vadd.f32 %v2957, %v7888
    %v7890 = vpop.f32.mrb[0].mxu0
    %v7891 = vpop.f32.mrb[0].mxu0
    %v7892 = vadd.f32 %v2957, %v7891
    %v7893 = vpop.f32.mrb[0].mxu0
    %7894 = vmatprep.mubr.bf16.mxu0 0
    %7895 = vmatmul.mubr.bf16.gmra.mrb[0].mxu0 %v7734
    %v7896 = vpop.f32.mrb[0].mxu0
    %v7897 = vadd.f32 %v2957, %v7896
    %v7898 = vpop.f32.mrb[0].mxu0
    %v7899 = vpop.f32.mrb[0].mxu0
    %v7900 = vadd.f32 %v2957, %v7899
    %v7901 = vpop.f32.mrb[0].mxu0
    %7902 = vmatprep.mubr.bf16.mxu0 0
    %7903 = vmatmul.mubr.bf16.gmra.mrb[0].mxu0 %v7735
    %v7904 = vpop.f32.mrb[0].mxu0
    %v7905 = vadd.f32 %v2957, %v7904
    %v7906 = vpop.f32.mrb[0].mxu0
    %v7907 = vpop.f32.mrb[0].mxu0
    %v7908 = vadd.f32 %v2957, %v7907
    %v7909 = vpop.f32.mrb[0].mxu0
    %7910 = vmatprep.mubr.bf16.mxu0 0
    %7911 = vmatmul.mubr.bf16.gmra.mrb[0].mxu0 %v7736
    %v7912 = vpop.f32.mrb[0].mxu0
    %v7913 = vadd.f32 %v2957, %v7912
    %v7914 = vpop.f32.mrb[0].mxu0
    %v7915 = vpop.f32.mrb[0].mxu0
    %v7916 = vadd.f32 %v2957, %v7915
    %v7917 = vpop.f32.mrb[0].mxu0
    %7918 = vmatprep.mubr.bf16.mxu0 0
    %7919 = vmatmul.mubr.bf16.gmra.mrb[0].mxu0 %v7737
    %v7920 = vpop.f32.mrb[0].mxu0
    %v7921 = vadd.f32 %v2957, %v7920
    %v7922 = vpop.f32.mrb[0].mxu0
    %v7923 = vpop.f32.mrb[0].mxu0
    %v7924 = vadd.f32 %v2957, %v7923
    %v7925 = vpop.f32.mrb[0].mxu0
    %7926 = vmatprep.mubr.bf16.mxu0 0
    %7927 = vmatmul.mubr.bf16.gmra.mrb[0].mxu0 %v7738
    %v7928 = vpop.f32.mrb[0].mxu0
    %v7929 = vadd.f32 %v2957, %v7928
    %v7930 = vpop.f32.mrb[0].mxu0
    %v7931 = vpop.f32.mrb[0].mxu0
    %v7932 = vadd.f32 %v2957, %v7931
    %v7933 = vpop.f32.mrb[0].mxu0
    %7934 = vmatprep.mubr.bf16.mxu0 0
    %7935 = vmatmul.mubr.bf16.gmra.mrb[0].mxu0 %v7739
    %v7936 = vpop.f32.mrb[0].mxu0
    %v7937 = vadd.f32 %v2957, %v7936
    %v7938 = vpop.f32.mrb[0].mxu0
    %v7939 = vpop.f32.mrb[0].mxu0
    %v7940 = vadd.f32 %v2957, %v7939
    %v7941 = vpop.f32.mrb[0].mxu0
    %7942 = vmatprep.mubr.bf16.mxu0 0
    %7943 = vmatmul.mubr.bf16.gmra.mrb[0].mxu0 %v7740
    %v7944 = vpop.f32.mrb[0].mxu0
    %v7945 = vadd.f32 %v2957, %v7944
    %v7946 = vpop.f32.mrb[0].mxu0
    %v7947 = vpop.f32.mrb[0].mxu0
    %v7948 = vadd.f32 %v2957, %v7947
    %v7949 = vpop.f32.mrb[0].mxu0
    %7950 = vdwg.mxu0
    %7951 = vmatprep.subr.bf16.mxu0 %v3396
    %7952 = vmatpush1.bf16.msra.mxu0 %v3395
    %7953 = vmatprep.subr.bf16.mxu0 %v3399
    %7954 = vmatpush1.bf16.msra.mxu0 %v3398
    %7955 = vmatprep.subr.bf16.mxu0 %v3402
    %7956 = vmatpush1.bf16.msra.mxu0 %v3401
    %7957 = vmatprep.subr.bf16.mxu0 %v3405
    %7958 = vmatpush1.bf16.msra.mxu0 %v3404
    %7959 = vmatprep.subr.bf16.mxu0 %v3408
    %7960 = vmatpush1.bf16.msra.mxu0 %v3407
    %7961 = vmatprep.subr.bf16.mxu0 %v3411
    %7962 = vmatpush1.bf16.msra.mxu0 %v3410
    %7963 = vmatprep.subr.bf16.mxu0 %v3414
    %7964 = vmatpush1.bf16.msra.mxu0 %v3413
    %7965 = vmatprep.subr.bf16.mxu0 %v3417
    %7966 = vmatpush1.bf16.msra.mxu0 %v3416
    %7967 = vmatprep.subr.bf16.mxu0 0
    %7968 = vmatpush1.bf16.msra.mxu0 0
    %7969 = vmatprep.subr.bf16.mxu0 0
    %7970 = vmatpush1.bf16.msra.mxu0 0
    %7971 = vmatprep.subr.bf16.mxu0 0
    %7972 = vmatpush1.bf16.msra.mxu0 0
    %7973 = vmatprep.subr.bf16.mxu0 0
    %7974 = vmatpush1.bf16.msra.mxu0 0
    %7975 = vmatprep.subr.bf16.mxu0 0
    %7976 = vmatpush1.bf16.msra.mxu0 0
    %7977 = vmatprep.subr.bf16.mxu0 0
    %7978 = vmatpush1.bf16.msra.mxu0 0
    %7979 = vmatprep.subr.bf16.mxu0 0
    %7980 = vmatpush1.bf16.msra.mxu0 0
    %7981 = vmatprep.subr.bf16.mxu0 0
    %7982 = vmatpush1.bf16.msra.mxu0 0
    %7983 = vmatprep.mubr.bf16.mxu0 0
    %7984 = vmatmul.mubr.bf16.gmra.mrb[0].mxu0 %v7338
    %v7985 = vpop.f32.mrb[0].mxu0
    %v7986 = vadd.f32 %v3303, %v7985
    %v7987 = vpop.f32.mrb[0].mxu0
    %v7988 = vadd.f32 %v3307, %v7987
    %v7989 = vpop.f32.mrb[0].mxu0
    %v7990 = vadd.f32 %v3303, %v7989
    %v7991 = vpop.f32.mrb[0].mxu0
    %v7992 = vadd.f32 %v3307, %v7991
    %7993 = vmatprep.mubr.bf16.mxu0 0
    %7994 = vmatmul.mubr.bf16.gmra.mrb[0].mxu0 %v7339
    %v7995 = vpop.f32.mrb[0].mxu0
    %v7996 = vadd.f32 %v3303, %v7995
    %v7997 = vpop.f32.mrb[0].mxu0
    %v7998 = vadd.f32 %v3307, %v7997
    %v7999 = vpop.f32.mrb[0].mxu0
    %v8000 = vadd.f32 %v3303, %v7999
    %v8001 = vpop.f32.mrb[0].mxu0
    %v8002 = vadd.f32 %v3307, %v8001
    %8003 = vmatprep.mubr.bf16.mxu0 0
    %8004 = vmatmul.mubr.bf16.gmra.mrb[0].mxu0 %v7340
    %v8005 = vpop.f32.mrb[0].mxu0
    %v8006 = vadd.f32 %v3303, %v8005
    %v8007 = vpop.f32.mrb[0].mxu0
    %v8008 = vadd.f32 %v3307, %v8007
    %v8009 = vpop.f32.mrb[0].mxu0
    %v8010 = vadd.f32 %v3303, %v8009
    %v8011 = vpop.f32.mrb[0].mxu0
    %v8012 = vadd.f32 %v3307, %v8011
    %8013 = vmatprep.mubr.bf16.mxu0 0
    %8014 = vmatmul.mubr.bf16.gmra.mrb[0].mxu0 %v7341
    %v8015 = vpop.f32.mrb[0].mxu0
    %v8016 = vadd.f32 %v3303, %v8015
    %v8017 = vpop.f32.mrb[0].mxu0
    %v8018 = vadd.f32 %v3307, %v8017
    %v8019 = vpop.f32.mrb[0].mxu0
    %v8020 = vadd.f32 %v3303, %v8019
    %v8021 = vpop.f32.mrb[0].mxu0
    %v8022 = vadd.f32 %v3307, %v8021
    %8023 = vmatprep.mubr.bf16.mxu0 0
    %8024 = vmatmul.mubr.bf16.gmra.mrb[0].mxu0 %v7342
    %v8025 = vpop.f32.mrb[0].mxu0
    %v8026 = vadd.f32 %v3303, %v8025
    %v8027 = vpop.f32.mrb[0].mxu0
    %v8028 = vadd.f32 %v3307, %v8027
    %v8029 = vpop.f32.mrb[0].mxu0
    %v8030 = vadd.f32 %v3303, %v8029
    %v8031 = vpop.f32.mrb[0].mxu0
    %v8032 = vadd.f32 %v3307, %v8031
    %8033 = vmatprep.mubr.bf16.mxu0 0
    %8034 = vmatmul.mubr.bf16.gmra.mrb[0].mxu0 %v7343
    %v8035 = vpop.f32.mrb[0].mxu0
    %v8036 = vadd.f32 %v3303, %v8035
    %v8037 = vpop.f32.mrb[0].mxu0
    %v8038 = vadd.f32 %v3307, %v8037
    %v8039 = vpop.f32.mrb[0].mxu0
    %v8040 = vadd.f32 %v3303, %v8039
    %v8041 = vpop.f32.mrb[0].mxu0
    %v8042 = vadd.f32 %v3307, %v8041
    %8043 = vmatprep.mubr.bf16.mxu0 0
    %8044 = vmatmul.mubr.bf16.gmra.mrb[0].mxu0 %v7344
    %v8045 = vpop.f32.mrb[0].mxu0
    %v8046 = vadd.f32 %v3303, %v8045
    %v8047 = vpop.f32.mrb[0].mxu0
    %v8048 = vadd.f32 %v3307, %v8047
    %v8049 = vpop.f32.mrb[0].mxu0
    %v8050 = vadd.f32 %v3303, %v8049
    %v8051 = vpop.f32.mrb[0].mxu0
    %v8052 = vadd.f32 %v3307, %v8051
    %8053 = vmatprep.mubr.bf16.mxu0 0
    %8054 = vmatmul.mubr.bf16.gmra.mrb[0].mxu0 %v7345
    %v8055 = vpop.f32.mrb[0].mxu0
    %v8056 = vadd.f32 %v3303, %v8055
    %v8057 = vpop.f32.mrb[0].mxu0
    %v8058 = vadd.f32 %v3307, %v8057
    %v8059 = vpop.f32.mrb[0].mxu0
    %v8060 = vadd.f32 %v3303, %v8059
    %v8061 = vpop.f32.mrb[0].mxu0
    %v8062 = vadd.f32 %v3307, %v8061
    %8063 = vdwg.mxu0
    %8064 = vmatprep.subr.bf16.mxu0 0
    %8065 = vmatpush1.bf16.msra.mxu0 %v3397
    %8066 = vmatprep.subr.bf16.mxu0 0
    %8067 = vmatpush1.bf16.msra.mxu0 %v3400
    %8068 = vmatprep.subr.bf16.mxu0 0
    %8069 = vmatpush1.bf16.msra.mxu0 %v3403
    %8070 = vmatprep.subr.bf16.mxu0 0
    %8071 = vmatpush1.bf16.msra.mxu0 %v3406
    %8072 = vmatprep.subr.bf16.mxu0 0
    %8073 = vmatpush1.bf16.msra.mxu0 %v3409
    %8074 = vmatprep.subr.bf16.mxu0 0
    %8075 = vmatpush1.bf16.msra.mxu0 %v3412
    %8076 = vmatprep.subr.bf16.mxu0 0
    %8077 = vmatpush1.bf16.msra.mxu0 %v3415
    %8078 = vmatprep.subr.bf16.mxu0 0
    %8079 = vmatpush1.bf16.msra.mxu0 %v3418
    %8080 = vmatprep.subr.bf16.mxu0 0
    %8081 = vmatpush1.bf16.msra.mxu0 0
    %8082 = vmatprep.subr.bf16.mxu0 0
    %8083 = vmatpush1.bf16.msra.mxu0 0
    %8084 = vmatprep.subr.bf16.mxu0 0
    %8085 = vmatpush1.bf16.msra.mxu0 0
    %8086 = vmatprep.subr.bf16.mxu0 0
    %8087 = vmatpush1.bf16.msra.mxu0 0
    %8088 = vmatprep.subr.bf16.mxu0 0
    %8089 = vmatpush1.bf16.msra.mxu0 0
    %8090 = vmatprep.subr.bf16.mxu0 0
    %8091 = vmatpush1.bf16.msra.mxu0 0
    %8092 = vmatprep.subr.bf16.mxu0 0
    %8093 = vmatpush1.bf16.msra.mxu0 0
    %8094 = vmatprep.subr.bf16.mxu0 0
    %8095 = vmatpush1.bf16.msra.mxu0 0
    %8096 = vmatprep.mubr.bf16.mxu0 0
    %8097 = vmatmul.mubr.bf16.gmra.mrb[0].mxu0 %v7338
    %v8098 = vpop.f32.mrb[0].mxu0
    %v8099 = vadd.f32 %v3311, %v8098
    %v8100 = vpop.f32.mrb[0].mxu0
    %v8101 = vpop.f32.mrb[0].mxu0
    %v8102 = vadd.f32 %v3311, %v8101
    %v8103 = vpop.f32.mrb[0].mxu0
    %8104 = vmatprep.mubr.bf16.mxu0 0
    %8105 = vmatmul.mubr.bf16.gmra.mrb[0].mxu0 %v7339
    %v8106 = vpop.f32.mrb[0].mxu0
    %v8107 = vadd.f32 %v3311, %v8106
    %v8108 = vpop.f32.mrb[0].mxu0
    %v8109 = vpop.f32.mrb[0].mxu0
    %v8110 = vadd.f32 %v3311, %v8109
    %v8111 = vpop.f32.mrb[0].mxu0
    %8112 = vmatprep.mubr.bf16.mxu0 0
    %8113 = vmatmul.mubr.bf16.gmra.mrb[0].mxu0 %v7340
    %v8114 = vpop.f32.mrb[0].mxu0
    %v8115 = vadd.f32 %v3311, %v8114
    %v8116 = vpop.f32.mrb[0].mxu0
    %v8117 = vpop.f32.mrb[0].mxu0
    %v8118 = vadd.f32 %v3311, %v8117
    %v8119 = vpop.f32.mrb[0].mxu0
    %8120 = vmatprep.mubr.bf16.mxu0 0
    %8121 = vmatmul.mubr.bf16.gmra.mrb[0].mxu0 %v7341
    %v8122 = vpop.f32.mrb[0].mxu0
    %v8123 = vadd.f32 %v3311, %v8122
    %v8124 = vpop.f32.mrb[0].mxu0
    %v8125 = vpop.f32.mrb[0].mxu0
    %v8126 = vadd.f32 %v3311, %v8125
    %v8127 = vpop.f32.mrb[0].mxu0
    %8128 = vmatprep.mubr.bf16.mxu0 0
    %8129 = vmatmul.mubr.bf16.gmra.mrb[0].mxu0 %v7342
    %v8130 = vpop.f32.mrb[0].mxu0
    %v8131 = vadd.f32 %v3311, %v8130
    %v8132 = vpop.f32.mrb[0].mxu0
    %v8133 = vpop.f32.mrb[0].mxu0
    %v8134 = vadd.f32 %v3311, %v8133
    %v8135 = vpop.f32.mrb[0].mxu0
    %8136 = vmatprep.mubr.bf16.mxu0 0
    %8137 = vmatmul.mubr.bf16.gmra.mrb[0].mxu0 %v7343
    %v8138 = vpop.f32.mrb[0].mxu0
    %v8139 = vadd.f32 %v3311, %v8138
    %v8140 = vpop.f32.mrb[0].mxu0
    %v8141 = vpop.f32.mrb[0].mxu0
    %v8142 = vadd.f32 %v3311, %v8141
    %v8143 = vpop.f32.mrb[0].mxu0
    %8144 = vmatprep.mubr.bf16.mxu0 0
    %8145 = vmatmul.mubr.bf16.gmra.mrb[0].mxu0 %v7344
    %v8146 = vpop.f32.mrb[0].mxu0
    %v8147 = vadd.f32 %v3311, %v8146
    %v8148 = vpop.f32.mrb[0].mxu0
    %v8149 = vpop.f32.mrb[0].mxu0
    %v8150 = vadd.f32 %v3311, %v8149
    %v8151 = vpop.f32.mrb[0].mxu0
    %8152 = vmatprep.mubr.bf16.mxu0 0
    %8153 = vmatmul.mubr.bf16.gmra.mrb[0].mxu0 %v7345
    %v8154 = vpop.f32.mrb[0].mxu0
    %v8155 = vadd.f32 %v3311, %v8154
    %v8156 = vpop.f32.mrb[0].mxu0
    %v8157 = vpop.f32.mrb[0].mxu0
    %v8158 = vadd.f32 %v3311, %v8157
    %v8159 = vpop.f32.mrb[0].mxu0
    %8160 = vdwg.mxu0
    %v8161 = vadd.f32 %v7776, %v7986
    %v8162 = vadd.f32 %v7780, %v7990
    %v8163 = vadd.f32 %v7786, %v7996
    %v8164 = vadd.f32 %v7790, %v8000
    %v8165 = vadd.f32 %v7796, %v8006
    %v8166 = vadd.f32 %v7800, %v8010
    %v8167 = vadd.f32 %v7806, %v8016
    %v8168 = vadd.f32 %v7810, %v8020
    %v8169 = vadd.f32 %v7816, %v8026
    %v8170 = vadd.f32 %v7820, %v8030
    %v8171 = vadd.f32 %v7826, %v8036
    %v8172 = vadd.f32 %v7830, %v8040
    %v8173 = vadd.f32 %v7836, %v8046
    %v8174 = vadd.f32 %v7840, %v8050
    %v8175 = vadd.f32 %v7846, %v8056
    %v8176 = vadd.f32 %v7850, %v8060
    %v8177 = vxor.u32 %v8161, 2147483648
    %v8178 = vxor.u32 %v8162, 2147483648
    %v8179 = vxor.u32 %v8163, 2147483648
    %v8180 = vxor.u32 %v8164, 2147483648
    %v8181 = vxor.u32 %v8165, 2147483648
    %v8182 = vxor.u32 %v8166, 2147483648
    %v8183 = vxor.u32 %v8167, 2147483648
    %v8184 = vxor.u32 %v8168, 2147483648
    %v8185 = vxor.u32 %v8169, 2147483648
    %v8186 = vxor.u32 %v8170, 2147483648
    %v8187 = vxor.u32 %v8171, 2147483648
    %v8188 = vxor.u32 %v8172, 2147483648
    %v8189 = vxor.u32 %v8173, 2147483648
    %v8190 = vxor.u32 %v8174, 2147483648
    %v8191 = vxor.u32 %v8175, 2147483648
    %v8192 = vxor.u32 %v8176, 2147483648
    %v8193 = vmul.f32 %v8177, 1.442695
    %v8194 = vpow.pop %v8193
    %v8195 = vmul.f32 %v8178, 1.442695
    %v8196 = vpow.pop %v8195
    %v8197 = vmul.f32 %v8179, 1.442695
    %v8198 = vpow.pop %v8197
    %v8199 = vmul.f32 %v8180, 1.442695
    %v8200 = vpow.pop %v8199
    %v8201 = vmul.f32 %v8181, 1.442695
    %v8202 = vpow.pop %v8201
    %v8203 = vmul.f32 %v8182, 1.442695
    %v8204 = vpow.pop %v8203
    %v8205 = vmul.f32 %v8183, 1.442695
    %v8206 = vpow.pop %v8205
    %v8207 = vmul.f32 %v8184, 1.442695
    %v8208 = vpow.pop %v8207
    %v8209 = vmul.f32 %v8185, 1.442695
    %v8210 = vpow.pop %v8209
    %v8211 = vmul.f32 %v8186, 1.442695
    %v8212 = vpow.pop %v8211
    %v8213 = vmul.f32 %v8187, 1.442695
    %v8214 = vpow.pop %v8213
    %v8215 = vmul.f32 %v8188, 1.442695
    %v8216 = vpow.pop %v8215
    %v8217 = vmul.f32 %v8189, 1.442695
    %v8218 = vpow.pop %v8217
    %v8219 = vmul.f32 %v8190, 1.442695
    %v8220 = vpow.pop %v8219
    %v8221 = vmul.f32 %v8191, 1.442695
    %v8222 = vpow.pop %v8221
    %v8223 = vmul.f32 %v8192, 1.442695
    %v8224 = vpow.pop %v8223
    %v8225 = vadd.f32 %v8194, 1.0
    %v8226 = vadd.f32 %v8196, 1.0
    %v8227 = vadd.f32 %v8198, 1.0
    %v8228 = vadd.f32 %v8200, 1.0
    %v8229 = vadd.f32 %v8202, 1.0
    %v8230 = vadd.f32 %v8204, 1.0
    %v8231 = vadd.f32 %v8206, 1.0
    %v8232 = vadd.f32 %v8208, 1.0
    %v8233 = vadd.f32 %v8210, 1.0
    %v8234 = vadd.f32 %v8212, 1.0
    %v8235 = vadd.f32 %v8214, 1.0
    %v8236 = vadd.f32 %v8216, 1.0
    %v8237 = vadd.f32 %v8218, 1.0
    %v8238 = vadd.f32 %v8220, 1.0
    %v8239 = vadd.f32 %v8222, 1.0
    %v8240 = vadd.f32 %v8224, 1.0
    %v8241 = vrcp.pop %v8225
    %v8242 = vmul.f32 1.0, %v8241
    %v8243 = vrcp.pop %v8226
    %v8244 = vmul.f32 1.0, %v8243
    %v8245 = vrcp.pop %v8227
    %v8246 = vmul.f32 1.0, %v8245
    %v8247 = vrcp.pop %v8228
    %v8248 = vmul.f32 1.0, %v8247
    %v8249 = vrcp.pop %v8229
    %v8250 = vmul.f32 1.0, %v8249
    %v8251 = vrcp.pop %v8230
    %v8252 = vmul.f32 1.0, %v8251
    %v8253 = vrcp.pop %v8231
    %v8254 = vmul.f32 1.0, %v8253
    %v8255 = vrcp.pop %v8232
    %v8256 = vmul.f32 1.0, %v8255
    %v8257 = vrcp.pop %v8233
    %v8258 = vmul.f32 1.0, %v8257
    %v8259 = vrcp.pop %v8234
    %v8260 = vmul.f32 1.0, %v8259
    %v8261 = vrcp.pop %v8235
    %v8262 = vmul.f32 1.0, %v8261
    %v8263 = vrcp.pop %v8236
    %v8264 = vmul.f32 1.0, %v8263
    %v8265 = vrcp.pop %v8237
    %v8266 = vmul.f32 1.0, %v8265
    %v8267 = vrcp.pop %v8238
    %v8268 = vmul.f32 1.0, %v8267
    %v8269 = vrcp.pop %v8239
    %v8270 = vmul.f32 1.0, %v8269
    %v8271 = vrcp.pop %v8240
    %v8272 = vmul.f32 1.0, %v8271
    %v8273 = vadd.f32 %v7778, %v7988
    %v8274 = vadd.f32 %v7782, %v7992
    %v8275 = vadd.f32 %v7788, %v7998
    %v8276 = vadd.f32 %v7792, %v8002
    %v8277 = vadd.f32 %v7798, %v8008
    %v8278 = vadd.f32 %v7802, %v8012
    %v8279 = vadd.f32 %v7808, %v8018
    %v8280 = vadd.f32 %v7812, %v8022
    %v8281 = vadd.f32 %v7818, %v8028
    %v8282 = vadd.f32 %v7822, %v8032
    %v8283 = vadd.f32 %v7828, %v8038
    %v8284 = vadd.f32 %v7832, %v8042
    %v8285 = vadd.f32 %v7838, %v8048
    %v8286 = vadd.f32 %v7842, %v8052
    %v8287 = vadd.f32 %v7848, %v8058
    %v8288 = vadd.f32 %v7852, %v8062
    %v8289 = vxor.u32 %v8273, 2147483648
    %v8290 = vxor.u32 %v8274, 2147483648
    %v8291 = vxor.u32 %v8275, 2147483648
    %v8292 = vxor.u32 %v8276, 2147483648
    %v8293 = vxor.u32 %v8277, 2147483648
    %v8294 = vxor.u32 %v8278, 2147483648
    %v8295 = vxor.u32 %v8279, 2147483648
    %v8296 = vxor.u32 %v8280, 2147483648
    %v8297 = vxor.u32 %v8281, 2147483648
    %v8298 = vxor.u32 %v8282, 2147483648
    %v8299 = vxor.u32 %v8283, 2147483648
    %v8300 = vxor.u32 %v8284, 2147483648
    %v8301 = vxor.u32 %v8285, 2147483648
    %v8302 = vxor.u32 %v8286, 2147483648
    %v8303 = vxor.u32 %v8287, 2147483648
    %v8304 = vxor.u32 %v8288, 2147483648
    %v8305 = vmul.f32 %v8289, 1.442695
    %v8306 = vpow.pop %v8305
    %v8307 = vmul.f32 %v8290, 1.442695
    %v8308 = vpow.pop %v8307
    %v8309 = vmul.f32 %v8291, 1.442695
    %v8310 = vpow.pop %v8309
    %v8311 = vmul.f32 %v8292, 1.442695
    %v8312 = vpow.pop %v8311
    %v8313 = vmul.f32 %v8293, 1.442695
    %v8314 = vpow.pop %v8313
    %v8315 = vmul.f32 %v8294, 1.442695
    %v8316 = vpow.pop %v8315
    %v8317 = vmul.f32 %v8295, 1.442695
    %v8318 = vpow.pop %v8317
    %v8319 = vmul.f32 %v8296, 1.442695
    %v8320 = vpow.pop %v8319
    %v8321 = vmul.f32 %v8297, 1.442695
    %v8322 = vpow.pop %v8321
    %v8323 = vmul.f32 %v8298, 1.442695
    %v8324 = vpow.pop %v8323
    %v8325 = vmul.f32 %v8299, 1.442695
    %v8326 = vpow.pop %v8325
    %v8327 = vmul.f32 %v8300, 1.442695
    %v8328 = vpow.pop %v8327
    %v8329 = vmul.f32 %v8301, 1.442695
    %v8330 = vpow.pop %v8329
    %v8331 = vmul.f32 %v8302, 1.442695
    %v8332 = vpow.pop %v8331
    %v8333 = vmul.f32 %v8303, 1.442695
    %v8334 = vpow.pop %v8333
    %v8335 = vmul.f32 %v8304, 1.442695
    %v8336 = vpow.pop %v8335
    %v8337 = vadd.f32 %v8306, 1.0
    %v8338 = vadd.f32 %v8308, 1.0
    %v8339 = vadd.f32 %v8310, 1.0
    %v8340 = vadd.f32 %v8312, 1.0
    %v8341 = vadd.f32 %v8314, 1.0
    %v8342 = vadd.f32 %v8316, 1.0
    %v8343 = vadd.f32 %v8318, 1.0
    %v8344 = vadd.f32 %v8320, 1.0
    %v8345 = vadd.f32 %v8322, 1.0
    %v8346 = vadd.f32 %v8324, 1.0
    %v8347 = vadd.f32 %v8326, 1.0
    %v8348 = vadd.f32 %v8328, 1.0
    %v8349 = vadd.f32 %v8330, 1.0
    %v8350 = vadd.f32 %v8332, 1.0
    %v8351 = vadd.f32 %v8334, 1.0
    %v8352 = vadd.f32 %v8336, 1.0
    %v8353 = vrcp.pop %v8337
    %v8354 = vmul.f32 1.0, %v8353
    %v8355 = vrcp.pop %v8338
    %v8356 = vmul.f32 1.0, %v8355
    %v8357 = vrcp.pop %v8339
    %v8358 = vmul.f32 1.0, %v8357
    %v8359 = vrcp.pop %v8340
    %v8360 = vmul.f32 1.0, %v8359
    %v8361 = vrcp.pop %v8341
    %v8362 = vmul.f32 1.0, %v8361
    %v8363 = vrcp.pop %v8342
    %v8364 = vmul.f32 1.0, %v8363
    %v8365 = vrcp.pop %v8343
    %v8366 = vmul.f32 1.0, %v8365
    %v8367 = vrcp.pop %v8344
    %v8368 = vmul.f32 1.0, %v8367
    %v8369 = vrcp.pop %v8345
    %v8370 = vmul.f32 1.0, %v8369
    %v8371 = vrcp.pop %v8346
    %v8372 = vmul.f32 1.0, %v8371
    %v8373 = vrcp.pop %v8347
    %v8374 = vmul.f32 1.0, %v8373
    %v8375 = vrcp.pop %v8348
    %v8376 = vmul.f32 1.0, %v8375
    %v8377 = vrcp.pop %v8349
    %v8378 = vmul.f32 1.0, %v8377
    %v8379 = vrcp.pop %v8350
    %v8380 = vmul.f32 1.0, %v8379
    %v8381 = vrcp.pop %v8351
    %v8382 = vmul.f32 1.0, %v8381
    %v8383 = vrcp.pop %v8352
    %v8384 = vmul.f32 1.0, %v8383
    %v8385 = vmul.f32 %v8242, %v8099
    %v8386 = vmul.f32 %v8244, %v8102
    %v8387 = vmul.f32 %v8246, %v8107
    %v8388 = vmul.f32 %v8248, %v8110
    %v8389 = vmul.f32 %v8250, %v8115
    %v8390 = vmul.f32 %v8252, %v8118
    %v8391 = vmul.f32 %v8254, %v8123
    %v8392 = vmul.f32 %v8256, %v8126
    %v8393 = vmul.f32 %v8258, %v8131
    %v8394 = vmul.f32 %v8260, %v8134
    %v8395 = vmul.f32 %v8262, %v8139
    %v8396 = vmul.f32 %v8264, %v8142
    %v8397 = vmul.f32 %v8266, %v8147
    %v8398 = vmul.f32 %v8268, %v8150
    %v8399 = vmul.f32 %v8270, %v8155
    %v8400 = vmul.f32 %v8272, %v8158
    %v8401 = vadd.f32 %v7889, %v8385
    %v8402 = vadd.f32 %v7892, %v8386
    %v8403 = vadd.f32 %v7897, %v8387
    %v8404 = vadd.f32 %v7900, %v8388
    %v8405 = vadd.f32 %v7905, %v8389
    %v8406 = vadd.f32 %v7908, %v8390
    %v8407 = vadd.f32 %v7913, %v8391
    %v8408 = vadd.f32 %v7916, %v8392
    %v8409 = vadd.f32 %v7921, %v8393
    %v8410 = vadd.f32 %v7924, %v8394
    %v8411 = vadd.f32 %v7929, %v8395
    %v8412 = vadd.f32 %v7932, %v8396
    %v8413 = vadd.f32 %v7937, %v8397
    %v8414 = vadd.f32 %v7940, %v8398
    %v8415 = vadd.f32 %v7945, %v8399
    %v8416 = vadd.f32 %v7948, %v8400
    %v8417 = vtanh.pop %v8401
    %v8418 = vtanh.pop %v8402
    %v8419 = vtanh.pop %v8403
    %v8420 = vtanh.pop %v8404
    %v8421 = vtanh.pop %v8405
    %v8422 = vtanh.pop %v8406
    %v8423 = vtanh.pop %v8407
    %v8424 = vtanh.pop %v8408
    %v8425 = vtanh.pop %v8409
    %v8426 = vtanh.pop %v8410
    %v8427 = vtanh.pop %v8411
    %v8428 = vtanh.pop %v8412
    %v8429 = vtanh.pop %v8413
    %v8430 = vtanh.pop %v8414
    %v8431 = vtanh.pop %v8415
    %v8432 = vtanh.pop %v8416
    %v8433 = vsub.f32 1.0, %v8354
    %v8434 = vsub.f32 1.0, %v8356
    %v8435 = vsub.f32 1.0, %v8358
    %v8436 = vsub.f32 1.0, %v8360
    %v8437 = vsub.f32 1.0, %v8362
    %v8438 = vsub.f32 1.0, %v8364
    %v8439 = vsub.f32 1.0, %v8366
    %v8440 = vsub.f32 1.0, %v8368
    %v8441 = vsub.f32 1.0, %v8370
    %v8442 = vsub.f32 1.0, %v8372
    %v8443 = vsub.f32 1.0, %v8374
    %v8444 = vsub.f32 1.0, %v8376
    %v8445 = vsub.f32 1.0, %v8378
    %v8446 = vsub.f32 1.0, %v8380
    %v8447 = vsub.f32 1.0, %v8382
    %v8448 = vsub.f32 1.0, %v8384
    %v8449 = vmul.f32 %v8433, %v8417
    %v8450 = vmul.f32 %v8434, %v8418
    %v8451 = vmul.f32 %v8435, %v8419
    %v8452 = vmul.f32 %v8436, %v8420
    %v8453 = vmul.f32 %v8437, %v8421
    %v8454 = vmul.f32 %v8438, %v8422
    %v8455 = vmul.f32 %v8439, %v8423
    %v8456 = vmul.f32 %v8440, %v8424
    %v8457 = vmul.f32 %v8441, %v8425
    %v8458 = vmul.f32 %v8442, %v8426
    %v8459 = vmul.f32 %v8443, %v8427
    %v8460 = vmul.f32 %v8444, %v8428
    %v8461 = vmul.f32 %v8445, %v8429
    %v8462 = vmul.f32 %v8446, %v8430
    %v8463 = vmul.f32 %v8447, %v8431
    %v8464 = vmul.f32 %v8448, %v8432
    %v8465 = vmul.f32 %v8354, %v7322
    %v8466 = vmul.f32 %v8356, %v7323
    %v8467 = vmul.f32 %v8358, %v7324
    %v8468 = vmul.f32 %v8360, %v7325
    %v8469 = vmul.f32 %v8362, %v7326
    %v8470 = vmul.f32 %v8364, %v7327
    %v8471 = vmul.f32 %v8366, %v7328
    %v8472 = vmul.f32 %v8368, %v7329
    %v8473 = vmul.f32 %v8370, %v7330
    %v8474 = vmul.f32 %v8372, %v7331
    %v8475 = vmul.f32 %v8374, %v7332
    %v8476 = vmul.f32 %v8376, %v7333
    %v8477 = vmul.f32 %v8378, %v7334
    %v8478 = vmul.f32 %v8380, %v7335
    %v8479 = vmul.f32 %v8382, %v7336
    %v8480 = vmul.f32 %v8384, %v7337
    %v8481 = vadd.f32 %v8449, %v8465
    %v8482 = vadd.f32 %v8450, %v8466
    %v8483 = vadd.f32 %v8451, %v8467
    %v8484 = vadd.f32 %v8452, %v8468
    %v8485 = vadd.f32 %v8453, %v8469
    %v8486 = vadd.f32 %v8454, %v8470
    %v8487 = vadd.f32 %v8455, %v8471
    %v8488 = vadd.f32 %v8456, %v8472
    %v8489 = vadd.f32 %v8457, %v8473
    %v8490 = vadd.f32 %v8458, %v8474
    %v8491 = vadd.f32 %v8459, %v8475
    %v8492 = vadd.f32 %v8460, %v8476
    %v8493 = vadd.f32 %v8461, %v8477
    %v8494 = vadd.f32 %v8462, %v8478
    %v8495 = vadd.f32 %v8463, %v8479
    %v8496 = vadd.f32 %v8464, %v8480
    %v8497 = vpack.c.bf16 %v8482, %v8481
    %v8498 = vpack.c.bf16 %v8484, %v8483
    %v8499 = vpack.c.bf16 %v8486, %v8485
    %v8500 = vpack.c.bf16 %v8488, %v8487
    %v8501 = vpack.c.bf16 %v8490, %v8489
    %v8502 = vpack.c.bf16 %v8492, %v8491
    %v8503 = vpack.c.bf16 %v8494, %v8493
    %v8504 = vpack.c.bf16 %v8496, %v8495
    %8505 = vmatprep.subr.bf16.mxu0 0
    %8506 = vmatpush1.bf16.msra.mxu0 %v941
    %8507 = vmatprep.subr.bf16.mxu0 0
    %8508 = vmatpush1.bf16.msra.mxu0 %v942
    %8509 = vmatprep.subr.bf16.mxu0 0
    %8510 = vmatpush1.bf16.msra.mxu0 %v943
    %8511 = vmatprep.subr.bf16.mxu0 0
    %8512 = vmatpush1.bf16.msra.mxu0 %v944
    %8513 = vmatprep.subr.bf16.mxu0 0
    %8514 = vmatpush1.bf16.msra.mxu0 %v945
    %8515 = vmatprep.subr.bf16.mxu0 0
    %8516 = vmatpush1.bf16.msra.mxu0 %v946
    %8517 = vmatprep.subr.bf16.mxu0 0
    %8518 = vmatpush1.bf16.msra.mxu0 %v947
    %8519 = vmatprep.subr.bf16.mxu0 0
    %8520 = vmatpush1.bf16.msra.mxu0 %v948
    %8521 = vmatprep.subr.bf16.mxu0 0
    %8522 = vmatpush1.bf16.msra.mxu0 0
    %8523 = vmatprep.subr.bf16.mxu0 0
    %8524 = vmatpush1.bf16.msra.mxu0 0
    %8525 = vmatprep.subr.bf16.mxu0 0
    %8526 = vmatpush1.bf16.msra.mxu0 0
    %8527 = vmatprep.subr.bf16.mxu0 0
    %8528 = vmatpush1.bf16.msra.mxu0 0
    %8529 = vmatprep.subr.bf16.mxu0 0
    %8530 = vmatpush1.bf16.msra.mxu0 0
    %8531 = vmatprep.subr.bf16.mxu0 0
    %8532 = vmatpush1.bf16.msra.mxu0 0
    %8533 = vmatprep.subr.bf16.mxu0 0
    %8534 = vmatpush1.bf16.msra.mxu0 0
    %8535 = vmatprep.subr.bf16.mxu0 0
    %8536 = vmatpush1.bf16.msra.mxu0 0
    %8537 = vmatprep.mubr.bf16.mxu0 0
    %8538 = vmatmul.mubr.bf16.gmra.mrb[0].mxu0 %v8497
    %v8539 = vpop.f32.mrb[0].mxu0
    %v8540 = vadd.f32 %v907, %v8539
    %v8541 = vpop.f32.mrb[0].mxu0
    %v8542 = vpop.f32.mrb[0].mxu0
    %v8543 = vadd.f32 %v907, %v8542
    %v8544 = vpop.f32.mrb[0].mxu0
    %8545 = vmatprep.mubr.bf16.mxu0 0
    %8546 = vmatmul.mubr.bf16.gmra.mrb[0].mxu0 %v8498
    %v8547 = vpop.f32.mrb[0].mxu0
    %v8548 = vadd.f32 %v907, %v8547
    %v8549 = vpop.f32.mrb[0].mxu0
    %v8550 = vpop.f32.mrb[0].mxu0
    %v8551 = vadd.f32 %v907, %v8550
    %v8552 = vpop.f32.mrb[0].mxu0
    %8553 = vmatprep.mubr.bf16.mxu0 0
    %8554 = vmatmul.mubr.bf16.gmra.mrb[0].mxu0 %v8499
    %v8555 = vpop.f32.mrb[0].mxu0
    %v8556 = vadd.f32 %v907, %v8555
    %v8557 = vpop.f32.mrb[0].mxu0
    %v8558 = vpop.f32.mrb[0].mxu0
    %v8559 = vadd.f32 %v907, %v8558
    %v8560 = vpop.f32.mrb[0].mxu0
    %8561 = vmatprep.mubr.bf16.mxu0 0
    %8562 = vmatmul.mubr.bf16.gmra.mrb[0].mxu0 %v8500
    %v8563 = vpop.f32.mrb[0].mxu0
    %v8564 = vadd.f32 %v907, %v8563
    %v8565 = vpop.f32.mrb[0].mxu0
    %v8566 = vpop.f32.mrb[0].mxu0
    %v8567 = vadd.f32 %v907, %v8566
    %v8568 = vpop.f32.mrb[0].mxu0
    %8569 = vmatprep.mubr.bf16.mxu0 0
    %8570 = vmatmul.mubr.bf16.gmra.mrb[0].mxu0 %v8501
    %v8571 = vpop.f32.mrb[0].mxu0
    %v8572 = vadd.f32 %v907, %v8571
    %v8573 = vpop.f32.mrb[0].mxu0
    %v8574 = vpop.f32.mrb[0].mxu0
    %v8575 = vadd.f32 %v907, %v8574
    %v8576 = vpop.f32.mrb[0].mxu0
    %8577 = vmatprep.mubr.bf16.mxu0 0
    %8578 = vmatmul.mubr.bf16.gmra.mrb[0].mxu0 %v8502
    %v8579 = vpop.f32.mrb[0].mxu0
    %v8580 = vadd.f32 %v907, %v8579
    %v8581 = vpop.f32.mrb[0].mxu0
    %v8582 = vpop.f32.mrb[0].mxu0
    %v8583 = vadd.f32 %v907, %v8582
    %v8584 = vpop.f32.mrb[0].mxu0
    %8585 = vmatprep.mubr.bf16.mxu0 0
    %8586 = vmatmul.mubr.bf16.gmra.mrb[0].mxu0 %v8503
    %v8587 = vpop.f32.mrb[0].mxu0
    %v8588 = vadd.f32 %v907, %v8587
    %v8589 = vpop.f32.mrb[0].mxu0
    %v8590 = vpop.f32.mrb[0].mxu0
    %v8591 = vadd.f32 %v907, %v8590
    %v8592 = vpop.f32.mrb[0].mxu0
    %8593 = vmatprep.mubr.bf16.mxu0 0
    %8594 = vmatmul.mubr.bf16.gmra.mrb[0].mxu0 %v8504
    %v8595 = vpop.f32.mrb[0].mxu0
    %v8596 = vadd.f32 %v907, %v8595
    %v8597 = vpop.f32.mrb[0].mxu0
    %v8598 = vpop.f32.mrb[0].mxu0
    %v8599 = vadd.f32 %v907, %v8598
    %v8600 = vpop.f32.mrb[0].mxu0
    %8601 = vdwg.mxu0
    %v8602 = vmax.f32 %v8540, 0.0
    %v8603 = vmax.f32 %v8543, 0.0
    %v8604 = vmax.f32 %v8548, 0.0
    %v8605 = vmax.f32 %v8551, 0.0
    %v8606 = vmax.f32 %v8556, 0.0
    %v8607 = vmax.f32 %v8559, 0.0
    %v8608 = vmax.f32 %v8564, 0.0
    %v8609 = vmax.f32 %v8567, 0.0
    %v8610 = vmax.f32 %v8572, 0.0
    %v8611 = vmax.f32 %v8575, 0.0
    %v8612 = vmax.f32 %v8580, 0.0
    %v8613 = vmax.f32 %v8583, 0.0
    %v8614 = vmax.f32 %v8588, 0.0
    %v8615 = vmax.f32 %v8591, 0.0
    %v8616 = vmax.f32 %v8596, 0.0
    %v8617 = vmax.f32 %v8599, 0.0
    %v8618 = vpack.c.bf16 %v8603, %v8602
    %v8619 = vpack.c.bf16 %v8605, %v8604
    %v8620 = vpack.c.bf16 %v8607, %v8606
    %v8621 = vpack.c.bf16 %v8609, %v8608
    %v8622 = vpack.c.bf16 %v8611, %v8610
    %v8623 = vpack.c.bf16 %v8613, %v8612
    %v8624 = vpack.c.bf16 %v8615, %v8614
    %v8625 = vpack.c.bf16 %v8617, %v8616
    %8626 = vmatprep.subr.bf16.mxu0 0
    %8627 = vmatpush1.bf16.msra.mxu0 %v1116
    %8628 = vmatprep.subr.bf16.mxu0 0
    %8629 = vmatpush1.bf16.msra.mxu0 %v1117
    %8630 = vmatprep.subr.bf16.mxu0 0
    %8631 = vmatpush1.bf16.msra.mxu0 %v1118
    %8632 = vmatprep.subr.bf16.mxu0 0
    %8633 = vmatpush1.bf16.msra.mxu0 %v1119
    %8634 = vmatprep.subr.bf16.mxu0 0
    %8635 = vmatpush1.bf16.msra.mxu0 %v1120
    %8636 = vmatprep.subr.bf16.mxu0 0
    %8637 = vmatpush1.bf16.msra.mxu0 %v1121
    %8638 = vmatprep.subr.bf16.mxu0 0
    %8639 = vmatpush1.bf16.msra.mxu0 %v1122
    %8640 = vmatprep.subr.bf16.mxu0 0
    %8641 = vmatpush1.bf16.msra.mxu0 %v1123
    %8642 = vmatprep.subr.bf16.mxu0 0
    %8643 = vmatpush1.bf16.msra.mxu0 0
    %8644 = vmatprep.subr.bf16.mxu0 0
    %8645 = vmatpush1.bf16.msra.mxu0 0
    %8646 = vmatprep.subr.bf16.mxu0 0
    %8647 = vmatpush1.bf16.msra.mxu0 0
    %8648 = vmatprep.subr.bf16.mxu0 0
    %8649 = vmatpush1.bf16.msra.mxu0 0
    %8650 = vmatprep.subr.bf16.mxu0 0
    %8651 = vmatpush1.bf16.msra.mxu0 0
    %8652 = vmatprep.subr.bf16.mxu0 0
    %8653 = vmatpush1.bf16.msra.mxu0 0
    %8654 = vmatprep.subr.bf16.mxu0 0
    %8655 = vmatpush1.bf16.msra.mxu0 0
    %8656 = vmatprep.subr.bf16.mxu0 0
    %8657 = vmatpush1.bf16.msra.mxu0 0
    %8658 = vmatprep.mubr.bf16.mxu0 0
    %8659 = vmatmul.mubr.bf16.gmra.mrb[0].mxu0 %v8618
    %v8660 = vpop.f32.mrb[0].mxu0
    %v8661 = vadd.f32 %v1082, %v8660
    %v8662 = vpop.f32.mrb[0].mxu0
    %v8663 = vpop.f32.mrb[0].mxu0
    %v8664 = vadd.f32 %v1082, %v8663
    %v8665 = vpop.f32.mrb[0].mxu0
    %8666 = vmatprep.mubr.bf16.mxu0 0
    %8667 = vmatmul.mubr.bf16.gmra.mrb[0].mxu0 %v8619
    %v8668 = vpop.f32.mrb[0].mxu0
    %v8669 = vadd.f32 %v1082, %v8668
    %v8670 = vpop.f32.mrb[0].mxu0
    %v8671 = vpop.f32.mrb[0].mxu0
    %v8672 = vadd.f32 %v1082, %v8671
    %v8673 = vpop.f32.mrb[0].mxu0
    %8674 = vmatprep.mubr.bf16.mxu0 0
    %8675 = vmatmul.mubr.bf16.gmra.mrb[0].mxu0 %v8620
    %v8676 = vpop.f32.mrb[0].mxu0
    %v8677 = vadd.f32 %v1082, %v8676
    %v8678 = vpop.f32.mrb[0].mxu0
    %v8679 = vpop.f32.mrb[0].mxu0
    %v8680 = vadd.f32 %v1082, %v8679
    %v8681 = vpop.f32.mrb[0].mxu0
    %8682 = vmatprep.mubr.bf16.mxu0 0
    %8683 = vmatmul.mubr.bf16.gmra.mrb[0].mxu0 %v8621
    %v8684 = vpop.f32.mrb[0].mxu0
    %v8685 = vadd.f32 %v1082, %v8684
    %v8686 = vpop.f32.mrb[0].mxu0
    %v8687 = vpop.f32.mrb[0].mxu0
    %v8688 = vadd.f32 %v1082, %v8687
    %v8689 = vpop.f32.mrb[0].mxu0
    %8690 = vmatprep.mubr.bf16.mxu0 0
    %8691 = vmatmul.mubr.bf16.gmra.mrb[0].mxu0 %v8622
    %v8692 = vpop.f32.mrb[0].mxu0
    %v8693 = vadd.f32 %v1082, %v8692
    %v8694 = vpop.f32.mrb[0].mxu0
    %v8695 = vpop.f32.mrb[0].mxu0
    %v8696 = vadd.f32 %v1082, %v8695
    %v8697 = vpop.f32.mrb[0].mxu0
    %8698 = vmatprep.mubr.bf16.mxu0 0
    %8699 = vmatmul.mubr.bf16.gmra.mrb[0].mxu0 %v8623
    %v8700 = vpop.f32.mrb[0].mxu0
    %v8701 = vadd.f32 %v1082, %v8700
    %v8702 = vpop.f32.mrb[0].mxu0
    %v8703 = vpop.f32.mrb[0].mxu0
    %v8704 = vadd.f32 %v1082, %v8703
    %v8705 = vpop.f32.mrb[0].mxu0
    %8706 = vmatprep.mubr.bf16.mxu0 0
    %8707 = vmatmul.mubr.bf16.gmra.mrb[0].mxu0 %v8624
    %v8708 = vpop.f32.mrb[0].mxu0
    %v8709 = vadd.f32 %v1082, %v8708
    %v8710 = vpop.f32.mrb[0].mxu0
    %v8711 = vpop.f32.mrb[0].mxu0
    %v8712 = vadd.f32 %v1082, %v8711
    %v8713 = vpop.f32.mrb[0].mxu0
    %8714 = vmatprep.mubr.bf16.mxu0 0
    %8715 = vmatmul.mubr.bf16.gmra.mrb[0].mxu0 %v8625
    %v8716 = vpop.f32.mrb[0].mxu0
    %v8717 = vadd.f32 %v1082, %v8716
    %v8718 = vpop.f32.mrb[0].mxu0
    %v8719 = vpop.f32.mrb[0].mxu0
    %v8720 = vadd.f32 %v1082, %v8719
    %v8721 = vpop.f32.mrb[0].mxu0
    %8722 = vdwg.mxu0
    %v8723 = vpack.c.bf16 %v8664, %v8661
    %v8724 = vpack.c.bf16 %v8672, %v8669
    %v8725 = vpack.c.bf16 %v8680, %v8677
    %v8726 = vpack.c.bf16 %v8688, %v8685
    %v8727 = vpack.c.bf16 %v8696, %v8693
    %v8728 = vpack.c.bf16 %v8704, %v8701
    %v8729 = vpack.c.bf16 %v8712, %v8709
    %v8730 = vpack.c.bf16 %v8720, %v8717
    %8731 = vmatprep.subr.bf16.mxu0 0
    %8732 = vmatpush1.bf16.msra.mxu0 %v8723
    %8733 = vmatprep.subr.bf16.mxu0 0
    %8734 = vmatpush1.bf16.msra.mxu0 %v8724
    %8735 = vmatprep.subr.bf16.mxu0 0
    %8736 = vmatpush1.bf16.msra.mxu0 %v8725
    %8737 = vmatprep.subr.bf16.mxu0 0
    %8738 = vmatpush1.bf16.msra.mxu0 %v8726
    %8739 = vmatprep.subr.bf16.mxu0 0
    %8740 = vmatpush1.bf16.msra.mxu0 %v8727
    %8741 = vmatprep.subr.bf16.mxu0 0
    %8742 = vmatpush1.bf16.msra.mxu0 %v8728
    %8743 = vmatprep.subr.bf16.mxu0 0
    %8744 = vmatpush1.bf16.msra.mxu0 %v8729
    %8745 = vmatprep.subr.bf16.mxu0 0
    %8746 = vmatpush1.bf16.msra.mxu0 %v8730
    %8747 = vmatprep.subr.bf16.mxu0 0
    %8748 = vmatpush1.bf16.msra.mxu0 0
    %8749 = vmatprep.subr.bf16.mxu0 0
    %8750 = vmatpush1.bf16.msra.mxu0 0
    %8751 = vmatprep.subr.bf16.mxu0 0
    %8752 = vmatpush1.bf16.msra.mxu0 0
    %8753 = vmatprep.subr.bf16.mxu0 0
    %8754 = vmatpush1.bf16.msra.mxu0 0
    %8755 = vmatprep.subr.bf16.mxu0 0
    %8756 = vmatpush1.bf16.msra.mxu0 0
    %8757 = vmatprep.subr.bf16.mxu0 0
    %8758 = vmatpush1.bf16.msra.mxu0 0
    %8759 = vmatprep.subr.bf16.mxu0 0
    %8760 = vmatpush1.bf16.msra.mxu0 0
    %8761 = vmatprep.subr.bf16.mxu0 0
    %8762 = vmatpush1.bf16.msra.mxu0 0
    %8763 = vmatprep.mubr.bf16.mxu0 0
    %8764 = vmatmul.mubr.bf16.gmra.mrb[0].mxu0 %v1269
    %v8765 = vpop.f32.mrb[0].mxu0
    %v8766 = vadd.f32 0.0, %v8765
    %v8767 = vpop.f32.mrb[0].mxu0
    %v8768 = vpop.f32.mrb[0].mxu0
    %v8769 = vadd.f32 0.0, %v8768
    %v8770 = vpop.f32.mrb[0].mxu0
    %8771 = vmatprep.mubr.bf16.mxu0 0
    %8772 = vmatmul.mubr.bf16.gmra.mrb[0].mxu0 %v1270
    %v8773 = vpop.f32.mrb[0].mxu0
    %v8774 = vadd.f32 0.0, %v8773
    %v8775 = vpop.f32.mrb[0].mxu0
    %v8776 = vpop.f32.mrb[0].mxu0
    %v8777 = vadd.f32 0.0, %v8776
    %v8778 = vpop.f32.mrb[0].mxu0
    %8779 = vmatprep.mubr.bf16.mxu0 0
    %8780 = vmatmul.mubr.bf16.gmra.mrb[0].mxu0 %v1271
    %v8781 = vpop.f32.mrb[0].mxu0
    %v8782 = vadd.f32 0.0, %v8781
    %v8783 = vpop.f32.mrb[0].mxu0
    %v8784 = vpop.f32.mrb[0].mxu0
    %v8785 = vadd.f32 0.0, %v8784
    %v8786 = vpop.f32.mrb[0].mxu0
    %8787 = vmatprep.mubr.bf16.mxu0 0
    %8788 = vmatmul.mubr.bf16.gmra.mrb[0].mxu0 %v1272
    %v8789 = vpop.f32.mrb[0].mxu0
    %v8790 = vadd.f32 0.0, %v8789
    %v8791 = vpop.f32.mrb[0].mxu0
    %v8792 = vpop.f32.mrb[0].mxu0
    %v8793 = vadd.f32 0.0, %v8792
    %v8794 = vpop.f32.mrb[0].mxu0
    %8795 = vmatprep.mubr.bf16.mxu0 0
    %8796 = vmatmul.mubr.bf16.gmra.mrb[0].mxu0 %v1273
    %v8797 = vpop.f32.mrb[0].mxu0
    %v8798 = vadd.f32 0.0, %v8797
    %v8799 = vpop.f32.mrb[0].mxu0
    %v8800 = vpop.f32.mrb[0].mxu0
    %v8801 = vadd.f32 0.0, %v8800
    %v8802 = vpop.f32.mrb[0].mxu0
    %8803 = vmatprep.mubr.bf16.mxu0 0
    %8804 = vmatmul.mubr.bf16.gmra.mrb[0].mxu0 %v1274
    %v8805 = vpop.f32.mrb[0].mxu0
    %v8806 = vadd.f32 0.0, %v8805
    %v8807 = vpop.f32.mrb[0].mxu0
    %v8808 = vpop.f32.mrb[0].mxu0
    %v8809 = vadd.f32 0.0, %v8808
    %v8810 = vpop.f32.mrb[0].mxu0
    %8811 = vmatprep.mubr.bf16.mxu0 0
    %8812 = vmatmul.mubr.bf16.gmra.mrb[0].mxu0 %v1275
    %v8813 = vpop.f32.mrb[0].mxu0
    %v8814 = vadd.f32 0.0, %v8813
    %v8815 = vpop.f32.mrb[0].mxu0
    %v8816 = vpop.f32.mrb[0].mxu0
    %v8817 = vadd.f32 0.0, %v8816
    %v8818 = vpop.f32.mrb[0].mxu0
    %8819 = vmatprep.mubr.bf16.mxu0 0
    %8820 = vmatmul.mubr.bf16.gmra.mrb[0].mxu0 %v1276
    %v8821 = vpop.f32.mrb[0].mxu0
    %v8822 = vadd.f32 0.0, %v8821
    %v8823 = vpop.f32.mrb[0].mxu0
    %v8824 = vpop.f32.mrb[0].mxu0
    %v8825 = vadd.f32 0.0, %v8824
    %v8826 = vpop.f32.mrb[0].mxu0
    %8827 = vdwg.mxu0
    %v8828 = vpack.c.bf16 %v8769, %v8766
    %v8829 = vpack.c.bf16 %v8777, %v8774
    %v8830 = vpack.c.bf16 %v8785, %v8782
    %v8831 = vpack.c.bf16 %v8793, %v8790
    %v8832 = vpack.c.bf16 %v8801, %v8798
    %v8833 = vpack.c.bf16 %v8809, %v8806
    %v8834 = vpack.c.bf16 %v8817, %v8814
    %v8835 = vpack.c.bf16 %v8825, %v8822
    %8836 = vmatprep.subr.bf16.mxu0 %v1487
    %8837 = vmatpush1.bf16.msra.mxu0 %v1486
    %8838 = vmatprep.subr.bf16.mxu0 %v1490
    %8839 = vmatpush1.bf16.msra.mxu0 %v1489
    %8840 = vmatprep.subr.bf16.mxu0 %v1493
    %8841 = vmatpush1.bf16.msra.mxu0 %v1492
    %8842 = vmatprep.subr.bf16.mxu0 %v1496
    %8843 = vmatpush1.bf16.msra.mxu0 %v1495
    %8844 = vmatprep.subr.bf16.mxu0 %v1499
    %8845 = vmatpush1.bf16.msra.mxu0 %v1498
    %8846 = vmatprep.subr.bf16.mxu0 %v1502
    %8847 = vmatpush1.bf16.msra.mxu0 %v1501
    %8848 = vmatprep.subr.bf16.mxu0 %v1505
    %8849 = vmatpush1.bf16.msra.mxu0 %v1504
    %8850 = vmatprep.subr.bf16.mxu0 %v1508
    %8851 = vmatpush1.bf16.msra.mxu0 %v1507
    %8852 = vmatprep.subr.bf16.mxu0 0
    %8853 = vmatpush1.bf16.msra.mxu0 0
    %8854 = vmatprep.subr.bf16.mxu0 0
    %8855 = vmatpush1.bf16.msra.mxu0 0
    %8856 = vmatprep.subr.bf16.mxu0 0
    %8857 = vmatpush1.bf16.msra.mxu0 0
    %8858 = vmatprep.subr.bf16.mxu0 0
    %8859 = vmatpush1.bf16.msra.mxu0 0
    %8860 = vmatprep.subr.bf16.mxu0 0
    %8861 = vmatpush1.bf16.msra.mxu0 0
    %8862 = vmatprep.subr.bf16.mxu0 0
    %8863 = vmatpush1.bf16.msra.mxu0 0
    %8864 = vmatprep.subr.bf16.mxu0 0
    %8865 = vmatpush1.bf16.msra.mxu0 0
    %8866 = vmatprep.subr.bf16.mxu0 0
    %8867 = vmatpush1.bf16.msra.mxu0 0
    %8868 = vmatprep.mubr.bf16.mxu0 0
    %8869 = vmatmul.mubr.bf16.gmra.mrb[0].mxu0 %v8828
    %v8870 = vpop.f32.mrb[0].mxu0
    %v8871 = vadd.f32 %v1394, %v8870
    %v8872 = vpop.f32.mrb[0].mxu0
    %v8873 = vadd.f32 %v1398, %v8872
    %v8874 = vpop.f32.mrb[0].mxu0
    %v8875 = vadd.f32 %v1394, %v8874
    %v8876 = vpop.f32.mrb[0].mxu0
    %v8877 = vadd.f32 %v1398, %v8876
    %8878 = vmatprep.mubr.bf16.mxu0 0
    %8879 = vmatmul.mubr.bf16.gmra.mrb[0].mxu0 %v8829
    %v8880 = vpop.f32.mrb[0].mxu0
    %v8881 = vadd.f32 %v1394, %v8880
    %v8882 = vpop.f32.mrb[0].mxu0
    %v8883 = vadd.f32 %v1398, %v8882
    %v8884 = vpop.f32.mrb[0].mxu0
    %v8885 = vadd.f32 %v1394, %v8884
    %v8886 = vpop.f32.mrb[0].mxu0
    %v8887 = vadd.f32 %v1398, %v8886
    %8888 = vmatprep.mubr.bf16.mxu0 0
    %8889 = vmatmul.mubr.bf16.gmra.mrb[0].mxu0 %v8830
    %v8890 = vpop.f32.mrb[0].mxu0
    %v8891 = vadd.f32 %v1394, %v8890
    %v8892 = vpop.f32.mrb[0].mxu0
    %v8893 = vadd.f32 %v1398, %v8892
    %v8894 = vpop.f32.mrb[0].mxu0
    %v8895 = vadd.f32 %v1394, %v8894
    %v8896 = vpop.f32.mrb[0].mxu0
    %v8897 = vadd.f32 %v1398, %v8896
    %8898 = vmatprep.mubr.bf16.mxu0 0
    %8899 = vmatmul.mubr.bf16.gmra.mrb[0].mxu0 %v8831
    %v8900 = vpop.f32.mrb[0].mxu0
    %v8901 = vadd.f32 %v1394, %v8900
    %v8902 = vpop.f32.mrb[0].mxu0
    %v8903 = vadd.f32 %v1398, %v8902
    %v8904 = vpop.f32.mrb[0].mxu0
    %v8905 = vadd.f32 %v1394, %v8904
    %v8906 = vpop.f32.mrb[0].mxu0
    %v8907 = vadd.f32 %v1398, %v8906
    %8908 = vmatprep.mubr.bf16.mxu0 0
    %8909 = vmatmul.mubr.bf16.gmra.mrb[0].mxu0 %v8832
    %v8910 = vpop.f32.mrb[0].mxu0
    %v8911 = vadd.f32 %v1394, %v8910
    %v8912 = vpop.f32.mrb[0].mxu0
    %v8913 = vadd.f32 %v1398, %v8912
    %v8914 = vpop.f32.mrb[0].mxu0
    %v8915 = vadd.f32 %v1394, %v8914
    %v8916 = vpop.f32.mrb[0].mxu0
    %v8917 = vadd.f32 %v1398, %v8916
    %8918 = vmatprep.mubr.bf16.mxu0 0
    %8919 = vmatmul.mubr.bf16.gmra.mrb[0].mxu0 %v8833
    %v8920 = vpop.f32.mrb[0].mxu0
    %v8921 = vadd.f32 %v1394, %v8920
    %v8922 = vpop.f32.mrb[0].mxu0
    %v8923 = vadd.f32 %v1398, %v8922
    %v8924 = vpop.f32.mrb[0].mxu0
    %v8925 = vadd.f32 %v1394, %v8924
    %v8926 = vpop.f32.mrb[0].mxu0
    %v8927 = vadd.f32 %v1398, %v8926
    %8928 = vmatprep.mubr.bf16.mxu0 0
    %8929 = vmatmul.mubr.bf16.gmra.mrb[0].mxu0 %v8834
    %v8930 = vpop.f32.mrb[0].mxu0
    %v8931 = vadd.f32 %v1394, %v8930
    %v8932 = vpop.f32.mrb[0].mxu0
    %v8933 = vadd.f32 %v1398, %v8932
    %v8934 = vpop.f32.mrb[0].mxu0
    %v8935 = vadd.f32 %v1394, %v8934
    %v8936 = vpop.f32.mrb[0].mxu0
    %v8937 = vadd.f32 %v1398, %v8936
    %8938 = vmatprep.mubr.bf16.mxu0 0
    %8939 = vmatmul.mubr.bf16.gmra.mrb[0].mxu0 %v8835
    %v8940 = vpop.f32.mrb[0].mxu0
    %v8941 = vadd.f32 %v1394, %v8940
    %v8942 = vpop.f32.mrb[0].mxu0
    %v8943 = vadd.f32 %v1398, %v8942
    %v8944 = vpop.f32.mrb[0].mxu0
    %v8945 = vadd.f32 %v1394, %v8944
    %v8946 = vpop.f32.mrb[0].mxu0
    %v8947 = vadd.f32 %v1398, %v8946
    %8948 = vdwg.mxu0
    %8949 = vmatprep.subr.bf16.mxu0 0
    %8950 = vmatpush1.bf16.msra.mxu0 %v1488
    %8951 = vmatprep.subr.bf16.mxu0 0
    %8952 = vmatpush1.bf16.msra.mxu0 %v1491
    %8953 = vmatprep.subr.bf16.mxu0 0
    %8954 = vmatpush1.bf16.msra.mxu0 %v1494
    %8955 = vmatprep.subr.bf16.mxu0 0
    %8956 = vmatpush1.bf16.msra.mxu0 %v1497
    %8957 = vmatprep.subr.bf16.mxu0 0
    %8958 = vmatpush1.bf16.msra.mxu0 %v1500
    %8959 = vmatprep.subr.bf16.mxu0 0
    %8960 = vmatpush1.bf16.msra.mxu0 %v1503
    %8961 = vmatprep.subr.bf16.mxu0 0
    %8962 = vmatpush1.bf16.msra.mxu0 %v1506
    %8963 = vmatprep.subr.bf16.mxu0 0
    %8964 = vmatpush1.bf16.msra.mxu0 %v1509
    %8965 = vmatprep.subr.bf16.mxu0 0
    %8966 = vmatpush1.bf16.msra.mxu0 0
    %8967 = vmatprep.subr.bf16.mxu0 0
    %8968 = vmatpush1.bf16.msra.mxu0 0
    %8969 = vmatprep.subr.bf16.mxu0 0
    %8970 = vmatpush1.bf16.msra.mxu0 0
    %8971 = vmatprep.subr.bf16.mxu0 0
    %8972 = vmatpush1.bf16.msra.mxu0 0
    %8973 = vmatprep.subr.bf16.mxu0 0
    %8974 = vmatpush1.bf16.msra.mxu0 0
    %8975 = vmatprep.subr.bf16.mxu0 0
    %8976 = vmatpush1.bf16.msra.mxu0 0
    %8977 = vmatprep.subr.bf16.mxu0 0
    %8978 = vmatpush1.bf16.msra.mxu0 0
    %8979 = vmatprep.subr.bf16.mxu0 0
    %8980 = vmatpush1.bf16.msra.mxu0 0
    %8981 = vmatprep.mubr.bf16.mxu0 0
    %8982 = vmatmul.mubr.bf16.gmra.mrb[0].mxu0 %v8828
    %v8983 = vpop.f32.mrb[0].mxu0
    %v8984 = vadd.f32 %v1402, %v8983
    %v8985 = vpop.f32.mrb[0].mxu0
    %v8986 = vpop.f32.mrb[0].mxu0
    %v8987 = vadd.f32 %v1402, %v8986
    %v8988 = vpop.f32.mrb[0].mxu0
    %8989 = vmatprep.mubr.bf16.mxu0 0
    %8990 = vmatmul.mubr.bf16.gmra.mrb[0].mxu0 %v8829
    %v8991 = vpop.f32.mrb[0].mxu0
    %v8992 = vadd.f32 %v1402, %v8991
    %v8993 = vpop.f32.mrb[0].mxu0
    %v8994 = vpop.f32.mrb[0].mxu0
    %v8995 = vadd.f32 %v1402, %v8994
    %v8996 = vpop.f32.mrb[0].mxu0
    %8997 = vmatprep.mubr.bf16.mxu0 0
    %8998 = vmatmul.mubr.bf16.gmra.mrb[0].mxu0 %v8830
    %v8999 = vpop.f32.mrb[0].mxu0
    %v9000 = vadd.f32 %v1402, %v8999
    %v9001 = vpop.f32.mrb[0].mxu0
    %v9002 = vpop.f32.mrb[0].mxu0
    %v9003 = vadd.f32 %v1402, %v9002
    %v9004 = vpop.f32.mrb[0].mxu0
    %9005 = vmatprep.mubr.bf16.mxu0 0
    %9006 = vmatmul.mubr.bf16.gmra.mrb[0].mxu0 %v8831
    %v9007 = vpop.f32.mrb[0].mxu0
    %v9008 = vadd.f32 %v1402, %v9007
    %v9009 = vpop.f32.mrb[0].mxu0
    %v9010 = vpop.f32.mrb[0].mxu0
    %v9011 = vadd.f32 %v1402, %v9010
    %v9012 = vpop.f32.mrb[0].mxu0
    %9013 = vmatprep.mubr.bf16.mxu0 0
    %9014 = vmatmul.mubr.bf16.gmra.mrb[0].mxu0 %v8832
    %v9015 = vpop.f32.mrb[0].mxu0
    %v9016 = vadd.f32 %v1402, %v9015
    %v9017 = vpop.f32.mrb[0].mxu0
    %v9018 = vpop.f32.mrb[0].mxu0
    %v9019 = vadd.f32 %v1402, %v9018
    %v9020 = vpop.f32.mrb[0].mxu0
    %9021 = vmatprep.mubr.bf16.mxu0 0
    %9022 = vmatmul.mubr.bf16.gmra.mrb[0].mxu0 %v8833
    %v9023 = vpop.f32.mrb[0].mxu0
    %v9024 = vadd.f32 %v1402, %v9023
    %v9025 = vpop.f32.mrb[0].mxu0
    %v9026 = vpop.f32.mrb[0].mxu0
    %v9027 = vadd.f32 %v1402, %v9026
    %v9028 = vpop.f32.mrb[0].mxu0
    %9029 = vmatprep.mubr.bf16.mxu0 0
    %9030 = vmatmul.mubr.bf16.gmra.mrb[0].mxu0 %v8834
    %v9031 = vpop.f32.mrb[0].mxu0
    %v9032 = vadd.f32 %v1402, %v9031
    %v9033 = vpop.f32.mrb[0].mxu0
    %v9034 = vpop.f32.mrb[0].mxu0
    %v9035 = vadd.f32 %v1402, %v9034
    %v9036 = vpop.f32.mrb[0].mxu0
    %9037 = vmatprep.mubr.bf16.mxu0 0
    %9038 = vmatmul.mubr.bf16.gmra.mrb[0].mxu0 %v8835
    %v9039 = vpop.f32.mrb[0].mxu0
    %v9040 = vadd.f32 %v1402, %v9039
    %v9041 = vpop.f32.mrb[0].mxu0
    %v9042 = vpop.f32.mrb[0].mxu0
    %v9043 = vadd.f32 %v1402, %v9042
    %v9044 = vpop.f32.mrb[0].mxu0
    %9045 = vdwg.mxu0
    %9046 = vmatprep.subr.bf16.mxu0 %v1841
    %9047 = vmatpush1.bf16.msra.mxu0 %v1840
    %9048 = vmatprep.subr.bf16.mxu0 %v1844
    %9049 = vmatpush1.bf16.msra.mxu0 %v1843
    %9050 = vmatprep.subr.bf16.mxu0 %v1847
    %9051 = vmatpush1.bf16.msra.mxu0 %v1846
    %9052 = vmatprep.subr.bf16.mxu0 %v1850
    %9053 = vmatpush1.bf16.msra.mxu0 %v1849
    %9054 = vmatprep.subr.bf16.mxu0 %v1853
    %9055 = vmatpush1.bf16.msra.mxu0 %v1852
    %9056 = vmatprep.subr.bf16.mxu0 %v1856
    %9057 = vmatpush1.bf16.msra.mxu0 %v1855
    %9058 = vmatprep.subr.bf16.mxu0 %v1859
    %9059 = vmatpush1.bf16.msra.mxu0 %v1858
    %9060 = vmatprep.subr.bf16.mxu0 %v1862
    %9061 = vmatpush1.bf16.msra.mxu0 %v1861
    %9062 = vmatprep.subr.bf16.mxu0 0
    %9063 = vmatpush1.bf16.msra.mxu0 0
    %9064 = vmatprep.subr.bf16.mxu0 0
    %9065 = vmatpush1.bf16.msra.mxu0 0
    %9066 = vmatprep.subr.bf16.mxu0 0
    %9067 = vmatpush1.bf16.msra.mxu0 0
    %9068 = vmatprep.subr.bf16.mxu0 0
    %9069 = vmatpush1.bf16.msra.mxu0 0
    %9070 = vmatprep.subr.bf16.mxu0 0
    %9071 = vmatpush1.bf16.msra.mxu0 0
    %9072 = vmatprep.subr.bf16.mxu0 0
    %9073 = vmatpush1.bf16.msra.mxu0 0
    %9074 = vmatprep.subr.bf16.mxu0 0
    %9075 = vmatpush1.bf16.msra.mxu0 0
    %9076 = vmatprep.subr.bf16.mxu0 0
    %9077 = vmatpush1.bf16.msra.mxu0 0
    %9078 = vmatprep.mubr.bf16.mxu0 0
    %9079 = vmatmul.mubr.bf16.gmra.mrb[0].mxu0 %v8497
    %v9080 = vpop.f32.mrb[0].mxu0
    %v9081 = vadd.f32 %v1748, %v9080
    %v9082 = vpop.f32.mrb[0].mxu0
    %v9083 = vadd.f32 %v1752, %v9082
    %v9084 = vpop.f32.mrb[0].mxu0
    %v9085 = vadd.f32 %v1748, %v9084
    %v9086 = vpop.f32.mrb[0].mxu0
    %v9087 = vadd.f32 %v1752, %v9086
    %9088 = vmatprep.mubr.bf16.mxu0 0
    %9089 = vmatmul.mubr.bf16.gmra.mrb[0].mxu0 %v8498
    %v9090 = vpop.f32.mrb[0].mxu0
    %v9091 = vadd.f32 %v1748, %v9090
    %v9092 = vpop.f32.mrb[0].mxu0
    %v9093 = vadd.f32 %v1752, %v9092
    %v9094 = vpop.f32.mrb[0].mxu0
    %v9095 = vadd.f32 %v1748, %v9094
    %v9096 = vpop.f32.mrb[0].mxu0
    %v9097 = vadd.f32 %v1752, %v9096
    %9098 = vmatprep.mubr.bf16.mxu0 0
    %9099 = vmatmul.mubr.bf16.gmra.mrb[0].mxu0 %v8499
    %v9100 = vpop.f32.mrb[0].mxu0
    %v9101 = vadd.f32 %v1748, %v9100
    %v9102 = vpop.f32.mrb[0].mxu0
    %v9103 = vadd.f32 %v1752, %v9102
    %v9104 = vpop.f32.mrb[0].mxu0
    %v9105 = vadd.f32 %v1748, %v9104
    %v9106 = vpop.f32.mrb[0].mxu0
    %v9107 = vadd.f32 %v1752, %v9106
    %9108 = vmatprep.mubr.bf16.mxu0 0
    %9109 = vmatmul.mubr.bf16.gmra.mrb[0].mxu0 %v8500
    %v9110 = vpop.f32.mrb[0].mxu0
    %v9111 = vadd.f32 %v1748, %v9110
    %v9112 = vpop.f32.mrb[0].mxu0
    %v9113 = vadd.f32 %v1752, %v9112
    %v9114 = vpop.f32.mrb[0].mxu0
    %v9115 = vadd.f32 %v1748, %v9114
    %v9116 = vpop.f32.mrb[0].mxu0
    %v9117 = vadd.f32 %v1752, %v9116
    %9118 = vmatprep.mubr.bf16.mxu0 0
    %9119 = vmatmul.mubr.bf16.gmra.mrb[0].mxu0 %v8501
    %v9120 = vpop.f32.mrb[0].mxu0
    %v9121 = vadd.f32 %v1748, %v9120
    %v9122 = vpop.f32.mrb[0].mxu0
    %v9123 = vadd.f32 %v1752, %v9122
    %v9124 = vpop.f32.mrb[0].mxu0
    %v9125 = vadd.f32 %v1748, %v9124
    %v9126 = vpop.f32.mrb[0].mxu0
    %v9127 = vadd.f32 %v1752, %v9126
    %9128 = vmatprep.mubr.bf16.mxu0 0
    %9129 = vmatmul.mubr.bf16.gmra.mrb[0].mxu0 %v8502
    %v9130 = vpop.f32.mrb[0].mxu0
    %v9131 = vadd.f32 %v1748, %v9130
    %v9132 = vpop.f32.mrb[0].mxu0
    %v9133 = vadd.f32 %v1752, %v9132
    %v9134 = vpop.f32.mrb[0].mxu0
    %v9135 = vadd.f32 %v1748, %v9134
    %v9136 = vpop.f32.mrb[0].mxu0
    %v9137 = vadd.f32 %v1752, %v9136
    %9138 = vmatprep.mubr.bf16.mxu0 0
    %9139 = vmatmul.mubr.bf16.gmra.mrb[0].mxu0 %v8503
    %v9140 = vpop.f32.mrb[0].mxu0
    %v9141 = vadd.f32 %v1748, %v9140
    %v9142 = vpop.f32.mrb[0].mxu0
    %v9143 = vadd.f32 %v1752, %v9142
    %v9144 = vpop.f32.mrb[0].mxu0
    %v9145 = vadd.f32 %v1748, %v9144
    %v9146 = vpop.f32.mrb[0].mxu0
    %v9147 = vadd.f32 %v1752, %v9146
    %9148 = vmatprep.mubr.bf16.mxu0 0
    %9149 = vmatmul.mubr.bf16.gmra.mrb[0].mxu0 %v8504
    %v9150 = vpop.f32.mrb[0].mxu0
    %v9151 = vadd.f32 %v1748, %v9150
    %v9152 = vpop.f32.mrb[0].mxu0
    %v9153 = vadd.f32 %v1752, %v9152
    %v9154 = vpop.f32.mrb[0].mxu0
    %v9155 = vadd.f32 %v1748, %v9154
    %v9156 = vpop.f32.mrb[0].mxu0
    %v9157 = vadd.f32 %v1752, %v9156
    %9158 = vdwg.mxu0
    %9159 = vmatprep.subr.bf16.mxu0 0
    %9160 = vmatpush1.bf16.msra.mxu0 %v1842
    %9161 = vmatprep.subr.bf16.mxu0 0
    %9162 = vmatpush1.bf16.msra.mxu0 %v1845
    %9163 = vmatprep.subr.bf16.mxu0 0
    %9164 = vmatpush1.bf16.msra.mxu0 %v1848
    %9165 = vmatprep.subr.bf16.mxu0 0
    %9166 = vmatpush1.bf16.msra.mxu0 %v1851
    %9167 = vmatprep.subr.bf16.mxu0 0
    %9168 = vmatpush1.bf16.msra.mxu0 %v1854
    %9169 = vmatprep.subr.bf16.mxu0 0
    %9170 = vmatpush1.bf16.msra.mxu0 %v1857
    %9171 = vmatprep.subr.bf16.mxu0 0
    %9172 = vmatpush1.bf16.msra.mxu0 %v1860
    %9173 = vmatprep.subr.bf16.mxu0 0
    %9174 = vmatpush1.bf16.msra.mxu0 %v1863
    %9175 = vmatprep.subr.bf16.mxu0 0
    %9176 = vmatpush1.bf16.msra.mxu0 0
    %9177 = vmatprep.subr.bf16.mxu0 0
    %9178 = vmatpush1.bf16.msra.mxu0 0
    %9179 = vmatprep.subr.bf16.mxu0 0
    %9180 = vmatpush1.bf16.msra.mxu0 0
    %9181 = vmatprep.subr.bf16.mxu0 0
    %9182 = vmatpush1.bf16.msra.mxu0 0
    %9183 = vmatprep.subr.bf16.mxu0 0
    %9184 = vmatpush1.bf16.msra.mxu0 0
    %9185 = vmatprep.subr.bf16.mxu0 0
    %9186 = vmatpush1.bf16.msra.mxu0 0
    %9187 = vmatprep.subr.bf16.mxu0 0
    %9188 = vmatpush1.bf16.msra.mxu0 0
    %9189 = vmatprep.subr.bf16.mxu0 0
    %9190 = vmatpush1.bf16.msra.mxu0 0
    %9191 = vmatprep.mubr.bf16.mxu0 0
    %9192 = vmatmul.mubr.bf16.gmra.mrb[0].mxu0 %v8497
    %v9193 = vpop.f32.mrb[0].mxu0
    %v9194 = vadd.f32 %v1756, %v9193
    %v9195 = vpop.f32.mrb[0].mxu0
    %v9196 = vpop.f32.mrb[0].mxu0
    %v9197 = vadd.f32 %v1756, %v9196
    %v9198 = vpop.f32.mrb[0].mxu0
    %9199 = vmatprep.mubr.bf16.mxu0 0
    %9200 = vmatmul.mubr.bf16.gmra.mrb[0].mxu0 %v8498
    %v9201 = vpop.f32.mrb[0].mxu0
    %v9202 = vadd.f32 %v1756, %v9201
    %v9203 = vpop.f32.mrb[0].mxu0
    %v9204 = vpop.f32.mrb[0].mxu0
    %v9205 = vadd.f32 %v1756, %v9204
    %v9206 = vpop.f32.mrb[0].mxu0
    %9207 = vmatprep.mubr.bf16.mxu0 0
    %9208 = vmatmul.mubr.bf16.gmra.mrb[0].mxu0 %v8499
    %v9209 = vpop.f32.mrb[0].mxu0
    %v9210 = vadd.f32 %v1756, %v9209
    %v9211 = vpop.f32.mrb[0].mxu0
    %v9212 = vpop.f32.mrb[0].mxu0
    %v9213 = vadd.f32 %v1756, %v9212
    %v9214 = vpop.f32.mrb[0].mxu0
    %9215 = vmatprep.mubr.bf16.mxu0 0
    %9216 = vmatmul.mubr.bf16.gmra.mrb[0].mxu0 %v8500
    %v9217 = vpop.f32.mrb[0].mxu0
    %v9218 = vadd.f32 %v1756, %v9217
    %v9219 = vpop.f32.mrb[0].mxu0
    %v9220 = vpop.f32.mrb[0].mxu0
    %v9221 = vadd.f32 %v1756, %v9220
    %v9222 = vpop.f32.mrb[0].mxu0
    %9223 = vmatprep.mubr.bf16.mxu0 0
    %9224 = vmatmul.mubr.bf16.gmra.mrb[0].mxu0 %v8501
    %v9225 = vpop.f32.mrb[0].mxu0
    %v9226 = vadd.f32 %v1756, %v9225
    %v9227 = vpop.f32.mrb[0].mxu0
    %v9228 = vpop.f32.mrb[0].mxu0
    %v9229 = vadd.f32 %v1756, %v9228
    %v9230 = vpop.f32.mrb[0].mxu0
    %9231 = vmatprep.mubr.bf16.mxu0 0
    %9232 = vmatmul.mubr.bf16.gmra.mrb[0].mxu0 %v8502
    %v9233 = vpop.f32.mrb[0].mxu0
    %v9234 = vadd.f32 %v1756, %v9233
    %v9235 = vpop.f32.mrb[0].mxu0
    %v9236 = vpop.f32.mrb[0].mxu0
    %v9237 = vadd.f32 %v1756, %v9236
    %v9238 = vpop.f32.mrb[0].mxu0
    %9239 = vmatprep.mubr.bf16.mxu0 0
    %9240 = vmatmul.mubr.bf16.gmra.mrb[0].mxu0 %v8503
    %v9241 = vpop.f32.mrb[0].mxu0
    %v9242 = vadd.f32 %v1756, %v9241
    %v9243 = vpop.f32.mrb[0].mxu0
    %v9244 = vpop.f32.mrb[0].mxu0
    %v9245 = vadd.f32 %v1756, %v9244
    %v9246 = vpop.f32.mrb[0].mxu0
    %9247 = vmatprep.mubr.bf16.mxu0 0
    %9248 = vmatmul.mubr.bf16.gmra.mrb[0].mxu0 %v8504
    %v9249 = vpop.f32.mrb[0].mxu0
    %v9250 = vadd.f32 %v1756, %v9249
    %v9251 = vpop.f32.mrb[0].mxu0
    %v9252 = vpop.f32.mrb[0].mxu0
    %v9253 = vadd.f32 %v1756, %v9252
    %v9254 = vpop.f32.mrb[0].mxu0
    %9255 = vdwg.mxu0
    %v9256 = vadd.f32 %v8871, %v9081
    %v9257 = vadd.f32 %v8875, %v9085
    %v9258 = vadd.f32 %v8881, %v9091
    %v9259 = vadd.f32 %v8885, %v9095
    %v9260 = vadd.f32 %v8891, %v9101
    %v9261 = vadd.f32 %v8895, %v9105
    %v9262 = vadd.f32 %v8901, %v9111
    %v9263 = vadd.f32 %v8905, %v9115
    %v9264 = vadd.f32 %v8911, %v9121
    %v9265 = vadd.f32 %v8915, %v9125
    %v9266 = vadd.f32 %v8921, %v9131
    %v9267 = vadd.f32 %v8925, %v9135
    %v9268 = vadd.f32 %v8931, %v9141
    %v9269 = vadd.f32 %v8935, %v9145
    %v9270 = vadd.f32 %v8941, %v9151
    %v9271 = vadd.f32 %v8945, %v9155
    %v9272 = vxor.u32 %v9256, 2147483648
    %v9273 = vxor.u32 %v9257, 2147483648
    %v9274 = vxor.u32 %v9258, 2147483648
    %v9275 = vxor.u32 %v9259, 2147483648
    %v9276 = vxor.u32 %v9260, 2147483648
    %v9277 = vxor.u32 %v9261, 2147483648
    %v9278 = vxor.u32 %v9262, 2147483648
    %v9279 = vxor.u32 %v9263, 2147483648
    %v9280 = vxor.u32 %v9264, 2147483648
    %v9281 = vxor.u32 %v9265, 2147483648
    %v9282 = vxor.u32 %v9266, 2147483648
    %v9283 = vxor.u32 %v9267, 2147483648
    %v9284 = vxor.u32 %v9268, 2147483648
    %v9285 = vxor.u32 %v9269, 2147483648
    %v9286 = vxor.u32 %v9270, 2147483648
    %v9287 = vxor.u32 %v9271, 2147483648
    %v9288 = vmul.f32 %v9272, 1.442695
    %v9289 = vpow.pop %v9288
    %v9290 = vmul.f32 %v9273, 1.442695
    %v9291 = vpow.pop %v9290
    %v9292 = vmul.f32 %v9274, 1.442695
    %v9293 = vpow.pop %v9292
    %v9294 = vmul.f32 %v9275, 1.442695
    %v9295 = vpow.pop %v9294
    %v9296 = vmul.f32 %v9276, 1.442695
    %v9297 = vpow.pop %v9296
    %v9298 = vmul.f32 %v9277, 1.442695
    %v9299 = vpow.pop %v9298
    %v9300 = vmul.f32 %v9278, 1.442695
    %v9301 = vpow.pop %v9300
    %v9302 = vmul.f32 %v9279, 1.442695
    %v9303 = vpow.pop %v9302
    %v9304 = vmul.f32 %v9280, 1.442695
    %v9305 = vpow.pop %v9304
    %v9306 = vmul.f32 %v9281, 1.442695
    %v9307 = vpow.pop %v9306
    %v9308 = vmul.f32 %v9282, 1.442695
    %v9309 = vpow.pop %v9308
    %v9310 = vmul.f32 %v9283, 1.442695
    %v9311 = vpow.pop %v9310
    %v9312 = vmul.f32 %v9284, 1.442695
    %v9313 = vpow.pop %v9312
    %v9314 = vmul.f32 %v9285, 1.442695
    %v9315 = vpow.pop %v9314
    %v9316 = vmul.f32 %v9286, 1.442695
    %v9317 = vpow.pop %v9316
    %v9318 = vmul.f32 %v9287, 1.442695
    %v9319 = vpow.pop %v9318
    %v9320 = vadd.f32 %v9289, 1.0
    %v9321 = vadd.f32 %v9291, 1.0
    %v9322 = vadd.f32 %v9293, 1.0
    %v9323 = vadd.f32 %v9295, 1.0
    %v9324 = vadd.f32 %v9297, 1.0
    %v9325 = vadd.f32 %v9299, 1.0
    %v9326 = vadd.f32 %v9301, 1.0
    %v9327 = vadd.f32 %v9303, 1.0
    %v9328 = vadd.f32 %v9305, 1.0
    %v9329 = vadd.f32 %v9307, 1.0
    %v9330 = vadd.f32 %v9309, 1.0
    %v9331 = vadd.f32 %v9311, 1.0
    %v9332 = vadd.f32 %v9313, 1.0
    %v9333 = vadd.f32 %v9315, 1.0
    %v9334 = vadd.f32 %v9317, 1.0
    %v9335 = vadd.f32 %v9319, 1.0
    %v9336 = vrcp.pop %v9320
    %v9337 = vmul.f32 1.0, %v9336
    %v9338 = vrcp.pop %v9321
    %v9339 = vmul.f32 1.0, %v9338
    %v9340 = vrcp.pop %v9322
    %v9341 = vmul.f32 1.0, %v9340
    %v9342 = vrcp.pop %v9323
    %v9343 = vmul.f32 1.0, %v9342
    %v9344 = vrcp.pop %v9324
    %v9345 = vmul.f32 1.0, %v9344
    %v9346 = vrcp.pop %v9325
    %v9347 = vmul.f32 1.0, %v9346
    %v9348 = vrcp.pop %v9326
    %v9349 = vmul.f32 1.0, %v9348
    %v9350 = vrcp.pop %v9327
    %v9351 = vmul.f32 1.0, %v9350
    %v9352 = vrcp.pop %v9328
    %v9353 = vmul.f32 1.0, %v9352
    %v9354 = vrcp.pop %v9329
    %v9355 = vmul.f32 1.0, %v9354
    %v9356 = vrcp.pop %v9330
    %v9357 = vmul.f32 1.0, %v9356
    %v9358 = vrcp.pop %v9331
    %v9359 = vmul.f32 1.0, %v9358
    %v9360 = vrcp.pop %v9332
    %v9361 = vmul.f32 1.0, %v9360
    %v9362 = vrcp.pop %v9333
    %v9363 = vmul.f32 1.0, %v9362
    %v9364 = vrcp.pop %v9334
    %v9365 = vmul.f32 1.0, %v9364
    %v9366 = vrcp.pop %v9335
    %v9367 = vmul.f32 1.0, %v9366
    %v9368 = vadd.f32 %v8873, %v9083
    %v9369 = vadd.f32 %v8877, %v9087
    %v9370 = vadd.f32 %v8883, %v9093
    %v9371 = vadd.f32 %v8887, %v9097
    %v9372 = vadd.f32 %v8893, %v9103
    %v9373 = vadd.f32 %v8897, %v9107
    %v9374 = vadd.f32 %v8903, %v9113
    %v9375 = vadd.f32 %v8907, %v9117
    %v9376 = vadd.f32 %v8913, %v9123
    %v9377 = vadd.f32 %v8917, %v9127
    %v9378 = vadd.f32 %v8923, %v9133
    %v9379 = vadd.f32 %v8927, %v9137
    %v9380 = vadd.f32 %v8933, %v9143
    %v9381 = vadd.f32 %v8937, %v9147
    %v9382 = vadd.f32 %v8943, %v9153
    %v9383 = vadd.f32 %v8947, %v9157
    %v9384 = vxor.u32 %v9368, 2147483648
    %v9385 = vxor.u32 %v9369, 2147483648
    %v9386 = vxor.u32 %v9370, 2147483648
    %v9387 = vxor.u32 %v9371, 2147483648
    %v9388 = vxor.u32 %v9372, 2147483648
    %v9389 = vxor.u32 %v9373, 2147483648
    %v9390 = vxor.u32 %v9374, 2147483648
    %v9391 = vxor.u32 %v9375, 2147483648
    %v9392 = vxor.u32 %v9376, 2147483648
    %v9393 = vxor.u32 %v9377, 2147483648
    %v9394 = vxor.u32 %v9378, 2147483648
    %v9395 = vxor.u32 %v9379, 2147483648
    %v9396 = vxor.u32 %v9380, 2147483648
    %v9397 = vxor.u32 %v9381, 2147483648
    %v9398 = vxor.u32 %v9382, 2147483648
    %v9399 = vxor.u32 %v9383, 2147483648
    %v9400 = vmul.f32 %v9384, 1.442695
    %v9401 = vpow.pop %v9400
    %v9402 = vmul.f32 %v9385, 1.442695
    %v9403 = vpow.pop %v9402
    %v9404 = vmul.f32 %v9386, 1.442695
    %v9405 = vpow.pop %v9404
    %v9406 = vmul.f32 %v9387, 1.442695
    %v9407 = vpow.pop %v9406
    %v9408 = vmul.f32 %v9388, 1.442695
    %v9409 = vpow.pop %v9408
    %v9410 = vmul.f32 %v9389, 1.442695
    %v9411 = vpow.pop %v9410
    %v9412 = vmul.f32 %v9390, 1.442695
    %v9413 = vpow.pop %v9412
    %v9414 = vmul.f32 %v9391, 1.442695
    %v9415 = vpow.pop %v9414
    %v9416 = vmul.f32 %v9392, 1.442695
    %v9417 = vpow.pop %v9416
    %v9418 = vmul.f32 %v9393, 1.442695
    %v9419 = vpow.pop %v9418
    %v9420 = vmul.f32 %v9394, 1.442695
    %v9421 = vpow.pop %v9420
    %v9422 = vmul.f32 %v9395, 1.442695
    %v9423 = vpow.pop %v9422
    %v9424 = vmul.f32 %v9396, 1.442695
    %v9425 = vpow.pop %v9424
    %v9426 = vmul.f32 %v9397, 1.442695
    %v9427 = vpow.pop %v9426
    %v9428 = vmul.f32 %v9398, 1.442695
    %v9429 = vpow.pop %v9428
    %v9430 = vmul.f32 %v9399, 1.442695
    %v9431 = vpow.pop %v9430
    %v9432 = vadd.f32 %v9401, 1.0
    %v9433 = vadd.f32 %v9403, 1.0
    %v9434 = vadd.f32 %v9405, 1.0
    %v9435 = vadd.f32 %v9407, 1.0
    %v9436 = vadd.f32 %v9409, 1.0
    %v9437 = vadd.f32 %v9411, 1.0
    %v9438 = vadd.f32 %v9413, 1.0
    %v9439 = vadd.f32 %v9415, 1.0
    %v9440 = vadd.f32 %v9417, 1.0
    %v9441 = vadd.f32 %v9419, 1.0
    %v9442 = vadd.f32 %v9421, 1.0
    %v9443 = vadd.f32 %v9423, 1.0
    %v9444 = vadd.f32 %v9425, 1.0
    %v9445 = vadd.f32 %v9427, 1.0
    %v9446 = vadd.f32 %v9429, 1.0
    %v9447 = vadd.f32 %v9431, 1.0
    %v9448 = vrcp.pop %v9432
    %v9449 = vmul.f32 1.0, %v9448
    %v9450 = vrcp.pop %v9433
    %v9451 = vmul.f32 1.0, %v9450
    %v9452 = vrcp.pop %v9434
    %v9453 = vmul.f32 1.0, %v9452
    %v9454 = vrcp.pop %v9435
    %v9455 = vmul.f32 1.0, %v9454
    %v9456 = vrcp.pop %v9436
    %v9457 = vmul.f32 1.0, %v9456
    %v9458 = vrcp.pop %v9437
    %v9459 = vmul.f32 1.0, %v9458
    %v9460 = vrcp.pop %v9438
    %v9461 = vmul.f32 1.0, %v9460
    %v9462 = vrcp.pop %v9439
    %v9463 = vmul.f32 1.0, %v9462
    %v9464 = vrcp.pop %v9440
    %v9465 = vmul.f32 1.0, %v9464
    %v9466 = vrcp.pop %v9441
    %v9467 = vmul.f32 1.0, %v9466
    %v9468 = vrcp.pop %v9442
    %v9469 = vmul.f32 1.0, %v9468
    %v9470 = vrcp.pop %v9443
    %v9471 = vmul.f32 1.0, %v9470
    %v9472 = vrcp.pop %v9444
    %v9473 = vmul.f32 1.0, %v9472
    %v9474 = vrcp.pop %v9445
    %v9475 = vmul.f32 1.0, %v9474
    %v9476 = vrcp.pop %v9446
    %v9477 = vmul.f32 1.0, %v9476
    %v9478 = vrcp.pop %v9447
    %v9479 = vmul.f32 1.0, %v9478
    %v9480 = vmul.f32 %v9337, %v9194
    %v9481 = vmul.f32 %v9339, %v9197
    %v9482 = vmul.f32 %v9341, %v9202
    %v9483 = vmul.f32 %v9343, %v9205
    %v9484 = vmul.f32 %v9345, %v9210
    %v9485 = vmul.f32 %v9347, %v9213
    %v9486 = vmul.f32 %v9349, %v9218
    %v9487 = vmul.f32 %v9351, %v9221
    %v9488 = vmul.f32 %v9353, %v9226
    %v9489 = vmul.f32 %v9355, %v9229
    %v9490 = vmul.f32 %v9357, %v9234
    %v9491 = vmul.f32 %v9359, %v9237
    %v9492 = vmul.f32 %v9361, %v9242
    %v9493 = vmul.f32 %v9363, %v9245
    %v9494 = vmul.f32 %v9365, %v9250
    %v9495 = vmul.f32 %v9367, %v9253
    %v9496 = vadd.f32 %v8984, %v9480
    %v9497 = vadd.f32 %v8987, %v9481
    %v9498 = vadd.f32 %v8992, %v9482
    %v9499 = vadd.f32 %v8995, %v9483
    %v9500 = vadd.f32 %v9000, %v9484
    %v9501 = vadd.f32 %v9003, %v9485
    %v9502 = vadd.f32 %v9008, %v9486
    %v9503 = vadd.f32 %v9011, %v9487
    %v9504 = vadd.f32 %v9016, %v9488
    %v9505 = vadd.f32 %v9019, %v9489
    %v9506 = vadd.f32 %v9024, %v9490
    %v9507 = vadd.f32 %v9027, %v9491
    %v9508 = vadd.f32 %v9032, %v9492
    %v9509 = vadd.f32 %v9035, %v9493
    %v9510 = vadd.f32 %v9040, %v9494
    %v9511 = vadd.f32 %v9043, %v9495
    %v9512 = vtanh.pop %v9496
    %v9513 = vtanh.pop %v9497
    %v9514 = vtanh.pop %v9498
    %v9515 = vtanh.pop %v9499
    %v9516 = vtanh.pop %v9500
    %v9517 = vtanh.pop %v9501
    %v9518 = vtanh.pop %v9502
    %v9519 = vtanh.pop %v9503
    %v9520 = vtanh.pop %v9504
    %v9521 = vtanh.pop %v9505
    %v9522 = vtanh.pop %v9506
    %v9523 = vtanh.pop %v9507
    %v9524 = vtanh.pop %v9508
    %v9525 = vtanh.pop %v9509
    %v9526 = vtanh.pop %v9510
    %v9527 = vtanh.pop %v9511
    %v9528 = vsub.f32 1.0, %v9449
    %v9529 = vsub.f32 1.0, %v9451
    %v9530 = vsub.f32 1.0, %v9453
    %v9531 = vsub.f32 1.0, %v9455
    %v9532 = vsub.f32 1.0, %v9457
    %v9533 = vsub.f32 1.0, %v9459
    %v9534 = vsub.f32 1.0, %v9461
    %v9535 = vsub.f32 1.0, %v9463
    %v9536 = vsub.f32 1.0, %v9465
    %v9537 = vsub.f32 1.0, %v9467
    %v9538 = vsub.f32 1.0, %v9469
    %v9539 = vsub.f32 1.0, %v9471
    %v9540 = vsub.f32 1.0, %v9473
    %v9541 = vsub.f32 1.0, %v9475
    %v9542 = vsub.f32 1.0, %v9477
    %v9543 = vsub.f32 1.0, %v9479
    %v9544 = vmul.f32 %v9528, %v9512
    %v9545 = vmul.f32 %v9529, %v9513
    %v9546 = vmul.f32 %v9530, %v9514
    %v9547 = vmul.f32 %v9531, %v9515
    %v9548 = vmul.f32 %v9532, %v9516
    %v9549 = vmul.f32 %v9533, %v9517
    %v9550 = vmul.f32 %v9534, %v9518
    %v9551 = vmul.f32 %v9535, %v9519
    %v9552 = vmul.f32 %v9536, %v9520
    %v9553 = vmul.f32 %v9537, %v9521
    %v9554 = vmul.f32 %v9538, %v9522
    %v9555 = vmul.f32 %v9539, %v9523
    %v9556 = vmul.f32 %v9540, %v9524
    %v9557 = vmul.f32 %v9541, %v9525
    %v9558 = vmul.f32 %v9542, %v9526
    %v9559 = vmul.f32 %v9543, %v9527
    %v9560 = vmul.f32 %v9449, %v8481
    %v9561 = vmul.f32 %v9451, %v8482
    %v9562 = vmul.f32 %v9453, %v8483
    %v9563 = vmul.f32 %v9455, %v8484
    %v9564 = vmul.f32 %v9457, %v8485
    %v9565 = vmul.f32 %v9459, %v8486
    %v9566 = vmul.f32 %v9461, %v8487
    %v9567 = vmul.f32 %v9463, %v8488
    %v9568 = vmul.f32 %v9465, %v8489
    %v9569 = vmul.f32 %v9467, %v8490
    %v9570 = vmul.f32 %v9469, %v8491
    %v9571 = vmul.f32 %v9471, %v8492
    %v9572 = vmul.f32 %v9473, %v8493
    %v9573 = vmul.f32 %v9475, %v8494
    %v9574 = vmul.f32 %v9477, %v8495
    %v9575 = vmul.f32 %v9479, %v8496
    %v9576 = vadd.f32 %v9544, %v9560
    %v9577 = vadd.f32 %v9545, %v9561
    %v9578 = vadd.f32 %v9546, %v9562
    %v9579 = vadd.f32 %v9547, %v9563
    %v9580 = vadd.f32 %v9548, %v9564
    %v9581 = vadd.f32 %v9549, %v9565
    %v9582 = vadd.f32 %v9550, %v9566
    %v9583 = vadd.f32 %v9551, %v9567
    %v9584 = vadd.f32 %v9552, %v9568
    %v9585 = vadd.f32 %v9553, %v9569
    %v9586 = vadd.f32 %v9554, %v9570
    %v9587 = vadd.f32 %v9555, %v9571
    %v9588 = vadd.f32 %v9556, %v9572
    %v9589 = vadd.f32 %v9557, %v9573
    %v9590 = vadd.f32 %v9558, %v9574
    %v9591 = vadd.f32 %v9559, %v9575
    %v9592 = vpack.c.bf16 %v9577, %v9576
    %v9593 = vpack.c.bf16 %v9579, %v9578
    %v9594 = vpack.c.bf16 %v9581, %v9580
    %v9595 = vpack.c.bf16 %v9583, %v9582
    %v9596 = vpack.c.bf16 %v9585, %v9584
    %v9597 = vpack.c.bf16 %v9587, %v9586
    %v9598 = vpack.c.bf16 %v9589, %v9588
    %v9599 = vpack.c.bf16 %v9591, %v9590
    %9600 = vmatprep.subr.bf16.mxu0 0
    %9601 = vmatpush1.bf16.msra.mxu0 %v2480
    %9602 = vmatprep.subr.bf16.mxu0 0
    %9603 = vmatpush1.bf16.msra.mxu0 %v2481
    %9604 = vmatprep.subr.bf16.mxu0 0
    %9605 = vmatpush1.bf16.msra.mxu0 %v2482
    %9606 = vmatprep.subr.bf16.mxu0 0
    %9607 = vmatpush1.bf16.msra.mxu0 %v2483
    %9608 = vmatprep.subr.bf16.mxu0 0
    %9609 = vmatpush1.bf16.msra.mxu0 %v2484
    %9610 = vmatprep.subr.bf16.mxu0 0
    %9611 = vmatpush1.bf16.msra.mxu0 %v2485
    %9612 = vmatprep.subr.bf16.mxu0 0
    %9613 = vmatpush1.bf16.msra.mxu0 %v2486
    %9614 = vmatprep.subr.bf16.mxu0 0
    %9615 = vmatpush1.bf16.msra.mxu0 %v2487
    %9616 = vmatprep.subr.bf16.mxu0 0
    %9617 = vmatpush1.bf16.msra.mxu0 0
    %9618 = vmatprep.subr.bf16.mxu0 0
    %9619 = vmatpush1.bf16.msra.mxu0 0
    %9620 = vmatprep.subr.bf16.mxu0 0
    %9621 = vmatpush1.bf16.msra.mxu0 0
    %9622 = vmatprep.subr.bf16.mxu0 0
    %9623 = vmatpush1.bf16.msra.mxu0 0
    %9624 = vmatprep.subr.bf16.mxu0 0
    %9625 = vmatpush1.bf16.msra.mxu0 0
    %9626 = vmatprep.subr.bf16.mxu0 0
    %9627 = vmatpush1.bf16.msra.mxu0 0
    %9628 = vmatprep.subr.bf16.mxu0 0
    %9629 = vmatpush1.bf16.msra.mxu0 0
    %9630 = vmatprep.subr.bf16.mxu0 0
    %9631 = vmatpush1.bf16.msra.mxu0 0
    %9632 = vmatprep.mubr.bf16.mxu0 0
    %9633 = vmatmul.mubr.bf16.gmra.mrb[0].mxu0 %v9592
    %v9634 = vpop.f32.mrb[0].mxu0
    %v9635 = vadd.f32 %v2446, %v9634
    %v9636 = vpop.f32.mrb[0].mxu0
    %v9637 = vpop.f32.mrb[0].mxu0
    %v9638 = vadd.f32 %v2446, %v9637
    %v9639 = vpop.f32.mrb[0].mxu0
    %9640 = vmatprep.mubr.bf16.mxu0 0
    %9641 = vmatmul.mubr.bf16.gmra.mrb[0].mxu0 %v9593
    %v9642 = vpop.f32.mrb[0].mxu0
    %v9643 = vadd.f32 %v2446, %v9642
    %v9644 = vpop.f32.mrb[0].mxu0
    %v9645 = vpop.f32.mrb[0].mxu0
    %v9646 = vadd.f32 %v2446, %v9645
    %v9647 = vpop.f32.mrb[0].mxu0
    %9648 = vmatprep.mubr.bf16.mxu0 0
    %9649 = vmatmul.mubr.bf16.gmra.mrb[0].mxu0 %v9594
    %v9650 = vpop.f32.mrb[0].mxu0
    %v9651 = vadd.f32 %v2446, %v9650
    %v9652 = vpop.f32.mrb[0].mxu0
    %v9653 = vpop.f32.mrb[0].mxu0
    %v9654 = vadd.f32 %v2446, %v9653
    %v9655 = vpop.f32.mrb[0].mxu0
    %9656 = vmatprep.mubr.bf16.mxu0 0
    %9657 = vmatmul.mubr.bf16.gmra.mrb[0].mxu0 %v9595
    %v9658 = vpop.f32.mrb[0].mxu0
    %v9659 = vadd.f32 %v2446, %v9658
    %v9660 = vpop.f32.mrb[0].mxu0
    %v9661 = vpop.f32.mrb[0].mxu0
    %v9662 = vadd.f32 %v2446, %v9661
    %v9663 = vpop.f32.mrb[0].mxu0
    %9664 = vmatprep.mubr.bf16.mxu0 0
    %9665 = vmatmul.mubr.bf16.gmra.mrb[0].mxu0 %v9596
    %v9666 = vpop.f32.mrb[0].mxu0
    %v9667 = vadd.f32 %v2446, %v9666
    %v9668 = vpop.f32.mrb[0].mxu0
    %v9669 = vpop.f32.mrb[0].mxu0
    %v9670 = vadd.f32 %v2446, %v9669
    %v9671 = vpop.f32.mrb[0].mxu0
    %9672 = vmatprep.mubr.bf16.mxu0 0
    %9673 = vmatmul.mubr.bf16.gmra.mrb[0].mxu0 %v9597
    %v9674 = vpop.f32.mrb[0].mxu0
    %v9675 = vadd.f32 %v2446, %v9674
    %v9676 = vpop.f32.mrb[0].mxu0
    %v9677 = vpop.f32.mrb[0].mxu0
    %v9678 = vadd.f32 %v2446, %v9677
    %v9679 = vpop.f32.mrb[0].mxu0
    %9680 = vmatprep.mubr.bf16.mxu0 0
    %9681 = vmatmul.mubr.bf16.gmra.mrb[0].mxu0 %v9598
    %v9682 = vpop.f32.mrb[0].mxu0
    %v9683 = vadd.f32 %v2446, %v9682
    %v9684 = vpop.f32.mrb[0].mxu0
    %v9685 = vpop.f32.mrb[0].mxu0
    %v9686 = vadd.f32 %v2446, %v9685
    %v9687 = vpop.f32.mrb[0].mxu0
    %9688 = vmatprep.mubr.bf16.mxu0 0
    %9689 = vmatmul.mubr.bf16.gmra.mrb[0].mxu0 %v9599
    %v9690 = vpop.f32.mrb[0].mxu0
    %v9691 = vadd.f32 %v2446, %v9690
    %v9692 = vpop.f32.mrb[0].mxu0
    %v9693 = vpop.f32.mrb[0].mxu0
    %v9694 = vadd.f32 %v2446, %v9693
    %v9695 = vpop.f32.mrb[0].mxu0
    %9696 = vdwg.mxu0
    %v9697 = vmax.f32 %v9635, 0.0
    %v9698 = vmax.f32 %v9638, 0.0
    %v9699 = vmax.f32 %v9643, 0.0
    %v9700 = vmax.f32 %v9646, 0.0
    %v9701 = vmax.f32 %v9651, 0.0
    %v9702 = vmax.f32 %v9654, 0.0
    %v9703 = vmax.f32 %v9659, 0.0
    %v9704 = vmax.f32 %v9662, 0.0
    %v9705 = vmax.f32 %v9667, 0.0
    %v9706 = vmax.f32 %v9670, 0.0
    %v9707 = vmax.f32 %v9675, 0.0
    %v9708 = vmax.f32 %v9678, 0.0
    %v9709 = vmax.f32 %v9683, 0.0
    %v9710 = vmax.f32 %v9686, 0.0
    %v9711 = vmax.f32 %v9691, 0.0
    %v9712 = vmax.f32 %v9694, 0.0
    %v9713 = vpack.c.bf16 %v9698, %v9697
    %v9714 = vpack.c.bf16 %v9700, %v9699
    %v9715 = vpack.c.bf16 %v9702, %v9701
    %v9716 = vpack.c.bf16 %v9704, %v9703
    %v9717 = vpack.c.bf16 %v9706, %v9705
    %v9718 = vpack.c.bf16 %v9708, %v9707
    %v9719 = vpack.c.bf16 %v9710, %v9709
    %v9720 = vpack.c.bf16 %v9712, %v9711
    %9721 = vmatprep.subr.bf16.mxu0 0
    %9722 = vmatpush1.bf16.msra.mxu0 %v2655
    %9723 = vmatprep.subr.bf16.mxu0 0
    %9724 = vmatpush1.bf16.msra.mxu0 %v2656
    %9725 = vmatprep.subr.bf16.mxu0 0
    %9726 = vmatpush1.bf16.msra.mxu0 %v2657
    %9727 = vmatprep.subr.bf16.mxu0 0
    %9728 = vmatpush1.bf16.msra.mxu0 %v2658
    %9729 = vmatprep.subr.bf16.mxu0 0
    %9730 = vmatpush1.bf16.msra.mxu0 %v2659
    %9731 = vmatprep.subr.bf16.mxu0 0
    %9732 = vmatpush1.bf16.msra.mxu0 %v2660
    %9733 = vmatprep.subr.bf16.mxu0 0
    %9734 = vmatpush1.bf16.msra.mxu0 %v2661
    %9735 = vmatprep.subr.bf16.mxu0 0
    %9736 = vmatpush1.bf16.msra.mxu0 %v2662
    %9737 = vmatprep.subr.bf16.mxu0 0
    %9738 = vmatpush1.bf16.msra.mxu0 0
    %9739 = vmatprep.subr.bf16.mxu0 0
    %9740 = vmatpush1.bf16.msra.mxu0 0
    %9741 = vmatprep.subr.bf16.mxu0 0
    %9742 = vmatpush1.bf16.msra.mxu0 0
    %9743 = vmatprep.subr.bf16.mxu0 0
    %9744 = vmatpush1.bf16.msra.mxu0 0
    %9745 = vmatprep.subr.bf16.mxu0 0
    %9746 = vmatpush1.bf16.msra.mxu0 0
    %9747 = vmatprep.subr.bf16.mxu0 0
    %9748 = vmatpush1.bf16.msra.mxu0 0
    %9749 = vmatprep.subr.bf16.mxu0 0
    %9750 = vmatpush1.bf16.msra.mxu0 0
    %9751 = vmatprep.subr.bf16.mxu0 0
    %9752 = vmatpush1.bf16.msra.mxu0 0
    %9753 = vmatprep.mubr.bf16.mxu0 0
    %9754 = vmatmul.mubr.bf16.gmra.mrb[0].mxu0 %v9713
    %v9755 = vpop.f32.mrb[0].mxu0
    %v9756 = vadd.f32 %v2621, %v9755
    %v9757 = vpop.f32.mrb[0].mxu0
    %v9758 = vpop.f32.mrb[0].mxu0
    %v9759 = vadd.f32 %v2621, %v9758
    %v9760 = vpop.f32.mrb[0].mxu0
    %9761 = vmatprep.mubr.bf16.mxu0 0
    %9762 = vmatmul.mubr.bf16.gmra.mrb[0].mxu0 %v9714
    %v9763 = vpop.f32.mrb[0].mxu0
    %v9764 = vadd.f32 %v2621, %v9763
    %v9765 = vpop.f32.mrb[0].mxu0
    %v9766 = vpop.f32.mrb[0].mxu0
    %v9767 = vadd.f32 %v2621, %v9766
    %v9768 = vpop.f32.mrb[0].mxu0
    %9769 = vmatprep.mubr.bf16.mxu0 0
    %9770 = vmatmul.mubr.bf16.gmra.mrb[0].mxu0 %v9715
    %v9771 = vpop.f32.mrb[0].mxu0
    %v9772 = vadd.f32 %v2621, %v9771
    %v9773 = vpop.f32.mrb[0].mxu0
    %v9774 = vpop.f32.mrb[0].mxu0
    %v9775 = vadd.f32 %v2621, %v9774
    %v9776 = vpop.f32.mrb[0].mxu0
    %9777 = vmatprep.mubr.bf16.mxu0 0
    %9778 = vmatmul.mubr.bf16.gmra.mrb[0].mxu0 %v9716
    %v9779 = vpop.f32.mrb[0].mxu0
    %v9780 = vadd.f32 %v2621, %v9779
    %v9781 = vpop.f32.mrb[0].mxu0
    %v9782 = vpop.f32.mrb[0].mxu0
    %v9783 = vadd.f32 %v2621, %v9782
    %v9784 = vpop.f32.mrb[0].mxu0
    %9785 = vmatprep.mubr.bf16.mxu0 0
    %9786 = vmatmul.mubr.bf16.gmra.mrb[0].mxu0 %v9717
    %v9787 = vpop.f32.mrb[0].mxu0
    %v9788 = vadd.f32 %v2621, %v9787
    %v9789 = vpop.f32.mrb[0].mxu0
    %v9790 = vpop.f32.mrb[0].mxu0
    %v9791 = vadd.f32 %v2621, %v9790
    %v9792 = vpop.f32.mrb[0].mxu0
    %9793 = vmatprep.mubr.bf16.mxu0 0
    %9794 = vmatmul.mubr.bf16.gmra.mrb[0].mxu0 %v9718
    %v9795 = vpop.f32.mrb[0].mxu0
    %v9796 = vadd.f32 %v2621, %v9795
    %v9797 = vpop.f32.mrb[0].mxu0
    %v9798 = vpop.f32.mrb[0].mxu0
    %v9799 = vadd.f32 %v2621, %v9798
    %v9800 = vpop.f32.mrb[0].mxu0
    %9801 = vmatprep.mubr.bf16.mxu0 0
    %9802 = vmatmul.mubr.bf16.gmra.mrb[0].mxu0 %v9719
    %v9803 = vpop.f32.mrb[0].mxu0
    %v9804 = vadd.f32 %v2621, %v9803
    %v9805 = vpop.f32.mrb[0].mxu0
    %v9806 = vpop.f32.mrb[0].mxu0
    %v9807 = vadd.f32 %v2621, %v9806
    %v9808 = vpop.f32.mrb[0].mxu0
    %9809 = vmatprep.mubr.bf16.mxu0 0
    %9810 = vmatmul.mubr.bf16.gmra.mrb[0].mxu0 %v9720
    %v9811 = vpop.f32.mrb[0].mxu0
    %v9812 = vadd.f32 %v2621, %v9811
    %v9813 = vpop.f32.mrb[0].mxu0
    %v9814 = vpop.f32.mrb[0].mxu0
    %v9815 = vadd.f32 %v2621, %v9814
    %v9816 = vpop.f32.mrb[0].mxu0
    %9817 = vdwg.mxu0
    %9818 = vxpose.xlu0.b32.start [1/16] %v9756, 128
    %9819 = vxpose.xlu0.b32.cont [2/16] %v9759, 128
    %9820 = vxpose.xlu0.b32.cont [3/16] %v9764, 128
    %9821 = vxpose.xlu0.b32.cont [4/16] %v9767, 128
    %9822 = vxpose.xlu0.b32.cont [5/16] %v9772, 128
    %9823 = vxpose.xlu0.b32.cont [6/16] %v9775, 128
    %9824 = vxpose.xlu0.b32.cont [7/16] %v9780, 128
    %9825 = vxpose.xlu0.b32.cont [8/16] %v9783, 128
    %9826 = vxpose.xlu0.b32.cont [9/16] %v9788, 128
    %9827 = vxpose.xlu0.b32.cont [10/16] %v9791, 128
    %9828 = vxpose.xlu0.b32.cont [11/16] %v9796, 128
    %9829 = vxpose.xlu0.b32.cont [12/16] %v9799, 128
    %9830 = vxpose.xlu0.b32.cont [13/16] %v9804, 128
    %9831 = vxpose.xlu0.b32.cont [14/16] %v9807, 128
    %9832 = vxpose.xlu0.b32.cont [15/16] %v9812, 128
    %9833 = vxpose.xlu0.b32.end [16/16] %v9815, 128
    %v9834 = vpop.trf.xlu0
    %v9835 = vpop.trf.xlu0
    %v9836 = vpop.trf.xlu0
    %v9837 = vpop.trf.xlu0
    %v9838 = vpop.trf.xlu0
    %v9839 = vpop.trf.xlu0
    %v9840 = vpop.trf.xlu0
    %v9841 = vpop.trf.xlu0
    %v9842 = vpop.trf.xlu0
    %v9843 = vpop.trf.xlu0
    %v9844 = vpop.trf.xlu0
    %v9845 = vpop.trf.xlu0
    %v9846 = vpop.trf.xlu0
    %v9847 = vpop.trf.xlu0
    %v9848 = vpop.trf.xlu0
    %v9849 = vpop.trf.xlu0
    %v9850 = vpack.c.bf16 %v9835, %v9834
    %v9851 = vpack.c.bf16 %v9837, %v9836
    %v9852 = vpack.c.bf16 %v9839, %v9838
    %v9853 = vpack.c.bf16 %v9841, %v9840
    %v9854 = vpack.c.bf16 %v9843, %v9842
    %v9855 = vpack.c.bf16 %v9845, %v9844
    %v9856 = vpack.c.bf16 %v9847, %v9846
    %v9857 = vpack.c.bf16 %v9849, %v9848
    %9858 = vmatprep.subr.bf16.mxu0 0
    %9859 = vmatpush1.bf16.msra.mxu0 %v1269
    %9860 = vmatprep.subr.bf16.mxu0 0
    %9861 = vmatpush1.bf16.msra.mxu0 %v1270
    %9862 = vmatprep.subr.bf16.mxu0 0
    %9863 = vmatpush1.bf16.msra.mxu0 %v1271
    %9864 = vmatprep.subr.bf16.mxu0 0
    %9865 = vmatpush1.bf16.msra.mxu0 %v1272
    %9866 = vmatprep.subr.bf16.mxu0 0
    %9867 = vmatpush1.bf16.msra.mxu0 %v1273
    %9868 = vmatprep.subr.bf16.mxu0 0
    %9869 = vmatpush1.bf16.msra.mxu0 %v1274
    %9870 = vmatprep.subr.bf16.mxu0 0
    %9871 = vmatpush1.bf16.msra.mxu0 %v1275
    %9872 = vmatprep.subr.bf16.mxu0 0
    %9873 = vmatpush1.bf16.msra.mxu0 %v1276
    %9874 = vmatprep.subr.bf16.mxu0 0
    %9875 = vmatpush1.bf16.msra.mxu0 0
    %9876 = vmatprep.subr.bf16.mxu0 0
    %9877 = vmatpush1.bf16.msra.mxu0 0
    %9878 = vmatprep.subr.bf16.mxu0 0
    %9879 = vmatpush1.bf16.msra.mxu0 0
    %9880 = vmatprep.subr.bf16.mxu0 0
    %9881 = vmatpush1.bf16.msra.mxu0 0
    %9882 = vmatprep.subr.bf16.mxu0 0
    %9883 = vmatpush1.bf16.msra.mxu0 0
    %9884 = vmatprep.subr.bf16.mxu0 0
    %9885 = vmatpush1.bf16.msra.mxu0 0
    %9886 = vmatprep.subr.bf16.mxu0 0
    %9887 = vmatpush1.bf16.msra.mxu0 0
    %9888 = vmatprep.subr.bf16.mxu0 0
    %9889 = vmatpush1.bf16.msra.mxu0 0
    %9890 = vmatprep.mubr.bf16.mxu0 0
    %9891 = vmatmul.mubr.bf16.gmra.mrb[0].mxu0 %v9850
    %v9892 = vpop.f32.mrb[0].mxu0
    %v9893 = vadd.f32 0.0, %v9892
    %v9894 = vpop.f32.mrb[0].mxu0
    %v9895 = vpop.f32.mrb[0].mxu0
    %v9896 = vadd.f32 0.0, %v9895
    %v9897 = vpop.f32.mrb[0].mxu0
    %9898 = vmatprep.mubr.bf16.mxu0 0
    %9899 = vmatmul.mubr.bf16.gmra.mrb[0].mxu0 %v9851
    %v9900 = vpop.f32.mrb[0].mxu0
    %v9901 = vadd.f32 0.0, %v9900
    %v9902 = vpop.f32.mrb[0].mxu0
    %v9903 = vpop.f32.mrb[0].mxu0
    %v9904 = vadd.f32 0.0, %v9903
    %v9905 = vpop.f32.mrb[0].mxu0
    %9906 = vmatprep.mubr.bf16.mxu0 0
    %9907 = vmatmul.mubr.bf16.gmra.mrb[0].mxu0 %v9852
    %v9908 = vpop.f32.mrb[0].mxu0
    %v9909 = vadd.f32 0.0, %v9908
    %v9910 = vpop.f32.mrb[0].mxu0
    %v9911 = vpop.f32.mrb[0].mxu0
    %v9912 = vadd.f32 0.0, %v9911
    %v9913 = vpop.f32.mrb[0].mxu0
    %9914 = vmatprep.mubr.bf16.mxu0 0
    %9915 = vmatmul.mubr.bf16.gmra.mrb[0].mxu0 %v9853
    %v9916 = vpop.f32.mrb[0].mxu0
    %v9917 = vadd.f32 0.0, %v9916
    %v9918 = vpop.f32.mrb[0].mxu0
    %v9919 = vpop.f32.mrb[0].mxu0
    %v9920 = vadd.f32 0.0, %v9919
    %v9921 = vpop.f32.mrb[0].mxu0
    %9922 = vmatprep.mubr.bf16.mxu0 0
    %9923 = vmatmul.mubr.bf16.gmra.mrb[0].mxu0 %v9854
    %v9924 = vpop.f32.mrb[0].mxu0
    %v9925 = vadd.f32 0.0, %v9924
    %v9926 = vpop.f32.mrb[0].mxu0
    %v9927 = vpop.f32.mrb[0].mxu0
    %v9928 = vadd.f32 0.0, %v9927
    %v9929 = vpop.f32.mrb[0].mxu0
    %9930 = vmatprep.mubr.bf16.mxu0 0
    %9931 = vmatmul.mubr.bf16.gmra.mrb[0].mxu0 %v9855
    %v9932 = vpop.f32.mrb[0].mxu0
    %v9933 = vadd.f32 0.0, %v9932
    %v9934 = vpop.f32.mrb[0].mxu0
    %v9935 = vpop.f32.mrb[0].mxu0
    %v9936 = vadd.f32 0.0, %v9935
    %v9937 = vpop.f32.mrb[0].mxu0
    %9938 = vmatprep.mubr.bf16.mxu0 0
    %9939 = vmatmul.mubr.bf16.gmra.mrb[0].mxu0 %v9856
    %v9940 = vpop.f32.mrb[0].mxu0
    %v9941 = vadd.f32 0.0, %v9940
    %v9942 = vpop.f32.mrb[0].mxu0
    %v9943 = vpop.f32.mrb[0].mxu0
    %v9944 = vadd.f32 0.0, %v9943
    %v9945 = vpop.f32.mrb[0].mxu0
    %9946 = vmatprep.mubr.bf16.mxu0 0
    %9947 = vmatmul.mubr.bf16.gmra.mrb[0].mxu0 %v9857
    %v9948 = vpop.f32.mrb[0].mxu0
    %v9949 = vadd.f32 0.0, %v9948
    %v9950 = vpop.f32.mrb[0].mxu0
    %v9951 = vpop.f32.mrb[0].mxu0
    %v9952 = vadd.f32 0.0, %v9951
    %v9953 = vpop.f32.mrb[0].mxu0
    %9954 = vdwg.mxu0
    %9955 = vxpose.xlu0.b32.start [1/16] %v9893, 128
    %9956 = vxpose.xlu0.b32.cont [2/16] %v9896, 128
    %9957 = vxpose.xlu0.b32.cont [3/16] %v9901, 128
    %9958 = vxpose.xlu0.b32.cont [4/16] %v9904, 128
    %9959 = vxpose.xlu0.b32.cont [5/16] %v9909, 128
    %9960 = vxpose.xlu0.b32.cont [6/16] %v9912, 128
    %9961 = vxpose.xlu0.b32.cont [7/16] %v9917, 128
    %9962 = vxpose.xlu0.b32.cont [8/16] %v9920, 128
    %9963 = vxpose.xlu0.b32.cont [9/16] %v9925, 128
    %9964 = vxpose.xlu0.b32.cont [10/16] %v9928, 128
    %9965 = vxpose.xlu0.b32.cont [11/16] %v9933, 128
    %9966 = vxpose.xlu0.b32.cont [12/16] %v9936, 128
    %9967 = vxpose.xlu0.b32.cont [13/16] %v9941, 128
    %9968 = vxpose.xlu0.b32.cont [14/16] %v9944, 128
    %9969 = vxpose.xlu0.b32.cont [15/16] %v9949, 128
    %9970 = vxpose.xlu0.b32.end [16/16] %v9952, 128
    %v9971 = vpop.trf.xlu0
    %v9972 = vpop.trf.xlu0
    %v9973 = vpop.trf.xlu0
    %v9974 = vpop.trf.xlu0
    %v9975 = vpop.trf.xlu0
    %v9976 = vpop.trf.xlu0
    %v9977 = vpop.trf.xlu0
    %v9978 = vpop.trf.xlu0
    %v9979 = vpop.trf.xlu0
    %v9980 = vpop.trf.xlu0
    %v9981 = vpop.trf.xlu0
    %v9982 = vpop.trf.xlu0
    %v9983 = vpop.trf.xlu0
    %v9984 = vpop.trf.xlu0
    %v9985 = vpop.trf.xlu0
    %v9986 = vpop.trf.xlu0
    %v9987 = vpack.c.bf16 %v9972, %v9971
    %v9988 = vpack.c.bf16 %v9974, %v9973
    %v9989 = vpack.c.bf16 %v9976, %v9975
    %v9990 = vpack.c.bf16 %v9978, %v9977
    %v9991 = vpack.c.bf16 %v9980, %v9979
    %v9992 = vpack.c.bf16 %v9982, %v9981
    %v9993 = vpack.c.bf16 %v9984, %v9983
    %v9994 = vpack.c.bf16 %v9986, %v9985
    %9995 = vmatprep.subr.bf16.mxu0 %v3042
    %9996 = vmatpush1.bf16.msra.mxu0 %v3041
    %9997 = vmatprep.subr.bf16.mxu0 %v3045
    %9998 = vmatpush1.bf16.msra.mxu0 %v3044
    %9999 = vmatprep.subr.bf16.mxu0 %v3048
    %10000 = vmatpush1.bf16.msra.mxu0 %v3047
    %10001 = vmatprep.subr.bf16.mxu0 %v3051
    %10002 = vmatpush1.bf16.msra.mxu0 %v3050
    %10003 = vmatprep.subr.bf16.mxu0 %v3054
    %10004 = vmatpush1.bf16.msra.mxu0 %v3053
    %10005 = vmatprep.subr.bf16.mxu0 %v3057
    %10006 = vmatpush1.bf16.msra.mxu0 %v3056
    %10007 = vmatprep.subr.bf16.mxu0 %v3060
    %10008 = vmatpush1.bf16.msra.mxu0 %v3059
    %10009 = vmatprep.subr.bf16.mxu0 %v3063
    %10010 = vmatpush1.bf16.msra.mxu0 %v3062
    %10011 = vmatprep.subr.bf16.mxu0 0
    %10012 = vmatpush1.bf16.msra.mxu0 0
    %10013 = vmatprep.subr.bf16.mxu0 0
    %10014 = vmatpush1.bf16.msra.mxu0 0
    %10015 = vmatprep.subr.bf16.mxu0 0
    %10016 = vmatpush1.bf16.msra.mxu0 0
    %10017 = vmatprep.subr.bf16.mxu0 0
    %10018 = vmatpush1.bf16.msra.mxu0 0
    %10019 = vmatprep.subr.bf16.mxu0 0
    %10020 = vmatpush1.bf16.msra.mxu0 0
    %10021 = vmatprep.subr.bf16.mxu0 0
    %10022 = vmatpush1.bf16.msra.mxu0 0
    %10023 = vmatprep.subr.bf16.mxu0 0
    %10024 = vmatpush1.bf16.msra.mxu0 0
    %10025 = vmatprep.subr.bf16.mxu0 0
    %10026 = vmatpush1.bf16.msra.mxu0 0
    %10027 = vmatprep.mubr.bf16.mxu0 0
    %10028 = vmatmul.mubr.bf16.gmra.mrb[0].mxu0 %v9987
    %v10029 = vpop.f32.mrb[0].mxu0
    %v10030 = vadd.f32 %v2949, %v10029
    %v10031 = vpop.f32.mrb[0].mxu0
    %v10032 = vadd.f32 %v2953, %v10031
    %v10033 = vpop.f32.mrb[0].mxu0
    %v10034 = vadd.f32 %v2949, %v10033
    %v10035 = vpop.f32.mrb[0].mxu0
    %v10036 = vadd.f32 %v2953, %v10035
    %10037 = vmatprep.mubr.bf16.mxu0 0
    %10038 = vmatmul.mubr.bf16.gmra.mrb[0].mxu0 %v9988
    %v10039 = vpop.f32.mrb[0].mxu0
    %v10040 = vadd.f32 %v2949, %v10039
    %v10041 = vpop.f32.mrb[0].mxu0
    %v10042 = vadd.f32 %v2953, %v10041
    %v10043 = vpop.f32.mrb[0].mxu0
    %v10044 = vadd.f32 %v2949, %v10043
    %v10045 = vpop.f32.mrb[0].mxu0
    %v10046 = vadd.f32 %v2953, %v10045
    %10047 = vmatprep.mubr.bf16.mxu0 0
    %10048 = vmatmul.mubr.bf16.gmra.mrb[0].mxu0 %v9989
    %v10049 = vpop.f32.mrb[0].mxu0
    %v10050 = vadd.f32 %v2949, %v10049
    %v10051 = vpop.f32.mrb[0].mxu0
    %v10052 = vadd.f32 %v2953, %v10051
    %v10053 = vpop.f32.mrb[0].mxu0
    %v10054 = vadd.f32 %v2949, %v10053
    %v10055 = vpop.f32.mrb[0].mxu0
    %v10056 = vadd.f32 %v2953, %v10055
    %10057 = vmatprep.mubr.bf16.mxu0 0
    %10058 = vmatmul.mubr.bf16.gmra.mrb[0].mxu0 %v9990
    %v10059 = vpop.f32.mrb[0].mxu0
    %v10060 = vadd.f32 %v2949, %v10059
    %v10061 = vpop.f32.mrb[0].mxu0
    %v10062 = vadd.f32 %v2953, %v10061
    %v10063 = vpop.f32.mrb[0].mxu0
    %v10064 = vadd.f32 %v2949, %v10063
    %v10065 = vpop.f32.mrb[0].mxu0
    %v10066 = vadd.f32 %v2953, %v10065
    %10067 = vmatprep.mubr.bf16.mxu0 0
    %10068 = vmatmul.mubr.bf16.gmra.mrb[0].mxu0 %v9991
    %v10069 = vpop.f32.mrb[0].mxu0
    %v10070 = vadd.f32 %v2949, %v10069
    %v10071 = vpop.f32.mrb[0].mxu0
    %v10072 = vadd.f32 %v2953, %v10071
    %v10073 = vpop.f32.mrb[0].mxu0
    %v10074 = vadd.f32 %v2949, %v10073
    %v10075 = vpop.f32.mrb[0].mxu0
    %v10076 = vadd.f32 %v2953, %v10075
    %10077 = vmatprep.mubr.bf16.mxu0 0
    %10078 = vmatmul.mubr.bf16.gmra.mrb[0].mxu0 %v9992
    %v10079 = vpop.f32.mrb[0].mxu0
    %v10080 = vadd.f32 %v2949, %v10079
    %v10081 = vpop.f32.mrb[0].mxu0
    %v10082 = vadd.f32 %v2953, %v10081
    %v10083 = vpop.f32.mrb[0].mxu0
    %v10084 = vadd.f32 %v2949, %v10083
    %v10085 = vpop.f32.mrb[0].mxu0
    %v10086 = vadd.f32 %v2953, %v10085
    %10087 = vmatprep.mubr.bf16.mxu0 0
    %10088 = vmatmul.mubr.bf16.gmra.mrb[0].mxu0 %v9993
    %v10089 = vpop.f32.mrb[0].mxu0
    %v10090 = vadd.f32 %v2949, %v10089
    %v10091 = vpop.f32.mrb[0].mxu0
    %v10092 = vadd.f32 %v2953, %v10091
    %v10093 = vpop.f32.mrb[0].mxu0
    %v10094 = vadd.f32 %v2949, %v10093
    %v10095 = vpop.f32.mrb[0].mxu0
    %v10096 = vadd.f32 %v2953, %v10095
    %10097 = vmatprep.mubr.bf16.mxu0 0
    %10098 = vmatmul.mubr.bf16.gmra.mrb[0].mxu0 %v9994
    %v10099 = vpop.f32.mrb[0].mxu0
    %v10100 = vadd.f32 %v2949, %v10099
    %v10101 = vpop.f32.mrb[0].mxu0
    %v10102 = vadd.f32 %v2953, %v10101
    %v10103 = vpop.f32.mrb[0].mxu0
    %v10104 = vadd.f32 %v2949, %v10103
    %v10105 = vpop.f32.mrb[0].mxu0
    %v10106 = vadd.f32 %v2953, %v10105
    %10107 = vdwg.mxu0
    %10108 = vmatprep.subr.bf16.mxu0 0
    %10109 = vmatpush1.bf16.msra.mxu0 %v3043
    %10110 = vmatprep.subr.bf16.mxu0 0
    %10111 = vmatpush1.bf16.msra.mxu0 %v3046
    %10112 = vmatprep.subr.bf16.mxu0 0
    %10113 = vmatpush1.bf16.msra.mxu0 %v3049
    %10114 = vmatprep.subr.bf16.mxu0 0
    %10115 = vmatpush1.bf16.msra.mxu0 %v3052
    %10116 = vmatprep.subr.bf16.mxu0 0
    %10117 = vmatpush1.bf16.msra.mxu0 %v3055
    %10118 = vmatprep.subr.bf16.mxu0 0
    %10119 = vmatpush1.bf16.msra.mxu0 %v3058
    %10120 = vmatprep.subr.bf16.mxu0 0
    %10121 = vmatpush1.bf16.msra.mxu0 %v3061
    %10122 = vmatprep.subr.bf16.mxu0 0
    %10123 = vmatpush1.bf16.msra.mxu0 %v3064
    %10124 = vmatprep.subr.bf16.mxu0 0
    %10125 = vmatpush1.bf16.msra.mxu0 0
    %10126 = vmatprep.subr.bf16.mxu0 0
    %10127 = vmatpush1.bf16.msra.mxu0 0
    %10128 = vmatprep.subr.bf16.mxu0 0
    %10129 = vmatpush1.bf16.msra.mxu0 0
    %10130 = vmatprep.subr.bf16.mxu0 0
    %10131 = vmatpush1.bf16.msra.mxu0 0
    %10132 = vmatprep.subr.bf16.mxu0 0
    %10133 = vmatpush1.bf16.msra.mxu0 0
    %10134 = vmatprep.subr.bf16.mxu0 0
    %10135 = vmatpush1.bf16.msra.mxu0 0
    %10136 = vmatprep.subr.bf16.mxu0 0
    %10137 = vmatpush1.bf16.msra.mxu0 0
    %10138 = vmatprep.subr.bf16.mxu0 0
    %10139 = vmatpush1.bf16.msra.mxu0 0
    %10140 = vmatprep.mubr.bf16.mxu0 0
    %10141 = vmatmul.mubr.bf16.gmra.mrb[0].mxu0 %v9987
    %v10142 = vpop.f32.mrb[0].mxu0
    %v10143 = vadd.f32 %v2957, %v10142
    %v10144 = vpop.f32.mrb[0].mxu0
    %v10145 = vpop.f32.mrb[0].mxu0
    %v10146 = vadd.f32 %v2957, %v10145
    %v10147 = vpop.f32.mrb[0].mxu0
    %10148 = vmatprep.mubr.bf16.mxu0 0
    %10149 = vmatmul.mubr.bf16.gmra.mrb[0].mxu0 %v9988
    %v10150 = vpop.f32.mrb[0].mxu0
    %v10151 = vadd.f32 %v2957, %v10150
    %v10152 = vpop.f32.mrb[0].mxu0
    %v10153 = vpop.f32.mrb[0].mxu0
    %v10154 = vadd.f32 %v2957, %v10153
    %v10155 = vpop.f32.mrb[0].mxu0
    %10156 = vmatprep.mubr.bf16.mxu0 0
    %10157 = vmatmul.mubr.bf16.gmra.mrb[0].mxu0 %v9989
    %v10158 = vpop.f32.mrb[0].mxu0
    %v10159 = vadd.f32 %v2957, %v10158
    %v10160 = vpop.f32.mrb[0].mxu0
    %v10161 = vpop.f32.mrb[0].mxu0
    %v10162 = vadd.f32 %v2957, %v10161
    %v10163 = vpop.f32.mrb[0].mxu0
    %10164 = vmatprep.mubr.bf16.mxu0 0
    %10165 = vmatmul.mubr.bf16.gmra.mrb[0].mxu0 %v9990
    %v10166 = vpop.f32.mrb[0].mxu0
    %v10167 = vadd.f32 %v2957, %v10166
    %v10168 = vpop.f32.mrb[0].mxu0
    %v10169 = vpop.f32.mrb[0].mxu0
    %v10170 = vadd.f32 %v2957, %v10169
    %v10171 = vpop.f32.mrb[0].mxu0
    %10172 = vmatprep.mubr.bf16.mxu0 0
    %10173 = vmatmul.mubr.bf16.gmra.mrb[0].mxu0 %v9991
    %v10174 = vpop.f32.mrb[0].mxu0
    %v10175 = vadd.f32 %v2957, %v10174
    %v10176 = vpop.f32.mrb[0].mxu0
    %v10177 = vpop.f32.mrb[0].mxu0
    %v10178 = vadd.f32 %v2957, %v10177
    %v10179 = vpop.f32.mrb[0].mxu0
    %10180 = vmatprep.mubr.bf16.mxu0 0
    %10181 = vmatmul.mubr.bf16.gmra.mrb[0].mxu0 %v9992
    %v10182 = vpop.f32.mrb[0].mxu0
    %v10183 = vadd.f32 %v2957, %v10182
    %v10184 = vpop.f32.mrb[0].mxu0
    %v10185 = vpop.f32.mrb[0].mxu0
    %v10186 = vadd.f32 %v2957, %v10185
    %v10187 = vpop.f32.mrb[0].mxu0
    %10188 = vmatprep.mubr.bf16.mxu0 0
    %10189 = vmatmul.mubr.bf16.gmra.mrb[0].mxu0 %v9993
    %v10190 = vpop.f32.mrb[0].mxu0
    %v10191 = vadd.f32 %v2957, %v10190
    %v10192 = vpop.f32.mrb[0].mxu0
    %v10193 = vpop.f32.mrb[0].mxu0
    %v10194 = vadd.f32 %v2957, %v10193
    %v10195 = vpop.f32.mrb[0].mxu0
    %10196 = vmatprep.mubr.bf16.mxu0 0
    %10197 = vmatmul.mubr.bf16.gmra.mrb[0].mxu0 %v9994
    %v10198 = vpop.f32.mrb[0].mxu0
    %v10199 = vadd.f32 %v2957, %v10198
    %v10200 = vpop.f32.mrb[0].mxu0
    %v10201 = vpop.f32.mrb[0].mxu0
    %v10202 = vadd.f32 %v2957, %v10201
    %v10203 = vpop.f32.mrb[0].mxu0
    %10204 = vdwg.mxu0
    %10205 = vmatprep.subr.bf16.mxu0 %v3396
    %10206 = vmatpush1.bf16.msra.mxu0 %v3395
    %10207 = vmatprep.subr.bf16.mxu0 %v3399
    %10208 = vmatpush1.bf16.msra.mxu0 %v3398
    %10209 = vmatprep.subr.bf16.mxu0 %v3402
    %10210 = vmatpush1.bf16.msra.mxu0 %v3401
    %10211 = vmatprep.subr.bf16.mxu0 %v3405
    %10212 = vmatpush1.bf16.msra.mxu0 %v3404
    %10213 = vmatprep.subr.bf16.mxu0 %v3408
    %10214 = vmatpush1.bf16.msra.mxu0 %v3407
    %10215 = vmatprep.subr.bf16.mxu0 %v3411
    %10216 = vmatpush1.bf16.msra.mxu0 %v3410
    %10217 = vmatprep.subr.bf16.mxu0 %v3414
    %10218 = vmatpush1.bf16.msra.mxu0 %v3413
    %10219 = vmatprep.subr.bf16.mxu0 %v3417
    %10220 = vmatpush1.bf16.msra.mxu0 %v3416
    %10221 = vmatprep.subr.bf16.mxu0 0
    %10222 = vmatpush1.bf16.msra.mxu0 0
    %10223 = vmatprep.subr.bf16.mxu0 0
    %10224 = vmatpush1.bf16.msra.mxu0 0
    %10225 = vmatprep.subr.bf16.mxu0 0
    %10226 = vmatpush1.bf16.msra.mxu0 0
    %10227 = vmatprep.subr.bf16.mxu0 0
    %10228 = vmatpush1.bf16.msra.mxu0 0
    %10229 = vmatprep.subr.bf16.mxu0 0
    %10230 = vmatpush1.bf16.msra.mxu0 0
    %10231 = vmatprep.subr.bf16.mxu0 0
    %10232 = vmatpush1.bf16.msra.mxu0 0
    %10233 = vmatprep.subr.bf16.mxu0 0
    %10234 = vmatpush1.bf16.msra.mxu0 0
    %10235 = vmatprep.subr.bf16.mxu0 0
    %10236 = vmatpush1.bf16.msra.mxu0 0
    %10237 = vmatprep.mubr.bf16.mxu0 0
    %10238 = vmatmul.mubr.bf16.gmra.mrb[0].mxu0 %v9592
    %v10239 = vpop.f32.mrb[0].mxu0
    %v10240 = vadd.f32 %v3303, %v10239
    %v10241 = vpop.f32.mrb[0].mxu0
    %v10242 = vadd.f32 %v3307, %v10241
    %v10243 = vpop.f32.mrb[0].mxu0
    %v10244 = vadd.f32 %v3303, %v10243
    %v10245 = vpop.f32.mrb[0].mxu0
    %v10246 = vadd.f32 %v3307, %v10245
    %10247 = vmatprep.mubr.bf16.mxu0 0
    %10248 = vmatmul.mubr.bf16.gmra.mrb[0].mxu0 %v9593
    %v10249 = vpop.f32.mrb[0].mxu0
    %v10250 = vadd.f32 %v3303, %v10249
    %v10251 = vpop.f32.mrb[0].mxu0
    %v10252 = vadd.f32 %v3307, %v10251
    %v10253 = vpop.f32.mrb[0].mxu0
    %v10254 = vadd.f32 %v3303, %v10253
    %v10255 = vpop.f32.mrb[0].mxu0
    %v10256 = vadd.f32 %v3307, %v10255
    %10257 = vmatprep.mubr.bf16.mxu0 0
    %10258 = vmatmul.mubr.bf16.gmra.mrb[0].mxu0 %v9594
    %v10259 = vpop.f32.mrb[0].mxu0
    %v10260 = vadd.f32 %v3303, %v10259
    %v10261 = vpop.f32.mrb[0].mxu0
    %v10262 = vadd.f32 %v3307, %v10261
    %v10263 = vpop.f32.mrb[0].mxu0
    %v10264 = vadd.f32 %v3303, %v10263
    %v10265 = vpop.f32.mrb[0].mxu0
    %v10266 = vadd.f32 %v3307, %v10265
    %10267 = vmatprep.mubr.bf16.mxu0 0
    %10268 = vmatmul.mubr.bf16.gmra.mrb[0].mxu0 %v9595
    %v10269 = vpop.f32.mrb[0].mxu0
    %v10270 = vadd.f32 %v3303, %v10269
    %v10271 = vpop.f32.mrb[0].mxu0
    %v10272 = vadd.f32 %v3307, %v10271
    %v10273 = vpop.f32.mrb[0].mxu0
    %v10274 = vadd.f32 %v3303, %v10273
    %v10275 = vpop.f32.mrb[0].mxu0
    %v10276 = vadd.f32 %v3307, %v10275
    %10277 = vmatprep.mubr.bf16.mxu0 0
    %10278 = vmatmul.mubr.bf16.gmra.mrb[0].mxu0 %v9596
    %v10279 = vpop.f32.mrb[0].mxu0
    %v10280 = vadd.f32 %v3303, %v10279
    %v10281 = vpop.f32.mrb[0].mxu0
    %v10282 = vadd.f32 %v3307, %v10281
    %v10283 = vpop.f32.mrb[0].mxu0
    %v10284 = vadd.f32 %v3303, %v10283
    %v10285 = vpop.f32.mrb[0].mxu0
    %v10286 = vadd.f32 %v3307, %v10285
    %10287 = vmatprep.mubr.bf16.mxu0 0
    %10288 = vmatmul.mubr.bf16.gmra.mrb[0].mxu0 %v9597
    %v10289 = vpop.f32.mrb[0].mxu0
    %v10290 = vadd.f32 %v3303, %v10289
    %v10291 = vpop.f32.mrb[0].mxu0
    %v10292 = vadd.f32 %v3307, %v10291
    %v10293 = vpop.f32.mrb[0].mxu0
    %v10294 = vadd.f32 %v3303, %v10293
    %v10295 = vpop.f32.mrb[0].mxu0
    %v10296 = vadd.f32 %v3307, %v10295
    %10297 = vmatprep.mubr.bf16.mxu0 0
    %10298 = vmatmul.mubr.bf16.gmra.mrb[0].mxu0 %v9598
    %v10299 = vpop.f32.mrb[0].mxu0
    %v10300 = vadd.f32 %v3303, %v10299
    %v10301 = vpop.f32.mrb[0].mxu0
    %v10302 = vadd.f32 %v3307, %v10301
    %v10303 = vpop.f32.mrb[0].mxu0
    %v10304 = vadd.f32 %v3303, %v10303
    %v10305 = vpop.f32.mrb[0].mxu0
    %v10306 = vadd.f32 %v3307, %v10305
    %10307 = vmatprep.mubr.bf16.mxu0 0
    %10308 = vmatmul.mubr.bf16.gmra.mrb[0].mxu0 %v9599
    %v10309 = vpop.f32.mrb[0].mxu0
    %v10310 = vadd.f32 %v3303, %v10309
    %v10311 = vpop.f32.mrb[0].mxu0
    %v10312 = vadd.f32 %v3307, %v10311
    %v10313 = vpop.f32.mrb[0].mxu0
    %v10314 = vadd.f32 %v3303, %v10313
    %v10315 = vpop.f32.mrb[0].mxu0
    %v10316 = vadd.f32 %v3307, %v10315
    %10317 = vdwg.mxu0
    %10318 = vmatprep.subr.bf16.mxu0 0
    %10319 = vmatpush1.bf16.msra.mxu0 %v3397
    %10320 = vmatprep.subr.bf16.mxu0 0
    %10321 = vmatpush1.bf16.msra.mxu0 %v3400
    %10322 = vmatprep.subr.bf16.mxu0 0
    %10323 = vmatpush1.bf16.msra.mxu0 %v3403
    %10324 = vmatprep.subr.bf16.mxu0 0
    %10325 = vmatpush1.bf16.msra.mxu0 %v3406
    %10326 = vmatprep.subr.bf16.mxu0 0
    %10327 = vmatpush1.bf16.msra.mxu0 %v3409
    %10328 = vmatprep.subr.bf16.mxu0 0
    %10329 = vmatpush1.bf16.msra.mxu0 %v3412
    %10330 = vmatprep.subr.bf16.mxu0 0
    %10331 = vmatpush1.bf16.msra.mxu0 %v3415
    %10332 = vmatprep.subr.bf16.mxu0 0
    %10333 = vmatpush1.bf16.msra.mxu0 %v3418
    %10334 = vmatprep.subr.bf16.mxu0 0
    %10335 = vmatpush1.bf16.msra.mxu0 0
    %10336 = vmatprep.subr.bf16.mxu0 0
    %10337 = vmatpush1.bf16.msra.mxu0 0
    %10338 = vmatprep.subr.bf16.mxu0 0
    %10339 = vmatpush1.bf16.msra.mxu0 0
    %10340 = vmatprep.subr.bf16.mxu0 0
    %10341 = vmatpush1.bf16.msra.mxu0 0
    %10342 = vmatprep.subr.bf16.mxu0 0
    %10343 = vmatpush1.bf16.msra.mxu0 0
    %10344 = vmatprep.subr.bf16.mxu0 0
    %10345 = vmatpush1.bf16.msra.mxu0 0
    %10346 = vmatprep.subr.bf16.mxu0 0
    %10347 = vmatpush1.bf16.msra.mxu0 0
    %10348 = vmatprep.subr.bf16.mxu0 0
    %10349 = vmatpush1.bf16.msra.mxu0 0
    %10350 = vmatprep.mubr.bf16.mxu0 0
    %10351 = vmatmul.mubr.bf16.gmra.mrb[0].mxu0 %v9592
    %v10352 = vpop.f32.mrb[0].mxu0
    %v10353 = vadd.f32 %v3311, %v10352
    %v10354 = vpop.f32.mrb[0].mxu0
    %v10355 = vpop.f32.mrb[0].mxu0
    %v10356 = vadd.f32 %v3311, %v10355
    %v10357 = vpop.f32.mrb[0].mxu0
    %10358 = vmatprep.mubr.bf16.mxu0 0
    %10359 = vmatmul.mubr.bf16.gmra.mrb[0].mxu0 %v9593
    %v10360 = vpop.f32.mrb[0].mxu0
    %v10361 = vadd.f32 %v3311, %v10360
    %v10362 = vpop.f32.mrb[0].mxu0
    %v10363 = vpop.f32.mrb[0].mxu0
    %v10364 = vadd.f32 %v3311, %v10363
    %v10365 = vpop.f32.mrb[0].mxu0
    %10366 = vmatprep.mubr.bf16.mxu0 0
    %10367 = vmatmul.mubr.bf16.gmra.mrb[0].mxu0 %v9594
    %v10368 = vpop.f32.mrb[0].mxu0
    %v10369 = vadd.f32 %v3311, %v10368
    %v10370 = vpop.f32.mrb[0].mxu0
    %v10371 = vpop.f32.mrb[0].mxu0
    %v10372 = vadd.f32 %v3311, %v10371
    %v10373 = vpop.f32.mrb[0].mxu0
    %10374 = vmatprep.mubr.bf16.mxu0 0
    %10375 = vmatmul.mubr.bf16.gmra.mrb[0].mxu0 %v9595
    %v10376 = vpop.f32.mrb[0].mxu0
    %v10377 = vadd.f32 %v3311, %v10376
    %v10378 = vpop.f32.mrb[0].mxu0
    %v10379 = vpop.f32.mrb[0].mxu0
    %v10380 = vadd.f32 %v3311, %v10379
    %v10381 = vpop.f32.mrb[0].mxu0
    %10382 = vmatprep.mubr.bf16.mxu0 0
    %10383 = vmatmul.mubr.bf16.gmra.mrb[0].mxu0 %v9596
    %v10384 = vpop.f32.mrb[0].mxu0
    %v10385 = vadd.f32 %v3311, %v10384
    %v10386 = vpop.f32.mrb[0].mxu0
    %v10387 = vpop.f32.mrb[0].mxu0
    %v10388 = vadd.f32 %v3311, %v10387
    %v10389 = vpop.f32.mrb[0].mxu0
    %10390 = vmatprep.mubr.bf16.mxu0 0
    %10391 = vmatmul.mubr.bf16.gmra.mrb[0].mxu0 %v9597
    %v10392 = vpop.f32.mrb[0].mxu0
    %v10393 = vadd.f32 %v3311, %v10392
    %v10394 = vpop.f32.mrb[0].mxu0
    %v10395 = vpop.f32.mrb[0].mxu0
    %v10396 = vadd.f32 %v3311, %v10395
    %v10397 = vpop.f32.mrb[0].mxu0
    %10398 = vmatprep.mubr.bf16.mxu0 0
    %10399 = vmatmul.mubr.bf16.gmra.mrb[0].mxu0 %v9598
    %v10400 = vpop.f32.mrb[0].mxu0
    %v10401 = vadd.f32 %v3311, %v10400
    %v10402 = vpop.f32.mrb[0].mxu0
    %v10403 = vpop.f32.mrb[0].mxu0
    %v10404 = vadd.f32 %v3311, %v10403
    %v10405 = vpop.f32.mrb[0].mxu0
    %10406 = vmatprep.mubr.bf16.mxu0 0
    %10407 = vmatmul.mubr.bf16.gmra.mrb[0].mxu0 %v9599
    %v10408 = vpop.f32.mrb[0].mxu0
    %v10409 = vadd.f32 %v3311, %v10408
    %v10410 = vpop.f32.mrb[0].mxu0
    %v10411 = vpop.f32.mrb[0].mxu0
    %v10412 = vadd.f32 %v3311, %v10411
    %v10413 = vpop.f32.mrb[0].mxu0
    %10414 = vdwg.mxu0
    %v10415 = vadd.f32 %v10030, %v10240
    %v10416 = vadd.f32 %v10034, %v10244
    %v10417 = vadd.f32 %v10040, %v10250
    %v10418 = vadd.f32 %v10044, %v10254
    %v10419 = vadd.f32 %v10050, %v10260
    %v10420 = vadd.f32 %v10054, %v10264
    %v10421 = vadd.f32 %v10060, %v10270
    %v10422 = vadd.f32 %v10064, %v10274
    %v10423 = vadd.f32 %v10070, %v10280
    %v10424 = vadd.f32 %v10074, %v10284
    %v10425 = vadd.f32 %v10080, %v10290
    %v10426 = vadd.f32 %v10084, %v10294
    %v10427 = vadd.f32 %v10090, %v10300
    %v10428 = vadd.f32 %v10094, %v10304
    %v10429 = vadd.f32 %v10100, %v10310
    %v10430 = vadd.f32 %v10104, %v10314
    %v10431 = vxor.u32 %v10415, 2147483648
    %v10432 = vxor.u32 %v10416, 2147483648
    %v10433 = vxor.u32 %v10417, 2147483648
    %v10434 = vxor.u32 %v10418, 2147483648
    %v10435 = vxor.u32 %v10419, 2147483648
    %v10436 = vxor.u32 %v10420, 2147483648
    %v10437 = vxor.u32 %v10421, 2147483648
    %v10438 = vxor.u32 %v10422, 2147483648
    %v10439 = vxor.u32 %v10423, 2147483648
    %v10440 = vxor.u32 %v10424, 2147483648
    %v10441 = vxor.u32 %v10425, 2147483648
    %v10442 = vxor.u32 %v10426, 2147483648
    %v10443 = vxor.u32 %v10427, 2147483648
    %v10444 = vxor.u32 %v10428, 2147483648
    %v10445 = vxor.u32 %v10429, 2147483648
    %v10446 = vxor.u32 %v10430, 2147483648
    %v10447 = vmul.f32 %v10431, 1.442695
    %v10448 = vpow.pop %v10447
    %v10449 = vmul.f32 %v10432, 1.442695
    %v10450 = vpow.pop %v10449
    %v10451 = vmul.f32 %v10433, 1.442695
    %v10452 = vpow.pop %v10451
    %v10453 = vmul.f32 %v10434, 1.442695
    %v10454 = vpow.pop %v10453
    %v10455 = vmul.f32 %v10435, 1.442695
    %v10456 = vpow.pop %v10455
    %v10457 = vmul.f32 %v10436, 1.442695
    %v10458 = vpow.pop %v10457
    %v10459 = vmul.f32 %v10437, 1.442695
    %v10460 = vpow.pop %v10459
    %v10461 = vmul.f32 %v10438, 1.442695
    %v10462 = vpow.pop %v10461
    %v10463 = vmul.f32 %v10439, 1.442695
    %v10464 = vpow.pop %v10463
    %v10465 = vmul.f32 %v10440, 1.442695
    %v10466 = vpow.pop %v10465
    %v10467 = vmul.f32 %v10441, 1.442695
    %v10468 = vpow.pop %v10467
    %v10469 = vmul.f32 %v10442, 1.442695
    %v10470 = vpow.pop %v10469
    %v10471 = vmul.f32 %v10443, 1.442695
    %v10472 = vpow.pop %v10471
    %v10473 = vmul.f32 %v10444, 1.442695
    %v10474 = vpow.pop %v10473
    %v10475 = vmul.f32 %v10445, 1.442695
    %v10476 = vpow.pop %v10475
    %v10477 = vmul.f32 %v10446, 1.442695
    %v10478 = vpow.pop %v10477
    %v10479 = vadd.f32 %v10448, 1.0
    %v10480 = vadd.f32 %v10450, 1.0
    %v10481 = vadd.f32 %v10452, 1.0
    %v10482 = vadd.f32 %v10454, 1.0
    %v10483 = vadd.f32 %v10456, 1.0
    %v10484 = vadd.f32 %v10458, 1.0
    %v10485 = vadd.f32 %v10460, 1.0
    %v10486 = vadd.f32 %v10462, 1.0
    %v10487 = vadd.f32 %v10464, 1.0
    %v10488 = vadd.f32 %v10466, 1.0
    %v10489 = vadd.f32 %v10468, 1.0
    %v10490 = vadd.f32 %v10470, 1.0
    %v10491 = vadd.f32 %v10472, 1.0
    %v10492 = vadd.f32 %v10474, 1.0
    %v10493 = vadd.f32 %v10476, 1.0
    %v10494 = vadd.f32 %v10478, 1.0
    %v10495 = vrcp.pop %v10479
    %v10496 = vmul.f32 1.0, %v10495
    %v10497 = vrcp.pop %v10480
    %v10498 = vmul.f32 1.0, %v10497
    %v10499 = vrcp.pop %v10481
    %v10500 = vmul.f32 1.0, %v10499
    %v10501 = vrcp.pop %v10482
    %v10502 = vmul.f32 1.0, %v10501
    %v10503 = vrcp.pop %v10483
    %v10504 = vmul.f32 1.0, %v10503
    %v10505 = vrcp.pop %v10484
    %v10506 = vmul.f32 1.0, %v10505
    %v10507 = vrcp.pop %v10485
    %v10508 = vmul.f32 1.0, %v10507
    %v10509 = vrcp.pop %v10486
    %v10510 = vmul.f32 1.0, %v10509
    %v10511 = vrcp.pop %v10487
    %v10512 = vmul.f32 1.0, %v10511
    %v10513 = vrcp.pop %v10488
    %v10514 = vmul.f32 1.0, %v10513
    %v10515 = vrcp.pop %v10489
    %v10516 = vmul.f32 1.0, %v10515
    %v10517 = vrcp.pop %v10490
    %v10518 = vmul.f32 1.0, %v10517
    %v10519 = vrcp.pop %v10491
    %v10520 = vmul.f32 1.0, %v10519
    %v10521 = vrcp.pop %v10492
    %v10522 = vmul.f32 1.0, %v10521
    %v10523 = vrcp.pop %v10493
    %v10524 = vmul.f32 1.0, %v10523
    %v10525 = vrcp.pop %v10494
    %v10526 = vmul.f32 1.0, %v10525
    %v10527 = vadd.f32 %v10032, %v10242
    %v10528 = vadd.f32 %v10036, %v10246
    %v10529 = vadd.f32 %v10042, %v10252
    %v10530 = vadd.f32 %v10046, %v10256
    %v10531 = vadd.f32 %v10052, %v10262
    %v10532 = vadd.f32 %v10056, %v10266
    %v10533 = vadd.f32 %v10062, %v10272
    %v10534 = vadd.f32 %v10066, %v10276
    %v10535 = vadd.f32 %v10072, %v10282
    %v10536 = vadd.f32 %v10076, %v10286
    %v10537 = vadd.f32 %v10082, %v10292
    %v10538 = vadd.f32 %v10086, %v10296
    %v10539 = vadd.f32 %v10092, %v10302
    %v10540 = vadd.f32 %v10096, %v10306
    %v10541 = vadd.f32 %v10102, %v10312
    %v10542 = vadd.f32 %v10106, %v10316
    %v10543 = vxor.u32 %v10527, 2147483648
    %v10544 = vxor.u32 %v10528, 2147483648
    %v10545 = vxor.u32 %v10529, 2147483648
    %v10546 = vxor.u32 %v10530, 2147483648
    %v10547 = vxor.u32 %v10531, 2147483648
    %v10548 = vxor.u32 %v10532, 2147483648
    %v10549 = vxor.u32 %v10533, 2147483648
    %v10550 = vxor.u32 %v10534, 2147483648
    %v10551 = vxor.u32 %v10535, 2147483648
    %v10552 = vxor.u32 %v10536, 2147483648
    %v10553 = vxor.u32 %v10537, 2147483648
    %v10554 = vxor.u32 %v10538, 2147483648
    %v10555 = vxor.u32 %v10539, 2147483648
    %v10556 = vxor.u32 %v10540, 2147483648
    %v10557 = vxor.u32 %v10541, 2147483648
    %v10558 = vxor.u32 %v10542, 2147483648
    %v10559 = vmul.f32 %v10543, 1.442695
    %v10560 = vpow.pop %v10559
    %v10561 = vmul.f32 %v10544, 1.442695
    %v10562 = vpow.pop %v10561
    %v10563 = vmul.f32 %v10545, 1.442695
    %v10564 = vpow.pop %v10563
    %v10565 = vmul.f32 %v10546, 1.442695
    %v10566 = vpow.pop %v10565
    %v10567 = vmul.f32 %v10547, 1.442695
    %v10568 = vpow.pop %v10567
    %v10569 = vmul.f32 %v10548, 1.442695
    %v10570 = vpow.pop %v10569
    %v10571 = vmul.f32 %v10549, 1.442695
    %v10572 = vpow.pop %v10571
    %v10573 = vmul.f32 %v10550, 1.442695
    %v10574 = vpow.pop %v10573
    %v10575 = vmul.f32 %v10551, 1.442695
    %v10576 = vpow.pop %v10575
    %v10577 = vmul.f32 %v10552, 1.442695
    %v10578 = vpow.pop %v10577
    %v10579 = vmul.f32 %v10553, 1.442695
    %v10580 = vpow.pop %v10579
    %v10581 = vmul.f32 %v10554, 1.442695
    %v10582 = vpow.pop %v10581
    %v10583 = vmul.f32 %v10555, 1.442695
    %v10584 = vpow.pop %v10583
    %v10585 = vmul.f32 %v10556, 1.442695
    %v10586 = vpow.pop %v10585
    %v10587 = vmul.f32 %v10557, 1.442695
    %v10588 = vpow.pop %v10587
    %v10589 = vmul.f32 %v10558, 1.442695
    %v10590 = vpow.pop %v10589
    %v10591 = vadd.f32 %v10560, 1.0
    %v10592 = vadd.f32 %v10562, 1.0
    %v10593 = vadd.f32 %v10564, 1.0
    %v10594 = vadd.f32 %v10566, 1.0
    %v10595 = vadd.f32 %v10568, 1.0
    %v10596 = vadd.f32 %v10570, 1.0
    %v10597 = vadd.f32 %v10572, 1.0
    %v10598 = vadd.f32 %v10574, 1.0
    %v10599 = vadd.f32 %v10576, 1.0
    %v10600 = vadd.f32 %v10578, 1.0
    %v10601 = vadd.f32 %v10580, 1.0
    %v10602 = vadd.f32 %v10582, 1.0
    %v10603 = vadd.f32 %v10584, 1.0
    %v10604 = vadd.f32 %v10586, 1.0
    %v10605 = vadd.f32 %v10588, 1.0
    %v10606 = vadd.f32 %v10590, 1.0
    %v10607 = vrcp.pop %v10591
    %v10608 = vmul.f32 1.0, %v10607
    %v10609 = vrcp.pop %v10592
    %v10610 = vmul.f32 1.0, %v10609
    %v10611 = vrcp.pop %v10593
    %v10612 = vmul.f32 1.0, %v10611
    %v10613 = vrcp.pop %v10594
    %v10614 = vmul.f32 1.0, %v10613
    %v10615 = vrcp.pop %v10595
    %v10616 = vmul.f32 1.0, %v10615
    %v10617 = vrcp.pop %v10596
    %v10618 = vmul.f32 1.0, %v10617
    %v10619 = vrcp.pop %v10597
    %v10620 = vmul.f32 1.0, %v10619
    %v10621 = vrcp.pop %v10598
    %v10622 = vmul.f32 1.0, %v10621
    %v10623 = vrcp.pop %v10599
    %v10624 = vmul.f32 1.0, %v10623
    %v10625 = vrcp.pop %v10600
    %v10626 = vmul.f32 1.0, %v10625
    %v10627 = vrcp.pop %v10601
    %v10628 = vmul.f32 1.0, %v10627
    %v10629 = vrcp.pop %v10602
    %v10630 = vmul.f32 1.0, %v10629
    %v10631 = vrcp.pop %v10603
    %v10632 = vmul.f32 1.0, %v10631
    %v10633 = vrcp.pop %v10604
    %v10634 = vmul.f32 1.0, %v10633
    %v10635 = vrcp.pop %v10605
    %v10636 = vmul.f32 1.0, %v10635
    %v10637 = vrcp.pop %v10606
    %v10638 = vmul.f32 1.0, %v10637
    %v10639 = vmul.f32 %v10496, %v10353
    %v10640 = vmul.f32 %v10498, %v10356
    %v10641 = vmul.f32 %v10500, %v10361
    %v10642 = vmul.f32 %v10502, %v10364
    %v10643 = vmul.f32 %v10504, %v10369
    %v10644 = vmul.f32 %v10506, %v10372
    %v10645 = vmul.f32 %v10508, %v10377
    %v10646 = vmul.f32 %v10510, %v10380
    %v10647 = vmul.f32 %v10512, %v10385
    %v10648 = vmul.f32 %v10514, %v10388
    %v10649 = vmul.f32 %v10516, %v10393
    %v10650 = vmul.f32 %v10518, %v10396
    %v10651 = vmul.f32 %v10520, %v10401
    %v10652 = vmul.f32 %v10522, %v10404
    %v10653 = vmul.f32 %v10524, %v10409
    %v10654 = vmul.f32 %v10526, %v10412
    %v10655 = vadd.f32 %v10143, %v10639
    %v10656 = vadd.f32 %v10146, %v10640
    %v10657 = vadd.f32 %v10151, %v10641
    %v10658 = vadd.f32 %v10154, %v10642
    %v10659 = vadd.f32 %v10159, %v10643
    %v10660 = vadd.f32 %v10162, %v10644
    %v10661 = vadd.f32 %v10167, %v10645
    %v10662 = vadd.f32 %v10170, %v10646
    %v10663 = vadd.f32 %v10175, %v10647
    %v10664 = vadd.f32 %v10178, %v10648
    %v10665 = vadd.f32 %v10183, %v10649
    %v10666 = vadd.f32 %v10186, %v10650
    %v10667 = vadd.f32 %v10191, %v10651
    %v10668 = vadd.f32 %v10194, %v10652
    %v10669 = vadd.f32 %v10199, %v10653
    %v10670 = vadd.f32 %v10202, %v10654
    %v10671 = vtanh.pop %v10655
    %v10672 = vtanh.pop %v10656
    %v10673 = vtanh.pop %v10657
    %v10674 = vtanh.pop %v10658
    %v10675 = vtanh.pop %v10659
    %v10676 = vtanh.pop %v10660
    %v10677 = vtanh.pop %v10661
    %v10678 = vtanh.pop %v10662
    %v10679 = vtanh.pop %v10663
    %v10680 = vtanh.pop %v10664
    %v10681 = vtanh.pop %v10665
    %v10682 = vtanh.pop %v10666
    %v10683 = vtanh.pop %v10667
    %v10684 = vtanh.pop %v10668
    %v10685 = vtanh.pop %v10669
    %v10686 = vtanh.pop %v10670
    %v10687 = vsub.f32 1.0, %v10608
    %v10688 = vsub.f32 1.0, %v10610
    %v10689 = vsub.f32 1.0, %v10612
    %v10690 = vsub.f32 1.0, %v10614
    %v10691 = vsub.f32 1.0, %v10616
    %v10692 = vsub.f32 1.0, %v10618
    %v10693 = vsub.f32 1.0, %v10620
    %v10694 = vsub.f32 1.0, %v10622
    %v10695 = vsub.f32 1.0, %v10624
    %v10696 = vsub.f32 1.0, %v10626
    %v10697 = vsub.f32 1.0, %v10628
    %v10698 = vsub.f32 1.0, %v10630
    %v10699 = vsub.f32 1.0, %v10632
    %v10700 = vsub.f32 1.0, %v10634
    %v10701 = vsub.f32 1.0, %v10636
    %v10702 = vsub.f32 1.0, %v10638
    %v10703 = vmul.f32 %v10687, %v10671
    %v10704 = vmul.f32 %v10688, %v10672
    %v10705 = vmul.f32 %v10689, %v10673
    %v10706 = vmul.f32 %v10690, %v10674
    %v10707 = vmul.f32 %v10691, %v10675
    %v10708 = vmul.f32 %v10692, %v10676
    %v10709 = vmul.f32 %v10693, %v10677
    %v10710 = vmul.f32 %v10694, %v10678
    %v10711 = vmul.f32 %v10695, %v10679
    %v10712 = vmul.f32 %v10696, %v10680
    %v10713 = vmul.f32 %v10697, %v10681
    %v10714 = vmul.f32 %v10698, %v10682
    %v10715 = vmul.f32 %v10699, %v10683
    %v10716 = vmul.f32 %v10700, %v10684
    %v10717 = vmul.f32 %v10701, %v10685
    %v10718 = vmul.f32 %v10702, %v10686
    %v10719 = vmul.f32 %v10608, %v9576
    %v10720 = vmul.f32 %v10610, %v9577
    %v10721 = vmul.f32 %v10612, %v9578
    %v10722 = vmul.f32 %v10614, %v9579
    %v10723 = vmul.f32 %v10616, %v9580
    %v10724 = vmul.f32 %v10618, %v9581
    %v10725 = vmul.f32 %v10620, %v9582
    %v10726 = vmul.f32 %v10622, %v9583
    %v10727 = vmul.f32 %v10624, %v9584
    %v10728 = vmul.f32 %v10626, %v9585
    %v10729 = vmul.f32 %v10628, %v9586
    %v10730 = vmul.f32 %v10630, %v9587
    %v10731 = vmul.f32 %v10632, %v9588
    %v10732 = vmul.f32 %v10634, %v9589
    %v10733 = vmul.f32 %v10636, %v9590
    %v10734 = vmul.f32 %v10638, %v9591
    %v10735 = vadd.f32 %v10703, %v10719
    %v10736 = vadd.f32 %v10704, %v10720
    %v10737 = vadd.f32 %v10705, %v10721
    %v10738 = vadd.f32 %v10706, %v10722
    %v10739 = vadd.f32 %v10707, %v10723
    %v10740 = vadd.f32 %v10708, %v10724
    %v10741 = vadd.f32 %v10709, %v10725
    %v10742 = vadd.f32 %v10710, %v10726
    %v10743 = vadd.f32 %v10711, %v10727
    %v10744 = vadd.f32 %v10712, %v10728
    %v10745 = vadd.f32 %v10713, %v10729
    %v10746 = vadd.f32 %v10714, %v10730
    %v10747 = vadd.f32 %v10715, %v10731
    %v10748 = vadd.f32 %v10716, %v10732
    %v10749 = vadd.f32 %v10717, %v10733
    %v10750 = vadd.f32 %v10718, %v10734
    %v10751 = vpack.c.bf16 %v10736, %v10735
    %v10752 = vpack.c.bf16 %v10738, %v10737
    %v10753 = vpack.c.bf16 %v10740, %v10739
    %v10754 = vpack.c.bf16 %v10742, %v10741
    %v10755 = vpack.c.bf16 %v10744, %v10743
    %v10756 = vpack.c.bf16 %v10746, %v10745
    %v10757 = vpack.c.bf16 %v10748, %v10747
    %v10758 = vpack.c.bf16 %v10750, %v10749
    %v10760 = vlaneseq
    %v10761 = vshrl.u32 %v10760, 7
    %v10762 = vsub.s32 0, %v10761
    %v10763 = vrot.slane %v543, %v10762
    %v10781 = vunpack.c.l.b16 %v527
    %v10782 = vunpack.c.l.b16 %v528
    %v10783 = vunpack.c.l.b16 %v529
    %v10784 = vunpack.c.l.b16 %v530
    %v10785 = vunpack.c.l.b16 %v531
    %v10786 = vunpack.c.l.b16 %v532
    %v10787 = vunpack.c.l.b16 %v533
    %v10788 = vunpack.c.l.b16 %v534
    %v10789 = vunpack.c.l.b16 %v535
    %v10790 = vunpack.c.l.b16 %v536
    %v10791 = vunpack.c.l.b16 %v537
    %v10792 = vunpack.c.l.b16 %v538
    %v10793 = vunpack.c.l.b16 %v539
    %v10794 = vunpack.c.l.b16 %v540
    %v10795 = vunpack.c.l.b16 %v541
    %v10796 = vunpack.c.l.b16 %v542
    %v10797 = vpack.c.b16 %v10782, %v10781
    %v10798 = vpack.c.b16 %v10784, %v10783
    %v10799 = vpack.c.b16 %v10786, %v10785
    %v10800 = vpack.c.b16 %v10788, %v10787
    %v10801 = vpack.c.b16 %v10790, %v10789
    %v10802 = vpack.c.b16 %v10792, %v10791
    %v10803 = vpack.c.b16 %v10794, %v10793
    %v10804 = vpack.c.b16 %v10796, %v10795
    %10813 = vmatprep.subr.bf16.mxu0 0
    %10814 = vmatpush1.bf16.msra.mxu0 %v10797
    %10815 = vmatprep.subr.bf16.mxu0 0
    %10816 = vmatpush1.bf16.msra.mxu0 %v10798
    %10817 = vmatprep.subr.bf16.mxu0 0
    %10818 = vmatpush1.bf16.msra.mxu0 %v10799
    %10819 = vmatprep.subr.bf16.mxu0 0
    %10820 = vmatpush1.bf16.msra.mxu0 %v10800
    %10821 = vmatprep.subr.bf16.mxu0 0
    %10822 = vmatpush1.bf16.msra.mxu0 %v10801
    %10823 = vmatprep.subr.bf16.mxu0 0
    %10824 = vmatpush1.bf16.msra.mxu0 %v10802
    %10825 = vmatprep.subr.bf16.mxu0 0
    %10826 = vmatpush1.bf16.msra.mxu0 %v10803
    %10827 = vmatprep.subr.bf16.mxu0 0
    %10828 = vmatpush1.bf16.msra.mxu0 %v10804
    %10829 = vmatprep.subr.bf16.mxu0 0
    %10830 = vmatpush1.bf16.msra.mxu0 0
    %10831 = vmatprep.subr.bf16.mxu0 0
    %10832 = vmatpush1.bf16.msra.mxu0 0
    %10833 = vmatprep.subr.bf16.mxu0 0
    %10834 = vmatpush1.bf16.msra.mxu0 0
    %10835 = vmatprep.subr.bf16.mxu0 0
    %10836 = vmatpush1.bf16.msra.mxu0 0
    %10837 = vmatprep.subr.bf16.mxu0 0
    %10838 = vmatpush1.bf16.msra.mxu0 0
    %10839 = vmatprep.subr.bf16.mxu0 0
    %10840 = vmatpush1.bf16.msra.mxu0 0
    %10841 = vmatprep.subr.bf16.mxu0 0
    %10842 = vmatpush1.bf16.msra.mxu0 0
    %10843 = vmatprep.subr.bf16.mxu0 0
    %10844 = vmatpush1.bf16.msra.mxu0 0
    %10845 = vmatprep.mubr.bf16.mxu0 0
    %10846 = vmatmul.mubr.bf16.gmra.mrb[0].mxu0 %v10751
    %v10847 = vpop.f32.mrb[0].mxu0
    %v10848 = vadd.f32 %v10763, %v10847
    %v10849 = vpop.f32.mrb[0].mxu0
    %v10850 = vpop.f32.mrb[0].mxu0
    %v10851 = vadd.f32 %v10763, %v10850
    %v10852 = vpop.f32.mrb[0].mxu0
    %10853 = vmatprep.mubr.bf16.mxu0 0
    %10854 = vmatmul.mubr.bf16.gmra.mrb[0].mxu0 %v10752
    %v10855 = vpop.f32.mrb[0].mxu0
    %v10856 = vadd.f32 %v10763, %v10855
    %v10857 = vpop.f32.mrb[0].mxu0
    %v10858 = vpop.f32.mrb[0].mxu0
    %v10859 = vadd.f32 %v10763, %v10858
    %v10860 = vpop.f32.mrb[0].mxu0
    %10861 = vmatprep.mubr.bf16.mxu0 0
    %10862 = vmatmul.mubr.bf16.gmra.mrb[0].mxu0 %v10753
    %v10863 = vpop.f32.mrb[0].mxu0
    %v10864 = vadd.f32 %v10763, %v10863
    %v10865 = vpop.f32.mrb[0].mxu0
    %v10866 = vpop.f32.mrb[0].mxu0
    %v10867 = vadd.f32 %v10763, %v10866
    %v10868 = vpop.f32.mrb[0].mxu0
    %10869 = vmatprep.mubr.bf16.mxu0 0
    %10870 = vmatmul.mubr.bf16.gmra.mrb[0].mxu0 %v10754
    %v10871 = vpop.f32.mrb[0].mxu0
    %v10872 = vadd.f32 %v10763, %v10871
    %v10873 = vpop.f32.mrb[0].mxu0
    %v10874 = vpop.f32.mrb[0].mxu0
    %v10875 = vadd.f32 %v10763, %v10874
    %v10876 = vpop.f32.mrb[0].mxu0
    %10877 = vmatprep.mubr.bf16.mxu0 0
    %10878 = vmatmul.mubr.bf16.gmra.mrb[0].mxu0 %v10755
    %v10879 = vpop.f32.mrb[0].mxu0
    %v10880 = vadd.f32 %v10763, %v10879
    %v10881 = vpop.f32.mrb[0].mxu0
    %v10882 = vpop.f32.mrb[0].mxu0
    %v10883 = vadd.f32 %v10763, %v10882
    %v10884 = vpop.f32.mrb[0].mxu0
    %10885 = vmatprep.mubr.bf16.mxu0 0
    %10886 = vmatmul.mubr.bf16.gmra.mrb[0].mxu0 %v10756
    %v10887 = vpop.f32.mrb[0].mxu0
    %v10888 = vadd.f32 %v10763, %v10887
    %v10889 = vpop.f32.mrb[0].mxu0
    %v10890 = vpop.f32.mrb[0].mxu0
    %v10891 = vadd.f32 %v10763, %v10890
    %v10892 = vpop.f32.mrb[0].mxu0
    %10893 = vmatprep.mubr.bf16.mxu0 0
    %10894 = vmatmul.mubr.bf16.gmra.mrb[0].mxu0 %v10757
    %v10895 = vpop.f32.mrb[0].mxu0
    %v10896 = vadd.f32 %v10763, %v10895
    %v10897 = vpop.f32.mrb[0].mxu0
    %v10898 = vpop.f32.mrb[0].mxu0
    %v10899 = vadd.f32 %v10763, %v10898
    %v10900 = vpop.f32.mrb[0].mxu0
    %10901 = vmatprep.mubr.bf16.mxu0 0
    %10902 = vmatmul.mubr.bf16.gmra.mrb[0].mxu0 %v10758
    %v10903 = vpop.f32.mrb[0].mxu0
    %v10904 = vadd.f32 %v10763, %v10903
    %v10905 = vpop.f32.mrb[0].mxu0
    %v10906 = vpop.f32.mrb[0].mxu0
    %v10907 = vadd.f32 %v10763, %v10906
    %v10908 = vpop.f32.mrb[0].mxu0
    %10909 = vdwg.mxu0
    %v10910 = vmax.f32 %v10848, 0.0
    %v10911 = vmax.f32 %v10851, 0.0
    %v10912 = vmax.f32 %v10856, 0.0
    %v10913 = vmax.f32 %v10859, 0.0
    %v10914 = vmax.f32 %v10864, 0.0
    %v10915 = vmax.f32 %v10867, 0.0
    %v10916 = vmax.f32 %v10872, 0.0
    %v10917 = vmax.f32 %v10875, 0.0
    %v10918 = vmax.f32 %v10880, 0.0
    %v10919 = vmax.f32 %v10883, 0.0
    %v10920 = vmax.f32 %v10888, 0.0
    %v10921 = vmax.f32 %v10891, 0.0
    %v10922 = vmax.f32 %v10896, 0.0
    %v10923 = vmax.f32 %v10899, 0.0
    %v10924 = vmax.f32 %v10904, 0.0
    %v10925 = vmax.f32 %v10907, 0.0
    %v10926 = vpack.c.bf16 %v10911, %v10910
    %v10927 = vpack.c.bf16 %v10913, %v10912
    %v10928 = vpack.c.bf16 %v10915, %v10914
    %v10929 = vpack.c.bf16 %v10917, %v10916
    %v10930 = vpack.c.bf16 %v10919, %v10918
    %v10931 = vpack.c.bf16 %v10921, %v10920
    %v10932 = vpack.c.bf16 %v10923, %v10922
    %v10933 = vpack.c.bf16 %v10925, %v10924
    %v10935 = vlaneseq
    %v10936 = vshrl.u32 %v10935, 7
    %v10937 = vsub.s32 0, %v10936
    %v10938 = vrot.slane %v560, %v10937
    %v10956 = vunpack.c.l.b16 %v544
    %v10957 = vunpack.c.l.b16 %v545
    %v10958 = vunpack.c.l.b16 %v546
    %v10959 = vunpack.c.l.b16 %v547
    %v10960 = vunpack.c.l.b16 %v548
    %v10961 = vunpack.c.l.b16 %v549
    %v10962 = vunpack.c.l.b16 %v550
    %v10963 = vunpack.c.l.b16 %v551
    %v10964 = vunpack.c.l.b16 %v552
    %v10965 = vunpack.c.l.b16 %v553
    %v10966 = vunpack.c.l.b16 %v554
    %v10967 = vunpack.c.l.b16 %v555
    %v10968 = vunpack.c.l.b16 %v556
    %v10969 = vunpack.c.l.b16 %v557
    %v10970 = vunpack.c.l.b16 %v558
    %v10971 = vunpack.c.l.b16 %v559
    %v10972 = vpack.c.b16 %v10957, %v10956
    %v10973 = vpack.c.b16 %v10959, %v10958
    %v10974 = vpack.c.b16 %v10961, %v10960
    %v10975 = vpack.c.b16 %v10963, %v10962
    %v10976 = vpack.c.b16 %v10965, %v10964
    %v10977 = vpack.c.b16 %v10967, %v10966
    %v10978 = vpack.c.b16 %v10969, %v10968
    %v10979 = vpack.c.b16 %v10971, %v10970
    %10988 = vmatprep.subr.bf16.mxu0 0
    %10989 = vmatpush1.bf16.msra.mxu0 %v10972
    %10990 = vmatprep.subr.bf16.mxu0 0
    %10991 = vmatpush1.bf16.msra.mxu0 %v10973
    %10992 = vmatprep.subr.bf16.mxu0 0
    %10993 = vmatpush1.bf16.msra.mxu0 %v10974
    %10994 = vmatprep.subr.bf16.mxu0 0
    %10995 = vmatpush1.bf16.msra.mxu0 %v10975
    %10996 = vmatprep.subr.bf16.mxu0 0
    %10997 = vmatpush1.bf16.msra.mxu0 %v10976
    %10998 = vmatprep.subr.bf16.mxu0 0
    %10999 = vmatpush1.bf16.msra.mxu0 %v10977
    %11000 = vmatprep.subr.bf16.mxu0 0
    %11001 = vmatpush1.bf16.msra.mxu0 %v10978
    %11002 = vmatprep.subr.bf16.mxu0 0
    %11003 = vmatpush1.bf16.msra.mxu0 %v10979
    %11004 = vmatprep.subr.bf16.mxu0 0
    %11005 = vmatpush1.bf16.msra.mxu0 0
    %11006 = vmatprep.subr.bf16.mxu0 0
    %11007 = vmatpush1.bf16.msra.mxu0 0
    %11008 = vmatprep.subr.bf16.mxu0 0
    %11009 = vmatpush1.bf16.msra.mxu0 0
    %11010 = vmatprep.subr.bf16.mxu0 0
    %11011 = vmatpush1.bf16.msra.mxu0 0
    %11012 = vmatprep.subr.bf16.mxu0 0
    %11013 = vmatpush1.bf16.msra.mxu0 0
    %11014 = vmatprep.subr.bf16.mxu0 0
    %11015 = vmatpush1.bf16.msra.mxu0 0
    %11016 = vmatprep.subr.bf16.mxu0 0
    %11017 = vmatpush1.bf16.msra.mxu0 0
    %11018 = vmatprep.subr.bf16.mxu0 0
    %11019 = vmatpush1.bf16.msra.mxu0 0
    %11020 = vmatprep.mubr.bf16.mxu0 0
    %11021 = vmatmul.mubr.bf16.gmra.mrb[0].mxu0 %v10926
    %v11022 = vpop.f32.mrb[0].mxu0
    %v11023 = vadd.f32 %v10938, %v11022
    %v11024 = vpop.f32.mrb[0].mxu0
    %v11025 = vpop.f32.mrb[0].mxu0
    %v11026 = vadd.f32 %v10938, %v11025
    %v11027 = vpop.f32.mrb[0].mxu0
    %11028 = vmatprep.mubr.bf16.mxu0 0
    %11029 = vmatmul.mubr.bf16.gmra.mrb[0].mxu0 %v10927
    %v11030 = vpop.f32.mrb[0].mxu0
    %v11031 = vadd.f32 %v10938, %v11030
    %v11032 = vpop.f32.mrb[0].mxu0
    %v11033 = vpop.f32.mrb[0].mxu0
    %v11034 = vadd.f32 %v10938, %v11033
    %v11035 = vpop.f32.mrb[0].mxu0
    %11036 = vmatprep.mubr.bf16.mxu0 0
    %11037 = vmatmul.mubr.bf16.gmra.mrb[0].mxu0 %v10928
    %v11038 = vpop.f32.mrb[0].mxu0
    %v11039 = vadd.f32 %v10938, %v11038
    %v11040 = vpop.f32.mrb[0].mxu0
    %v11041 = vpop.f32.mrb[0].mxu0
    %v11042 = vadd.f32 %v10938, %v11041
    %v11043 = vpop.f32.mrb[0].mxu0
    %11044 = vmatprep.mubr.bf16.mxu0 0
    %11045 = vmatmul.mubr.bf16.gmra.mrb[0].mxu0 %v10929
    %v11046 = vpop.f32.mrb[0].mxu0
    %v11047 = vadd.f32 %v10938, %v11046
    %v11048 = vpop.f32.mrb[0].mxu0
    %v11049 = vpop.f32.mrb[0].mxu0
    %v11050 = vadd.f32 %v10938, %v11049
    %v11051 = vpop.f32.mrb[0].mxu0
    %11052 = vmatprep.mubr.bf16.mxu0 0
    %11053 = vmatmul.mubr.bf16.gmra.mrb[0].mxu0 %v10930
    %v11054 = vpop.f32.mrb[0].mxu0
    %v11055 = vadd.f32 %v10938, %v11054
    %v11056 = vpop.f32.mrb[0].mxu0
    %v11057 = vpop.f32.mrb[0].mxu0
    %v11058 = vadd.f32 %v10938, %v11057
    %v11059 = vpop.f32.mrb[0].mxu0
    %11060 = vmatprep.mubr.bf16.mxu0 0
    %11061 = vmatmul.mubr.bf16.gmra.mrb[0].mxu0 %v10931
    %v11062 = vpop.f32.mrb[0].mxu0
    %v11063 = vadd.f32 %v10938, %v11062
    %v11064 = vpop.f32.mrb[0].mxu0
    %v11065 = vpop.f32.mrb[0].mxu0
    %v11066 = vadd.f32 %v10938, %v11065
    %v11067 = vpop.f32.mrb[0].mxu0
    %11068 = vmatprep.mubr.bf16.mxu0 0
    %11069 = vmatmul.mubr.bf16.gmra.mrb[0].mxu0 %v10932
    %v11070 = vpop.f32.mrb[0].mxu0
    %v11071 = vadd.f32 %v10938, %v11070
    %v11072 = vpop.f32.mrb[0].mxu0
    %v11073 = vpop.f32.mrb[0].mxu0
    %v11074 = vadd.f32 %v10938, %v11073
    %v11075 = vpop.f32.mrb[0].mxu0
    %11076 = vmatprep.mubr.bf16.mxu0 0
    %11077 = vmatmul.mubr.bf16.gmra.mrb[0].mxu0 %v10933
    %v11078 = vpop.f32.mrb[0].mxu0
    %v11079 = vadd.f32 %v10938, %v11078
    %v11080 = vpop.f32.mrb[0].mxu0
    %v11081 = vpop.f32.mrb[0].mxu0
    %v11082 = vadd.f32 %v10938, %v11081
    %v11083 = vpop.f32.mrb[0].mxu0
    %11084 = vdwg.mxu0
    %11085 = vst [vmem:[#allocation23] sm:$0xff] %v11023
    %11086 = vst [vmem:[#allocation23 + $0x8] sm:$0xff] %v11026
    %11087 = vst [vmem:[#allocation23 + $0x10] sm:$0xff] %v11031
    %11088 = vst [vmem:[#allocation23 + $0x18] sm:$0xff] %v11034
    %11089 = vst [vmem:[#allocation23 + $0x20] sm:$0xff] %v11039
    %11090 = vst [vmem:[#allocation23 + $0x28] sm:$0xff] %v11042
    %11091 = vst [vmem:[#allocation23 + $0x30] sm:$0xff] %v11047
    %11092 = vst [vmem:[#allocation23 + $0x38] sm:$0xff] %v11050
    %11093 = vst [vmem:[#allocation23 + $0x40] sm:$0xff] %v11055
    %11094 = vst [vmem:[#allocation23 + $0x48] sm:$0xff] %v11058
    %11095 = vst [vmem:[#allocation23 + $0x50] sm:$0xff] %v11063
    %11096 = vst [vmem:[#allocation23 + $0x58] sm:$0xff] %v11066
    %11097 = vst [vmem:[#allocation23 + $0x60] sm:$0xff] %v11071
    %11098 = vst [vmem:[#allocation23 + $0x68] sm:$0xff] %v11074
    %11099 = vst [vmem:[#allocation23 + $0x70] sm:$0xff] %v11079
    %11100 = vst [vmem:[#allocation23 + $0x78] sm:$0xff] %v11082
    // Predicated region
    $region158: #{tpu_custom_call.1} parent=1 // pred_check
      _
    $region159: #{tpu_custom_call.1} parent=1 // pred_check_branch
      %11102 = sbr.rel (0) target = $region161
    $region160: #{tpu_custom_call.1} parent=1 // pred_region
      %s11104 = ssub.s32 2048, 2048
      %11105 = vsyncadd [#allocation4], %s11104
      %s11106 = sshll.u32 [#allocation23], 4
      %s11107 = int_to_ptr.vmem [resolvable:$true] %s11106
      %11112 = dma.vmem_to_hbm [thread:$0]  %s11107, 2048, %s26, [#allocation4], 128, 128, 8
    $region161: #{tpu_custom_call.1} parent=1 // pred_fallthru
      _
    // Predicated region
    $region162: #{tpu_custom_call.1} parent=1 // pred_check
      _
    $region163: #{tpu_custom_call.1} parent=1 // pred_check_branch
      %11114 = sbr.rel (0) target = $region165
    $region164: #{tpu_custom_call.1} parent=1 // pred_region
      %11115 = dma.done [#allocation4], 2048
    $region165: #{tpu_custom_call.1} parent=1 // pred_fallthru
      _
    %11116 = vsyncpa [#allocation3], 1
    %11117 = vsyncpa [#allocation6], 1
    %11118 = vsyncpa [#allocation9], 1
    %11119 = vsyncpa [#allocation12], 1
    %11120 = vsyncpa [#allocation15], 1
    %11121 = vsyncpa [#allocation18], 1
    %11122 = vsyncpa [#allocation21], 1
    %11123 = vsyncpa [#allocation4], 1

</llo_original>
